<compile_context>
chip_gen: v7x
topology: tpu7x:2x2x1
jax: 0.10.0
libtpu: 0.0.40
codegen_flags: <defaults>
</compile_context>

<pallas_src>
import functools
import math

import jax
import jax.numpy as jnp
import numpy as np
from jax.experimental import pallas as pl
from jax.experimental.pallas import tpu as pltpu

N_FRAMES = 4
N_ACTIONS = 12            # e.g. COMPLEX_MOVEMENT action set
NUM_ATOMS = 51
HIDDEN = 512
FEATURE_DIM = 64 * 7 * 7          # 3136 (hardcoded by module -> input must be 84x84)
FEATURE_DIM_PAD = 3200            # 25 * 128: K padded so K-tiles are lane aligned
FC1_BK = 640                      # K tile (5 steps), multiple of 128
FC1_BN = 512                      # N tile (2 parallel steps)

_VMEM_LIMIT = 32 * 1024 * 1024    # explicit budget, safe on v5e/v6e/v7x


# ---------------------------------------------------------------------------
# Pallas kernels
# ---------------------------------------------------------------------------
def _linear_kernel(x_ref, w_ref, b_ref, o_ref, *, relu):
    """o = [relu](x @ w + b); w is bf16, accumulate f32."""
    x = x_ref[...].astype(jnp.bfloat16)
    acc = jnp.dot(x, w_ref[...], preferred_element_type=jnp.float32)
    acc = acc + b_ref[...]                      # (1, N) broadcast
    if relu:
        acc = jnp.maximum(acc, 0.0)
    o_ref[...] = acc


def linear_pallas(x, w_bf16, b, *, relu=False, bm=None):
    """y = [relu](x @ w + b) ; x:(M,K) f32, w:(K,N) bf16, b:(N,) f32 -> (M,N) f32."""
    M, K = x.shape
    Kw, N = w_bf16.shape
    assert K == Kw
    if bm is None or M % bm != 0 or bm % 8 != 0:
        bm = M                                  # single full block fallback
    grid = (M // bm,)
    return pl.pallas_call(
        functools.partial(_linear_kernel, relu=relu),
        grid=grid,
        in_specs=[
            pl.BlockSpec((bm, K), lambda i: (i, 0)),
            pl.BlockSpec((K, N), lambda i: (0, 0)),
            pl.BlockSpec((1, N), lambda i: (0, 0)),
        ],
        out_specs=pl.BlockSpec((bm, N), lambda i: (i, 0)),
        out_shape=jax.ShapeDtypeStruct((M, N), jnp.float32),
        compiler_params=pltpu.CompilerParams(
            dimension_semantics=("parallel",),
            vmem_limit_bytes=_VMEM_LIMIT),
    )(x, w_bf16, b.reshape(1, N))


def _fc1_kernel(x_ref, w_ref, b_ref, o_ref):
    """Fused value|advantage fc1: K-tiled matmul, accumulate in the output block,
    add bias + ReLU on the last K step."""
    k = pl.program_id(1)

    @pl.when(k == 0)
    def _init():
        o_ref[...] = jnp.zeros_like(o_ref)

    o_ref[...] += jnp.dot(x_ref[...].astype(jnp.bfloat16), w_ref[...],
                          preferred_element_type=jnp.float32)

    @pl.when(k == pl.num_programs(1) - 1)
    def _finalize():
        o_ref[...] = jnp.maximum(o_ref[...] + b_ref[...], 0.0)


def fc1_fused_pallas(feat_p, w1_bf16, b1):
    """feat_p:(B, 3200) f32, w1:(3200, 1024) bf16, b1:(1024,) f32 -> (B, 1024) f32."""
    B, KP = feat_p.shape
    N = w1_bf16.shape[1]
    grid = (N // FC1_BN, KP // FC1_BK)          # (parallel N, arbitrary K)
    return pl.pallas_call(
        _fc1_kernel,
        grid=grid,
        in_specs=[
            pl.BlockSpec((B, FC1_BK), lambda n, k: (0, k)),
            pl.BlockSpec((FC1_BK, FC1_BN), lambda n, k: (k, n)),
            pl.BlockSpec((1, FC1_BN), lambda n, k: (0, n)),
        ],
        out_specs=pl.BlockSpec((B, FC1_BN), lambda n, k: (0, n)),
        out_shape=jax.ShapeDtypeStruct((B, N), jnp.float32),
        compiler_params=pltpu.CompilerParams(
            dimension_semantics=("parallel", "arbitrary"),
            vmem_limit_bytes=_VMEM_LIMIT),
    )(feat_p, w1_bf16, b1.reshape(1, N))


def _head_kernel(h_ref, wv_ref, bv_ref, wa_ref, ba_ref, o_ref):
    """Fused fc_value2 + fc_advantage2 + dueling combine + softmax over atoms.
    Output layout is (N_ACTIONS, B, NUM_ATOMS); wrapper transposes to torch order."""
    h = h_ref[...]                                        # (B, 2*HIDDEN) f32
    h_v = h[:, :HIDDEN].astype(jnp.bfloat16)              # value-branch hidden
    h_a = h[:, HIDDEN:].astype(jnp.bfloat16)              # advantage-branch hidden

    value = jnp.dot(h_v, wv_ref[...],
                    preferred_element_type=jnp.float32) + bv_ref[...]   # (B, 51)

    advs = []
    for j in range(N_ACTIONS):                            # static unroll (12 tiny dots)
        a_j = jnp.dot(h_a, wa_ref[j],
                      preferred_element_type=jnp.float32) + ba_ref[j]   # (B, 51)
        advs.append(a_j)

    a_sum = advs[0]
    for j in range(1, N_ACTIONS):
        a_sum = a_sum + advs[j]
    base = value - a_sum * (1.0 / N_ACTIONS)              # value - mean(advantage)

    for j in range(N_ACTIONS):
        q = base + advs[j]
        q = q - jnp.max(q, axis=-1, keepdims=True)        # stable softmax over atoms
        e = jnp.exp(q)
        o_ref[j] = e / jnp.sum(e, axis=-1, keepdims=True)


def head_pallas(h, wv2, bv2, wa2, ba2):
    B = h.shape[0]
    dist = pl.pallas_call(
        _head_kernel,
        out_shape=jax.ShapeDtypeStruct((N_ACTIONS, B, NUM_ATOMS), jnp.float32),
        in_specs=[pl.BlockSpec(memory_space=pltpu.MemorySpace.VMEM)
                  for _ in range(5)],
        out_specs=pl.BlockSpec(memory_space=pltpu.MemorySpace.VMEM),
        compiler_params=pltpu.CompilerParams(vmem_limit_bytes=_VMEM_LIMIT),
    )(h, wv2, bv2, wa2, ba2)
    return jnp.transpose(dist, (1, 0, 2))                 # (B, N_ACTIONS, NUM_ATOMS)


# ---------------------------------------------------------------------------
# Conv = im2col (plain-JAX data rearrangement) + Pallas matmul
# ---------------------------------------------------------------------------
def _im2col(x_nhwc, k, s):
    B, H, W, C = x_nhwc.shape
    Ho = (H - k) // s + 1
    Wo = (W - k) // s + 1
    cols = []
    for di in range(k):
        for dj in range(k):
            cols.append(x_nhwc[:, di:di + s * Ho:s, dj:dj + s * Wo:s, :])
    p = jnp.stack(cols, axis=3)                           # (B, Ho, Wo, k*k, C)
    return p.reshape(B * Ho * Wo, k * k * C), Ho, Wo


def conv2d_relu_pallas(x_nhwc, w_mat_bf16, b, ksize, stride, bm=None):
    cols, Ho, Wo = _im2col(x_nhwc, ksize, stride)
    y = linear_pallas(cols, w_mat_bf16, b, relu=True, bm=bm)
    B = x_nhwc.shape[0]
    c_out = w_mat_bf16.shape[1]
    return y.reshape(B, Ho, Wo, c_out)


# ---------------------------------------------------------------------------
# Deterministic parameter construction (mirrors the module's __init__ shapes)
# ---------------------------------------------------------------------------
def init_params(key):
    ks = jax.random.split(key, 8)

    def conv_init(k, c_out, c_in, kk):
        fan_in = c_in * kk * kk
        bound = 1.0 / math.sqrt(fan_in)
        w = jax.random.uniform(k, (c_out, c_in, kk, kk), jnp.float32, -bound, bound)
        b = jax.random.uniform(jax.random.fold_in(k, 1), (c_out,), jnp.float32,
                               -bound, bound)
        # (O, C, kh, kw) -> (kh*kw*C, O), matching the im2col patch order; bf16 storage.
        w_mat = jnp.transpose(w, (2, 3, 1, 0)).reshape(-1, c_out).astype(jnp.bfloat16)
        return w_mat, b

    def scale_noise(k, n):
        x = jax.random.normal(k, (n,), jnp.float32)
        return jnp.sign(x) * jnp.sqrt(jnp.abs(x))

    def noisy_eff(k, in_f, out_f, std_init=1.0):
        # PyTorch default is training=True -> W = mu + sigma * (eps_out ⊗ eps_in).
        k1, k2, k3, k4 = jax.random.split(k, 4)
        mu_range = 1.0 / math.sqrt(in_f)
        w_mu = jax.random.uniform(k1, (out_f, in_f), jnp.float32, -mu_range, mu_range)
        w_sig = jnp.full((out_f, in_f), std_init / math.sqrt(in_f), jnp.float32)
        b_mu = jax.random.uniform(k2, (out_f,), jnp.float32, -mu_range, mu_range)
        b_sig = jnp.full((out_f,), std_init / math.sqrt(out_f), jnp.float32)
        eps_in = scale_noise(k3, in_f)
        eps_out = scale_noise(k4, out_f)
        w_eff = w_mu + w_sig * jnp.outer(eps_out, eps_in)   # (out, in) torch layout
        b_eff = b_mu + b_sig * eps_out
        return w_eff, b_eff

    # One-time row reindex of the fc1 weights: NCHW-flatten order -> NHWC-flatten
    # order, so forward() can skip the runtime transpose of the conv feature map.
    hh, ww, cc = np.meshgrid(np.arange(7), np.arange(7), np.arange(64), indexing="ij")
    nchw_row = (cc * 49 + hh * 7 + ww).reshape(-1)          # NHWC pos -> NCHW row

    wv1, bv1 = noisy_eff(ks[3], FEATURE_DIM, HIDDEN)        # (512, 3136)
    wa1, ba1 = noisy_eff(ks[5], FEATURE_DIM, HIDDEN)
    w1 = jnp.concatenate([wv1.T, wa1.T], axis=1)            # (3136, 1024) fused
    w1 = w1[nchw_row, :]                                    # NHWC-flatten row order
    w1 = jnp.pad(w1, ((0, FEATURE_DIM_PAD - FEATURE_DIM), (0, 0)))   # zero-pad K
    b1 = jnp.concatenate([bv1, ba1], axis=0)                # (1024,)

    wv2, bv2 = noisy_eff(ks[4], HIDDEN, NUM_ATOMS)                    # (51, 512)
    wa2, ba2 = noisy_eff(ks[6], HIDDEN, N_ACTIONS * NUM_ATOMS)        # (612, 512)
    wa2_r = wa2.reshape(N_ACTIONS, NUM_ATOMS, HIDDEN).transpose(0, 2, 1)  # (12,512,51)
    ba2_r = ba2.reshape(N_ACTIONS, 1, NUM_ATOMS)                          # (12,1,51)

    return {
        "conv1": conv_init(ks[0], 64, N_FRAMES, 8),
        "conv2": conv_init(ks[1], 64, 64, 4),
        "conv3": conv_init(ks[2], 64, 64, 3),
        "fc1_w": w1.astype(jnp.bfloat16),                   # (3200, 1024) bf16
        "fc1_b": b1,                                        # (1024,) f32
        "fc_v2_w": wv2.T.astype(jnp.bfloat16),              # (512, 51) bf16
        "fc_v2_b": bv2.reshape(1, NUM_ATOMS),               # (1, 51) f32
        "fc_a2_w": wa2_r.astype(jnp.bfloat16),              # (12, 512, 51) bf16
        "fc_a2_b": ba2_r,                                   # (12, 1, 51) f32
    }


# ---------------------------------------------------------------------------
# Forward pass
# ---------------------------------------------------------------------------
def forward(params, x_nchw):
    B = x_nchw.shape[0]
    x = jnp.transpose(x_nchw, (0, 2, 3, 1))                 # NCHW -> NHWC (only once)

    w1c, b1c = params["conv1"]
    x = conv2d_relu_pallas(x, w1c, b1c, ksize=8, stride=4, bm=400)   # (B,20,20,64)
    w2c, b2c = params["conv2"]
    x = conv2d_relu_pallas(x, w2c, b2c, ksize=4, stride=2)           # (B, 9, 9,64)
    w3c, b3c = params["conv3"]
    x = conv2d_relu_pallas(x, w3c, b3c, ksize=3, stride=1)           # (B, 7, 7,64)

    # NHWC flatten; the fc1 weight rows were pre-permuted to match this order.
    feat = x.reshape(B, FEATURE_DIM)
    feat = jnp.pad(feat, ((0, 0), (0, FEATURE_DIM_PAD - FEATURE_DIM)))

    # fused value|advantage fc1 (+ReLU): (B, 1024) = [value_hidden | adv_hidden]
    h = fc1_fused_pallas(feat, params["fc1_w"], params["fc1_b"])

    # fused fc2 + dueling combine + softmax
    return head_pallas(h, params["fc_v2_w"], params["fc_v2_b"],
                       params["fc_a2_w"], params["fc_a2_b"])         # (B, 12, 51)


if __name__ == "__main__":
    key = jax.random.PRNGKey(0)
    pkey, xkey = jax.random.split(key)
    params = init_params(pkey)
    # input spatial must be 84x84 since the module hardcodes feature_dim = 64*7*7
    x = jax.random.normal(xkey, (2, N_FRAMES, 84, 84), dtype=jnp.float32)

    out = jax.jit(forward)(params, x)
    out = jax.block_until_ready(out)

    assert out.shape == (2, N_ACTIONS, NUM_ATOMS), out.shape
    out_np = np.asarray(out)
    sums = out_np.sum(axis=-1)
    assert np.allclose(sums, 1.0, atol=1e-4), sums          # softmax rows sum to 1
    assert np.all(out_np >= 0.0)
    print("KERNEL_OK")
</pallas_src>

<mosaic_0001>
module attributes {stable_mosaic.version = 11 : i64} {
  func.func @_linear_kernel(%arg0: i32, %arg1: memref<400x256xf32, #tpu.memory_space<vmem>>, %arg2: memref<256x64xbf16, #tpu.memory_space<vmem>>, %arg3: memref<1x64xf32, #tpu.memory_space<vmem>>, %arg4: memref<400x64xf32, #tpu.memory_space<vmem>>) attributes {dimension_semantics = [#tpu.dimension_semantics<parallel>], iteration_bounds = array<i64: 2>, scalar_prefetch = 0 : i64, scratch_operands = 0 : i64, tpu.core_type = #tpu.core_type<tc>, window_params = [{transform_indices = @transform_0, window_bounds = array<i64: 400, 256>}, {pipeline_mode = #tpu.pipeline_mode<synchronous>, transform_indices = @transform_1, window_bounds = array<i64: 256, 64>}, {pipeline_mode = #tpu.pipeline_mode<synchronous>, transform_indices = @transform_2, window_bounds = array<i64: 1, 64>}, {transform_indices = @transform_3, window_bounds = array<i64: 400, 64>}]} {
    %c0 = arith.constant 0 : index
    %c0_0 = arith.constant 0 : index
    %0 = vector.load %arg1[%c0, %c0_0] : memref<400x256xf32, #tpu.memory_space<vmem>>, vector<400x256xf32>
    %1 = arith.truncf %0 : vector<400x256xf32> to vector<400x256xbf16>
    %c0_1 = arith.constant 0 : index
    %c0_2 = arith.constant 0 : index
    %2 = vector.load %arg2[%c0_1, %c0_2] : memref<256x64xbf16, #tpu.memory_space<vmem>>, vector<256x64xbf16>
    %cst = arith.constant dense<0.000000e+00> : vector<400x64xf32>
    %3 = tpu.matmul %1, %2, %cst {dimension_numbers = #tpu.dot_dimension_numbers<[1], [0], [0], [1], [0, 0, 1, 1], [], []>} : vector<400x256xbf16>, vector<256x64xbf16>, vector<400x64xf32> -> vector<400x64xf32>
    %c0_3 = arith.constant 0 : index
    %c0_4 = arith.constant 0 : index
    %4 = vector.load %arg3[%c0_3, %c0_4] : memref<1x64xf32, #tpu.memory_space<vmem>>, vector<1x64xf32>
    %5 = vector.broadcast %4 : vector<1x64xf32> to vector<400x64xf32>
    %6 = arith.addf %3, %5 : vector<400x64xf32>
    %cst_5 = arith.constant 0.000000e+00 : f32
    %7 = vector.broadcast %cst_5 : f32 to vector<400x64xf32>
    %8 = arith.maximumf %6, %7 : vector<400x64xf32>
    %c0_6 = arith.constant 0 : index
    %c0_7 = arith.constant 0 : index
    %9 = vector.load %arg4[%c0_6, %c0_7] : memref<400x64xf32, #tpu.memory_space<vmem>>, vector<400x64xf32>
    tpu.vector_store %arg4[%c0_6, %c0_7], %8 {strides = array<i32>} : memref<400x64xf32, #tpu.memory_space<vmem>>, vector<400x64xf32>,
    return
  }
  func.func @transform_0(%arg0: i32) -> (i32, i32) {
    %c0_i32 = arith.constant 0 : i32
    %c0_i32_0 = arith.constant 0 : i32
    return %arg0, %c0_i32 : i32, i32
  }
  func.func @transform_1(%arg0: i32) -> (i32, i32) {
    %c0_i32 = arith.constant 0 : i32
    %c0_i32_0 = arith.constant 0 : i32
    %c0_i32_1 = arith.constant 0 : i32
    return %c0_i32, %c0_i32_0 : i32, i32
  }
  func.func @transform_2(%arg0: i32) -> (i32, i32) {
    %c0_i32 = arith.constant 0 : i32
    %c0_i32_0 = arith.constant 0 : i32
    %c0_i32_1 = arith.constant 0 : i32
    return %c0_i32, %c0_i32_0 : i32, i32
  }
  func.func @transform_3(%arg0: i32) -> (i32, i32) {
    %c0_i32 = arith.constant 0 : i32
    %c0_i32_0 = arith.constant 0 : i32
    return %arg0, %c0_i32 : i32, i32
  }
}

module attributes {stable_mosaic.version = 11 : i64} {
  func.func @_linear_kernel(%arg0: i32, %arg1: memref<162x1024xf32, #tpu.memory_space<vmem>>, %arg2: memref<1024x64xbf16, #tpu.memory_space<vmem>>, %arg3: memref<1x64xf32, #tpu.memory_space<vmem>>, %arg4: memref<162x64xf32, #tpu.memory_space<vmem>>) attributes {dimension_semantics = [#tpu.dimension_semantics<parallel>], iteration_bounds = array<i64: 1>, scalar_prefetch = 0 : i64, scratch_operands = 0 : i64, tpu.core_type = #tpu.core_type<tc>, window_params = [{transform_indices = @transform_0, window_bounds = array<i64: 162, 1024>}, {pipeline_mode = #tpu.pipeline_mode<synchronous>, transform_indices = @transform_1, window_bounds = array<i64: 1024, 64>}, {pipeline_mode = #tpu.pipeline_mode<synchronous>, transform_indices = @transform_2, window_bounds = array<i64: 1, 64>}, {transform_indices = @transform_3, window_bounds = array<i64: 162, 64>}]} {
    %c0 = arith.constant 0 : index
    %c0_0 = arith.constant 0 : index
    %0 = vector.load %arg1[%c0, %c0_0] : memref<162x1024xf32, #tpu.memory_space<vmem>>, vector<162x1024xf32>
    %1 = arith.truncf %0 : vector<162x1024xf32> to vector<162x1024xbf16>
    %c0_1 = arith.constant 0 : index
    %c0_2 = arith.constant 0 : index
    %2 = vector.load %arg2[%c0_1, %c0_2] : memref<1024x64xbf16, #tpu.memory_space<vmem>>, vector<1024x64xbf16>
    %cst = arith.constant dense<0.000000e+00> : vector<162x64xf32>
    %3 = tpu.matmul %1, %2, %cst {dimension_numbers = #tpu.dot_dimension_numbers<[1], [0], [0], [1], [0, 0, 1, 1], [], []>} : vector<162x1024xbf16>, vector<1024x64xbf16>, vector<162x64xf32> -> vector<162x64xf32>
    %c0_3 = arith.constant 0 : index
    %c0_4 = arith.constant 0 : index
    %4 = vector.load %arg3[%c0_3, %c0_4] : memref<1x64xf32, #tpu.memory_space<vmem>>, vector<1x64xf32>
    %5 = vector.broadcast %4 : vector<1x64xf32> to vector<162x64xf32>
    %6 = arith.addf %3, %5 : vector<162x64xf32>
    %cst_5 = arith.constant 0.000000e+00 : f32
    %7 = vector.broadcast %cst_5 : f32 to vector<162x64xf32>
    %8 = arith.maximumf %6, %7 : vector<162x64xf32>
    %c0_6 = arith.constant 0 : index
    %c0_7 = arith.constant 0 : index
    %9 = vector.load %arg4[%c0_6, %c0_7] : memref<162x64xf32, #tpu.memory_space<vmem>>, vector<162x64xf32>
    tpu.vector_store %arg4[%c0_6, %c0_7], %8 {strides = array<i32>} : memref<162x64xf32, #tpu.memory_space<vmem>>, vector<162x64xf32>,
    return
  }
  func.func @transform_0(%arg0: i32) -> (i32, i32) {
    %c0_i32 = arith.constant 0 : i32
    %c0_i32_0 = arith.constant 0 : i32
    return %arg0, %c0_i32 : i32, i32
  }
  func.func @transform_1(%arg0: i32) -> (i32, i32) {
    %c0_i32 = arith.constant 0 : i32
    %c0_i32_0 = arith.constant 0 : i32
    %c0_i32_1 = arith.constant 0 : i32
    return %c0_i32, %c0_i32_0 : i32, i32
  }
  func.func @transform_2(%arg0: i32) -> (i32, i32) {
    %c0_i32 = arith.constant 0 : i32
    %c0_i32_0 = arith.constant 0 : i32
    %c0_i32_1 = arith.constant 0 : i32
    return %c0_i32, %c0_i32_0 : i32, i32
  }
  func.func @transform_3(%arg0: i32) -> (i32, i32) {
    %c0_i32 = arith.constant 0 : i32
    %c0_i32_0 = arith.constant 0 : i32
    return %arg0, %c0_i32 : i32, i32
  }
}

module attributes {stable_mosaic.version = 11 : i64} {
  func.func @_linear_kernel(%arg0: i32, %arg1: memref<98x576xf32, #tpu.memory_space<vmem>>, %arg2: memref<576x64xbf16, #tpu.memory_space<vmem>>, %arg3: memref<1x64xf32, #tpu.memory_space<vmem>>, %arg4: memref<98x64xf32, #tpu.memory_space<vmem>>) attributes {dimension_semantics = [#tpu.dimension_semantics<parallel>], iteration_bounds = array<i64: 1>, scalar_prefetch = 0 : i64, scratch_operands = 0 : i64, tpu.core_type = #tpu.core_type<tc>, window_params = [{transform_indices = @transform_0, window_bounds = array<i64: 98, 576>}, {pipeline_mode = #tpu.pipeline_mode<synchronous>, transform_indices = @transform_1, window_bounds = array<i64: 576, 64>}, {pipeline_mode = #tpu.pipeline_mode<synchronous>, transform_indices = @transform_2, window_bounds = array<i64: 1, 64>}, {transform_indices = @transform_3, window_bounds = array<i64: 98, 64>}]} {
    %c0 = arith.constant 0 : index
    %c0_0 = arith.constant 0 : index
    %0 = vector.load %arg1[%c0, %c0_0] : memref<98x576xf32, #tpu.memory_space<vmem>>, vector<98x576xf32>
    %1 = arith.truncf %0 : vector<98x576xf32> to vector<98x576xbf16>
    %c0_1 = arith.constant 0 : index
    %c0_2 = arith.constant 0 : index
    %2 = vector.load %arg2[%c0_1, %c0_2] : memref<576x64xbf16, #tpu.memory_space<vmem>>, vector<576x64xbf16>
    %cst = arith.constant dense<0.000000e+00> : vector<98x64xf32>
    %3 = tpu.matmul %1, %2, %cst {dimension_numbers = #tpu.dot_dimension_numbers<[1], [0], [0], [1], [0, 0, 1, 1], [], []>} : vector<98x576xbf16>, vector<576x64xbf16>, vector<98x64xf32> -> vector<98x64xf32>
    %c0_3 = arith.constant 0 : index
    %c0_4 = arith.constant 0 : index
    %4 = vector.load %arg3[%c0_3, %c0_4] : memref<1x64xf32, #tpu.memory_space<vmem>>, vector<1x64xf32>
    %5 = vector.broadcast %4 : vector<1x64xf32> to vector<98x64xf32>
    %6 = arith.addf %3, %5 : vector<98x64xf32>
    %cst_5 = arith.constant 0.000000e+00 : f32
    %7 = vector.broadcast %cst_5 : f32 to vector<98x64xf32>
    %8 = arith.maximumf %6, %7 : vector<98x64xf32>
    %c0_6 = arith.constant 0 : index
    %c0_7 = arith.constant 0 : index
    %9 = vector.load %arg4[%c0_6, %c0_7] : memref<98x64xf32, #tpu.memory_space<vmem>>, vector<98x64xf32>
    tpu.vector_store %arg4[%c0_6, %c0_7], %8 {strides = array<i32>} : memref<98x64xf32, #tpu.memory_space<vmem>>, vector<98x64xf32>,
    return
  }
  func.func @transform_0(%arg0: i32) -> (i32, i32) {
    %c0_i32 = arith.constant 0 : i32
    %c0_i32_0 = arith.constant 0 : i32
    return %arg0, %c0_i32 : i32, i32
  }
  func.func @transform_1(%arg0: i32) -> (i32, i32) {
    %c0_i32 = arith.constant 0 : i32
    %c0_i32_0 = arith.constant 0 : i32
    %c0_i32_1 = arith.constant 0 : i32
    return %c0_i32, %c0_i32_0 : i32, i32
  }
  func.func @transform_2(%arg0: i32) -> (i32, i32) {
    %c0_i32 = arith.constant 0 : i32
    %c0_i32_0 = arith.constant 0 : i32
    %c0_i32_1 = arith.constant 0 : i32
    return %c0_i32, %c0_i32_0 : i32, i32
  }
  func.func @transform_3(%arg0: i32) -> (i32, i32) {
    %c0_i32 = arith.constant 0 : i32
    %c0_i32_0 = arith.constant 0 : i32
    return %arg0, %c0_i32 : i32, i32
  }
}

module attributes {stable_mosaic.version = 11 : i64} {
  func.func @_fc1_kernel(%arg0: i32, %arg1: i32, %arg2: memref<2x640xf32, #tpu.memory_space<vmem>>, %arg3: memref<640x512xbf16, #tpu.memory_space<vmem>>, %arg4: memref<1x512xf32, #tpu.memory_space<vmem>>, %arg5: memref<2x512xf32, #tpu.memory_space<vmem>>) attributes {dimension_semantics = [#tpu.dimension_semantics<parallel>, #tpu.dimension_semantics<arbitrary>], iteration_bounds = array<i64: 2, 5>, scalar_prefetch = 0 : i64, scratch_operands = 0 : i64, tpu.core_type = #tpu.core_type<tc>, window_params = [{transform_indices = @transform_0, window_bounds = array<i64: 2, 640>}, {transform_indices = @transform_1, window_bounds = array<i64: 640, 512>}, {transform_indices = @transform_2, window_bounds = array<i64: 1, 512>}, {transform_indices = @transform_3, window_bounds = array<i64: 2, 512>}]} {
    %c0_i32 = arith.constant 0 : i32
    %0 = arith.cmpi eq, %arg1, %c0_i32 : i32
    %1 = arith.extui %0 : i1 to i32
    %c0_i32_0 = arith.constant 0 : i32
    %2 = arith.cmpi ne, %1, %c0_i32_0 : i32
    scf.if %2 {
      %cst_9 = arith.constant 0.000000e+00 : f32
      %13 = vector.broadcast %cst_9 : f32 to vector<2x512xf32>
      %c0_10 = arith.constant 0 : index
      %c0_11 = arith.constant 0 : index
      %14 = vector.load %arg5[%c0_10, %c0_11] : memref<2x512xf32, #tpu.memory_space<vmem>>, vector<2x512xf32>
      tpu.vector_store %arg5[%c0_10, %c0_11], %13 {strides = array<i32>} : memref<2x512xf32, #tpu.memory_space<vmem>>, vector<2x512xf32>,
    } else {
    }
    %c0 = arith.constant 0 : index
    %c0_1 = arith.constant 0 : index
    %3 = vector.load %arg5[%c0, %c0_1] : memref<2x512xf32, #tpu.memory_space<vmem>>, vector<2x512xf32>
    %c0_2 = arith.constant 0 : index
    %c0_3 = arith.constant 0 : index
    %4 = vector.load %arg2[%c0_2, %c0_3] : memref<2x640xf32, #tpu.memory_space<vmem>>, vector<2x640xf32>
    %5 = arith.truncf %4 : vector<2x640xf32> to vector<2x640xbf16>
    %c0_4 = arith.constant 0 : index
    %c0_5 = arith.constant 0 : index
    %6 = vector.load %arg3[%c0_4, %c0_5] : memref<640x512xbf16, #tpu.memory_space<vmem>>, vector<640x512xbf16>
    %cst = arith.constant dense<0.000000e+00> : vector<2x512xf32>
    %7 = tpu.matmul %5, %6, %cst {dimension_numbers = #tpu.dot_dimension_numbers<[1], [0], [0], [1], [0, 0, 1, 1], [], []>} : vector<2x640xbf16>, vector<640x512xbf16>, vector<2x512xf32> -> vector<2x512xf32>
    %8 = arith.addf %3, %7 : vector<2x512xf32>
    %c0_6 = arith.constant 0 : index
    %c0_7 = arith.constant 0 : index
    %9 = vector.load %arg5[%c0_6, %c0_7] : memref<2x512xf32, #tpu.memory_space<vmem>>, vector<2x512xf32>
    tpu.vector_store %arg5[%c0_6, %c0_7], %8 {strides = array<i32>} : memref<2x512xf32, #tpu.memory_space<vmem>>, vector<2x512xf32>,
    %c4_i32 = arith.constant 4 : i32
    %10 = arith.cmpi eq, %arg1, %c4_i32 : i32
    %11 = arith.extui %10 : i1 to i32
    %c0_i32_8 = arith.constant 0 : i32
    %12 = arith.cmpi ne, %11, %c0_i32_8 : i32
    scf.if %12 {
      %c0_9 = arith.constant 0 : index
      %c0_10 = arith.constant 0 : index
      %13 = vector.load %arg5[%c0_9, %c0_10] : memref<2x512xf32, #tpu.memory_space<vmem>>, vector<2x512xf32>
      %c0_11 = arith.constant 0 : index
      %c0_12 = arith.constant 0 : index
      %14 = vector.load %arg4[%c0_11, %c0_12] : memref<1x512xf32, #tpu.memory_space<vmem>>, vector<1x512xf32>
      %15 = vector.broadcast %14 : vector<1x512xf32> to vector<2x512xf32>
      %16 = arith.addf %13, %15 : vector<2x512xf32>
      %cst_13 = arith.constant 0.000000e+00 : f32
      %17 = vector.broadcast %cst_13 : f32 to vector<2x512xf32>
      %18 = arith.maximumf %16, %17 : vector<2x512xf32>
      %c0_14 = arith.constant 0 : index
      %c0_15 = arith.constant 0 : index
      %19 = vector.load %arg5[%c0_14, %c0_15] : memref<2x512xf32, #tpu.memory_space<vmem>>, vector<2x512xf32>
      tpu.vector_store %arg5[%c0_14, %c0_15], %18 {strides = array<i32>} : memref<2x512xf32, #tpu.memory_space<vmem>>, vector<2x512xf32>,
    } else {
    }
    return
  }
  func.func @transform_0(%arg0: i32, %arg1: i32) -> (i32, i32) {
    %c0_i32 = arith.constant 0 : i32
    %c0_i32_0 = arith.constant 0 : i32
    return %c0_i32, %arg1 : i32, i32
  }
  func.func @transform_1(%arg0: i32, %arg1: i32) -> (i32, i32) {
    %c0_i32 = arith.constant 0 : i32
    return %arg1, %arg0 : i32, i32
  }
  func.func @transform_2(%arg0: i32, %arg1: i32) -> (i32, i32) {
    %c0_i32 = arith.constant 0 : i32
    %c0_i32_0 = arith.constant 0 : i32
    return %c0_i32, %arg0 : i32, i32
  }
  func.func @transform_3(%arg0: i32, %arg1: i32) -> (i32, i32) {
    %c0_i32 = arith.constant 0 : i32
    %c0_i32_0 = arith.constant 0 : i32
    return %c0_i32, %arg0 : i32, i32
  }
}

module attributes {stable_mosaic.version = 11 : i64} {
  func.func @_head_kernel(%arg0: memref<2x1024xf32, #tpu.memory_space<vmem>>, %arg1: memref<512x51xbf16, #tpu.memory_space<vmem>>, %arg2: memref<1x51xf32, #tpu.memory_space<vmem>>, %arg3: memref<12x512x51xbf16, #tpu.memory_space<vmem>>, %arg4: memref<12x1x51xf32, #tpu.memory_space<vmem>>, %arg5: memref<12x2x51xf32, #tpu.memory_space<vmem>>) attributes {dimension_semantics = [], scalar_prefetch = 0 : i64, scratch_operands = 0 : i64, tpu.core_type = #tpu.core_type<tc>} {
    %c0 = arith.constant 0 : index
    %c0_0 = arith.constant 0 : index
    %0 = vector.load %arg0[%c0, %c0_0] : memref<2x1024xf32, #tpu.memory_space<vmem>>, vector<2x1024xf32>
    %1 = vector.extract_strided_slice %0 {offsets = [0, 0], sizes = [2, 512], strides = [1, 1]} : vector<2x1024xf32> to vector<2x512xf32>
    %2 = arith.truncf %1 : vector<2x512xf32> to vector<2x512xbf16>
    %3 = vector.extract_strided_slice %0 {offsets = [0, 512], sizes = [2, 512], strides = [1, 1]} : vector<2x1024xf32> to vector<2x512xf32>
    %4 = arith.truncf %3 : vector<2x512xf32> to vector<2x512xbf16>
    %c0_1 = arith.constant 0 : index
    %c0_2 = arith.constant 0 : index
    %5 = vector.load %arg1[%c0_1, %c0_2] : memref<512x51xbf16, #tpu.memory_space<vmem>>, vector<512x51xbf16>
    %cst = arith.constant dense<0.000000e+00> : vector<2x51xf32>
    %6 = tpu.matmul %2, %5, %cst {dimension_numbers = #tpu.dot_dimension_numbers<[1], [0], [0], [1], [0, 0, 1, 1], [], []>} : vector<2x512xbf16>, vector<512x51xbf16>, vector<2x51xf32> -> vector<2x51xf32>
    %c0_3 = arith.constant 0 : index
    %c0_4 = arith.constant 0 : index
    %7 = vector.load %arg2[%c0_3, %c0_4] : memref<1x51xf32, #tpu.memory_space<vmem>>, vector<1x51xf32>
    %8 = vector.broadcast %7 : vector<1x51xf32> to vector<2x51xf32>
    %9 = arith.addf %6, %8 : vector<2x51xf32>
    %c0_5 = arith.constant 0 : index
    %c0_6 = arith.constant 0 : index
    %c0_7 = arith.constant 0 : index
    %10 = vector.load %arg3[%c0_5, %c0_6, %c0_7] : memref<12x512x51xbf16, #tpu.memory_space<vmem>>, vector<1x512x51xbf16>
    %11 = vector.shape_cast %10 : vector<1x512x51xbf16> to vector<512x51xbf16>
    %cst_8 = arith.constant dense<0.000000e+00> : vector<2x51xf32>
    %12 = tpu.matmul %4, %11, %cst_8 {dimension_numbers = #tpu.dot_dimension_numbers<[1], [0], [0], [1], [0, 0, 1, 1], [], []>} : vector<2x512xbf16>, vector<512x51xbf16>, vector<2x51xf32> -> vector<2x51xf32>
    %c0_9 = arith.constant 0 : index
    %c0_10 = arith.constant 0 : index
    %c0_11 = arith.constant 0 : index
    %13 = vector.load %arg4[%c0_9, %c0_10, %c0_11] : memref<12x1x51xf32, #tpu.memory_space<vmem>>, vector<1x1x51xf32>
    %14 = vector.shape_cast %13 : vector<1x1x51xf32> to vector<1x51xf32>
    %15 = vector.broadcast %14 : vector<1x51xf32> to vector<2x51xf32>
    %16 = arith.addf %12, %15 : vector<2x51xf32>
    %c1 = arith.constant 1 : index
    %c0_12 = arith.constant 0 : index
    %c0_13 = arith.constant 0 : index
    %17 = vector.load %arg3[%c1, %c0_12, %c0_13] : memref<12x512x51xbf16, #tpu.memory_space<vmem>>, vector<1x512x51xbf16>
    %18 = vector.shape_cast %17 : vector<1x512x51xbf16> to vector<512x51xbf16>
    %cst_14 = arith.constant dense<0.000000e+00> : vector<2x51xf32>
    %19 = tpu.matmul %4, %18, %cst_14 {dimension_numbers = #tpu.dot_dimension_numbers<[1], [0], [0], [1], [0, 0, 1, 1], [], []>} : vector<2x512xbf16>, vector<512x51xbf16>, vector<2x51xf32> -> vector<2x51xf32>
    %c1_15 = arith.constant 1 : index
    %c0_16 = arith.constant 0 : index
    %c0_17 = arith.constant 0 : index
    %20 = vector.load %arg4[%c1_15, %c0_16, %c0_17] : memref<12x1x51xf32, #tpu.memory_space<vmem>>, vector<1x1x51xf32>
    %21 = vector.shape_cast %20 : vector<1x1x51xf32> to vector<1x51xf32>
    %22 = vector.broadcast %21 : vector<1x51xf32> to vector<2x51xf32>
    %23 = arith.addf %19, %22 : vector<2x51xf32>
    %c2 = arith.constant 2 : index
    %c0_18 = arith.constant 0 : index
    %c0_19 = arith.constant 0 : index
    %24 = vector.load %arg3[%c2, %c0_18, %c0_19] : memref<12x512x51xbf16, #tpu.memory_space<vmem>>, vector<1x512x51xbf16>
    %25 = vector.shape_cast %24 : vector<1x512x51xbf16> to vector<512x51xbf16>
    %cst_20 = arith.constant dense<0.000000e+00> : vector<2x51xf32>
    %26 = tpu.matmul %4, %25, %cst_20 {dimension_numbers = #tpu.dot_dimension_numbers<[1], [0], [0], [1], [0, 0, 1, 1], [], []>} : vector<2x512xbf16>, vector<512x51xbf16>, vector<2x51xf32> -> vector<2x51xf32>
    %c2_21 = arith.constant 2 : index
    %c0_22 = arith.constant 0 : index
    %c0_23 = arith.constant 0 : index
    %27 = vector.load %arg4[%c2_21, %c0_22, %c0_23] : memref<12x1x51xf32, #tpu.memory_space<vmem>>, vector<1x1x51xf32>
    %28 = vector.shape_cast %27 : vector<1x1x51xf32> to vector<1x51xf32>
    %29 = vector.broadcast %28 : vector<1x51xf32> to vector<2x51xf32>
    %30 = arith.addf %26, %29 : vector<2x51xf32>
    %c3 = arith.constant 3 : index
    %c0_24 = arith.constant 0 : index
    %c0_25 = arith.constant 0 : index
    %31 = vector.load %arg3[%c3, %c0_24, %c0_25] : memref<12x512x51xbf16, #tpu.memory_space<vmem>>, vector<1x512x51xbf16>
    %32 = vector.shape_cast %31 : vector<1x512x51xbf16> to vector<512x51xbf16>
    %cst_26 = arith.constant dense<0.000000e+00> : vector<2x51xf32>
    %33 = tpu.matmul %4, %32, %cst_26 {dimension_numbers = #tpu.dot_dimension_numbers<[1], [0], [0], [1], [0, 0, 1, 1], [], []>} : vector<2x512xbf16>, vector<512x51xbf16>, vector<2x51xf32> -> vector<2x51xf32>
    %c3_27 = arith.constant 3 : index
    %c0_28 = arith.constant 0 : index
    %c0_29 = arith.constant 0 : index
    %34 = vector.load %arg4[%c3_27, %c0_28, %c0_29] : memref<12x1x51xf32, #tpu.memory_space<vmem>>, vector<1x1x51xf32>
    %35 = vector.shape_cast %34 : vector<1x1x51xf32> to vector<1x51xf32>
    %36 = vector.broadcast %35 : vector<1x51xf32> to vector<2x51xf32>
    %37 = arith.addf %33, %36 : vector<2x51xf32>
    %c4 = arith.constant 4 : index
    %c0_30 = arith.constant 0 : index
    %c0_31 = arith.constant 0 : index
    %38 = vector.load %arg3[%c4, %c0_30, %c0_31] : memref<12x512x51xbf16, #tpu.memory_space<vmem>>, vector<1x512x51xbf16>
    %39 = vector.shape_cast %38 : vector<1x512x51xbf16> to vector<512x51xbf16>
    %cst_32 = arith.constant dense<0.000000e+00> : vector<2x51xf32>
    %40 = tpu.matmul %4, %39, %cst_32 {dimension_numbers = #tpu.dot_dimension_numbers<[1], [0], [0], [1], [0, 0, 1, 1], [], []>} : vector<2x512xbf16>, vector<512x51xbf16>, vector<2x51xf32> -> vector<2x51xf32>
    %c4_33 = arith.constant 4 : index
    %c0_34 = arith.constant 0 : index
    %c0_35 = arith.constant 0 : index
    %41 = vector.load %arg4[%c4_33, %c0_34, %c0_35] : memref<12x1x51xf32, #tpu.memory_space<vmem>>, vector<1x1x51xf32>
    %42 = vector.shape_cast %41 : vector<1x1x51xf32> to vector<1x51xf32>
    %43 = vector.broadcast %42 : vector<1x51xf32> to vector<2x51xf32>
    %44 = arith.addf %40, %43 : vector<2x51xf32>
    %c5 = arith.constant 5 : index
    %c0_36 = arith.constant 0 : index
    %c0_37 = arith.constant 0 : index
    %45 = vector.load %arg3[%c5, %c0_36, %c0_37] : memref<12x512x51xbf16, #tpu.memory_space<vmem>>, vector<1x512x51xbf16>
    %46 = vector.shape_cast %45 : vector<1x512x51xbf16> to vector<512x51xbf16>
    %cst_38 = arith.constant dense<0.000000e+00> : vector<2x51xf32>
    %47 = tpu.matmul %4, %46, %cst_38 {dimension_numbers = #tpu.dot_dimension_numbers<[1], [0], [0], [1], [0, 0, 1, 1], [], []>} : vector<2x512xbf16>, vector<512x51xbf16>, vector<2x51xf32> -> vector<2x51xf32>
    %c5_39 = arith.constant 5 : index
    %c0_40 = arith.constant 0 : index
    %c0_41 = arith.constant 0 : index
    %48 = vector.load %arg4[%c5_39, %c0_40, %c0_41] : memref<12x1x51xf32, #tpu.memory_space<vmem>>, vector<1x1x51xf32>
    %49 = vector.shape_cast %48 : vector<1x1x51xf32> to vector<1x51xf32>
    %50 = vector.broadcast %49 : vector<1x51xf32> to vector<2x51xf32>
    %51 = arith.addf %47, %50 : vector<2x51xf32>
    %c6 = arith.constant 6 : index
    %c0_42 = arith.constant 0 : index
    %c0_43 = arith.constant 0 : index
    %52 = vector.load %arg3[%c6, %c0_42, %c0_43] : memref<12x512x51xbf16, #tpu.memory_space<vmem>>, vector<1x512x51xbf16>
    %53 = vector.shape_cast %52 : vector<1x512x51xbf16> to vector<512x51xbf16>
    %cst_44 = arith.constant dense<0.000000e+00> : vector<2x51xf32>
    %54 = tpu.matmul %4, %53, %cst_44 {dimension_numbers = #tpu.dot_dimension_numbers<[1], [0], [0], [1], [0, 0, 1, 1], [], []>} : vector<2x512xbf16>, vector<512x51xbf16>, vector<2x51xf32> -> vector<2x51xf32>
    %c6_45 = arith.constant 6 : index
    %c0_46 = arith.constant 0 : index
    %c0_47 = arith.constant 0 : index
    %55 = vector.load %arg4[%c6_45, %c0_46, %c0_47] : memref<12x1x51xf32, #tpu.memory_space<vmem>>, vector<1x1x51xf32>
    %56 = vector.shape_cast %55 : vector<1x1x51xf32> to vector<1x51xf32>
    %57 = vector.broadcast %56 : vector<1x51xf32> to vector<2x51xf32>
    %58 = arith.addf %54, %57 : vector<2x51xf32>
    %c7 = arith.constant 7 : index
    %c0_48 = arith.constant 0 : index
    %c0_49 = arith.constant 0 : index
    %59 = vector.load %arg3[%c7, %c0_48, %c0_49] : memref<12x512x51xbf16, #tpu.memory_space<vmem>>, vector<1x512x51xbf16>
    %60 = vector.shape_cast %59 : vector<1x512x51xbf16> to vector<512x51xbf16>
    %cst_50 = arith.constant dense<0.000000e+00> : vector<2x51xf32>
    %61 = tpu.matmul %4, %60, %cst_50 {dimension_numbers = #tpu.dot_dimension_numbers<[1], [0], [0], [1], [0, 0, 1, 1], [], []>} : vector<2x512xbf16>, vector<512x51xbf16>, vector<2x51xf32> -> vector<2x51xf32>
    %c7_51 = arith.constant 7 : index
    %c0_52 = arith.constant 0 : index
    %c0_53 = arith.constant 0 : index
    %62 = vector.load %arg4[%c7_51, %c0_52, %c0_53] : memref<12x1x51xf32, #tpu.memory_space<vmem>>, vector<1x1x51xf32>
    %63 = vector.shape_cast %62 : vector<1x1x51xf32> to vector<1x51xf32>
    %64 = vector.broadcast %63 : vector<1x51xf32> to vector<2x51xf32>
    %65 = arith.addf %61, %64 : vector<2x51xf32>
    %c8 = arith.constant 8 : index
    %c0_54 = arith.constant 0 : index
    %c0_55 = arith.constant 0 : index
    %66 = vector.load %arg3[%c8, %c0_54, %c0_55] : memref<12x512x51xbf16, #tpu.memory_space<vmem>>, vector<1x512x51xbf16>
    %67 = vector.shape_cast %66 : vector<1x512x51xbf16> to vector<512x51xbf16>
    %cst_56 = arith.constant dense<0.000000e+00> : vector<2x51xf32>
    %68 = tpu.matmul %4, %67, %cst_56 {dimension_numbers = #tpu.dot_dimension_numbers<[1], [0], [0], [1], [0, 0, 1, 1], [], []>} : vector<2x512xbf16>, vector<512x51xbf16>, vector<2x51xf32> -> vector<2x51xf32>
    %c8_57 = arith.constant 8 : index
    %c0_58 = arith.constant 0 : index
    %c0_59 = arith.constant 0 : index
    %69 = vector.load %arg4[%c8_57, %c0_58, %c0_59] : memref<12x1x51xf32, #tpu.memory_space<vmem>>, vector<1x1x51xf32>
    %70 = vector.shape_cast %69 : vector<1x1x51xf32> to vector<1x51xf32>
    %71 = vector.broadcast %70 : vector<1x51xf32> to vector<2x51xf32>
    %72 = arith.addf %68, %71 : vector<2x51xf32>
    %c9 = arith.constant 9 : index
    %c0_60 = arith.constant 0 : index
    %c0_61 = arith.constant 0 : index
    %73 = vector.load %arg3[%c9, %c0_60, %c0_61] : memref<12x512x51xbf16, #tpu.memory_space<vmem>>, vector<1x512x51xbf16>
    %74 = vector.shape_cast %73 : vector<1x512x51xbf16> to vector<512x51xbf16>
    %cst_62 = arith.constant dense<0.000000e+00> : vector<2x51xf32>
    %75 = tpu.matmul %4, %74, %cst_62 {dimension_numbers = #tpu.dot_dimension_numbers<[1], [0], [0], [1], [0, 0, 1, 1], [], []>} : vector<2x512xbf16>, vector<512x51xbf16>, vector<2x51xf32> -> vector<2x51xf32>
    %c9_63 = arith.constant 9 : index
    %c0_64 = arith.constant 0 : index
    %c0_65 = arith.constant 0 : index
    %76 = vector.load %arg4[%c9_63, %c0_64, %c0_65] : memref<12x1x51xf32, #tpu.memory_space<vmem>>, vector<1x1x51xf32>
    %77 = vector.shape_cast %76 : vector<1x1x51xf32> to vector<1x51xf32>
    %78 = vector.broadcast %77 : vector<1x51xf32> to vector<2x51xf32>
    %79 = arith.addf %75, %78 : vector<2x51xf32>
    %c10 = arith.constant 10 : index
    %c0_66 = arith.constant 0 : index
    %c0_67 = arith.constant 0 : index
    %80 = vector.load %arg3[%c10, %c0_66, %c0_67] : memref<12x512x51xbf16, #tpu.memory_space<vmem>>, vector<1x512x51xbf16>
    %81 = vector.shape_cast %80 : vector<1x512x51xbf16> to vector<512x51xbf16>
    %cst_68 = arith.constant dense<0.000000e+00> : vector<2x51xf32>
    %82 = tpu.matmul %4, %81, %cst_68 {dimension_numbers = #tpu.dot_dimension_numbers<[1], [0], [0], [1], [0, 0, 1, 1], [], []>} : vector<2x512xbf16>, vector<512x51xbf16>, vector<2x51xf32> -> vector<2x51xf32>
    %c10_69 = arith.constant 10 : index
    %c0_70 = arith.constant 0 : index
    %c0_71 = arith.constant 0 : index
    %83 = vector.load %arg4[%c10_69, %c0_70, %c0_71] : memref<12x1x51xf32, #tpu.memory_space<vmem>>, vector<1x1x51xf32>
    %84 = vector.shape_cast %83 : vector<1x1x51xf32> to vector<1x51xf32>
    %85 = vector.broadcast %84 : vector<1x51xf32> to vector<2x51xf32>
    %86 = arith.addf %82, %85 : vector<2x51xf32>
    %c11 = arith.constant 11 : index
    %c0_72 = arith.constant 0 : index
    %c0_73 = arith.constant 0 : index
    %87 = vector.load %arg3[%c11, %c0_72, %c0_73] : memref<12x512x51xbf16, #tpu.memory_space<vmem>>, vector<1x512x51xbf16>
    %88 = vector.shape_cast %87 : vector<1x512x51xbf16> to vector<512x51xbf16>
    %cst_74 = arith.constant dense<0.000000e+00> : vector<2x51xf32>
    %89 = tpu.matmul %4, %88, %cst_74 {dimension_numbers = #tpu.dot_dimension_numbers<[1], [0], [0], [1], [0, 0, 1, 1], [], []>} : vector<2x512xbf16>, vector<512x51xbf16>, vector<2x51xf32> -> vector<2x51xf32>
    %c11_75 = arith.constant 11 : index
    %c0_76 = arith.constant 0 : index
    %c0_77 = arith.constant 0 : index
    %90 = vector.load %arg4[%c11_75, %c0_76, %c0_77] : memref<12x1x51xf32, #tpu.memory_space<vmem>>, vector<1x1x51xf32>
    %91 = vector.shape_cast %90 : vector<1x1x51xf32> to vector<1x51xf32>
    %92 = vector.broadcast %91 : vector<1x51xf32> to vector<2x51xf32>
    %93 = arith.addf %89, %92 : vector<2x51xf32>
    %94 = arith.addf %16, %23 : vector<2x51xf32>
    %95 = arith.addf %94, %30 : vector<2x51xf32>
    %96 = arith.addf %95, %37 : vector<2x51xf32>
    %97 = arith.addf %96, %44 : vector<2x51xf32>
    %98 = arith.addf %97, %51 : vector<2x51xf32>
    %99 = arith.addf %98, %58 : vector<2x51xf32>
    %100 = arith.addf %99, %65 : vector<2x51xf32>
    %101 = arith.addf %100, %72 : vector<2x51xf32>
    %102 = arith.addf %101, %79 : vector<2x51xf32>
    %103 = arith.addf %102, %86 : vector<2x51xf32>
    %104 = arith.addf %103, %93 : vector<2x51xf32>
    %cst_78 = arith.constant 0.0833333358 : f32
    %105 = vector.broadcast %cst_78 : f32 to vector<2x51xf32>
    %106 = arith.mulf %104, %105 : vector<2x51xf32>
    %107 = arith.subf %9, %106 : vector<2x51xf32>
    %108 = arith.addf %107, %16 : vector<2x51xf32>
    %cst_79 = arith.constant dense<0xFF800000> : vector<2xf32>
    %109 = vector.multi_reduction <maximumf>, %108, %cst_79 [1] : vector<2x51xf32> to vector<2xf32>
    %110 = vector.shape_cast %109 : vector<2xf32> to vector<2x1xf32>
    %111 = vector.broadcast %110 : vector<2x1xf32> to vector<2x51xf32>
    %112 = arith.subf %108, %111 : vector<2x51xf32>
    %113 = math.exp %112 : vector<2x51xf32>
    %cst_80 = arith.constant dense<0.000000e+00> : vector<2xf32>
    %114 = vector.multi_reduction <add>, %113, %cst_80 [1] : vector<2x51xf32> to vector<2xf32>
    %115 = vector.shape_cast %114 : vector<2xf32> to vector<2x1xf32>
    %116 = vector.broadcast %115 : vector<2x1xf32> to vector<2x51xf32>
    %117 = arith.divf %113, %116 : vector<2x51xf32>
    %c0_81 = arith.constant 0 : index
    %c0_82 = arith.constant 0 : index
    %c0_83 = arith.constant 0 : index
    %118 = vector.load %arg5[%c0_81, %c0_82, %c0_83] : memref<12x2x51xf32, #tpu.memory_space<vmem>>, vector<1x2x51xf32>
    %119 = vector.shape_cast %118 : vector<1x2x51xf32> to vector<2x51xf32>
    %120 = vector.shape_cast %117 : vector<2x51xf32> to vector<1x2x51xf32>
    tpu.vector_store %arg5[%c0_81, %c0_82, %c0_83], %120 {strides = array<i32>} : memref<12x2x51xf32, #tpu.memory_space<vmem>>, vector<1x2x51xf32>,
    %121 = arith.addf %107, %23 : vector<2x51xf32>
    %cst_84 = arith.constant dense<0xFF800000> : vector<2xf32>
    %122 = vector.multi_reduction <maximumf>, %121, %cst_84 [1] : vector<2x51xf32> to vector<2xf32>
    %123 = vector.shape_cast %122 : vector<2xf32> to vector<2x1xf32>
    %124 = vector.broadcast %123 : vector<2x1xf32> to vector<2x51xf32>
    %125 = arith.subf %121, %124 : vector<2x51xf32>
    %126 = math.exp %125 : vector<2x51xf32>
    %cst_85 = arith.constant dense<0.000000e+00> : vector<2xf32>
    %127 = vector.multi_reduction <add>, %126, %cst_85 [1] : vector<2x51xf32> to vector<2xf32>
    %128 = vector.shape_cast %127 : vector<2xf32> to vector<2x1xf32>
    %129 = vector.broadcast %128 : vector<2x1xf32> to vector<2x51xf32>
    %130 = arith.divf %126, %129 : vector<2x51xf32>
    %c1_86 = arith.constant 1 : index
    %c0_87 = arith.constant 0 : index
    %c0_88 = arith.constant 0 : index
    %131 = vector.load %arg5[%c1_86, %c0_87, %c0_88] : memref<12x2x51xf32, #tpu.memory_space<vmem>>, vector<1x2x51xf32>
    %132 = vector.shape_cast %131 : vector<1x2x51xf32> to vector<2x51xf32>
    %133 = vector.shape_cast %130 : vector<2x51xf32> to vector<1x2x51xf32>
    tpu.vector_store %arg5[%c1_86, %c0_87, %c0_88], %133 {strides = array<i32>} : memref<12x2x51xf32, #tpu.memory_space<vmem>>, vector<1x2x51xf32>,
    %134 = arith.addf %107, %30 : vector<2x51xf32>
    %cst_89 = arith.constant dense<0xFF800000> : vector<2xf32>
    %135 = vector.multi_reduction <maximumf>, %134, %cst_89 [1] : vector<2x51xf32> to vector<2xf32>
    %136 = vector.shape_cast %135 : vector<2xf32> to vector<2x1xf32>
    %137 = vector.broadcast %136 : vector<2x1xf32> to vector<2x51xf32>
    %138 = arith.subf %134, %137 : vector<2x51xf32>
    %139 = math.exp %138 : vector<2x51xf32>
    %cst_90 = arith.constant dense<0.000000e+00> : vector<2xf32>
    %140 = vector.multi_reduction <add>, %139, %cst_90 [1] : vector<2x51xf32> to vector<2xf32>
    %141 = vector.shape_cast %140 : vector<2xf32> to vector<2x1xf32>
    %142 = vector.broadcast %141 : vector<2x1xf32> to vector<2x51xf32>
    %143 = arith.divf %139, %142 : vector<2x51xf32>
    %c2_91 = arith.constant 2 : index
    %c0_92 = arith.constant 0 : index
    %c0_93 = arith.constant 0 : index
    %144 = vector.load %arg5[%c2_91, %c0_92, %c0_93] : memref<12x2x51xf32, #tpu.memory_space<vmem>>, vector<1x2x51xf32>
    %145 = vector.shape_cast %144 : vector<1x2x51xf32> to vector<2x51xf32>
    %146 = vector.shape_cast %143 : vector<2x51xf32> to vector<1x2x51xf32>
    tpu.vector_store %arg5[%c2_91, %c0_92, %c0_93], %146 {strides = array<i32>} : memref<12x2x51xf32, #tpu.memory_space<vmem>>, vector<1x2x51xf32>,
    %147 = arith.addf %107, %37 : vector<2x51xf32>
    %cst_94 = arith.constant dense<0xFF800000> : vector<2xf32>
    %148 = vector.multi_reduction <maximumf>, %147, %cst_94 [1] : vector<2x51xf32> to vector<2xf32>
    %149 = vector.shape_cast %148 : vector<2xf32> to vector<2x1xf32>
    %150 = vector.broadcast %149 : vector<2x1xf32> to vector<2x51xf32>
    %151 = arith.subf %147, %150 : vector<2x51xf32>
    %152 = math.exp %151 : vector<2x51xf32>
    %cst_95 = arith.constant dense<0.000000e+00> : vector<2xf32>
    %153 = vector.multi_reduction <add>, %152, %cst_95 [1] : vector<2x51xf32> to vector<2xf32>
    %154 = vector.shape_cast %153 : vector<2xf32> to vector<2x1xf32>
    %155 = vector.broadcast %154 : vector<2x1xf32> to vector<2x51xf32>
    %156 = arith.divf %152, %155 : vector<2x51xf32>
    %c3_96 = arith.constant 3 : index
    %c0_97 = arith.constant 0 : index
    %c0_98 = arith.constant 0 : index
    %157 = vector.load %arg5[%c3_96, %c0_97, %c0_98] : memref<12x2x51xf32, #tpu.memory_space<vmem>>, vector<1x2x51xf32>
    %158 = vector.shape_cast %157 : vector<1x2x51xf32> to vector<2x51xf32>
    %159 = vector.shape_cast %156 : vector<2x51xf32> to vector<1x2x51xf32>
    tpu.vector_store %arg5[%c3_96, %c0_97, %c0_98], %159 {strides = array<i32>} : memref<12x2x51xf32, #tpu.memory_space<vmem>>, vector<1x2x51xf32>,
    %160 = arith.addf %107, %44 : vector<2x51xf32>
    %cst_99 = arith.constant dense<0xFF800000> : vector<2xf32>
    %161 = vector.multi_reduction <maximumf>, %160, %cst_99 [1] : vector<2x51xf32> to vector<2xf32>
    %162 = vector.shape_cast %161 : vector<2xf32> to vector<2x1xf32>
    %163 = vector.broadcast %162 : vector<2x1xf32> to vector<2x51xf32>
    %164 = arith.subf %160, %163 : vector<2x51xf32>
    %165 = math.exp %164 : vector<2x51xf32>
    %cst_100 = arith.constant dense<0.000000e+00> : vector<2xf32>
    %166 = vector.multi_reduction <add>, %165, %cst_100 [1] : vector<2x51xf32> to vector<2xf32>
    %167 = vector.shape_cast %166 : vector<2xf32> to vector<2x1xf32>
    %168 = vector.broadcast %167 : vector<2x1xf32> to vector<2x51xf32>
    %169 = arith.divf %165, %168 : vector<2x51xf32>
    %c4_101 = arith.constant 4 : index
    %c0_102 = arith.constant 0 : index
    %c0_103 = arith.constant 0 : index
    %170 = vector.load %arg5[%c4_101, %c0_102, %c0_103] : memref<12x2x51xf32, #tpu.memory_space<vmem>>, vector<1x2x51xf32>
    %171 = vector.shape_cast %170 : vector<1x2x51xf32> to vector<2x51xf32>
    %172 = vector.shape_cast %169 : vector<2x51xf32> to vector<1x2x51xf32>
    tpu.vector_store %arg5[%c4_101, %c0_102, %c0_103], %172 {strides = array<i32>} : memref<12x2x51xf32, #tpu.memory_space<vmem>>, vector<1x2x51xf32>,
    %173 = arith.addf %107, %51 : vector<2x51xf32>
    %cst_104 = arith.constant dense<0xFF800000> : vector<2xf32>
    %174 = vector.multi_reduction <maximumf>, %173, %cst_104 [1] : vector<2x51xf32> to vector<2xf32>
    %175 = vector.shape_cast %174 : vector<2xf32> to vector<2x1xf32>
    %176 = vector.broadcast %175 : vector<2x1xf32> to vector<2x51xf32>
    %177 = arith.subf %173, %176 : vector<2x51xf32>
    %178 = math.exp %177 : vector<2x51xf32>
    %cst_105 = arith.constant dense<0.000000e+00> : vector<2xf32>
    %179 = vector.multi_reduction <add>, %178, %cst_105 [1] : vector<2x51xf32> to vector<2xf32>
    %180 = vector.shape_cast %179 : vector<2xf32> to vector<2x1xf32>
    %181 = vector.broadcast %180 : vector<2x1xf32> to vector<2x51xf32>
    %182 = arith.divf %178, %181 : vector<2x51xf32>
    %c5_106 = arith.constant 5 : index
    %c0_107 = arith.constant 0 : index
    %c0_108 = arith.constant 0 : index
    %183 = vector.load %arg5[%c5_106, %c0_107, %c0_108] : memref<12x2x51xf32, #tpu.memory_space<vmem>>, vector<1x2x51xf32>
    %184 = vector.shape_cast %183 : vector<1x2x51xf32> to vector<2x51xf32>
    %185 = vector.shape_cast %182 : vector<2x51xf32> to vector<1x2x51xf32>
    tpu.vector_store %arg5[%c5_106, %c0_107, %c0_108], %185 {strides = array<i32>} : memref<12x2x51xf32, #tpu.memory_space<vmem>>, vector<1x2x51xf32>,
    %186 = arith.addf %107, %58 : vector<2x51xf32>
    %cst_109 = arith.constant dense<0xFF800000> : vector<2xf32>
    %187 = vector.multi_reduction <maximumf>, %186, %cst_109 [1] : vector<2x51xf32> to vector<2xf32>
    %188 = vector.shape_cast %187 : vector<2xf32> to vector<2x1xf32>
    %189 = vector.broadcast %188 : vector<2x1xf32> to vector<2x51xf32>
    %190 = arith.subf %186, %189 : vector<2x51xf32>
    %191 = math.exp %190 : vector<2x51xf32>
    %cst_110 = arith.constant dense<0.000000e+00> : vector<2xf32>
    %192 = vector.multi_reduction <add>, %191, %cst_110 [1] : vector<2x51xf32> to vector<2xf32>
    %193 = vector.shape_cast %192 : vector<2xf32> to vector<2x1xf32>
    %194 = vector.broadcast %193 : vector<2x1xf32> to vector<2x51xf32>
    %195 = arith.divf %191, %194 : vector<2x51xf32>
    %c6_111 = arith.constant 6 : index
    %c0_112 = arith.constant 0 : index
    %c0_113 = arith.constant 0 : index
    %196 = vector.load %arg5[%c6_111, %c0_112, %c0_113] : memref<12x2x51xf32, #tpu.memory_space<vmem>>, vector<1x2x51xf32>
    %197 = vector.shape_cast %196 : vector<1x2x51xf32> to vector<2x51xf32>
    %198 = vector.shape_cast %195 : vector<2x51xf32> to vector<1x2x51xf32>
    tpu.vector_store %arg5[%c6_111, %c0_112, %c0_113], %198 {strides = array<i32>} : memref<12x2x51xf32, #tpu.memory_space<vmem>>, vector<1x2x51xf32>,
    %199 = arith.addf %107, %65 : vector<2x51xf32>
    %cst_114 = arith.constant dense<0xFF800000> : vector<2xf32>
    %200 = vector.multi_reduction <maximumf>, %199, %cst_114 [1] : vector<2x51xf32> to vector<2xf32>
    %201 = vector.shape_cast %200 : vector<2xf32> to vector<2x1xf32>
    %202 = vector.broadcast %201 : vector<2x1xf32> to vector<2x51xf32>
    %203 = arith.subf %199, %202 : vector<2x51xf32>
    %204 = math.exp %203 : vector<2x51xf32>
    %cst_115 = arith.constant dense<0.000000e+00> : vector<2xf32>
    %205 = vector.multi_reduction <add>, %204, %cst_115 [1] : vector<2x51xf32> to vector<2xf32>
    %206 = vector.shape_cast %205 : vector<2xf32> to vector<2x1xf32>
    %207 = vector.broadcast %206 : vector<2x1xf32> to vector<2x51xf32>
    %208 = arith.divf %204, %207 : vector<2x51xf32>
    %c7_116 = arith.constant 7 : index
    %c0_117 = arith.constant 0 : index
    %c0_118 = arith.constant 0 : index
    %209 = vector.load %arg5[%c7_116, %c0_117, %c0_118] : memref<12x2x51xf32, #tpu.memory_space<vmem>>, vector<1x2x51xf32>
    %210 = vector.shape_cast %209 : vector<1x2x51xf32> to vector<2x51xf32>
    %211 = vector.shape_cast %208 : vector<2x51xf32> to vector<1x2x51xf32>
    tpu.vector_store %arg5[%c7_116, %c0_117, %c0_118], %211 {strides = array<i32>} : memref<12x2x51xf32, #tpu.memory_space<vmem>>, vector<1x2x51xf32>,
    %212 = arith.addf %107, %72 : vector<2x51xf32>
    %cst_119 = arith.constant dense<0xFF800000> : vector<2xf32>
    %213 = vector.multi_reduction <maximumf>, %212, %cst_119 [1] : vector<2x51xf32> to vector<2xf32>
    %214 = vector.shape_cast %213 : vector<2xf32> to vector<2x1xf32>
    %215 = vector.broadcast %214 : vector<2x1xf32> to vector<2x51xf32>
    %216 = arith.subf %212, %215 : vector<2x51xf32>
    %217 = math.exp %216 : vector<2x51xf32>
    %cst_120 = arith.constant dense<0.000000e+00> : vector<2xf32>
    %218 = vector.multi_reduction <add>, %217, %cst_120 [1] : vector<2x51xf32> to vector<2xf32>
    %219 = vector.shape_cast %218 : vector<2xf32> to vector<2x1xf32>
    %220 = vector.broadcast %219 : vector<2x1xf32> to vector<2x51xf32>
    %221 = arith.divf %217, %220 : vector<2x51xf32>
    %c8_121 = arith.constant 8 : index
    %c0_122 = arith.constant 0 : index
    %c0_123 = arith.constant 0 : index
    %222 = vector.load %arg5[%c8_121, %c0_122, %c0_123] : memref<12x2x51xf32, #tpu.memory_space<vmem>>, vector<1x2x51xf32>
    %223 = vector.shape_cast %222 : vector<1x2x51xf32> to vector<2x51xf32>
    %224 = vector.shape_cast %221 : vector<2x51xf32> to vector<1x2x51xf32>
    tpu.vector_store %arg5[%c8_121, %c0_122, %c0_123], %224 {strides = array<i32>} : memref<12x2x51xf32, #tpu.memory_space<vmem>>, vector<1x2x51xf32>,
    %225 = arith.addf %107, %79 : vector<2x51xf32>
    %cst_124 = arith.constant dense<0xFF800000> : vector<2xf32>
    %226 = vector.multi_reduction <maximumf>, %225, %cst_124 [1] : vector<2x51xf32> to vector<2xf32>
    %227 = vector.shape_cast %226 : vector<2xf32> to vector<2x1xf32>
    %228 = vector.broadcast %227 : vector<2x1xf32> to vector<2x51xf32>
    %229 = arith.subf %225, %228 : vector<2x51xf32>
    %230 = math.exp %229 : vector<2x51xf32>
    %cst_125 = arith.constant dense<0.000000e+00> : vector<2xf32>
    %231 = vector.multi_reduction <add>, %230, %cst_125 [1] : vector<2x51xf32> to vector<2xf32>
    %232 = vector.shape_cast %231 : vector<2xf32> to vector<2x1xf32>
    %233 = vector.broadcast %232 : vector<2x1xf32> to vector<2x51xf32>
    %234 = arith.divf %230, %233 : vector<2x51xf32>
    %c9_126 = arith.constant 9 : index
    %c0_127 = arith.constant 0 : index
    %c0_128 = arith.constant 0 : index
    %235 = vector.load %arg5[%c9_126, %c0_127, %c0_128] : memref<12x2x51xf32, #tpu.memory_space<vmem>>, vector<1x2x51xf32>
    %236 = vector.shape_cast %235 : vector<1x2x51xf32> to vector<2x51xf32>
    %237 = vector.shape_cast %234 : vector<2x51xf32> to vector<1x2x51xf32>
    tpu.vector_store %arg5[%c9_126, %c0_127, %c0_128], %237 {strides = array<i32>} : memref<12x2x51xf32, #tpu.memory_space<vmem>>, vector<1x2x51xf32>,
    %238 = arith.addf %107, %86 : vector<2x51xf32>
    %cst_129 = arith.constant dense<0xFF800000> : vector<2xf32>
    %239 = vector.multi_reduction <maximumf>, %238, %cst_129 [1] : vector<2x51xf32> to vector<2xf32>
    %240 = vector.shape_cast %239 : vector<2xf32> to vector<2x1xf32>
    %241 = vector.broadcast %240 : vector<2x1xf32> to vector<2x51xf32>
    %242 = arith.subf %238, %241 : vector<2x51xf32>
    %243 = math.exp %242 : vector<2x51xf32>
    %cst_130 = arith.constant dense<0.000000e+00> : vector<2xf32>
    %244 = vector.multi_reduction <add>, %243, %cst_130 [1] : vector<2x51xf32> to vector<2xf32>
    %245 = vector.shape_cast %244 : vector<2xf32> to vector<2x1xf32>
    %246 = vector.broadcast %245 : vector<2x1xf32> to vector<2x51xf32>
    %247 = arith.divf %243, %246 : vector<2x51xf32>
    %c10_131 = arith.constant 10 : index
    %c0_132 = arith.constant 0 : index
    %c0_133 = arith.constant 0 : index
    %248 = vector.load %arg5[%c10_131, %c0_132, %c0_133] : memref<12x2x51xf32, #tpu.memory_space<vmem>>, vector<1x2x51xf32>
    %249 = vector.shape_cast %248 : vector<1x2x51xf32> to vector<2x51xf32>
    %250 = vector.shape_cast %247 : vector<2x51xf32> to vector<1x2x51xf32>
    tpu.vector_store %arg5[%c10_131, %c0_132, %c0_133], %250 {strides = array<i32>} : memref<12x2x51xf32, #tpu.memory_space<vmem>>, vector<1x2x51xf32>,
    %251 = arith.addf %107, %93 : vector<2x51xf32>
    %cst_134 = arith.constant dense<0xFF800000> : vector<2xf32>
    %252 = vector.multi_reduction <maximumf>, %251, %cst_134 [1] : vector<2x51xf32> to vector<2xf32>
    %253 = vector.shape_cast %252 : vector<2xf32> to vector<2x1xf32>
    %254 = vector.broadcast %253 : vector<2x1xf32> to vector<2x51xf32>
    %255 = arith.subf %251, %254 : vector<2x51xf32>
    %256 = math.exp %255 : vector<2x51xf32>
    %cst_135 = arith.constant dense<0.000000e+00> : vector<2xf32>
    %257 = vector.multi_reduction <add>, %256, %cst_135 [1] : vector<2x51xf32> to vector<2xf32>
    %258 = vector.shape_cast %257 : vector<2xf32> to vector<2x1xf32>
    %259 = vector.broadcast %258 : vector<2x1xf32> to vector<2x51xf32>
    %260 = arith.divf %256, %259 : vector<2x51xf32>
    %c11_136 = arith.constant 11 : index
    %c0_137 = arith.constant 0 : index
    %c0_138 = arith.constant 0 : index
    %261 = vector.load %arg5[%c11_136, %c0_137, %c0_138] : memref<12x2x51xf32, #tpu.memory_space<vmem>>, vector<1x2x51xf32>
    %262 = vector.shape_cast %261 : vector<1x2x51xf32> to vector<2x51xf32>
    %263 = vector.shape_cast %260 : vector<2x51xf32> to vector<1x2x51xf32>
    tpu.vector_store %arg5[%c11_136, %c0_137, %c0_138], %263 {strides = array<i32>} : memref<12x2x51xf32, #tpu.memory_space<vmem>>, vector<1x2x51xf32>,
    return
  }
}

</mosaic_0001>

<llo_original>
// kernel: forward.5
$region0: #{forward.5}
  #allocation0 [shape = 'u32[]', space=smem, size = 0x4, offset = 0x4, fixed_abs, tag = 'smem constant byte address 0x4 - core index']
  #allocation1 [shape = 'u32[144,128]{1,0:T(1,128)}', space=vmem, size = 0x12000, scoped, tag = 'internal scratch']
  %s0 = inlined_call_operand.vmem [shape: f32[800,256], index: 0, kind: input, shape index: {}]
  %s1 = inlined_call_operand.vmem [shape: bf16[256,64], index: 1, kind: input, shape index: {}]
  %s2 = inlined_call_operand.vmem [shape: f32[1,64], index: 2, kind: input, shape index: {}]
  %s3 = inlined_call_operand.vmem [shape: f32[800,64], index: 3, kind: output, shape index: {}]
  %s4 = sld [smem:[#allocation0]]
  $region45: #{forward.5} parent=0
    _
  %s6 = ssub.s32 1, %s4
  %s7 = scalar_select 0, %s6, %s4
  loop: start=0, step=1, limit=4
  $region2: #{forward.5} parent=0 // loop_pre_header
    _
  $region3: #{forward.5} parent=0 // loop_header
    %s9 = sphi 0, %s13
    %p10 = scmp.ge.s32.totalorder %s9, 4
    %s19 = sphi 0, %s21
    %s22 = sphi 0, %s19
    %s23 = sphi 0, %s22
    %s39 = sphi 0, %s23
    %s43 = sphi 0, %s43
    %s45 = sphi 0, %s43
    %s46 = sphi 0, %s45
    %s60 = sphi 0, %s46
    %s64 = sphi 0, %s64
    %s66 = sphi 0, %s64
    %s67 = sphi 0, %s66
    %s81 = sphi 0, %s67
    %s87 = sphi 0, %s89
    %s90 = sphi 0, %s87
    %s91 = sphi 0, %s90
    %s107 = sphi 0, %s91
  $region4: #{forward.5} parent=0 // loop_header_branch
    %12 = sbr.rel (%p10) target = $region8
  $region5: #{forward.5} parent=0 // loop_body
    %s14 = ssub.s32 %s9, 1
    %s15 = ssub.s32 %s9, 2
    %s16 = sadd.s32 %s9, 1
    %s17 = ssub.s32 %s9, %s16
    %p18 = scmp.eq.s32.totalorder %s17, 0
    %s20 = sadd.s32 %s19, 1
    %s21 = scalar_select %p18, %s19, %s20
    %p24 = pneg %p18
    %p25 = scmp.eq.s32.totalorder %s9, 1
    %p26 = por %p24, %p25
    %p27 = scmp.ne.s32.totalorder %s19, %s22
    %p28 = scmp.eq.s32.totalorder %s9, 0
    %p29 = por %p27, %p28
    %p30 = scmp.ne.s32.totalorder %s19, %s22
    %p31 = scmp.eq.s32.totalorder %s14, 1
    %p32 = por %p30, %p31
    %p33 = scmp.ne.s32.totalorder %s22, %s23
    %p34 = scmp.eq.s32.totalorder %s14, 0
    %p35 = por %p33, %p34
    %p36 = scmp.ne.s32.totalorder %s22, %s23
    %p37 = scmp.eq.s32.totalorder %s15, 1
    %p38 = por %p36, %p37
    %p40 = scmp.ne.s32.totalorder %s23, %s39
    %p41 = scmp.eq.s32.totalorder %s15, 0
    %p42 = por %p40, %p41
    %s44 = sadd.s32 %s43, 1
    %p47 = scmp.eq.s32.totalorder %s9, 1
    %p48 = scmp.ne.s32.totalorder %s43, %s45
    %p49 = scmp.eq.s32.totalorder %s9, 0
    %p50 = por %p48, %p49
    %p51 = scmp.ne.s32.totalorder %s43, %s45
    %p52 = scmp.eq.s32.totalorder %s14, 1
    %p53 = por %p51, %p52
    %p54 = scmp.ne.s32.totalorder %s45, %s46
    %p55 = scmp.eq.s32.totalorder %s14, 0
    %p56 = por %p54, %p55
    %p57 = scmp.ne.s32.totalorder %s45, %s46
    %p58 = scmp.eq.s32.totalorder %s15, 1
    %p59 = por %p57, %p58
    %p61 = scmp.ne.s32.totalorder %s46, %s60
    %p62 = scmp.eq.s32.totalorder %s15, 0
    %p63 = por %p61, %p62
    %s65 = sadd.s32 %s64, 1
    %p68 = scmp.eq.s32.totalorder %s9, 1
    %p69 = scmp.ne.s32.totalorder %s64, %s66
    %p70 = scmp.eq.s32.totalorder %s9, 0
    %p71 = por %p69, %p70
    %p72 = scmp.ne.s32.totalorder %s64, %s66
    %p73 = scmp.eq.s32.totalorder %s14, 1
    %p74 = por %p72, %p73
    %p75 = scmp.ne.s32.totalorder %s66, %s67
    %p76 = scmp.eq.s32.totalorder %s14, 0
    %p77 = por %p75, %p76
    %p78 = scmp.ne.s32.totalorder %s66, %s67
    %p79 = scmp.eq.s32.totalorder %s15, 1
    %p80 = por %p78, %p79
    %p82 = scmp.ne.s32.totalorder %s67, %s81
    %p83 = scmp.eq.s32.totalorder %s15, 0
    %p84 = por %p82, %p83
    %s85 = ssub.s32 %s9, %s16
    %p86 = scmp.eq.s32.totalorder %s85, 0
    %s88 = sadd.s32 %s87, 1
    %s89 = scalar_select %p86, %s87, %s88
    %p92 = pneg %p86
    %p93 = scmp.eq.s32.totalorder %s9, 1
    %p94 = por %p92, %p93
    %p95 = scmp.ne.s32.totalorder %s87, %s90
    %p96 = scmp.eq.s32.totalorder %s9, 0
    %p97 = por %p95, %p96
    %p98 = scmp.ne.s32.totalorder %s87, %s90
    %p99 = scmp.eq.s32.totalorder %s14, 1
    %p100 = por %p98, %p99
    %p101 = scmp.ne.s32.totalorder %s90, %s91
    %p102 = scmp.eq.s32.totalorder %s14, 0
    %p103 = por %p101, %p102
    %p104 = scmp.ne.s32.totalorder %s90, %s91
    %p105 = scmp.eq.s32.totalorder %s15, 1
    %p106 = por %p104, %p105
    %p108 = scmp.ne.s32.totalorder %s91, %s107
    %p109 = scmp.eq.s32.totalorder %s15, 0
    %p110 = por %p108, %p109
    %p111 = scmp.le.s32.totalorder 1, %s9
    %p112 = scmp.lt.s32.totalorder %s9, 3
    %p113 = pnand %p111, %p112
    %p114 = pneg %p113
    // Predicated region
    $region9: #{forward.5} parent=5 // pred_check
      _
    $region10: #{forward.5} parent=5 // pred_check_branch
      %116 = sbr.rel (%p113) target = $region12
    $region11: #{forward.5} parent=5 // pred_region
      %s117 = ssub.s32 %s9, 1
      // Predicated region
      $region13: #{forward.5} parent=11 // pred_check
        %p118 = pneg %p56
      $region14: #{forward.5} parent=11 // pred_check_branch
        %120 = sbr.rel (%p118) target = $region16
      $region15: #{forward.5} parent=11 // pred_region
        _
      $region16: #{forward.5} parent=11 // pred_fallthru
        _
      // Predicated region
      $region17: #{forward.5} parent=11 // pred_check
        %p121 = pneg %p77
      $region18: #{forward.5} parent=11 // pred_check_branch
        %123 = sbr.rel (%p121) target = $region20
      $region19: #{forward.5} parent=11 // pred_region
        _
      $region20: #{forward.5} parent=11 // pred_fallthru
        _
    $region12: #{forward.5} parent=5 // pred_fallthru
      _
    %p124 = scmp.lt.s32.totalorder %s9, 2
    // Predicated region
    $region21: #{forward.5} parent=5 // pred_check
      %p125 = pneg %p124
    $region22: #{forward.5} parent=5 // pred_check_branch
      %127 = sbr.rel (%p125) target = $region24
    $region23: #{forward.5} parent=5 // pred_region
      // Predicated region
      $region25: #{forward.5} parent=23 // pred_check
        %p128 = pneg %p29
      $region26: #{forward.5} parent=23 // pred_check_branch
        %130 = sbr.rel (%p128) target = $region28
      $region27: #{forward.5} parent=23 // pred_region
        %s131 = smul.u32 50, %s9
        %p132 = scmp.lt.s32.totalorder %s131, 99
        %s133 = scalar_select %p132, %s131, 99
        %s134 = smul.addr %s133, 2
        %s135 = smul.addr %s134, 8
        %s136 = scalar_lea.vmem %s0, %s135
        %s137 = smul.u32 50, %s9
      $region28: #{forward.5} parent=23 // pred_fallthru
        _
    $region24: #{forward.5} parent=5 // pred_fallthru
      _
    %p138 = scmp.le.s32.totalorder 1, %s9
    %p139 = scmp.lt.s32.totalorder %s9, 3
    %p140 = pnand %p138, %p139
    %p141 = pneg %p140
    // Predicated region
    $region29: #{forward.5} parent=5 // pred_check
      _
    $region30: #{forward.5} parent=5 // pred_check_branch
      %143 = sbr.rel (%p140) target = $region32
    $region31: #{forward.5} parent=5 // pred_region
      %s144 = ssub.s32 %s9, 1
      %s145 = smul.u32 50, %s14
      %p146 = scmp.lt.s32.totalorder %s145, 99
      %s147 = scalar_select %p146, %s145, 99
      %s148 = smul.addr %s147, 2
      %s149 = smul.addr %s148, 8
      %s150 = scalar_lea.vmem %s0, %s149
      %p151 = pneg %p35
      %p152 = pneg %p32
      %p153 = pneg %p56
      %p154 = pneg %p53
      %p155 = pneg %p77
      %p156 = pneg %p74
      %p157 = pneg %p103
      %p158 = pneg %p100
      %s159 = smul.u32 50, %s14
      %p160 = scmp.lt.s32.totalorder %s159, 99
      %s161 = scalar_select %p160, %s159, 99
      %s162 = smul.addr %s161, 8
      %s163 = scalar_lea.vmem %s3, %s162
      %s164 = smul.u32 50, %s14
      %p165 = scmp.lt.s32.totalorder %s164, 99
      %s166 = scalar_select %p165, %s164, 99
      %s167 = smul.addr %s166, 2
      %s168 = smul.addr %s167, 8
      %s169 = scalar_lea.vmem %s0, %s168
      %s170 = smul.u32 50, %s14
      %s171 = smul.u32 50, %s14
      %p172 = scmp.lt.s32.totalorder %s171, 99
      %s173 = scalar_select %p172, %s171, 99
      %s174 = smul.addr %s173, 8
      %s175 = scalar_lea.vmem %s3, %s174
      %s176 = smul.u32 50, %s14
      %v178 = vld [vmem:[%s169] sm:$0xff]
      %v179 = vld [vmem:[%s169 + $0x8] sm:$0xff]
      %v180 = vld [vmem:[%s169 + $0x10] sm:$0xff]
      %v181 = vld [vmem:[%s169 + $0x18] sm:$0xff]
      %v182 = vld [vmem:[%s169 + $0x20] sm:$0xff]
      %v183 = vld [vmem:[%s169 + $0x28] sm:$0xff]
      %v184 = vld [vmem:[%s169 + $0x30] sm:$0xff]
      %v185 = vld [vmem:[%s169 + $0x38] sm:$0xff]
      %v186 = vld [vmem:[%s169 + $0x40] sm:$0xff]
      %v187 = vld [vmem:[%s169 + $0x48] sm:$0xff]
      %v188 = vld [vmem:[%s169 + $0x50] sm:$0xff]
      %v189 = vld [vmem:[%s169 + $0x58] sm:$0xff]
      %v190 = vld [vmem:[%s169 + $0x60] sm:$0xff]
      %v191 = vld [vmem:[%s169 + $0x68] sm:$0xff]
      %v192 = vld [vmem:[%s169 + $0x70] sm:$0xff]
      %v193 = vld [vmem:[%s169 + $0x78] sm:$0xff]
      %v194 = vld [vmem:[%s169 + $0x80] sm:$0xff]
      %v195 = vld [vmem:[%s169 + $0x88] sm:$0xff]
      %v196 = vld [vmem:[%s169 + $0x90] sm:$0xff]
      %v197 = vld [vmem:[%s169 + $0x98] sm:$0xff]
      %v198 = vld [vmem:[%s169 + $0xa0] sm:$0xff]
      %v199 = vld [vmem:[%s169 + $0xa8] sm:$0xff]
      %v200 = vld [vmem:[%s169 + $0xb0] sm:$0xff]
      %v201 = vld [vmem:[%s169 + $0xb8] sm:$0xff]
      %v202 = vld [vmem:[%s169 + $0xc0] sm:$0xff]
      %v203 = vld [vmem:[%s169 + $0xc8] sm:$0xff]
      %v204 = vld [vmem:[%s169 + $0xd0] sm:$0xff]
      %v205 = vld [vmem:[%s169 + $0xd8] sm:$0xff]
      %v206 = vld [vmem:[%s169 + $0xe0] sm:$0xff]
      %v207 = vld [vmem:[%s169 + $0xe8] sm:$0xff]
      %v208 = vld [vmem:[%s169 + $0xf0] sm:$0xff]
      %v209 = vld [vmem:[%s169 + $0xf8] sm:$0xff]
      %v210 = vld [vmem:[%s169 + $0x100] sm:$0xff]
      %v211 = vld [vmem:[%s169 + $0x108] sm:$0xff]
      %v212 = vld [vmem:[%s169 + $0x110] sm:$0xff]
      %v213 = vld [vmem:[%s169 + $0x118] sm:$0xff]
      %v214 = vld [vmem:[%s169 + $0x120] sm:$0xff]
      %v215 = vld [vmem:[%s169 + $0x128] sm:$0xff]
      %v216 = vld [vmem:[%s169 + $0x130] sm:$0xff]
      %v217 = vld [vmem:[%s169 + $0x138] sm:$0xff]
      %v218 = vld [vmem:[%s169 + $0x140] sm:$0xff]
      %v219 = vld [vmem:[%s169 + $0x148] sm:$0xff]
      %v220 = vld [vmem:[%s169 + $0x150] sm:$0xff]
      %v221 = vld [vmem:[%s169 + $0x158] sm:$0xff]
      %v222 = vld [vmem:[%s169 + $0x160] sm:$0xff]
      %v223 = vld [vmem:[%s169 + $0x168] sm:$0xff]
      %v224 = vld [vmem:[%s169 + $0x170] sm:$0xff]
      %v225 = vld [vmem:[%s169 + $0x178] sm:$0xff]
      %v226 = vld [vmem:[%s169 + $0x180] sm:$0xff]
      %v227 = vld [vmem:[%s169 + $0x188] sm:$0xff]
      %v228 = vld [vmem:[%s169 + $0x190] sm:$0xff]
      %v229 = vld [vmem:[%s169 + $0x198] sm:$0xff]
      %v230 = vld [vmem:[%s169 + $0x1a0] sm:$0xff]
      %v231 = vld [vmem:[%s169 + $0x1a8] sm:$0xff]
      %v232 = vld [vmem:[%s169 + $0x1b0] sm:$0xff]
      %v233 = vld [vmem:[%s169 + $0x1b8] sm:$0xff]
      %v234 = vld [vmem:[%s169 + $0x1c0] sm:$0xff]
      %v235 = vld [vmem:[%s169 + $0x1c8] sm:$0xff]
      %v236 = vld [vmem:[%s169 + $0x1d0] sm:$0xff]
      %v237 = vld [vmem:[%s169 + $0x1d8] sm:$0xff]
      %v238 = vld [vmem:[%s169 + $0x1e0] sm:$0xff]
      %v239 = vld [vmem:[%s169 + $0x1e8] sm:$0xff]
      %v240 = vld [vmem:[%s169 + $0x1f0] sm:$0xff]
      %v241 = vld [vmem:[%s169 + $0x1f8] sm:$0xff]
      %v242 = vld [vmem:[%s169 + $0x200] sm:$0xff]
      %v243 = vld [vmem:[%s169 + $0x208] sm:$0xff]
      %v244 = vld [vmem:[%s169 + $0x210] sm:$0xff]
      %v245 = vld [vmem:[%s169 + $0x218] sm:$0xff]
      %v246 = vld [vmem:[%s169 + $0x220] sm:$0xff]
      %v247 = vld [vmem:[%s169 + $0x228] sm:$0xff]
      %v248 = vld [vmem:[%s169 + $0x230] sm:$0xff]
      %v249 = vld [vmem:[%s169 + $0x238] sm:$0xff]
      %v250 = vld [vmem:[%s169 + $0x240] sm:$0xff]
      %v251 = vld [vmem:[%s169 + $0x248] sm:$0xff]
      %v252 = vld [vmem:[%s169 + $0x250] sm:$0xff]
      %v253 = vld [vmem:[%s169 + $0x258] sm:$0xff]
      %v254 = vld [vmem:[%s169 + $0x260] sm:$0xff]
      %v255 = vld [vmem:[%s169 + $0x268] sm:$0xff]
      %v256 = vld [vmem:[%s169 + $0x270] sm:$0xff]
      %v257 = vld [vmem:[%s169 + $0x278] sm:$0xff]
      %v258 = vld [vmem:[%s169 + $0x280] sm:$0xff]
      %v259 = vld [vmem:[%s169 + $0x288] sm:$0xff]
      %v260 = vld [vmem:[%s169 + $0x290] sm:$0xff]
      %v261 = vld [vmem:[%s169 + $0x298] sm:$0xff]
      %v262 = vld [vmem:[%s169 + $0x2a0] sm:$0xff]
      %v263 = vld [vmem:[%s169 + $0x2a8] sm:$0xff]
      %v264 = vld [vmem:[%s169 + $0x2b0] sm:$0xff]
      %v265 = vld [vmem:[%s169 + $0x2b8] sm:$0xff]
      %v266 = vld [vmem:[%s169 + $0x2c0] sm:$0xff]
      %v267 = vld [vmem:[%s169 + $0x2c8] sm:$0xff]
      %v268 = vld [vmem:[%s169 + $0x2d0] sm:$0xff]
      %v269 = vld [vmem:[%s169 + $0x2d8] sm:$0xff]
      %v270 = vld [vmem:[%s169 + $0x2e0] sm:$0xff]
      %v271 = vld [vmem:[%s169 + $0x2e8] sm:$0xff]
      %v272 = vld [vmem:[%s169 + $0x2f0] sm:$0xff]
      %v273 = vld [vmem:[%s169 + $0x2f8] sm:$0xff]
      %v274 = vld [vmem:[%s169 + $0x300] sm:$0xff]
      %v275 = vld [vmem:[%s169 + $0x308] sm:$0xff]
      %v276 = vld [vmem:[%s169 + $0x310] sm:$0xff]
      %v277 = vld [vmem:[%s169 + $0x318] sm:$0xff]
      %v278 = vpack.c.bf16 %v180, %v178
      %v279 = vpack.c.bf16 %v181, %v179
      %v280 = vpack.c.bf16 %v184, %v182
      %v281 = vpack.c.bf16 %v185, %v183
      %v282 = vpack.c.bf16 %v188, %v186
      %v283 = vpack.c.bf16 %v189, %v187
      %v284 = vpack.c.bf16 %v192, %v190
      %v285 = vpack.c.bf16 %v193, %v191
      %v286 = vpack.c.bf16 %v196, %v194
      %v287 = vpack.c.bf16 %v197, %v195
      %v288 = vpack.c.bf16 %v200, %v198
      %v289 = vpack.c.bf16 %v201, %v199
      %v290 = vpack.c.bf16 %v204, %v202
      %v291 = vpack.c.bf16 %v205, %v203
      %v292 = vpack.c.bf16 %v208, %v206
      %v293 = vpack.c.bf16 %v209, %v207
      %v294 = vpack.c.bf16 %v212, %v210
      %v295 = vpack.c.bf16 %v213, %v211
      %v296 = vpack.c.bf16 %v216, %v214
      %v297 = vpack.c.bf16 %v217, %v215
      %v298 = vpack.c.bf16 %v220, %v218
      %v299 = vpack.c.bf16 %v221, %v219
      %v300 = vpack.c.bf16 %v224, %v222
      %v301 = vpack.c.bf16 %v225, %v223
      %v302 = vpack.c.bf16 %v228, %v226
      %v303 = vpack.c.bf16 %v229, %v227
      %v304 = vpack.c.bf16 %v232, %v230
      %v305 = vpack.c.bf16 %v233, %v231
      %v306 = vpack.c.bf16 %v236, %v234
      %v307 = vpack.c.bf16 %v237, %v235
      %v308 = vpack.c.bf16 %v240, %v238
      %v309 = vpack.c.bf16 %v241, %v239
      %v310 = vpack.c.bf16 %v244, %v242
      %v311 = vpack.c.bf16 %v245, %v243
      %v312 = vpack.c.bf16 %v248, %v246
      %v313 = vpack.c.bf16 %v249, %v247
      %v314 = vpack.c.bf16 %v252, %v250
      %v315 = vpack.c.bf16 %v253, %v251
      %v316 = vpack.c.bf16 %v256, %v254
      %v317 = vpack.c.bf16 %v257, %v255
      %v318 = vpack.c.bf16 %v260, %v258
      %v319 = vpack.c.bf16 %v261, %v259
      %v320 = vpack.c.bf16 %v264, %v262
      %v321 = vpack.c.bf16 %v265, %v263
      %v322 = vpack.c.bf16 %v268, %v266
      %v323 = vpack.c.bf16 %v269, %v267
      %v324 = vpack.c.bf16 %v272, %v270
      %v325 = vpack.c.bf16 %v273, %v271
      %v326 = vpack.c.bf16 %v276, %v274
      %v327 = vpack.c.bf16 %v277, %v275
      %v328 = vld [vmem:[%s1] sm:$0xf]
      %v329 = vld [vmem:[%s1 + $0x4] sm:$0xf]
      %v330 = vld [vmem:[%s1 + $0x8] sm:$0xf]
      %v331 = vld [vmem:[%s1 + $0xc] sm:$0xf]
      %v332 = vld [vmem:[%s1 + $0x10] sm:$0xf]
      %v333 = vld [vmem:[%s1 + $0x14] sm:$0xf]
      %v334 = vld [vmem:[%s1 + $0x18] sm:$0xf]
      %v335 = vld [vmem:[%s1 + $0x1c] sm:$0xf]
      %v336 = vld [vmem:[%s1 + $0x20] sm:$0xf]
      %v337 = vld [vmem:[%s1 + $0x24] sm:$0xf]
      %v338 = vld [vmem:[%s1 + $0x28] sm:$0xf]
      %v339 = vld [vmem:[%s1 + $0x2c] sm:$0xf]
      %v340 = vld [vmem:[%s1 + $0x30] sm:$0xf]
      %v341 = vld [vmem:[%s1 + $0x34] sm:$0xf]
      %v342 = vld [vmem:[%s1 + $0x38] sm:$0xf]
      %v343 = vld [vmem:[%s1 + $0x3c] sm:$0xf]
      %v344 = vld [vmem:[%s1 + $0x40] sm:$0xf]
      %v345 = vld [vmem:[%s1 + $0x44] sm:$0xf]
      %v346 = vld [vmem:[%s1 + $0x48] sm:$0xf]
      %v347 = vld [vmem:[%s1 + $0x4c] sm:$0xf]
      %v348 = vld [vmem:[%s1 + $0x50] sm:$0xf]
      %v349 = vld [vmem:[%s1 + $0x54] sm:$0xf]
      %v350 = vld [vmem:[%s1 + $0x58] sm:$0xf]
      %v351 = vld [vmem:[%s1 + $0x5c] sm:$0xf]
      %v352 = vld [vmem:[%s1 + $0x60] sm:$0xf]
      %v353 = vld [vmem:[%s1 + $0x64] sm:$0xf]
      %v354 = vld [vmem:[%s1 + $0x68] sm:$0xf]
      %v355 = vld [vmem:[%s1 + $0x6c] sm:$0xf]
      %v356 = vld [vmem:[%s1 + $0x70] sm:$0xf]
      %v357 = vld [vmem:[%s1 + $0x74] sm:$0xf]
      %v358 = vld [vmem:[%s1 + $0x78] sm:$0xf]
      %v359 = vld [vmem:[%s1 + $0x7c] sm:$0xf]
      %v360 = vld [vmem:[%s2] sm:$0x1]
      %v362 = vlaneseq
      %v363 = vshrl.u32 %v362, 7
      %v364 = vsub.s32 0, %v363
      %v365 = vrot.slane %v360, %v364
      %v399 = vunpack.c.l.b16 %v328
      %v400 = vunpack.c.l.b16 %v329
      %v401 = vunpack.c.l.b16 %v330
      %v402 = vunpack.c.l.b16 %v331
      %v403 = vunpack.c.l.b16 %v332
      %v404 = vunpack.c.l.b16 %v333
      %v405 = vunpack.c.l.b16 %v334
      %v406 = vunpack.c.l.b16 %v335
      %v407 = vunpack.c.l.b16 %v336
      %v408 = vunpack.c.l.b16 %v337
      %v409 = vunpack.c.l.b16 %v338
      %v410 = vunpack.c.l.b16 %v339
      %v411 = vunpack.c.l.b16 %v340
      %v412 = vunpack.c.l.b16 %v341
      %v413 = vunpack.c.l.b16 %v342
      %v414 = vunpack.c.l.b16 %v343
      %v415 = vunpack.c.l.b16 %v344
      %v416 = vunpack.c.l.b16 %v345
      %v417 = vunpack.c.l.b16 %v346
      %v418 = vunpack.c.l.b16 %v347
      %v419 = vunpack.c.l.b16 %v348
      %v420 = vunpack.c.l.b16 %v349
      %v421 = vunpack.c.l.b16 %v350
      %v422 = vunpack.c.l.b16 %v351
      %v423 = vunpack.c.l.b16 %v352
      %v424 = vunpack.c.l.b16 %v353
      %v425 = vunpack.c.l.b16 %v354
      %v426 = vunpack.c.l.b16 %v355
      %v427 = vunpack.c.l.b16 %v356
      %v428 = vunpack.c.l.b16 %v357
      %v429 = vunpack.c.l.b16 %v358
      %v430 = vunpack.c.l.b16 %v359
      %v431 = vpack.c.b16 %v400, %v399
      %v432 = vpack.c.b16 %v402, %v401
      %v433 = vpack.c.b16 %v404, %v403
      %v434 = vpack.c.b16 %v406, %v405
      %v435 = vpack.c.b16 %v408, %v407
      %v436 = vpack.c.b16 %v410, %v409
      %v437 = vpack.c.b16 %v412, %v411
      %v438 = vpack.c.b16 %v414, %v413
      %v439 = vpack.c.b16 %v416, %v415
      %v440 = vpack.c.b16 %v418, %v417
      %v441 = vpack.c.b16 %v420, %v419
      %v442 = vpack.c.b16 %v422, %v421
      %v443 = vpack.c.b16 %v424, %v423
      %v444 = vpack.c.b16 %v426, %v425
      %v445 = vpack.c.b16 %v428, %v427
      %v446 = vpack.c.b16 %v430, %v429
      %463 = vmatprep.subr.bf16.mxu0 0
      %464 = vmatpush1.bf16.msra.mxu0 %v431
      %465 = vmatprep.subr.bf16.mxu0 0
      %466 = vmatpush1.bf16.msra.mxu0 %v432
      %467 = vmatprep.subr.bf16.mxu0 0
      %468 = vmatpush1.bf16.msra.mxu0 %v433
      %469 = vmatprep.subr.bf16.mxu0 0
      %470 = vmatpush1.bf16.msra.mxu0 %v434
      %471 = vmatprep.subr.bf16.mxu0 0
      %472 = vmatpush1.bf16.msra.mxu0 %v435
      %473 = vmatprep.subr.bf16.mxu0 0
      %474 = vmatpush1.bf16.msra.mxu0 %v436
      %475 = vmatprep.subr.bf16.mxu0 0
      %476 = vmatpush1.bf16.msra.mxu0 %v437
      %477 = vmatprep.subr.bf16.mxu0 0
      %478 = vmatpush1.bf16.msra.mxu0 %v438
      %479 = vmatprep.subr.bf16.mxu0 0
      %480 = vmatpush1.bf16.msra.mxu0 %v439
      %481 = vmatprep.subr.bf16.mxu0 0
      %482 = vmatpush1.bf16.msra.mxu0 %v440
      %483 = vmatprep.subr.bf16.mxu0 0
      %484 = vmatpush1.bf16.msra.mxu0 %v441
      %485 = vmatprep.subr.bf16.mxu0 0
      %486 = vmatpush1.bf16.msra.mxu0 %v442
      %487 = vmatprep.subr.bf16.mxu0 0
      %488 = vmatpush1.bf16.msra.mxu0 %v443
      %489 = vmatprep.subr.bf16.mxu0 0
      %490 = vmatpush1.bf16.msra.mxu0 %v444
      %491 = vmatprep.subr.bf16.mxu0 0
      %492 = vmatpush1.bf16.msra.mxu0 %v445
      %493 = vmatprep.subr.bf16.mxu0 0
      %494 = vmatpush1.bf16.msra.mxu0 %v446
      %495 = vmatprep.mubr.bf16.mxu0 %v279
      %496 = vmatmul.mubr.bf16.gmra.mrb[0].mxu0 %v278
      %v497 = vpop.f32.mrb[0].mxu0
      %v498 = vadd.f32 %v365, %v497
      %v499 = vpop.f32.mrb[0].mxu0
      %v500 = vpop.f32.mrb[0].mxu0
      %v501 = vadd.f32 %v365, %v500
      %v502 = vpop.f32.mrb[0].mxu0
      %503 = vmatprep.mubr.bf16.mxu0 %v281
      %504 = vmatmul.mubr.bf16.gmra.mrb[0].mxu0 %v280
      %v505 = vpop.f32.mrb[0].mxu0
      %v506 = vadd.f32 %v365, %v505
      %v507 = vpop.f32.mrb[0].mxu0
      %v508 = vpop.f32.mrb[0].mxu0
      %v509 = vadd.f32 %v365, %v508
      %v510 = vpop.f32.mrb[0].mxu0
      %511 = vmatprep.mubr.bf16.mxu0 %v283
      %512 = vmatmul.mubr.bf16.gmra.mrb[0].mxu0 %v282
      %v513 = vpop.f32.mrb[0].mxu0
      %v514 = vadd.f32 %v365, %v513
      %v515 = vpop.f32.mrb[0].mxu0
      %v516 = vpop.f32.mrb[0].mxu0
      %v517 = vadd.f32 %v365, %v516
      %v518 = vpop.f32.mrb[0].mxu0
      %519 = vmatprep.mubr.bf16.mxu0 %v285
      %520 = vmatmul.mubr.bf16.gmra.mrb[0].mxu0 %v284
      %v521 = vpop.f32.mrb[0].mxu0
      %v522 = vadd.f32 %v365, %v521
      %v523 = vpop.f32.mrb[0].mxu0
      %v524 = vpop.f32.mrb[0].mxu0
      %v525 = vadd.f32 %v365, %v524
      %v526 = vpop.f32.mrb[0].mxu0
      %527 = vmatprep.mubr.bf16.mxu0 %v287
      %528 = vmatmul.mubr.bf16.gmra.mrb[0].mxu0 %v286
      %v529 = vpop.f32.mrb[0].mxu0
      %v530 = vadd.f32 %v365, %v529
      %v531 = vpop.f32.mrb[0].mxu0
      %v532 = vpop.f32.mrb[0].mxu0
      %v533 = vadd.f32 %v365, %v532
      %v534 = vpop.f32.mrb[0].mxu0
      %535 = vmatprep.mubr.bf16.mxu0 %v289
      %536 = vmatmul.mubr.bf16.gmra.mrb[0].mxu0 %v288
      %v537 = vpop.f32.mrb[0].mxu0
      %v538 = vadd.f32 %v365, %v537
      %v539 = vpop.f32.mrb[0].mxu0
      %v540 = vpop.f32.mrb[0].mxu0
      %v541 = vadd.f32 %v365, %v540
      %v542 = vpop.f32.mrb[0].mxu0
      %543 = vmatprep.mubr.bf16.mxu0 %v291
      %544 = vmatmul.mubr.bf16.gmra.mrb[0].mxu0 %v290
      %v545 = vpop.f32.mrb[0].mxu0
      %v546 = vadd.f32 %v365, %v545
      %v547 = vpop.f32.mrb[0].mxu0
      %v548 = vpop.f32.mrb[0].mxu0
      %v549 = vadd.f32 %v365, %v548
      %v550 = vpop.f32.mrb[0].mxu0
      %551 = vmatprep.mubr.bf16.mxu0 %v293
      %552 = vmatmul.mubr.bf16.gmra.mrb[0].mxu0 %v292
      %v553 = vpop.f32.mrb[0].mxu0
      %v554 = vadd.f32 %v365, %v553
      %v555 = vpop.f32.mrb[0].mxu0
      %v556 = vpop.f32.mrb[0].mxu0
      %v557 = vadd.f32 %v365, %v556
      %v558 = vpop.f32.mrb[0].mxu0
      %559 = vmatprep.mubr.bf16.mxu0 %v295
      %560 = vmatmul.mubr.bf16.gmra.mrb[0].mxu0 %v294
      %v561 = vpop.f32.mrb[0].mxu0
      %v562 = vadd.f32 %v365, %v561
      %v563 = vpop.f32.mrb[0].mxu0
      %v564 = vpop.f32.mrb[0].mxu0
      %v565 = vadd.f32 %v365, %v564
      %v566 = vpop.f32.mrb[0].mxu0
      %567 = vmatprep.mubr.bf16.mxu0 %v297
      %568 = vmatmul.mubr.bf16.gmra.mrb[0].mxu0 %v296
      %v569 = vpop.f32.mrb[0].mxu0
      %v570 = vadd.f32 %v365, %v569
      %v571 = vpop.f32.mrb[0].mxu0
      %v572 = vpop.f32.mrb[0].mxu0
      %v573 = vadd.f32 %v365, %v572
      %v574 = vpop.f32.mrb[0].mxu0
      %575 = vmatprep.mubr.bf16.mxu0 %v299
      %576 = vmatmul.mubr.bf16.gmra.mrb[0].mxu0 %v298
      %v577 = vpop.f32.mrb[0].mxu0
      %v578 = vadd.f32 %v365, %v577
      %v579 = vpop.f32.mrb[0].mxu0
      %v580 = vpop.f32.mrb[0].mxu0
      %v581 = vadd.f32 %v365, %v580
      %v582 = vpop.f32.mrb[0].mxu0
      %583 = vmatprep.mubr.bf16.mxu0 %v301
      %584 = vmatmul.mubr.bf16.gmra.mrb[0].mxu0 %v300
      %v585 = vpop.f32.mrb[0].mxu0
      %v586 = vadd.f32 %v365, %v585
      %v587 = vpop.f32.mrb[0].mxu0
      %v588 = vpop.f32.mrb[0].mxu0
      %v589 = vadd.f32 %v365, %v588
      %v590 = vpop.f32.mrb[0].mxu0
      %591 = vmatprep.mubr.bf16.mxu0 %v303
      %592 = vmatmul.mubr.bf16.gmra.mrb[0].mxu0 %v302
      %v593 = vpop.f32.mrb[0].mxu0
      %v594 = vadd.f32 %v365, %v593
      %v595 = vpop.f32.mrb[0].mxu0
      %v596 = vpop.f32.mrb[0].mxu0
      %v597 = vadd.f32 %v365, %v596
      %v598 = vpop.f32.mrb[0].mxu0
      %599 = vmatprep.mubr.bf16.mxu0 %v305
      %600 = vmatmul.mubr.bf16.gmra.mrb[0].mxu0 %v304
      %v601 = vpop.f32.mrb[0].mxu0
      %v602 = vadd.f32 %v365, %v601
      %v603 = vpop.f32.mrb[0].mxu0
      %v604 = vpop.f32.mrb[0].mxu0
      %v605 = vadd.f32 %v365, %v604
      %v606 = vpop.f32.mrb[0].mxu0
      %607 = vmatprep.mubr.bf16.mxu0 %v307
      %608 = vmatmul.mubr.bf16.gmra.mrb[0].mxu0 %v306
      %v609 = vpop.f32.mrb[0].mxu0
      %v610 = vadd.f32 %v365, %v609
      %v611 = vpop.f32.mrb[0].mxu0
      %v612 = vpop.f32.mrb[0].mxu0
      %v613 = vadd.f32 %v365, %v612
      %v614 = vpop.f32.mrb[0].mxu0
      %615 = vmatprep.mubr.bf16.mxu0 %v309
      %616 = vmatmul.mubr.bf16.gmra.mrb[0].mxu0 %v308
      %v617 = vpop.f32.mrb[0].mxu0
      %v618 = vadd.f32 %v365, %v617
      %v619 = vpop.f32.mrb[0].mxu0
      %v620 = vpop.f32.mrb[0].mxu0
      %v621 = vadd.f32 %v365, %v620
      %v622 = vpop.f32.mrb[0].mxu0
      %623 = vmatprep.mubr.bf16.mxu0 %v311
      %624 = vmatmul.mubr.bf16.gmra.mrb[0].mxu0 %v310
      %v625 = vpop.f32.mrb[0].mxu0
      %v626 = vadd.f32 %v365, %v625
      %v627 = vpop.f32.mrb[0].mxu0
      %v628 = vpop.f32.mrb[0].mxu0
      %v629 = vadd.f32 %v365, %v628
      %v630 = vpop.f32.mrb[0].mxu0
      %631 = vmatprep.mubr.bf16.mxu0 %v313
      %632 = vmatmul.mubr.bf16.gmra.mrb[0].mxu0 %v312
      %v633 = vpop.f32.mrb[0].mxu0
      %v634 = vadd.f32 %v365, %v633
      %v635 = vpop.f32.mrb[0].mxu0
      %v636 = vpop.f32.mrb[0].mxu0
      %v637 = vadd.f32 %v365, %v636
      %v638 = vpop.f32.mrb[0].mxu0
      %639 = vmatprep.mubr.bf16.mxu0 %v315
      %640 = vmatmul.mubr.bf16.gmra.mrb[0].mxu0 %v314
      %v641 = vpop.f32.mrb[0].mxu0
      %v642 = vadd.f32 %v365, %v641
      %v643 = vpop.f32.mrb[0].mxu0
      %v644 = vpop.f32.mrb[0].mxu0
      %v645 = vadd.f32 %v365, %v644
      %v646 = vpop.f32.mrb[0].mxu0
      %647 = vmatprep.mubr.bf16.mxu0 %v317
      %648 = vmatmul.mubr.bf16.gmra.mrb[0].mxu0 %v316
      %v649 = vpop.f32.mrb[0].mxu0
      %v650 = vadd.f32 %v365, %v649
      %v651 = vpop.f32.mrb[0].mxu0
      %v652 = vpop.f32.mrb[0].mxu0
      %v653 = vadd.f32 %v365, %v652
      %v654 = vpop.f32.mrb[0].mxu0
      %655 = vmatprep.mubr.bf16.mxu0 %v319
      %656 = vmatmul.mubr.bf16.gmra.mrb[0].mxu0 %v318
      %v657 = vpop.f32.mrb[0].mxu0
      %v658 = vadd.f32 %v365, %v657
      %v659 = vpop.f32.mrb[0].mxu0
      %v660 = vpop.f32.mrb[0].mxu0
      %v661 = vadd.f32 %v365, %v660
      %v662 = vpop.f32.mrb[0].mxu0
      %663 = vmatprep.mubr.bf16.mxu0 %v321
      %664 = vmatmul.mubr.bf16.gmra.mrb[0].mxu0 %v320
      %v665 = vpop.f32.mrb[0].mxu0
      %v666 = vadd.f32 %v365, %v665
      %v667 = vpop.f32.mrb[0].mxu0
      %v668 = vpop.f32.mrb[0].mxu0
      %v669 = vadd.f32 %v365, %v668
      %v670 = vpop.f32.mrb[0].mxu0
      %671 = vmatprep.mubr.bf16.mxu0 %v323
      %672 = vmatmul.mubr.bf16.gmra.mrb[0].mxu0 %v322
      %v673 = vpop.f32.mrb[0].mxu0
      %v674 = vadd.f32 %v365, %v673
      %v675 = vpop.f32.mrb[0].mxu0
      %v676 = vpop.f32.mrb[0].mxu0
      %v677 = vadd.f32 %v365, %v676
      %v678 = vpop.f32.mrb[0].mxu0
      %679 = vmatprep.mubr.bf16.mxu0 %v325
      %680 = vmatmul.mubr.bf16.gmra.mrb[0].mxu0 %v324
      %v681 = vpop.f32.mrb[0].mxu0
      %v682 = vadd.f32 %v365, %v681
      %v683 = vpop.f32.mrb[0].mxu0
      %v684 = vpop.f32.mrb[0].mxu0
      %v685 = vadd.f32 %v365, %v684
      %v686 = vpop.f32.mrb[0].mxu0
      %687 = vmatprep.mubr.bf16.mxu0 %v327
      %688 = vmatmul.mubr.bf16.gmra.mrb[0].mxu0 %v326
      %v689 = vpop.f32.mrb[0].mxu0
      %v690 = vadd.f32 %v365, %v689
      %v691 = vpop.f32.mrb[0].mxu0
      %v692 = vpop.f32.mrb[0].mxu0
      %v693 = vadd.f32 %v365, %v692
      %v694 = vpop.f32.mrb[0].mxu0
      %695 = vdwg.mxu0
      %v696 = vmax.f32 %v498, 0.0
      %v697 = vmax.f32 %v501, 0.0
      %v698 = vmax.f32 %v506, 0.0
      %v699 = vmax.f32 %v509, 0.0
      %v700 = vmax.f32 %v514, 0.0
      %v701 = vmax.f32 %v517, 0.0
      %v702 = vmax.f32 %v522, 0.0
      %v703 = vmax.f32 %v525, 0.0
      %v704 = vmax.f32 %v530, 0.0
      %v705 = vmax.f32 %v533, 0.0
      %v706 = vmax.f32 %v538, 0.0
      %v707 = vmax.f32 %v541, 0.0
      %v708 = vmax.f32 %v546, 0.0
      %v709 = vmax.f32 %v549, 0.0
      %v710 = vmax.f32 %v554, 0.0
      %v711 = vmax.f32 %v557, 0.0
      %v712 = vmax.f32 %v562, 0.0
      %v713 = vmax.f32 %v565, 0.0
      %v714 = vmax.f32 %v570, 0.0
      %v715 = vmax.f32 %v573, 0.0
      %v716 = vmax.f32 %v578, 0.0
      %v717 = vmax.f32 %v581, 0.0
      %v718 = vmax.f32 %v586, 0.0
      %v719 = vmax.f32 %v589, 0.0
      %v720 = vmax.f32 %v594, 0.0
      %v721 = vmax.f32 %v597, 0.0
      %v722 = vmax.f32 %v602, 0.0
      %v723 = vmax.f32 %v605, 0.0
      %v724 = vmax.f32 %v610, 0.0
      %v725 = vmax.f32 %v613, 0.0
      %v726 = vmax.f32 %v618, 0.0
      %v727 = vmax.f32 %v621, 0.0
      %v728 = vmax.f32 %v626, 0.0
      %v729 = vmax.f32 %v629, 0.0
      %v730 = vmax.f32 %v634, 0.0
      %v731 = vmax.f32 %v637, 0.0
      %v732 = vmax.f32 %v642, 0.0
      %v733 = vmax.f32 %v645, 0.0
      %v734 = vmax.f32 %v650, 0.0
      %v735 = vmax.f32 %v653, 0.0
      %v736 = vmax.f32 %v658, 0.0
      %v737 = vmax.f32 %v661, 0.0
      %v738 = vmax.f32 %v666, 0.0
      %v739 = vmax.f32 %v669, 0.0
      %v740 = vmax.f32 %v674, 0.0
      %v741 = vmax.f32 %v677, 0.0
      %v742 = vmax.f32 %v682, 0.0
      %v743 = vmax.f32 %v685, 0.0
      %v744 = vmax.f32 %v690, 0.0
      %v745 = vmax.f32 %v693, 0.0
      %vm746 = vcmask 523264
      %747 = vst.msk [vmem:[%s175] sm:$0xff] %vm746, %v696
      %748 = vst.msk [vmem:[%s175 + $0x8] sm:$0xff] %vm746, %v697
      %749 = vst.msk [vmem:[%s175 + $0x10] sm:$0xff] %vm746, %v698
      %750 = vst.msk [vmem:[%s175 + $0x18] sm:$0xff] %vm746, %v699
      %751 = vst.msk [vmem:[%s175 + $0x20] sm:$0xff] %vm746, %v700
      %752 = vst.msk [vmem:[%s175 + $0x28] sm:$0xff] %vm746, %v701
      %753 = vst.msk [vmem:[%s175 + $0x30] sm:$0xff] %vm746, %v702
      %754 = vst.msk [vmem:[%s175 + $0x38] sm:$0xff] %vm746, %v703
      %755 = vst.msk [vmem:[%s175 + $0x40] sm:$0xff] %vm746, %v704
      %756 = vst.msk [vmem:[%s175 + $0x48] sm:$0xff] %vm746, %v705
      %757 = vst.msk [vmem:[%s175 + $0x50] sm:$0xff] %vm746, %v706
      %758 = vst.msk [vmem:[%s175 + $0x58] sm:$0xff] %vm746, %v707
      %759 = vst.msk [vmem:[%s175 + $0x60] sm:$0xff] %vm746, %v708
      %760 = vst.msk [vmem:[%s175 + $0x68] sm:$0xff] %vm746, %v709
      %761 = vst.msk [vmem:[%s175 + $0x70] sm:$0xff] %vm746, %v710
      %762 = vst.msk [vmem:[%s175 + $0x78] sm:$0xff] %vm746, %v711
      %763 = vst.msk [vmem:[%s175 + $0x80] sm:$0xff] %vm746, %v712
      %764 = vst.msk [vmem:[%s175 + $0x88] sm:$0xff] %vm746, %v713
      %765 = vst.msk [vmem:[%s175 + $0x90] sm:$0xff] %vm746, %v714
      %766 = vst.msk [vmem:[%s175 + $0x98] sm:$0xff] %vm746, %v715
      %767 = vst.msk [vmem:[%s175 + $0xa0] sm:$0xff] %vm746, %v716
      %768 = vst.msk [vmem:[%s175 + $0xa8] sm:$0xff] %vm746, %v717
      %769 = vst.msk [vmem:[%s175 + $0xb0] sm:$0xff] %vm746, %v718
      %770 = vst.msk [vmem:[%s175 + $0xb8] sm:$0xff] %vm746, %v719
      %771 = vst.msk [vmem:[%s175 + $0xc0] sm:$0xff] %vm746, %v720
      %772 = vst.msk [vmem:[%s175 + $0xc8] sm:$0xff] %vm746, %v721
      %773 = vst.msk [vmem:[%s175 + $0xd0] sm:$0xff] %vm746, %v722
      %774 = vst.msk [vmem:[%s175 + $0xd8] sm:$0xff] %vm746, %v723
      %775 = vst.msk [vmem:[%s175 + $0xe0] sm:$0xff] %vm746, %v724
      %776 = vst.msk [vmem:[%s175 + $0xe8] sm:$0xff] %vm746, %v725
      %777 = vst.msk [vmem:[%s175 + $0xf0] sm:$0xff] %vm746, %v726
      %778 = vst.msk [vmem:[%s175 + $0xf8] sm:$0xff] %vm746, %v727
      %779 = vst.msk [vmem:[%s175 + $0x100] sm:$0xff] %vm746, %v728
      %780 = vst.msk [vmem:[%s175 + $0x108] sm:$0xff] %vm746, %v729
      %781 = vst.msk [vmem:[%s175 + $0x110] sm:$0xff] %vm746, %v730
      %782 = vst.msk [vmem:[%s175 + $0x118] sm:$0xff] %vm746, %v731
      %783 = vst.msk [vmem:[%s175 + $0x120] sm:$0xff] %vm746, %v732
      %784 = vst.msk [vmem:[%s175 + $0x128] sm:$0xff] %vm746, %v733
      %785 = vst.msk [vmem:[%s175 + $0x130] sm:$0xff] %vm746, %v734
      %786 = vst.msk [vmem:[%s175 + $0x138] sm:$0xff] %vm746, %v735
      %787 = vst.msk [vmem:[%s175 + $0x140] sm:$0xff] %vm746, %v736
      %788 = vst.msk [vmem:[%s175 + $0x148] sm:$0xff] %vm746, %v737
      %789 = vst.msk [vmem:[%s175 + $0x150] sm:$0xff] %vm746, %v738
      %790 = vst.msk [vmem:[%s175 + $0x158] sm:$0xff] %vm746, %v739
      %791 = vst.msk [vmem:[%s175 + $0x160] sm:$0xff] %vm746, %v740
      %792 = vst.msk [vmem:[%s175 + $0x168] sm:$0xff] %vm746, %v741
      %793 = vst.msk [vmem:[%s175 + $0x170] sm:$0xff] %vm746, %v742
      %794 = vst.msk [vmem:[%s175 + $0x178] sm:$0xff] %vm746, %v743
      %795 = vst.msk [vmem:[%s175 + $0x180] sm:$0xff] %vm746, %v744
      %796 = vst.msk [vmem:[%s175 + $0x188] sm:$0xff] %vm746, %v745
      %s797 = smul.u32 50, %s14
      %p798 = scmp.lt.s32.totalorder %s797, 99
      %s799 = scalar_select %p798, %s797, 99
      %s800 = smul.addr %s799, 8
      %s801 = scalar_lea.vmem %s3, %s800
      // Predicated region
      $region33: #{forward.5} parent=31 // pred_check
        %p802 = pneg %p100
      $region34: #{forward.5} parent=31 // pred_check_branch
        %804 = sbr.rel (%p802) target = $region36
      $region35: #{forward.5} parent=31 // pred_region
        %s805 = smul.u32 50, %s14
      $region36: #{forward.5} parent=31 // pred_fallthru
        _
    $region32: #{forward.5} parent=5 // pred_fallthru
      _
    %p806 = scmp.le.s32.totalorder 2, %s9
    // Predicated region
    $region37: #{forward.5} parent=5 // pred_check
      %p807 = pneg %p806
    $region38: #{forward.5} parent=5 // pred_check_branch
      %809 = sbr.rel (%p807) target = $region40
    $region39: #{forward.5} parent=5 // pred_region
      %s810 = ssub.s32 %s9, 2
      // Predicated region
      $region41: #{forward.5} parent=39 // pred_check
        %p811 = pneg %p106
      $region42: #{forward.5} parent=39 // pred_check_branch
        %813 = sbr.rel (%p811) target = $region44
      $region43: #{forward.5} parent=39 // pred_region
        %s814 = smul.u32 50, %s15
        %p815 = scmp.lt.s32.totalorder %s814, 99
        %s816 = scalar_select %p815, %s814, 99
        %s817 = smul.addr %s816, 8
        %s818 = scalar_lea.vmem %s3, %s817
      $region44: #{forward.5} parent=39 // pred_fallthru
        _
    $region40: #{forward.5} parent=5 // pred_fallthru
      _
  $region6: #{forward.5} parent=0 // loop_footer
    %s13 = sadd.s32 1, %s9
  $region7: #{forward.5} parent=0 // loop_footer_branch
    %8 = sbr.rel target = $region3
  $region8: #{forward.5} parent=0 // loop_exit
    _

// kernel: forward.6
$region0: #{forward.6}
  #allocation0 [shape = 'u32[]', space=smem, size = 0x4, offset = 0x4, fixed_abs, tag = 'smem constant byte address 0x4 - core index']
  #allocation1 [shape = 'u32[144,128]{1,0:T(1,128)}', space=vmem, size = 0x12000, scoped, tag = 'internal scratch']
  %s0 = inlined_call_operand.vmem [shape: f32[162,1024], index: 0, kind: input, shape index: {}]
  %s1 = inlined_call_operand.vmem [shape: bf16[1024,64], index: 1, kind: input, shape index: {}]
  %s2 = inlined_call_operand.vmem [shape: f32[1,64], index: 2, kind: input, shape index: {}]
  %s3 = inlined_call_operand.vmem [shape: f32[162,64], index: 3, kind: output, shape index: {}]
  %s4 = sld [smem:[#allocation0]]
  $region22: #{forward.6} parent=0
    _
  %s6 = ssub.s32 1, %s4
  %s7 = scalar_select 0, %s6, %s4
  // Predicated region
  $region2: #{forward.6} parent=0 // pred_check
    _
  $region3: #{forward.6} parent=0 // pred_check_branch
    %9 = sbr.rel (0) target = $region5
  $region4: #{forward.6} parent=0 // pred_region
    _
  $region5: #{forward.6} parent=0 // pred_fallthru
    _
  // Predicated region
  $region6: #{forward.6} parent=0 // pred_check
    _
  $region7: #{forward.6} parent=0 // pred_check_branch
    %11 = sbr.rel (0) target = $region9
  $region8: #{forward.6} parent=0 // pred_region
    _
  $region9: #{forward.6} parent=0 // pred_fallthru
    _
  // Predicated region
  $region10: #{forward.6} parent=0 // pred_check
    _
  $region11: #{forward.6} parent=0 // pred_check_branch
    %13 = sbr.rel (0) target = $region13
  $region12: #{forward.6} parent=0 // pred_region
    _
  $region13: #{forward.6} parent=0 // pred_fallthru
    _
  %v15 = vld [vmem:[%s0] sm:$0xff]
  %v16 = vld [vmem:[%s0 + $0x8] sm:$0xff]
  %v17 = vld [vmem:[%s0 + $0x10] sm:$0xff]
  %v18 = vld [vmem:[%s0 + $0x18] sm:$0xff]
  %v19 = vld [vmem:[%s0 + $0x20] sm:$0xff]
  %v20 = vld [vmem:[%s0 + $0x28] sm:$0xff]
  %v21 = vld [vmem:[%s0 + $0x30] sm:$0xff]
  %v22 = vld [vmem:[%s0 + $0x38] sm:$0xff]
  %v23 = vld [vmem:[%s0 + $0x40] sm:$0xff]
  %v24 = vld [vmem:[%s0 + $0x48] sm:$0xff]
  %v25 = vld [vmem:[%s0 + $0x50] sm:$0xff]
  %v26 = vld [vmem:[%s0 + $0x58] sm:$0xff]
  %v27 = vld [vmem:[%s0 + $0x60] sm:$0xff]
  %v28 = vld [vmem:[%s0 + $0x68] sm:$0xff]
  %v29 = vld [vmem:[%s0 + $0x70] sm:$0xff]
  %v30 = vld [vmem:[%s0 + $0x78] sm:$0xff]
  %v31 = vld [vmem:[%s0 + $0x80] sm:$0xff]
  %v32 = vld [vmem:[%s0 + $0x88] sm:$0xff]
  %v33 = vld [vmem:[%s0 + $0x90] sm:$0xff]
  %v34 = vld [vmem:[%s0 + $0x98] sm:$0xff]
  %v35 = vld [vmem:[%s0 + $0xa0] sm:$0xff]
  %v36 = vld [vmem:[%s0 + $0xa8] sm:$0xff]
  %v37 = vld [vmem:[%s0 + $0xb0] sm:$0xff]
  %v38 = vld [vmem:[%s0 + $0xb8] sm:$0xff]
  %v39 = vld [vmem:[%s0 + $0xc0] sm:$0xff]
  %v40 = vld [vmem:[%s0 + $0xc8] sm:$0xff]
  %v41 = vld [vmem:[%s0 + $0xd0] sm:$0xff]
  %v42 = vld [vmem:[%s0 + $0xd8] sm:$0xff]
  %v43 = vld [vmem:[%s0 + $0xe0] sm:$0xff]
  %v44 = vld [vmem:[%s0 + $0xe8] sm:$0xff]
  %v45 = vld [vmem:[%s0 + $0xf0] sm:$0xff]
  %v46 = vld [vmem:[%s0 + $0xf8] sm:$0xff]
  %v47 = vld [vmem:[%s0 + $0x100] sm:$0xff]
  %v48 = vld [vmem:[%s0 + $0x108] sm:$0xff]
  %v49 = vld [vmem:[%s0 + $0x110] sm:$0xff]
  %v50 = vld [vmem:[%s0 + $0x118] sm:$0xff]
  %v51 = vld [vmem:[%s0 + $0x120] sm:$0xff]
  %v52 = vld [vmem:[%s0 + $0x128] sm:$0xff]
  %v53 = vld [vmem:[%s0 + $0x130] sm:$0xff]
  %v54 = vld [vmem:[%s0 + $0x138] sm:$0xff]
  %v55 = vld [vmem:[%s0 + $0x140] sm:$0xff]
  %v56 = vld [vmem:[%s0 + $0x148] sm:$0xff]
  %v57 = vld [vmem:[%s0 + $0x150] sm:$0xff]
  %v58 = vld [vmem:[%s0 + $0x158] sm:$0xff]
  %v59 = vld [vmem:[%s0 + $0x160] sm:$0xff]
  %v60 = vld [vmem:[%s0 + $0x168] sm:$0xff]
  %v61 = vld [vmem:[%s0 + $0x170] sm:$0xff]
  %v62 = vld [vmem:[%s0 + $0x178] sm:$0xff]
  %v63 = vld [vmem:[%s0 + $0x180] sm:$0xff]
  %v64 = vld [vmem:[%s0 + $0x188] sm:$0xff]
  %v65 = vld [vmem:[%s0 + $0x190] sm:$0xff]
  %v66 = vld [vmem:[%s0 + $0x198] sm:$0xff]
  %v67 = vld [vmem:[%s0 + $0x1a0] sm:$0xff]
  %v68 = vld [vmem:[%s0 + $0x1a8] sm:$0xff]
  %v69 = vld [vmem:[%s0 + $0x1b0] sm:$0xff]
  %v70 = vld [vmem:[%s0 + $0x1b8] sm:$0xff]
  %v71 = vld [vmem:[%s0 + $0x1c0] sm:$0xff]
  %v72 = vld [vmem:[%s0 + $0x1c8] sm:$0xff]
  %v73 = vld [vmem:[%s0 + $0x1d0] sm:$0xff]
  %v74 = vld [vmem:[%s0 + $0x1d8] sm:$0xff]
  %v75 = vld [vmem:[%s0 + $0x1e0] sm:$0xff]
  %v76 = vld [vmem:[%s0 + $0x1e8] sm:$0xff]
  %v77 = vld [vmem:[%s0 + $0x1f0] sm:$0xff]
  %v78 = vld [vmem:[%s0 + $0x1f8] sm:$0xff]
  %v79 = vld [vmem:[%s0 + $0x200] sm:$0xff]
  %v80 = vld [vmem:[%s0 + $0x208] sm:$0xff]
  %v81 = vld [vmem:[%s0 + $0x210] sm:$0xff]
  %v82 = vld [vmem:[%s0 + $0x218] sm:$0xff]
  %v83 = vld [vmem:[%s0 + $0x220] sm:$0xff]
  %v84 = vld [vmem:[%s0 + $0x228] sm:$0xff]
  %v85 = vld [vmem:[%s0 + $0x230] sm:$0xff]
  %v86 = vld [vmem:[%s0 + $0x238] sm:$0xff]
  %v87 = vld [vmem:[%s0 + $0x240] sm:$0xff]
  %v88 = vld [vmem:[%s0 + $0x248] sm:$0xff]
  %v89 = vld [vmem:[%s0 + $0x250] sm:$0xff]
  %v90 = vld [vmem:[%s0 + $0x258] sm:$0xff]
  %v91 = vld [vmem:[%s0 + $0x260] sm:$0xff]
  %v92 = vld [vmem:[%s0 + $0x268] sm:$0xff]
  %v93 = vld [vmem:[%s0 + $0x270] sm:$0xff]
  %v94 = vld [vmem:[%s0 + $0x278] sm:$0xff]
  %v95 = vld [vmem:[%s0 + $0x280] sm:$0xff]
  %v96 = vld [vmem:[%s0 + $0x288] sm:$0xff]
  %v97 = vld [vmem:[%s0 + $0x290] sm:$0xff]
  %v98 = vld [vmem:[%s0 + $0x298] sm:$0xff]
  %v99 = vld [vmem:[%s0 + $0x2a0] sm:$0xff]
  %v100 = vld [vmem:[%s0 + $0x2a8] sm:$0xff]
  %v101 = vld [vmem:[%s0 + $0x2b0] sm:$0xff]
  %v102 = vld [vmem:[%s0 + $0x2b8] sm:$0xff]
  %v103 = vld [vmem:[%s0 + $0x2c0] sm:$0xff]
  %v104 = vld [vmem:[%s0 + $0x2c8] sm:$0xff]
  %v105 = vld [vmem:[%s0 + $0x2d0] sm:$0xff]
  %v106 = vld [vmem:[%s0 + $0x2d8] sm:$0xff]
  %v107 = vld [vmem:[%s0 + $0x2e0] sm:$0xff]
  %v108 = vld [vmem:[%s0 + $0x2e8] sm:$0xff]
  %v109 = vld [vmem:[%s0 + $0x2f0] sm:$0xff]
  %v110 = vld [vmem:[%s0 + $0x2f8] sm:$0xff]
  %v111 = vld [vmem:[%s0 + $0x300] sm:$0xff]
  %v112 = vld [vmem:[%s0 + $0x308] sm:$0xff]
  %v113 = vld [vmem:[%s0 + $0x310] sm:$0xff]
  %v114 = vld [vmem:[%s0 + $0x318] sm:$0xff]
  %v115 = vld [vmem:[%s0 + $0x320] sm:$0xff]
  %v116 = vld [vmem:[%s0 + $0x328] sm:$0xff]
  %v117 = vld [vmem:[%s0 + $0x330] sm:$0xff]
  %v118 = vld [vmem:[%s0 + $0x338] sm:$0xff]
  %v119 = vld [vmem:[%s0 + $0x340] sm:$0xff]
  %v120 = vld [vmem:[%s0 + $0x348] sm:$0xff]
  %v121 = vld [vmem:[%s0 + $0x350] sm:$0xff]
  %v122 = vld [vmem:[%s0 + $0x358] sm:$0xff]
  %v123 = vld [vmem:[%s0 + $0x360] sm:$0xff]
  %v124 = vld [vmem:[%s0 + $0x368] sm:$0xff]
  %v125 = vld [vmem:[%s0 + $0x370] sm:$0xff]
  %v126 = vld [vmem:[%s0 + $0x378] sm:$0xff]
  %v127 = vld [vmem:[%s0 + $0x380] sm:$0xff]
  %v128 = vld [vmem:[%s0 + $0x388] sm:$0xff]
  %v129 = vld [vmem:[%s0 + $0x390] sm:$0xff]
  %v130 = vld [vmem:[%s0 + $0x398] sm:$0xff]
  %v131 = vld [vmem:[%s0 + $0x3a0] sm:$0xff]
  %v132 = vld [vmem:[%s0 + $0x3a8] sm:$0xff]
  %v133 = vld [vmem:[%s0 + $0x3b0] sm:$0xff]
  %v134 = vld [vmem:[%s0 + $0x3b8] sm:$0xff]
  %v135 = vld [vmem:[%s0 + $0x3c0] sm:$0xff]
  %v136 = vld [vmem:[%s0 + $0x3c8] sm:$0xff]
  %v137 = vld [vmem:[%s0 + $0x3d0] sm:$0xff]
  %v138 = vld [vmem:[%s0 + $0x3d8] sm:$0xff]
  %v139 = vld [vmem:[%s0 + $0x3e0] sm:$0xff]
  %v140 = vld [vmem:[%s0 + $0x3e8] sm:$0xff]
  %v141 = vld [vmem:[%s0 + $0x3f0] sm:$0xff]
  %v142 = vld [vmem:[%s0 + $0x3f8] sm:$0xff]
  %v143 = vld [vmem:[%s0 + $0x400] sm:$0xff]
  %v144 = vld [vmem:[%s0 + $0x408] sm:$0xff]
  %v145 = vld [vmem:[%s0 + $0x410] sm:$0xff]
  %v146 = vld [vmem:[%s0 + $0x418] sm:$0xff]
  %v147 = vld [vmem:[%s0 + $0x420] sm:$0xff]
  %v148 = vld [vmem:[%s0 + $0x428] sm:$0xff]
  %v149 = vld [vmem:[%s0 + $0x430] sm:$0xff]
  %v150 = vld [vmem:[%s0 + $0x438] sm:$0xff]
  %v151 = vld [vmem:[%s0 + $0x440] sm:$0xff]
  %v152 = vld [vmem:[%s0 + $0x448] sm:$0xff]
  %v153 = vld [vmem:[%s0 + $0x450] sm:$0xff]
  %v154 = vld [vmem:[%s0 + $0x458] sm:$0xff]
  %v155 = vld [vmem:[%s0 + $0x460] sm:$0xff]
  %v156 = vld [vmem:[%s0 + $0x468] sm:$0xff]
  %v157 = vld [vmem:[%s0 + $0x470] sm:$0xff]
  %v158 = vld [vmem:[%s0 + $0x478] sm:$0xff]
  %v159 = vld [vmem:[%s0 + $0x480] sm:$0xff]
  %v160 = vld [vmem:[%s0 + $0x488] sm:$0xff]
  %v161 = vld [vmem:[%s0 + $0x490] sm:$0xff]
  %v162 = vld [vmem:[%s0 + $0x498] sm:$0xff]
  %v163 = vld [vmem:[%s0 + $0x4a0] sm:$0xff]
  %v164 = vld [vmem:[%s0 + $0x4a8] sm:$0xff]
  %v165 = vld [vmem:[%s0 + $0x4b0] sm:$0xff]
  %v166 = vld [vmem:[%s0 + $0x4b8] sm:$0xff]
  %v167 = vld [vmem:[%s0 + $0x4c0] sm:$0xff]
  %v168 = vld [vmem:[%s0 + $0x4c8] sm:$0xff]
  %v169 = vld [vmem:[%s0 + $0x4d0] sm:$0xff]
  %v170 = vld [vmem:[%s0 + $0x4d8] sm:$0xff]
  %v171 = vld [vmem:[%s0 + $0x4e0] sm:$0xff]
  %v172 = vld [vmem:[%s0 + $0x4e8] sm:$0xff]
  %v173 = vld [vmem:[%s0 + $0x4f0] sm:$0xff]
  %v174 = vld [vmem:[%s0 + $0x4f8] sm:$0xff]
  %v175 = vld [vmem:[%s0 + $0x500] sm:$0x3]
  %v176 = vld [vmem:[%s0 + $0x508] sm:$0x3]
  %v177 = vld [vmem:[%s0 + $0x510] sm:$0x3]
  %v178 = vld [vmem:[%s0 + $0x518] sm:$0x3]
  %v179 = vld [vmem:[%s0 + $0x520] sm:$0x3]
  %v180 = vld [vmem:[%s0 + $0x528] sm:$0x3]
  %v181 = vld [vmem:[%s0 + $0x530] sm:$0x3]
  %v182 = vld [vmem:[%s0 + $0x538] sm:$0x3]
  %v183 = vpack.c.bf16 %v23, %v15
  %v184 = vpack.c.bf16 %v24, %v16
  %v185 = vpack.c.bf16 %v25, %v17
  %v186 = vpack.c.bf16 %v26, %v18
  %v187 = vpack.c.bf16 %v27, %v19
  %v188 = vpack.c.bf16 %v28, %v20
  %v189 = vpack.c.bf16 %v29, %v21
  %v190 = vpack.c.bf16 %v30, %v22
  %v191 = vpack.c.bf16 %v39, %v31
  %v192 = vpack.c.bf16 %v40, %v32
  %v193 = vpack.c.bf16 %v41, %v33
  %v194 = vpack.c.bf16 %v42, %v34
  %v195 = vpack.c.bf16 %v43, %v35
  %v196 = vpack.c.bf16 %v44, %v36
  %v197 = vpack.c.bf16 %v45, %v37
  %v198 = vpack.c.bf16 %v46, %v38
  %v199 = vpack.c.bf16 %v55, %v47
  %v200 = vpack.c.bf16 %v56, %v48
  %v201 = vpack.c.bf16 %v57, %v49
  %v202 = vpack.c.bf16 %v58, %v50
  %v203 = vpack.c.bf16 %v59, %v51
  %v204 = vpack.c.bf16 %v60, %v52
  %v205 = vpack.c.bf16 %v61, %v53
  %v206 = vpack.c.bf16 %v62, %v54
  %v207 = vpack.c.bf16 %v71, %v63
  %v208 = vpack.c.bf16 %v72, %v64
  %v209 = vpack.c.bf16 %v73, %v65
  %v210 = vpack.c.bf16 %v74, %v66
  %v211 = vpack.c.bf16 %v75, %v67
  %v212 = vpack.c.bf16 %v76, %v68
  %v213 = vpack.c.bf16 %v77, %v69
  %v214 = vpack.c.bf16 %v78, %v70
  %v215 = vpack.c.bf16 %v87, %v79
  %v216 = vpack.c.bf16 %v88, %v80
  %v217 = vpack.c.bf16 %v89, %v81
  %v218 = vpack.c.bf16 %v90, %v82
  %v219 = vpack.c.bf16 %v91, %v83
  %v220 = vpack.c.bf16 %v92, %v84
  %v221 = vpack.c.bf16 %v93, %v85
  %v222 = vpack.c.bf16 %v94, %v86
  %v223 = vpack.c.bf16 %v103, %v95
  %v224 = vpack.c.bf16 %v104, %v96
  %v225 = vpack.c.bf16 %v105, %v97
  %v226 = vpack.c.bf16 %v106, %v98
  %v227 = vpack.c.bf16 %v107, %v99
  %v228 = vpack.c.bf16 %v108, %v100
  %v229 = vpack.c.bf16 %v109, %v101
  %v230 = vpack.c.bf16 %v110, %v102
  %v231 = vpack.c.bf16 %v119, %v111
  %v232 = vpack.c.bf16 %v120, %v112
  %v233 = vpack.c.bf16 %v121, %v113
  %v234 = vpack.c.bf16 %v122, %v114
  %v235 = vpack.c.bf16 %v123, %v115
  %v236 = vpack.c.bf16 %v124, %v116
  %v237 = vpack.c.bf16 %v125, %v117
  %v238 = vpack.c.bf16 %v126, %v118
  %v239 = vpack.c.bf16 %v135, %v127
  %v240 = vpack.c.bf16 %v136, %v128
  %v241 = vpack.c.bf16 %v137, %v129
  %v242 = vpack.c.bf16 %v138, %v130
  %v243 = vpack.c.bf16 %v139, %v131
  %v244 = vpack.c.bf16 %v140, %v132
  %v245 = vpack.c.bf16 %v141, %v133
  %v246 = vpack.c.bf16 %v142, %v134
  %v247 = vpack.c.bf16 %v151, %v143
  %v248 = vpack.c.bf16 %v152, %v144
  %v249 = vpack.c.bf16 %v153, %v145
  %v250 = vpack.c.bf16 %v154, %v146
  %v251 = vpack.c.bf16 %v155, %v147
  %v252 = vpack.c.bf16 %v156, %v148
  %v253 = vpack.c.bf16 %v157, %v149
  %v254 = vpack.c.bf16 %v158, %v150
  %v255 = vpack.c.bf16 %v167, %v159
  %v256 = vpack.c.bf16 %v168, %v160
  %v257 = vpack.c.bf16 %v169, %v161
  %v258 = vpack.c.bf16 %v170, %v162
  %v259 = vpack.c.bf16 %v171, %v163
  %v260 = vpack.c.bf16 %v172, %v164
  %v261 = vpack.c.bf16 %v173, %v165
  %v262 = vpack.c.bf16 %v174, %v166
  %v263 = vpack.c.bf16 %v175, %v175
  %v264 = vpack.c.bf16 %v176, %v176
  %v265 = vpack.c.bf16 %v177, %v177
  %v266 = vpack.c.bf16 %v178, %v178
  %v267 = vpack.c.bf16 %v179, %v179
  %v268 = vpack.c.bf16 %v180, %v180
  %v269 = vpack.c.bf16 %v181, %v181
  %v270 = vpack.c.bf16 %v182, %v182
  %v271 = vld [vmem:[%s1] sm:$0xf]
  %v272 = vld [vmem:[%s1 + $0x4] sm:$0xf]
  %v273 = vld [vmem:[%s1 + $0x8] sm:$0xf]
  %v274 = vld [vmem:[%s1 + $0xc] sm:$0xf]
  %v275 = vld [vmem:[%s1 + $0x10] sm:$0xf]
  %v276 = vld [vmem:[%s1 + $0x14] sm:$0xf]
  %v277 = vld [vmem:[%s1 + $0x18] sm:$0xf]
  %v278 = vld [vmem:[%s1 + $0x1c] sm:$0xf]
  %v279 = vld [vmem:[%s1 + $0x20] sm:$0xf]
  %v280 = vld [vmem:[%s1 + $0x24] sm:$0xf]
  %v281 = vld [vmem:[%s1 + $0x28] sm:$0xf]
  %v282 = vld [vmem:[%s1 + $0x2c] sm:$0xf]
  %v283 = vld [vmem:[%s1 + $0x30] sm:$0xf]
  %v284 = vld [vmem:[%s1 + $0x34] sm:$0xf]
  %v285 = vld [vmem:[%s1 + $0x38] sm:$0xf]
  %v286 = vld [vmem:[%s1 + $0x3c] sm:$0xf]
  %v287 = vld [vmem:[%s1 + $0x40] sm:$0xf]
  %v288 = vld [vmem:[%s1 + $0x44] sm:$0xf]
  %v289 = vld [vmem:[%s1 + $0x48] sm:$0xf]
  %v290 = vld [vmem:[%s1 + $0x4c] sm:$0xf]
  %v291 = vld [vmem:[%s1 + $0x50] sm:$0xf]
  %v292 = vld [vmem:[%s1 + $0x54] sm:$0xf]
  %v293 = vld [vmem:[%s1 + $0x58] sm:$0xf]
  %v294 = vld [vmem:[%s1 + $0x5c] sm:$0xf]
  %v295 = vld [vmem:[%s1 + $0x60] sm:$0xf]
  %v296 = vld [vmem:[%s1 + $0x64] sm:$0xf]
  %v297 = vld [vmem:[%s1 + $0x68] sm:$0xf]
  %v298 = vld [vmem:[%s1 + $0x6c] sm:$0xf]
  %v299 = vld [vmem:[%s1 + $0x70] sm:$0xf]
  %v300 = vld [vmem:[%s1 + $0x74] sm:$0xf]
  %v301 = vld [vmem:[%s1 + $0x78] sm:$0xf]
  %v302 = vld [vmem:[%s1 + $0x7c] sm:$0xf]
  %v303 = vld [vmem:[%s1 + $0x80] sm:$0xf]
  %v304 = vld [vmem:[%s1 + $0x84] sm:$0xf]
  %v305 = vld [vmem:[%s1 + $0x88] sm:$0xf]
  %v306 = vld [vmem:[%s1 + $0x8c] sm:$0xf]
  %v307 = vld [vmem:[%s1 + $0x90] sm:$0xf]
  %v308 = vld [vmem:[%s1 + $0x94] sm:$0xf]
  %v309 = vld [vmem:[%s1 + $0x98] sm:$0xf]
  %v310 = vld [vmem:[%s1 + $0x9c] sm:$0xf]
  %v311 = vld [vmem:[%s1 + $0xa0] sm:$0xf]
  %v312 = vld [vmem:[%s1 + $0xa4] sm:$0xf]
  %v313 = vld [vmem:[%s1 + $0xa8] sm:$0xf]
  %v314 = vld [vmem:[%s1 + $0xac] sm:$0xf]
  %v315 = vld [vmem:[%s1 + $0xb0] sm:$0xf]
  %v316 = vld [vmem:[%s1 + $0xb4] sm:$0xf]
  %v317 = vld [vmem:[%s1 + $0xb8] sm:$0xf]
  %v318 = vld [vmem:[%s1 + $0xbc] sm:$0xf]
  %v319 = vld [vmem:[%s1 + $0xc0] sm:$0xf]
  %v320 = vld [vmem:[%s1 + $0xc4] sm:$0xf]
  %v321 = vld [vmem:[%s1 + $0xc8] sm:$0xf]
  %v322 = vld [vmem:[%s1 + $0xcc] sm:$0xf]
  %v323 = vld [vmem:[%s1 + $0xd0] sm:$0xf]
  %v324 = vld [vmem:[%s1 + $0xd4] sm:$0xf]
  %v325 = vld [vmem:[%s1 + $0xd8] sm:$0xf]
  %v326 = vld [vmem:[%s1 + $0xdc] sm:$0xf]
  %v327 = vld [vmem:[%s1 + $0xe0] sm:$0xf]
  %v328 = vld [vmem:[%s1 + $0xe4] sm:$0xf]
  %v329 = vld [vmem:[%s1 + $0xe8] sm:$0xf]
  %v330 = vld [vmem:[%s1 + $0xec] sm:$0xf]
  %v331 = vld [vmem:[%s1 + $0xf0] sm:$0xf]
  %v332 = vld [vmem:[%s1 + $0xf4] sm:$0xf]
  %v333 = vld [vmem:[%s1 + $0xf8] sm:$0xf]
  %v334 = vld [vmem:[%s1 + $0xfc] sm:$0xf]
  %v335 = vld [vmem:[%s1 + $0x100] sm:$0xf]
  %v336 = vld [vmem:[%s1 + $0x104] sm:$0xf]
  %v337 = vld [vmem:[%s1 + $0x108] sm:$0xf]
  %v338 = vld [vmem:[%s1 + $0x10c] sm:$0xf]
  %v339 = vld [vmem:[%s1 + $0x110] sm:$0xf]
  %v340 = vld [vmem:[%s1 + $0x114] sm:$0xf]
  %v341 = vld [vmem:[%s1 + $0x118] sm:$0xf]
  %v342 = vld [vmem:[%s1 + $0x11c] sm:$0xf]
  %v343 = vld [vmem:[%s1 + $0x120] sm:$0xf]
  %v344 = vld [vmem:[%s1 + $0x124] sm:$0xf]
  %v345 = vld [vmem:[%s1 + $0x128] sm:$0xf]
  %v346 = vld [vmem:[%s1 + $0x12c] sm:$0xf]
  %v347 = vld [vmem:[%s1 + $0x130] sm:$0xf]
  %v348 = vld [vmem:[%s1 + $0x134] sm:$0xf]
  %v349 = vld [vmem:[%s1 + $0x138] sm:$0xf]
  %v350 = vld [vmem:[%s1 + $0x13c] sm:$0xf]
  %v351 = vld [vmem:[%s1 + $0x140] sm:$0xf]
  %v352 = vld [vmem:[%s1 + $0x144] sm:$0xf]
  %v353 = vld [vmem:[%s1 + $0x148] sm:$0xf]
  %v354 = vld [vmem:[%s1 + $0x14c] sm:$0xf]
  %v355 = vld [vmem:[%s1 + $0x150] sm:$0xf]
  %v356 = vld [vmem:[%s1 + $0x154] sm:$0xf]
  %v357 = vld [vmem:[%s1 + $0x158] sm:$0xf]
  %v358 = vld [vmem:[%s1 + $0x15c] sm:$0xf]
  %v359 = vld [vmem:[%s1 + $0x160] sm:$0xf]
  %v360 = vld [vmem:[%s1 + $0x164] sm:$0xf]
  %v361 = vld [vmem:[%s1 + $0x168] sm:$0xf]
  %v362 = vld [vmem:[%s1 + $0x16c] sm:$0xf]
  %v363 = vld [vmem:[%s1 + $0x170] sm:$0xf]
  %v364 = vld [vmem:[%s1 + $0x174] sm:$0xf]
  %v365 = vld [vmem:[%s1 + $0x178] sm:$0xf]
  %v366 = vld [vmem:[%s1 + $0x17c] sm:$0xf]
  %v367 = vld [vmem:[%s1 + $0x180] sm:$0xf]
  %v368 = vld [vmem:[%s1 + $0x184] sm:$0xf]
  %v369 = vld [vmem:[%s1 + $0x188] sm:$0xf]
  %v370 = vld [vmem:[%s1 + $0x18c] sm:$0xf]
  %v371 = vld [vmem:[%s1 + $0x190] sm:$0xf]
  %v372 = vld [vmem:[%s1 + $0x194] sm:$0xf]
  %v373 = vld [vmem:[%s1 + $0x198] sm:$0xf]
  %v374 = vld [vmem:[%s1 + $0x19c] sm:$0xf]
  %v375 = vld [vmem:[%s1 + $0x1a0] sm:$0xf]
  %v376 = vld [vmem:[%s1 + $0x1a4] sm:$0xf]
  %v377 = vld [vmem:[%s1 + $0x1a8] sm:$0xf]
  %v378 = vld [vmem:[%s1 + $0x1ac] sm:$0xf]
  %v379 = vld [vmem:[%s1 + $0x1b0] sm:$0xf]
  %v380 = vld [vmem:[%s1 + $0x1b4] sm:$0xf]
  %v381 = vld [vmem:[%s1 + $0x1b8] sm:$0xf]
  %v382 = vld [vmem:[%s1 + $0x1bc] sm:$0xf]
  %v383 = vld [vmem:[%s1 + $0x1c0] sm:$0xf]
  %v384 = vld [vmem:[%s1 + $0x1c4] sm:$0xf]
  %v385 = vld [vmem:[%s1 + $0x1c8] sm:$0xf]
  %v386 = vld [vmem:[%s1 + $0x1cc] sm:$0xf]
  %v387 = vld [vmem:[%s1 + $0x1d0] sm:$0xf]
  %v388 = vld [vmem:[%s1 + $0x1d4] sm:$0xf]
  %v389 = vld [vmem:[%s1 + $0x1d8] sm:$0xf]
  %v390 = vld [vmem:[%s1 + $0x1dc] sm:$0xf]
  %v391 = vld [vmem:[%s1 + $0x1e0] sm:$0xf]
  %v392 = vld [vmem:[%s1 + $0x1e4] sm:$0xf]
  %v393 = vld [vmem:[%s1 + $0x1e8] sm:$0xf]
  %v394 = vld [vmem:[%s1 + $0x1ec] sm:$0xf]
  %v395 = vld [vmem:[%s1 + $0x1f0] sm:$0xf]
  %v396 = vld [vmem:[%s1 + $0x1f4] sm:$0xf]
  %v397 = vld [vmem:[%s1 + $0x1f8] sm:$0xf]
  %v398 = vld [vmem:[%s1 + $0x1fc] sm:$0xf]
  %v399 = vld [vmem:[%s2] sm:$0x1]
  %v401 = vlaneseq
  %v402 = vshrl.u32 %v401, 7
  %v403 = vsub.s32 0, %v402
  %v404 = vrot.slane %v399, %v403
  %v534 = vunpack.c.l.b16 %v271
  %v535 = vunpack.c.l.b16 %v272
  %v536 = vunpack.c.l.b16 %v273
  %v537 = vunpack.c.l.b16 %v274
  %v538 = vunpack.c.l.b16 %v275
  %v539 = vunpack.c.l.b16 %v276
  %v540 = vunpack.c.l.b16 %v277
  %v541 = vunpack.c.l.b16 %v278
  %v542 = vunpack.c.l.b16 %v279
  %v543 = vunpack.c.l.b16 %v280
  %v544 = vunpack.c.l.b16 %v281
  %v545 = vunpack.c.l.b16 %v282
  %v546 = vunpack.c.l.b16 %v283
  %v547 = vunpack.c.l.b16 %v284
  %v548 = vunpack.c.l.b16 %v285
  %v549 = vunpack.c.l.b16 %v286
  %v550 = vunpack.c.l.b16 %v287
  %v551 = vunpack.c.l.b16 %v288
  %v552 = vunpack.c.l.b16 %v289
  %v553 = vunpack.c.l.b16 %v290
  %v554 = vunpack.c.l.b16 %v291
  %v555 = vunpack.c.l.b16 %v292
  %v556 = vunpack.c.l.b16 %v293
  %v557 = vunpack.c.l.b16 %v294
  %v558 = vunpack.c.l.b16 %v295
  %v559 = vunpack.c.l.b16 %v296
  %v560 = vunpack.c.l.b16 %v297
  %v561 = vunpack.c.l.b16 %v298
  %v562 = vunpack.c.l.b16 %v299
  %v563 = vunpack.c.l.b16 %v300
  %v564 = vunpack.c.l.b16 %v301
  %v565 = vunpack.c.l.b16 %v302
  %v566 = vunpack.c.l.b16 %v303
  %v567 = vunpack.c.l.b16 %v304
  %v568 = vunpack.c.l.b16 %v305
  %v569 = vunpack.c.l.b16 %v306
  %v570 = vunpack.c.l.b16 %v307
  %v571 = vunpack.c.l.b16 %v308
  %v572 = vunpack.c.l.b16 %v309
  %v573 = vunpack.c.l.b16 %v310
  %v574 = vunpack.c.l.b16 %v311
  %v575 = vunpack.c.l.b16 %v312
  %v576 = vunpack.c.l.b16 %v313
  %v577 = vunpack.c.l.b16 %v314
  %v578 = vunpack.c.l.b16 %v315
  %v579 = vunpack.c.l.b16 %v316
  %v580 = vunpack.c.l.b16 %v317
  %v581 = vunpack.c.l.b16 %v318
  %v582 = vunpack.c.l.b16 %v319
  %v583 = vunpack.c.l.b16 %v320
  %v584 = vunpack.c.l.b16 %v321
  %v585 = vunpack.c.l.b16 %v322
  %v586 = vunpack.c.l.b16 %v323
  %v587 = vunpack.c.l.b16 %v324
  %v588 = vunpack.c.l.b16 %v325
  %v589 = vunpack.c.l.b16 %v326
  %v590 = vunpack.c.l.b16 %v327
  %v591 = vunpack.c.l.b16 %v328
  %v592 = vunpack.c.l.b16 %v329
  %v593 = vunpack.c.l.b16 %v330
  %v594 = vunpack.c.l.b16 %v331
  %v595 = vunpack.c.l.b16 %v332
  %v596 = vunpack.c.l.b16 %v333
  %v597 = vunpack.c.l.b16 %v334
  %v598 = vunpack.c.l.b16 %v335
  %v599 = vunpack.c.l.b16 %v336
  %v600 = vunpack.c.l.b16 %v337
  %v601 = vunpack.c.l.b16 %v338
  %v602 = vunpack.c.l.b16 %v339
  %v603 = vunpack.c.l.b16 %v340
  %v604 = vunpack.c.l.b16 %v341
  %v605 = vunpack.c.l.b16 %v342
  %v606 = vunpack.c.l.b16 %v343
  %v607 = vunpack.c.l.b16 %v344
  %v608 = vunpack.c.l.b16 %v345
  %v609 = vunpack.c.l.b16 %v346
  %v610 = vunpack.c.l.b16 %v347
  %v611 = vunpack.c.l.b16 %v348
  %v612 = vunpack.c.l.b16 %v349
  %v613 = vunpack.c.l.b16 %v350
  %v614 = vunpack.c.l.b16 %v351
  %v615 = vunpack.c.l.b16 %v352
  %v616 = vunpack.c.l.b16 %v353
  %v617 = vunpack.c.l.b16 %v354
  %v618 = vunpack.c.l.b16 %v355
  %v619 = vunpack.c.l.b16 %v356
  %v620 = vunpack.c.l.b16 %v357
  %v621 = vunpack.c.l.b16 %v358
  %v622 = vunpack.c.l.b16 %v359
  %v623 = vunpack.c.l.b16 %v360
  %v624 = vunpack.c.l.b16 %v361
  %v625 = vunpack.c.l.b16 %v362
  %v626 = vunpack.c.l.b16 %v363
  %v627 = vunpack.c.l.b16 %v364
  %v628 = vunpack.c.l.b16 %v365
  %v629 = vunpack.c.l.b16 %v366
  %v630 = vunpack.c.l.b16 %v367
  %v631 = vunpack.c.l.b16 %v368
  %v632 = vunpack.c.l.b16 %v369
  %v633 = vunpack.c.l.b16 %v370
  %v634 = vunpack.c.l.b16 %v371
  %v635 = vunpack.c.l.b16 %v372
  %v636 = vunpack.c.l.b16 %v373
  %v637 = vunpack.c.l.b16 %v374
  %v638 = vunpack.c.l.b16 %v375
  %v639 = vunpack.c.l.b16 %v376
  %v640 = vunpack.c.l.b16 %v377
  %v641 = vunpack.c.l.b16 %v378
  %v642 = vunpack.c.l.b16 %v379
  %v643 = vunpack.c.l.b16 %v380
  %v644 = vunpack.c.l.b16 %v381
  %v645 = vunpack.c.l.b16 %v382
  %v646 = vunpack.c.l.b16 %v383
  %v647 = vunpack.c.l.b16 %v384
  %v648 = vunpack.c.l.b16 %v385
  %v649 = vunpack.c.l.b16 %v386
  %v650 = vunpack.c.l.b16 %v387
  %v651 = vunpack.c.l.b16 %v388
  %v652 = vunpack.c.l.b16 %v389
  %v653 = vunpack.c.l.b16 %v390
  %v654 = vunpack.c.l.b16 %v391
  %v655 = vunpack.c.l.b16 %v392
  %v656 = vunpack.c.l.b16 %v393
  %v657 = vunpack.c.l.b16 %v394
  %v658 = vunpack.c.l.b16 %v395
  %v659 = vunpack.c.l.b16 %v396
  %v660 = vunpack.c.l.b16 %v397
  %v661 = vunpack.c.l.b16 %v398
  %v662 = vpack.c.b16 %v535, %v534
  %v663 = vpack.c.b16 %v537, %v536
  %v664 = vpack.c.b16 %v539, %v538
  %v665 = vpack.c.b16 %v541, %v540
  %v666 = vpack.c.b16 %v543, %v542
  %v667 = vpack.c.b16 %v545, %v544
  %v668 = vpack.c.b16 %v547, %v546
  %v669 = vpack.c.b16 %v549, %v548
  %v670 = vpack.c.b16 %v551, %v550
  %v671 = vpack.c.b16 %v553, %v552
  %v672 = vpack.c.b16 %v555, %v554
  %v673 = vpack.c.b16 %v557, %v556
  %v674 = vpack.c.b16 %v559, %v558
  %v675 = vpack.c.b16 %v561, %v560
  %v676 = vpack.c.b16 %v563, %v562
  %v677 = vpack.c.b16 %v565, %v564
  %v678 = vpack.c.b16 %v567, %v566
  %v679 = vpack.c.b16 %v569, %v568
  %v680 = vpack.c.b16 %v571, %v570
  %v681 = vpack.c.b16 %v573, %v572
  %v682 = vpack.c.b16 %v575, %v574
  %v683 = vpack.c.b16 %v577, %v576
  %v684 = vpack.c.b16 %v579, %v578
  %v685 = vpack.c.b16 %v581, %v580
  %v686 = vpack.c.b16 %v583, %v582
  %v687 = vpack.c.b16 %v585, %v584
  %v688 = vpack.c.b16 %v587, %v586
  %v689 = vpack.c.b16 %v589, %v588
  %v690 = vpack.c.b16 %v591, %v590
  %v691 = vpack.c.b16 %v593, %v592
  %v692 = vpack.c.b16 %v595, %v594
  %v693 = vpack.c.b16 %v597, %v596
  %v694 = vpack.c.b16 %v599, %v598
  %v695 = vpack.c.b16 %v601, %v600
  %v696 = vpack.c.b16 %v603, %v602
  %v697 = vpack.c.b16 %v605, %v604
  %v698 = vpack.c.b16 %v607, %v606
  %v699 = vpack.c.b16 %v609, %v608
  %v700 = vpack.c.b16 %v611, %v610
  %v701 = vpack.c.b16 %v613, %v612
  %v702 = vpack.c.b16 %v615, %v614
  %v703 = vpack.c.b16 %v617, %v616
  %v704 = vpack.c.b16 %v619, %v618
  %v705 = vpack.c.b16 %v621, %v620
  %v706 = vpack.c.b16 %v623, %v622
  %v707 = vpack.c.b16 %v625, %v624
  %v708 = vpack.c.b16 %v627, %v626
  %v709 = vpack.c.b16 %v629, %v628
  %v710 = vpack.c.b16 %v631, %v630
  %v711 = vpack.c.b16 %v633, %v632
  %v712 = vpack.c.b16 %v635, %v634
  %v713 = vpack.c.b16 %v637, %v636
  %v714 = vpack.c.b16 %v639, %v638
  %v715 = vpack.c.b16 %v641, %v640
  %v716 = vpack.c.b16 %v643, %v642
  %v717 = vpack.c.b16 %v645, %v644
  %v718 = vpack.c.b16 %v647, %v646
  %v719 = vpack.c.b16 %v649, %v648
  %v720 = vpack.c.b16 %v651, %v650
  %v721 = vpack.c.b16 %v653, %v652
  %v722 = vpack.c.b16 %v655, %v654
  %v723 = vpack.c.b16 %v657, %v656
  %v724 = vpack.c.b16 %v659, %v658
  %v725 = vpack.c.b16 %v661, %v660
  %790 = vmatprep.subr.bf16.mxu0 0
  %791 = vmatpush1.bf16.msra.mxu0 %v662
  %792 = vmatprep.subr.bf16.mxu0 0
  %793 = vmatpush1.bf16.msra.mxu0 %v663
  %794 = vmatprep.subr.bf16.mxu0 0
  %795 = vmatpush1.bf16.msra.mxu0 %v664
  %796 = vmatprep.subr.bf16.mxu0 0
  %797 = vmatpush1.bf16.msra.mxu0 %v665
  %798 = vmatprep.subr.bf16.mxu0 0
  %799 = vmatpush1.bf16.msra.mxu0 %v666
  %800 = vmatprep.subr.bf16.mxu0 0
  %801 = vmatpush1.bf16.msra.mxu0 %v667
  %802 = vmatprep.subr.bf16.mxu0 0
  %803 = vmatpush1.bf16.msra.mxu0 %v668
  %804 = vmatprep.subr.bf16.mxu0 0
  %805 = vmatpush1.bf16.msra.mxu0 %v669
  %806 = vmatprep.subr.bf16.mxu0 0
  %807 = vmatpush1.bf16.msra.mxu0 %v670
  %808 = vmatprep.subr.bf16.mxu0 0
  %809 = vmatpush1.bf16.msra.mxu0 %v671
  %810 = vmatprep.subr.bf16.mxu0 0
  %811 = vmatpush1.bf16.msra.mxu0 %v672
  %812 = vmatprep.subr.bf16.mxu0 0
  %813 = vmatpush1.bf16.msra.mxu0 %v673
  %814 = vmatprep.subr.bf16.mxu0 0
  %815 = vmatpush1.bf16.msra.mxu0 %v674
  %816 = vmatprep.subr.bf16.mxu0 0
  %817 = vmatpush1.bf16.msra.mxu0 %v675
  %818 = vmatprep.subr.bf16.mxu0 0
  %819 = vmatpush1.bf16.msra.mxu0 %v676
  %820 = vmatprep.subr.bf16.mxu0 0
  %821 = vmatpush1.bf16.msra.mxu0 %v677
  %822 = vmatprep.mubr.bf16.mxu0 %v184
  %823 = vmatmul.mubr.bf16.gmra.mrb[0].mxu0 %v183
  %v824 = vpop.f32.mrb[0].mxu0
  %v825 = vadd.f32 %v404, %v824
  %v826 = vpop.f32.mrb[0].mxu0
  %v827 = vpop.f32.mrb[0].mxu0
  %v828 = vadd.f32 %v404, %v827
  %v829 = vpop.f32.mrb[0].mxu0
  %830 = vmatprep.mubr.bf16.mxu0 %v192
  %831 = vmatmul.mubr.bf16.gmra.mrb[0].mxu0 %v191
  %v832 = vpop.f32.mrb[0].mxu0
  %v833 = vadd.f32 %v404, %v832
  %v834 = vpop.f32.mrb[0].mxu0
  %v835 = vpop.f32.mrb[0].mxu0
  %v836 = vadd.f32 %v404, %v835
  %v837 = vpop.f32.mrb[0].mxu0
  %838 = vmatprep.mubr.bf16.mxu0 %v200
  %839 = vmatmul.mubr.bf16.gmra.mrb[0].mxu0 %v199
  %v840 = vpop.f32.mrb[0].mxu0
  %v841 = vadd.f32 %v404, %v840
  %v842 = vpop.f32.mrb[0].mxu0
  %v843 = vpop.f32.mrb[0].mxu0
  %v844 = vadd.f32 %v404, %v843
  %v845 = vpop.f32.mrb[0].mxu0
  %846 = vmatprep.mubr.bf16.mxu0 %v208
  %847 = vmatmul.mubr.bf16.gmra.mrb[0].mxu0 %v207
  %v848 = vpop.f32.mrb[0].mxu0
  %v849 = vadd.f32 %v404, %v848
  %v850 = vpop.f32.mrb[0].mxu0
  %v851 = vpop.f32.mrb[0].mxu0
  %v852 = vadd.f32 %v404, %v851
  %v853 = vpop.f32.mrb[0].mxu0
  %854 = vmatprep.mubr.bf16.mxu0 %v216
  %855 = vmatmul.mubr.bf16.gmra.mrb[0].mxu0 %v215
  %v856 = vpop.f32.mrb[0].mxu0
  %v857 = vadd.f32 %v404, %v856
  %v858 = vpop.f32.mrb[0].mxu0
  %v859 = vpop.f32.mrb[0].mxu0
  %v860 = vadd.f32 %v404, %v859
  %v861 = vpop.f32.mrb[0].mxu0
  %862 = vmatprep.mubr.bf16.mxu0 %v224
  %863 = vmatmul.mubr.bf16.gmra.mrb[0].mxu0 %v223
  %v864 = vpop.f32.mrb[0].mxu0
  %v865 = vadd.f32 %v404, %v864
  %v866 = vpop.f32.mrb[0].mxu0
  %v867 = vpop.f32.mrb[0].mxu0
  %v868 = vadd.f32 %v404, %v867
  %v869 = vpop.f32.mrb[0].mxu0
  %870 = vmatprep.mubr.bf16.mxu0 %v232
  %871 = vmatmul.mubr.bf16.gmra.mrb[0].mxu0 %v231
  %v872 = vpop.f32.mrb[0].mxu0
  %v873 = vadd.f32 %v404, %v872
  %v874 = vpop.f32.mrb[0].mxu0
  %v875 = vpop.f32.mrb[0].mxu0
  %v876 = vadd.f32 %v404, %v875
  %v877 = vpop.f32.mrb[0].mxu0
  %878 = vmatprep.mubr.bf16.mxu0 %v240
  %879 = vmatmul.mubr.bf16.gmra.mrb[0].mxu0 %v239
  %v880 = vpop.f32.mrb[0].mxu0
  %v881 = vadd.f32 %v404, %v880
  %v882 = vpop.f32.mrb[0].mxu0
  %v883 = vpop.f32.mrb[0].mxu0
  %v884 = vadd.f32 %v404, %v883
  %v885 = vpop.f32.mrb[0].mxu0
  %886 = vmatprep.mubr.bf16.mxu0 %v248
  %887 = vmatmul.mubr.bf16.gmra.mrb[0].mxu0 %v247
  %v888 = vpop.f32.mrb[0].mxu0
  %v889 = vadd.f32 %v404, %v888
  %v890 = vpop.f32.mrb[0].mxu0
  %v891 = vpop.f32.mrb[0].mxu0
  %v892 = vadd.f32 %v404, %v891
  %v893 = vpop.f32.mrb[0].mxu0
  %894 = vmatprep.mubr.bf16.mxu0 %v256
  %895 = vmatmul.mubr.bf16.gmra.mrb[0].mxu0 %v255
  %v896 = vpop.f32.mrb[0].mxu0
  %v897 = vadd.f32 %v404, %v896
  %v898 = vpop.f32.mrb[0].mxu0
  %v899 = vpop.f32.mrb[0].mxu0
  %v900 = vadd.f32 %v404, %v899
  %v901 = vpop.f32.mrb[0].mxu0
  %902 = vmatprep.mubr.bf16.mxu0 %v264
  %903 = vmatmul.mubr.bf16.gmra.mrb[0].mxu0 %v263
  %v904 = vpop.f32.mrb[0].mxu0
  %v905 = vadd.f32 %v404, %v904
  %v906 = vpop.f32.mrb[0].mxu0
  %v907 = vpop.f32.mrb[0].mxu0
  %v908 = vpop.f32.mrb[0].mxu0
  %909 = vdwg.mxu0
  %910 = vmatprep.subr.bf16.mxu0 0
  %911 = vmatpush1.bf16.msra.mxu0 %v678
  %912 = vmatprep.subr.bf16.mxu0 0
  %913 = vmatpush1.bf16.msra.mxu0 %v679
  %914 = vmatprep.subr.bf16.mxu0 0
  %915 = vmatpush1.bf16.msra.mxu0 %v680
  %916 = vmatprep.subr.bf16.mxu0 0
  %917 = vmatpush1.bf16.msra.mxu0 %v681
  %918 = vmatprep.subr.bf16.mxu0 0
  %919 = vmatpush1.bf16.msra.mxu0 %v682
  %920 = vmatprep.subr.bf16.mxu0 0
  %921 = vmatpush1.bf16.msra.mxu0 %v683
  %922 = vmatprep.subr.bf16.mxu0 0
  %923 = vmatpush1.bf16.msra.mxu0 %v684
  %924 = vmatprep.subr.bf16.mxu0 0
  %925 = vmatpush1.bf16.msra.mxu0 %v685
  %926 = vmatprep.subr.bf16.mxu0 0
  %927 = vmatpush1.bf16.msra.mxu0 %v686
  %928 = vmatprep.subr.bf16.mxu0 0
  %929 = vmatpush1.bf16.msra.mxu0 %v687
  %930 = vmatprep.subr.bf16.mxu0 0
  %931 = vmatpush1.bf16.msra.mxu0 %v688
  %932 = vmatprep.subr.bf16.mxu0 0
  %933 = vmatpush1.bf16.msra.mxu0 %v689
  %934 = vmatprep.subr.bf16.mxu0 0
  %935 = vmatpush1.bf16.msra.mxu0 %v690
  %936 = vmatprep.subr.bf16.mxu0 0
  %937 = vmatpush1.bf16.msra.mxu0 %v691
  %938 = vmatprep.subr.bf16.mxu0 0
  %939 = vmatpush1.bf16.msra.mxu0 %v692
  %940 = vmatprep.subr.bf16.mxu0 0
  %941 = vmatpush1.bf16.msra.mxu0 %v693
  %942 = vmatprep.mubr.bf16.mxu0 %v186
  %943 = vmatmul.mubr.bf16.gmra.mrb[0].mxu0 %v185
  %v944 = vpop.f32.mrb[0].mxu0
  %v945 = vadd.f32 %v825, %v944
  %v946 = vpop.f32.mrb[0].mxu0
  %v947 = vpop.f32.mrb[0].mxu0
  %v948 = vadd.f32 %v828, %v947
  %v949 = vpop.f32.mrb[0].mxu0
  %950 = vmatprep.mubr.bf16.mxu0 %v194
  %951 = vmatmul.mubr.bf16.gmra.mrb[0].mxu0 %v193
  %v952 = vpop.f32.mrb[0].mxu0
  %v953 = vadd.f32 %v833, %v952
  %v954 = vpop.f32.mrb[0].mxu0
  %v955 = vpop.f32.mrb[0].mxu0
  %v956 = vadd.f32 %v836, %v955
  %v957 = vpop.f32.mrb[0].mxu0
  %958 = vmatprep.mubr.bf16.mxu0 %v202
  %959 = vmatmul.mubr.bf16.gmra.mrb[0].mxu0 %v201
  %v960 = vpop.f32.mrb[0].mxu0
  %v961 = vadd.f32 %v841, %v960
  %v962 = vpop.f32.mrb[0].mxu0
  %v963 = vpop.f32.mrb[0].mxu0
  %v964 = vadd.f32 %v844, %v963
  %v965 = vpop.f32.mrb[0].mxu0
  %966 = vmatprep.mubr.bf16.mxu0 %v210
  %967 = vmatmul.mubr.bf16.gmra.mrb[0].mxu0 %v209
  %v968 = vpop.f32.mrb[0].mxu0
  %v969 = vadd.f32 %v849, %v968
  %v970 = vpop.f32.mrb[0].mxu0
  %v971 = vpop.f32.mrb[0].mxu0
  %v972 = vadd.f32 %v852, %v971
  %v973 = vpop.f32.mrb[0].mxu0
  %974 = vmatprep.mubr.bf16.mxu0 %v218
  %975 = vmatmul.mubr.bf16.gmra.mrb[0].mxu0 %v217
  %v976 = vpop.f32.mrb[0].mxu0
  %v977 = vadd.f32 %v857, %v976
  %v978 = vpop.f32.mrb[0].mxu0
  %v979 = vpop.f32.mrb[0].mxu0
  %v980 = vadd.f32 %v860, %v979
  %v981 = vpop.f32.mrb[0].mxu0
  %982 = vmatprep.mubr.bf16.mxu0 %v226
  %983 = vmatmul.mubr.bf16.gmra.mrb[0].mxu0 %v225
  %v984 = vpop.f32.mrb[0].mxu0
  %v985 = vadd.f32 %v865, %v984
  %v986 = vpop.f32.mrb[0].mxu0
  %v987 = vpop.f32.mrb[0].mxu0
  %v988 = vadd.f32 %v868, %v987
  %v989 = vpop.f32.mrb[0].mxu0
  %990 = vmatprep.mubr.bf16.mxu0 %v234
  %991 = vmatmul.mubr.bf16.gmra.mrb[0].mxu0 %v233
  %v992 = vpop.f32.mrb[0].mxu0
  %v993 = vadd.f32 %v873, %v992
  %v994 = vpop.f32.mrb[0].mxu0
  %v995 = vpop.f32.mrb[0].mxu0
  %v996 = vadd.f32 %v876, %v995
  %v997 = vpop.f32.mrb[0].mxu0
  %998 = vmatprep.mubr.bf16.mxu0 %v242
  %999 = vmatmul.mubr.bf16.gmra.mrb[0].mxu0 %v241
  %v1000 = vpop.f32.mrb[0].mxu0
  %v1001 = vadd.f32 %v881, %v1000
  %v1002 = vpop.f32.mrb[0].mxu0
  %v1003 = vpop.f32.mrb[0].mxu0
  %v1004 = vadd.f32 %v884, %v1003
  %v1005 = vpop.f32.mrb[0].mxu0
  %1006 = vmatprep.mubr.bf16.mxu0 %v250
  %1007 = vmatmul.mubr.bf16.gmra.mrb[0].mxu0 %v249
  %v1008 = vpop.f32.mrb[0].mxu0
  %v1009 = vadd.f32 %v889, %v1008
  %v1010 = vpop.f32.mrb[0].mxu0
  %v1011 = vpop.f32.mrb[0].mxu0
  %v1012 = vadd.f32 %v892, %v1011
  %v1013 = vpop.f32.mrb[0].mxu0
  %1014 = vmatprep.mubr.bf16.mxu0 %v258
  %1015 = vmatmul.mubr.bf16.gmra.mrb[0].mxu0 %v257
  %v1016 = vpop.f32.mrb[0].mxu0
  %v1017 = vadd.f32 %v897, %v1016
  %v1018 = vpop.f32.mrb[0].mxu0
  %v1019 = vpop.f32.mrb[0].mxu0
  %v1020 = vadd.f32 %v900, %v1019
  %v1021 = vpop.f32.mrb[0].mxu0
  %1022 = vmatprep.mubr.bf16.mxu0 %v266
  %1023 = vmatmul.mubr.bf16.gmra.mrb[0].mxu0 %v265
  %v1024 = vpop.f32.mrb[0].mxu0
  %v1025 = vadd.f32 %v905, %v1024
  %v1026 = vpop.f32.mrb[0].mxu0
  %v1027 = vpop.f32.mrb[0].mxu0
  %v1028 = vpop.f32.mrb[0].mxu0
  %1029 = vdwg.mxu0
  %1030 = vmatprep.subr.bf16.mxu0 0
  %1031 = vmatpush1.bf16.msra.mxu0 %v694
  %1032 = vmatprep.subr.bf16.mxu0 0
  %1033 = vmatpush1.bf16.msra.mxu0 %v695
  %1034 = vmatprep.subr.bf16.mxu0 0
  %1035 = vmatpush1.bf16.msra.mxu0 %v696
  %1036 = vmatprep.subr.bf16.mxu0 0
  %1037 = vmatpush1.bf16.msra.mxu0 %v697
  %1038 = vmatprep.subr.bf16.mxu0 0
  %1039 = vmatpush1.bf16.msra.mxu0 %v698
  %1040 = vmatprep.subr.bf16.mxu0 0
  %1041 = vmatpush1.bf16.msra.mxu0 %v699
  %1042 = vmatprep.subr.bf16.mxu0 0
  %1043 = vmatpush1.bf16.msra.mxu0 %v700
  %1044 = vmatprep.subr.bf16.mxu0 0
  %1045 = vmatpush1.bf16.msra.mxu0 %v701
  %1046 = vmatprep.subr.bf16.mxu0 0
  %1047 = vmatpush1.bf16.msra.mxu0 %v702
  %1048 = vmatprep.subr.bf16.mxu0 0
  %1049 = vmatpush1.bf16.msra.mxu0 %v703
  %1050 = vmatprep.subr.bf16.mxu0 0
  %1051 = vmatpush1.bf16.msra.mxu0 %v704
  %1052 = vmatprep.subr.bf16.mxu0 0
  %1053 = vmatpush1.bf16.msra.mxu0 %v705
  %1054 = vmatprep.subr.bf16.mxu0 0
  %1055 = vmatpush1.bf16.msra.mxu0 %v706
  %1056 = vmatprep.subr.bf16.mxu0 0
  %1057 = vmatpush1.bf16.msra.mxu0 %v707
  %1058 = vmatprep.subr.bf16.mxu0 0
  %1059 = vmatpush1.bf16.msra.mxu0 %v708
  %1060 = vmatprep.subr.bf16.mxu0 0
  %1061 = vmatpush1.bf16.msra.mxu0 %v709
  %1062 = vmatprep.mubr.bf16.mxu0 %v188
  %1063 = vmatmul.mubr.bf16.gmra.mrb[0].mxu0 %v187
  %v1064 = vpop.f32.mrb[0].mxu0
  %v1065 = vadd.f32 %v945, %v1064
  %v1066 = vpop.f32.mrb[0].mxu0
  %v1067 = vpop.f32.mrb[0].mxu0
  %v1068 = vadd.f32 %v948, %v1067
  %v1069 = vpop.f32.mrb[0].mxu0
  %1070 = vmatprep.mubr.bf16.mxu0 %v196
  %1071 = vmatmul.mubr.bf16.gmra.mrb[0].mxu0 %v195
  %v1072 = vpop.f32.mrb[0].mxu0
  %v1073 = vadd.f32 %v953, %v1072
  %v1074 = vpop.f32.mrb[0].mxu0
  %v1075 = vpop.f32.mrb[0].mxu0
  %v1076 = vadd.f32 %v956, %v1075
  %v1077 = vpop.f32.mrb[0].mxu0
  %1078 = vmatprep.mubr.bf16.mxu0 %v204
  %1079 = vmatmul.mubr.bf16.gmra.mrb[0].mxu0 %v203
  %v1080 = vpop.f32.mrb[0].mxu0
  %v1081 = vadd.f32 %v961, %v1080
  %v1082 = vpop.f32.mrb[0].mxu0
  %v1083 = vpop.f32.mrb[0].mxu0
  %v1084 = vadd.f32 %v964, %v1083
  %v1085 = vpop.f32.mrb[0].mxu0
  %1086 = vmatprep.mubr.bf16.mxu0 %v212
  %1087 = vmatmul.mubr.bf16.gmra.mrb[0].mxu0 %v211
  %v1088 = vpop.f32.mrb[0].mxu0
  %v1089 = vadd.f32 %v969, %v1088
  %v1090 = vpop.f32.mrb[0].mxu0
  %v1091 = vpop.f32.mrb[0].mxu0
  %v1092 = vadd.f32 %v972, %v1091
  %v1093 = vpop.f32.mrb[0].mxu0
  %1094 = vmatprep.mubr.bf16.mxu0 %v220
  %1095 = vmatmul.mubr.bf16.gmra.mrb[0].mxu0 %v219
  %v1096 = vpop.f32.mrb[0].mxu0
  %v1097 = vadd.f32 %v977, %v1096
  %v1098 = vpop.f32.mrb[0].mxu0
  %v1099 = vpop.f32.mrb[0].mxu0
  %v1100 = vadd.f32 %v980, %v1099
  %v1101 = vpop.f32.mrb[0].mxu0
  %1102 = vmatprep.mubr.bf16.mxu0 %v228
  %1103 = vmatmul.mubr.bf16.gmra.mrb[0].mxu0 %v227
  %v1104 = vpop.f32.mrb[0].mxu0
  %v1105 = vadd.f32 %v985, %v1104
  %v1106 = vpop.f32.mrb[0].mxu0
  %v1107 = vpop.f32.mrb[0].mxu0
  %v1108 = vadd.f32 %v988, %v1107
  %v1109 = vpop.f32.mrb[0].mxu0
  %1110 = vmatprep.mubr.bf16.mxu0 %v236
  %1111 = vmatmul.mubr.bf16.gmra.mrb[0].mxu0 %v235
  %v1112 = vpop.f32.mrb[0].mxu0
  %v1113 = vadd.f32 %v993, %v1112
  %v1114 = vpop.f32.mrb[0].mxu0
  %v1115 = vpop.f32.mrb[0].mxu0
  %v1116 = vadd.f32 %v996, %v1115
  %v1117 = vpop.f32.mrb[0].mxu0
  %1118 = vmatprep.mubr.bf16.mxu0 %v244
  %1119 = vmatmul.mubr.bf16.gmra.mrb[0].mxu0 %v243
  %v1120 = vpop.f32.mrb[0].mxu0
  %v1121 = vadd.f32 %v1001, %v1120
  %v1122 = vpop.f32.mrb[0].mxu0
  %v1123 = vpop.f32.mrb[0].mxu0
  %v1124 = vadd.f32 %v1004, %v1123
  %v1125 = vpop.f32.mrb[0].mxu0
  %1126 = vmatprep.mubr.bf16.mxu0 %v252
  %1127 = vmatmul.mubr.bf16.gmra.mrb[0].mxu0 %v251
  %v1128 = vpop.f32.mrb[0].mxu0
  %v1129 = vadd.f32 %v1009, %v1128
  %v1130 = vpop.f32.mrb[0].mxu0
  %v1131 = vpop.f32.mrb[0].mxu0
  %v1132 = vadd.f32 %v1012, %v1131
  %v1133 = vpop.f32.mrb[0].mxu0
  %1134 = vmatprep.mubr.bf16.mxu0 %v260
  %1135 = vmatmul.mubr.bf16.gmra.mrb[0].mxu0 %v259
  %v1136 = vpop.f32.mrb[0].mxu0
  %v1137 = vadd.f32 %v1017, %v1136
  %v1138 = vpop.f32.mrb[0].mxu0
  %v1139 = vpop.f32.mrb[0].mxu0
  %v1140 = vadd.f32 %v1020, %v1139
  %v1141 = vpop.f32.mrb[0].mxu0
  %1142 = vmatprep.mubr.bf16.mxu0 %v268
  %1143 = vmatmul.mubr.bf16.gmra.mrb[0].mxu0 %v267
  %v1144 = vpop.f32.mrb[0].mxu0
  %v1145 = vadd.f32 %v1025, %v1144
  %v1146 = vpop.f32.mrb[0].mxu0
  %v1147 = vpop.f32.mrb[0].mxu0
  %v1148 = vpop.f32.mrb[0].mxu0
  %1149 = vdwg.mxu0
  %1150 = vmatprep.subr.bf16.mxu0 0
  %1151 = vmatpush1.bf16.msra.mxu0 %v710
  %1152 = vmatprep.subr.bf16.mxu0 0
  %1153 = vmatpush1.bf16.msra.mxu0 %v711
  %1154 = vmatprep.subr.bf16.mxu0 0
  %1155 = vmatpush1.bf16.msra.mxu0 %v712
  %1156 = vmatprep.subr.bf16.mxu0 0
  %1157 = vmatpush1.bf16.msra.mxu0 %v713
  %1158 = vmatprep.subr.bf16.mxu0 0
  %1159 = vmatpush1.bf16.msra.mxu0 %v714
  %1160 = vmatprep.subr.bf16.mxu0 0
  %1161 = vmatpush1.bf16.msra.mxu0 %v715
  %1162 = vmatprep.subr.bf16.mxu0 0
  %1163 = vmatpush1.bf16.msra.mxu0 %v716
  %1164 = vmatprep.subr.bf16.mxu0 0
  %1165 = vmatpush1.bf16.msra.mxu0 %v717
  %1166 = vmatprep.subr.bf16.mxu0 0
  %1167 = vmatpush1.bf16.msra.mxu0 %v718
  %1168 = vmatprep.subr.bf16.mxu0 0
  %1169 = vmatpush1.bf16.msra.mxu0 %v719
  %1170 = vmatprep.subr.bf16.mxu0 0
  %1171 = vmatpush1.bf16.msra.mxu0 %v720
  %1172 = vmatprep.subr.bf16.mxu0 0
  %1173 = vmatpush1.bf16.msra.mxu0 %v721
  %1174 = vmatprep.subr.bf16.mxu0 0
  %1175 = vmatpush1.bf16.msra.mxu0 %v722
  %1176 = vmatprep.subr.bf16.mxu0 0
  %1177 = vmatpush1.bf16.msra.mxu0 %v723
  %1178 = vmatprep.subr.bf16.mxu0 0
  %1179 = vmatpush1.bf16.msra.mxu0 %v724
  %1180 = vmatprep.subr.bf16.mxu0 0
  %1181 = vmatpush1.bf16.msra.mxu0 %v725
  %1182 = vmatprep.mubr.bf16.mxu0 %v190
  %1183 = vmatmul.mubr.bf16.gmra.mrb[0].mxu0 %v189
  %v1184 = vpop.f32.mrb[0].mxu0
  %v1185 = vadd.f32 %v1065, %v1184
  %v1186 = vpop.f32.mrb[0].mxu0
  %v1187 = vpop.f32.mrb[0].mxu0
  %v1188 = vadd.f32 %v1068, %v1187
  %v1189 = vpop.f32.mrb[0].mxu0
  %1190 = vmatprep.mubr.bf16.mxu0 %v198
  %1191 = vmatmul.mubr.bf16.gmra.mrb[0].mxu0 %v197
  %v1192 = vpop.f32.mrb[0].mxu0
  %v1193 = vadd.f32 %v1073, %v1192
  %v1194 = vpop.f32.mrb[0].mxu0
  %v1195 = vpop.f32.mrb[0].mxu0
  %v1196 = vadd.f32 %v1076, %v1195
  %v1197 = vpop.f32.mrb[0].mxu0
  %1198 = vmatprep.mubr.bf16.mxu0 %v206
  %1199 = vmatmul.mubr.bf16.gmra.mrb[0].mxu0 %v205
  %v1200 = vpop.f32.mrb[0].mxu0
  %v1201 = vadd.f32 %v1081, %v1200
  %v1202 = vpop.f32.mrb[0].mxu0
  %v1203 = vpop.f32.mrb[0].mxu0
  %v1204 = vadd.f32 %v1084, %v1203
  %v1205 = vpop.f32.mrb[0].mxu0
  %1206 = vmatprep.mubr.bf16.mxu0 %v214
  %1207 = vmatmul.mubr.bf16.gmra.mrb[0].mxu0 %v213
  %v1208 = vpop.f32.mrb[0].mxu0
  %v1209 = vadd.f32 %v1089, %v1208
  %v1210 = vpop.f32.mrb[0].mxu0
  %v1211 = vpop.f32.mrb[0].mxu0
  %v1212 = vadd.f32 %v1092, %v1211
  %v1213 = vpop.f32.mrb[0].mxu0
  %1214 = vmatprep.mubr.bf16.mxu0 %v222
  %1215 = vmatmul.mubr.bf16.gmra.mrb[0].mxu0 %v221
  %v1216 = vpop.f32.mrb[0].mxu0
  %v1217 = vadd.f32 %v1097, %v1216
  %v1218 = vpop.f32.mrb[0].mxu0
  %v1219 = vpop.f32.mrb[0].mxu0
  %v1220 = vadd.f32 %v1100, %v1219
  %v1221 = vpop.f32.mrb[0].mxu0
  %1222 = vmatprep.mubr.bf16.mxu0 %v230
  %1223 = vmatmul.mubr.bf16.gmra.mrb[0].mxu0 %v229
  %v1224 = vpop.f32.mrb[0].mxu0
  %v1225 = vadd.f32 %v1105, %v1224
  %v1226 = vpop.f32.mrb[0].mxu0
  %v1227 = vpop.f32.mrb[0].mxu0
  %v1228 = vadd.f32 %v1108, %v1227
  %v1229 = vpop.f32.mrb[0].mxu0
  %1230 = vmatprep.mubr.bf16.mxu0 %v238
  %1231 = vmatmul.mubr.bf16.gmra.mrb[0].mxu0 %v237
  %v1232 = vpop.f32.mrb[0].mxu0
  %v1233 = vadd.f32 %v1113, %v1232
  %v1234 = vpop.f32.mrb[0].mxu0
  %v1235 = vpop.f32.mrb[0].mxu0
  %v1236 = vadd.f32 %v1116, %v1235
  %v1237 = vpop.f32.mrb[0].mxu0
  %1238 = vmatprep.mubr.bf16.mxu0 %v246
  %1239 = vmatmul.mubr.bf16.gmra.mrb[0].mxu0 %v245
  %v1240 = vpop.f32.mrb[0].mxu0
  %v1241 = vadd.f32 %v1121, %v1240
  %v1242 = vpop.f32.mrb[0].mxu0
  %v1243 = vpop.f32.mrb[0].mxu0
  %v1244 = vadd.f32 %v1124, %v1243
  %v1245 = vpop.f32.mrb[0].mxu0
  %1246 = vmatprep.mubr.bf16.mxu0 %v254
  %1247 = vmatmul.mubr.bf16.gmra.mrb[0].mxu0 %v253
  %v1248 = vpop.f32.mrb[0].mxu0
  %v1249 = vadd.f32 %v1129, %v1248
  %v1250 = vpop.f32.mrb[0].mxu0
  %v1251 = vpop.f32.mrb[0].mxu0
  %v1252 = vadd.f32 %v1132, %v1251
  %v1253 = vpop.f32.mrb[0].mxu0
  %1254 = vmatprep.mubr.bf16.mxu0 %v262
  %1255 = vmatmul.mubr.bf16.gmra.mrb[0].mxu0 %v261
  %v1256 = vpop.f32.mrb[0].mxu0
  %v1257 = vadd.f32 %v1137, %v1256
  %v1258 = vpop.f32.mrb[0].mxu0
  %v1259 = vpop.f32.mrb[0].mxu0
  %v1260 = vadd.f32 %v1140, %v1259
  %v1261 = vpop.f32.mrb[0].mxu0
  %1262 = vmatprep.mubr.bf16.mxu0 %v270
  %1263 = vmatmul.mubr.bf16.gmra.mrb[0].mxu0 %v269
  %v1264 = vpop.f32.mrb[0].mxu0
  %v1265 = vadd.f32 %v1145, %v1264
  %v1266 = vpop.f32.mrb[0].mxu0
  %v1267 = vpop.f32.mrb[0].mxu0
  %v1268 = vpop.f32.mrb[0].mxu0
  %1269 = vdwg.mxu0
  %v1270 = vmax.f32 %v1185, 0.0
  %v1271 = vmax.f32 %v1188, 0.0
  %v1272 = vmax.f32 %v1193, 0.0
  %v1273 = vmax.f32 %v1196, 0.0
  %v1274 = vmax.f32 %v1201, 0.0
  %v1275 = vmax.f32 %v1204, 0.0
  %v1276 = vmax.f32 %v1209, 0.0
  %v1277 = vmax.f32 %v1212, 0.0
  %v1278 = vmax.f32 %v1217, 0.0
  %v1279 = vmax.f32 %v1220, 0.0
  %v1280 = vmax.f32 %v1225, 0.0
  %v1281 = vmax.f32 %v1228, 0.0
  %v1282 = vmax.f32 %v1233, 0.0
  %v1283 = vmax.f32 %v1236, 0.0
  %v1284 = vmax.f32 %v1241, 0.0
  %v1285 = vmax.f32 %v1244, 0.0
  %v1286 = vmax.f32 %v1249, 0.0
  %v1287 = vmax.f32 %v1252, 0.0
  %v1288 = vmax.f32 %v1257, 0.0
  %v1289 = vmax.f32 %v1260, 0.0
  %v1290 = vmax.f32 %v1265, 0.0
  %vm1291 = vcmask 523264
  %1292 = vst.msk [vmem:[%s3] sm:$0xff] %vm1291, %v1270
  %1293 = vst.msk [vmem:[%s3 + $0x8] sm:$0xff] %vm1291, %v1271
  %1294 = vst.msk [vmem:[%s3 + $0x10] sm:$0xff] %vm1291, %v1272
  %1295 = vst.msk [vmem:[%s3 + $0x18] sm:$0xff] %vm1291, %v1273
  %1296 = vst.msk [vmem:[%s3 + $0x20] sm:$0xff] %vm1291, %v1274
  %1297 = vst.msk [vmem:[%s3 + $0x28] sm:$0xff] %vm1291, %v1275
  %1298 = vst.msk [vmem:[%s3 + $0x30] sm:$0xff] %vm1291, %v1276
  %1299 = vst.msk [vmem:[%s3 + $0x38] sm:$0xff] %vm1291, %v1277
  %1300 = vst.msk [vmem:[%s3 + $0x40] sm:$0xff] %vm1291, %v1278
  %1301 = vst.msk [vmem:[%s3 + $0x48] sm:$0xff] %vm1291, %v1279
  %1302 = vst.msk [vmem:[%s3 + $0x50] sm:$0xff] %vm1291, %v1280
  %1303 = vst.msk [vmem:[%s3 + $0x58] sm:$0xff] %vm1291, %v1281
  %1304 = vst.msk [vmem:[%s3 + $0x60] sm:$0xff] %vm1291, %v1282
  %1305 = vst.msk [vmem:[%s3 + $0x68] sm:$0xff] %vm1291, %v1283
  %1306 = vst.msk [vmem:[%s3 + $0x70] sm:$0xff] %vm1291, %v1284
  %1307 = vst.msk [vmem:[%s3 + $0x78] sm:$0xff] %vm1291, %v1285
  %1308 = vst.msk [vmem:[%s3 + $0x80] sm:$0xff] %vm1291, %v1286
  %1309 = vst.msk [vmem:[%s3 + $0x88] sm:$0xff] %vm1291, %v1287
  %1310 = vst.msk [vmem:[%s3 + $0x90] sm:$0xff] %vm1291, %v1288
  %1311 = vst.msk [vmem:[%s3 + $0x98] sm:$0xff] %vm1291, %v1289
  %vm1312 = vcmask 517120
  %1313 = vst.msk [vmem:[%s3 + $0xa0] sm:$0x3] %vm1312, %v1290
  // Predicated region
  $region14: #{forward.6} parent=0 // pred_check
    _
  $region15: #{forward.6} parent=0 // pred_check_branch
    %1315 = sbr.rel (0) target = $region17
  $region16: #{forward.6} parent=0 // pred_region
    _
  $region17: #{forward.6} parent=0 // pred_fallthru
    _
  // Predicated region
  $region18: #{forward.6} parent=0 // pred_check
    _
  $region19: #{forward.6} parent=0 // pred_check_branch
    %1317 = sbr.rel (0) target = $region21
  $region20: #{forward.6} parent=0 // pred_region
    _
  $region21: #{forward.6} parent=0 // pred_fallthru
    _

// kernel: forward.7
$region0: #{forward.7}
  #allocation0 [shape = 'u32[]', space=smem, size = 0x4, offset = 0x4, fixed_abs, tag = 'smem constant byte address 0x4 - core index']
  #allocation1 [shape = 'u32[144,128]{1,0:T(1,128)}', space=vmem, size = 0x12000, scoped, tag = 'internal scratch']
  %s0 = inlined_call_operand.vmem [shape: f32[98,576], index: 0, kind: input, shape index: {}]
  %s1 = inlined_call_operand.vmem [shape: bf16[576,64], index: 1, kind: input, shape index: {}]
  %s2 = inlined_call_operand.vmem [shape: f32[1,64], index: 2, kind: input, shape index: {}]
  %s3 = inlined_call_operand.vmem [shape: f32[98,64], index: 3, kind: output, shape index: {}]
  %s4 = sld [smem:[#allocation0]]
  $region22: #{forward.7} parent=0
    _
  %s6 = ssub.s32 1, %s4
  %s7 = scalar_select 0, %s6, %s4
  // Predicated region
  $region2: #{forward.7} parent=0 // pred_check
    _
  $region3: #{forward.7} parent=0 // pred_check_branch
    %9 = sbr.rel (0) target = $region5
  $region4: #{forward.7} parent=0 // pred_region
    _
  $region5: #{forward.7} parent=0 // pred_fallthru
    _
  // Predicated region
  $region6: #{forward.7} parent=0 // pred_check
    _
  $region7: #{forward.7} parent=0 // pred_check_branch
    %11 = sbr.rel (0) target = $region9
  $region8: #{forward.7} parent=0 // pred_region
    _
  $region9: #{forward.7} parent=0 // pred_fallthru
    _
  // Predicated region
  $region10: #{forward.7} parent=0 // pred_check
    _
  $region11: #{forward.7} parent=0 // pred_check_branch
    %13 = sbr.rel (0) target = $region13
  $region12: #{forward.7} parent=0 // pred_region
    _
  $region13: #{forward.7} parent=0 // pred_fallthru
    _
  %v15 = vld [vmem:[%s0] sm:$0xff]
  %v16 = vld [vmem:[%s0 + $0x8] sm:$0xff]
  %v17 = vld [vmem:[%s0 + $0x10] sm:$0xff]
  %v18 = vld [vmem:[%s0 + $0x18] sm:$0xff]
  %v19 = vld [vmem:[%s0 + $0x20] sm:$0xff]
  %v20 = vld [vmem:[%s0 + $0x28] sm:$0xff]
  %v21 = vld [vmem:[%s0 + $0x30] sm:$0xff]
  %v22 = vld [vmem:[%s0 + $0x38] sm:$0xff]
  %v23 = vld [vmem:[%s0 + $0x40] sm:$0xff]
  %v24 = vld [vmem:[%s0 + $0x48] sm:$0xff]
  %v25 = vld [vmem:[%s0 + $0x50] sm:$0xff]
  %v26 = vld [vmem:[%s0 + $0x58] sm:$0xff]
  %v27 = vld [vmem:[%s0 + $0x60] sm:$0xff]
  %v28 = vld [vmem:[%s0 + $0x68] sm:$0xff]
  %v29 = vld [vmem:[%s0 + $0x70] sm:$0xff]
  %v30 = vld [vmem:[%s0 + $0x78] sm:$0xff]
  %v31 = vld [vmem:[%s0 + $0x80] sm:$0xff]
  %v32 = vld [vmem:[%s0 + $0x88] sm:$0xff]
  %v33 = vld [vmem:[%s0 + $0x90] sm:$0xff]
  %v34 = vld [vmem:[%s0 + $0x98] sm:$0xff]
  %v35 = vld [vmem:[%s0 + $0xa0] sm:$0xff]
  %v36 = vld [vmem:[%s0 + $0xa8] sm:$0xff]
  %v37 = vld [vmem:[%s0 + $0xb0] sm:$0xff]
  %v38 = vld [vmem:[%s0 + $0xb8] sm:$0xff]
  %v39 = vld [vmem:[%s0 + $0xc0] sm:$0xff]
  %v40 = vld [vmem:[%s0 + $0xc8] sm:$0xff]
  %v41 = vld [vmem:[%s0 + $0xd0] sm:$0xff]
  %v42 = vld [vmem:[%s0 + $0xd8] sm:$0xff]
  %v43 = vld [vmem:[%s0 + $0xe0] sm:$0xff]
  %v44 = vld [vmem:[%s0 + $0xe8] sm:$0xff]
  %v45 = vld [vmem:[%s0 + $0xf0] sm:$0xff]
  %v46 = vld [vmem:[%s0 + $0xf8] sm:$0xff]
  %v47 = vld [vmem:[%s0 + $0x100] sm:$0xff]
  %v48 = vld [vmem:[%s0 + $0x108] sm:$0xff]
  %v49 = vld [vmem:[%s0 + $0x110] sm:$0xff]
  %v50 = vld [vmem:[%s0 + $0x118] sm:$0xff]
  %v51 = vld [vmem:[%s0 + $0x120] sm:$0xff]
  %v52 = vld [vmem:[%s0 + $0x128] sm:$0xff]
  %v53 = vld [vmem:[%s0 + $0x130] sm:$0xff]
  %v54 = vld [vmem:[%s0 + $0x138] sm:$0xff]
  %v55 = vld [vmem:[%s0 + $0x140] sm:$0xff]
  %v56 = vld [vmem:[%s0 + $0x148] sm:$0xff]
  %v57 = vld [vmem:[%s0 + $0x150] sm:$0xff]
  %v58 = vld [vmem:[%s0 + $0x158] sm:$0xff]
  %v59 = vld [vmem:[%s0 + $0x160] sm:$0xff]
  %v60 = vld [vmem:[%s0 + $0x168] sm:$0xff]
  %v61 = vld [vmem:[%s0 + $0x170] sm:$0xff]
  %v62 = vld [vmem:[%s0 + $0x178] sm:$0xff]
  %v63 = vld [vmem:[%s0 + $0x180] sm:$0xff]
  %v64 = vld [vmem:[%s0 + $0x188] sm:$0xff]
  %v65 = vld [vmem:[%s0 + $0x190] sm:$0xff]
  %v66 = vld [vmem:[%s0 + $0x198] sm:$0xff]
  %v67 = vld [vmem:[%s0 + $0x1a0] sm:$0xff]
  %v68 = vld [vmem:[%s0 + $0x1a8] sm:$0xff]
  %v69 = vld [vmem:[%s0 + $0x1b0] sm:$0xff]
  %v70 = vld [vmem:[%s0 + $0x1b8] sm:$0xff]
  %v71 = vld [vmem:[%s0 + $0x1c0] sm:$0xff]
  %v72 = vld [vmem:[%s0 + $0x1c8] sm:$0xff]
  %v73 = vld [vmem:[%s0 + $0x1d0] sm:$0xff]
  %v74 = vld [vmem:[%s0 + $0x1d8] sm:$0xff]
  %v75 = vld [vmem:[%s0 + $0x1e0] sm:$0x3]
  %v76 = vld [vmem:[%s0 + $0x1e8] sm:$0x3]
  %v77 = vld [vmem:[%s0 + $0x1f0] sm:$0x3]
  %v78 = vld [vmem:[%s0 + $0x1f8] sm:$0x3]
  %v79 = vld [vmem:[%s0 + $0x200] sm:$0x3]
  %v80 = vpack.c.bf16 %v20, %v15
  %v81 = vpack.c.bf16 %v21, %v16
  %v82 = vpack.c.bf16 %v22, %v17
  %v83 = vpack.c.bf16 %v23, %v18
  %v84 = vpack.c.bf16 %v24, %v19
  %v85 = vpack.c.bf16 %v30, %v25
  %v86 = vpack.c.bf16 %v31, %v26
  %v87 = vpack.c.bf16 %v32, %v27
  %v88 = vpack.c.bf16 %v33, %v28
  %v89 = vpack.c.bf16 %v34, %v29
  %v90 = vpack.c.bf16 %v40, %v35
  %v91 = vpack.c.bf16 %v41, %v36
  %v92 = vpack.c.bf16 %v42, %v37
  %v93 = vpack.c.bf16 %v43, %v38
  %v94 = vpack.c.bf16 %v44, %v39
  %v95 = vpack.c.bf16 %v50, %v45
  %v96 = vpack.c.bf16 %v51, %v46
  %v97 = vpack.c.bf16 %v52, %v47
  %v98 = vpack.c.bf16 %v53, %v48
  %v99 = vpack.c.bf16 %v54, %v49
  %v100 = vpack.c.bf16 %v60, %v55
  %v101 = vpack.c.bf16 %v61, %v56
  %v102 = vpack.c.bf16 %v62, %v57
  %v103 = vpack.c.bf16 %v63, %v58
  %v104 = vpack.c.bf16 %v64, %v59
  %v105 = vpack.c.bf16 %v70, %v65
  %v106 = vpack.c.bf16 %v71, %v66
  %v107 = vpack.c.bf16 %v72, %v67
  %v108 = vpack.c.bf16 %v73, %v68
  %v109 = vpack.c.bf16 %v74, %v69
  %v110 = vpack.c.bf16 %v75, %v75
  %v111 = vpack.c.bf16 %v76, %v76
  %v112 = vpack.c.bf16 %v77, %v77
  %v113 = vpack.c.bf16 %v78, %v78
  %v114 = vpack.c.bf16 %v79, %v79
  %v115 = vld [vmem:[%s1] sm:$0xf]
  %v116 = vld [vmem:[%s1 + $0x4] sm:$0xf]
  %v117 = vld [vmem:[%s1 + $0x8] sm:$0xf]
  %v118 = vld [vmem:[%s1 + $0xc] sm:$0xf]
  %v119 = vld [vmem:[%s1 + $0x10] sm:$0xf]
  %v120 = vld [vmem:[%s1 + $0x14] sm:$0xf]
  %v121 = vld [vmem:[%s1 + $0x18] sm:$0xf]
  %v122 = vld [vmem:[%s1 + $0x1c] sm:$0xf]
  %v123 = vld [vmem:[%s1 + $0x20] sm:$0xf]
  %v124 = vld [vmem:[%s1 + $0x24] sm:$0xf]
  %v125 = vld [vmem:[%s1 + $0x28] sm:$0xf]
  %v126 = vld [vmem:[%s1 + $0x2c] sm:$0xf]
  %v127 = vld [vmem:[%s1 + $0x30] sm:$0xf]
  %v128 = vld [vmem:[%s1 + $0x34] sm:$0xf]
  %v129 = vld [vmem:[%s1 + $0x38] sm:$0xf]
  %v130 = vld [vmem:[%s1 + $0x3c] sm:$0xf]
  %v131 = vld [vmem:[%s1 + $0x40] sm:$0xf]
  %v132 = vld [vmem:[%s1 + $0x44] sm:$0xf]
  %v133 = vld [vmem:[%s1 + $0x48] sm:$0xf]
  %v134 = vld [vmem:[%s1 + $0x4c] sm:$0xf]
  %v135 = vld [vmem:[%s1 + $0x50] sm:$0xf]
  %v136 = vld [vmem:[%s1 + $0x54] sm:$0xf]
  %v137 = vld [vmem:[%s1 + $0x58] sm:$0xf]
  %v138 = vld [vmem:[%s1 + $0x5c] sm:$0xf]
  %v139 = vld [vmem:[%s1 + $0x60] sm:$0xf]
  %v140 = vld [vmem:[%s1 + $0x64] sm:$0xf]
  %v141 = vld [vmem:[%s1 + $0x68] sm:$0xf]
  %v142 = vld [vmem:[%s1 + $0x6c] sm:$0xf]
  %v143 = vld [vmem:[%s1 + $0x70] sm:$0xf]
  %v144 = vld [vmem:[%s1 + $0x74] sm:$0xf]
  %v145 = vld [vmem:[%s1 + $0x78] sm:$0xf]
  %v146 = vld [vmem:[%s1 + $0x7c] sm:$0xf]
  %v147 = vld [vmem:[%s1 + $0x80] sm:$0xf]
  %v148 = vld [vmem:[%s1 + $0x84] sm:$0xf]
  %v149 = vld [vmem:[%s1 + $0x88] sm:$0xf]
  %v150 = vld [vmem:[%s1 + $0x8c] sm:$0xf]
  %v151 = vld [vmem:[%s1 + $0x90] sm:$0xf]
  %v152 = vld [vmem:[%s1 + $0x94] sm:$0xf]
  %v153 = vld [vmem:[%s1 + $0x98] sm:$0xf]
  %v154 = vld [vmem:[%s1 + $0x9c] sm:$0xf]
  %v155 = vld [vmem:[%s1 + $0xa0] sm:$0xf]
  %v156 = vld [vmem:[%s1 + $0xa4] sm:$0xf]
  %v157 = vld [vmem:[%s1 + $0xa8] sm:$0xf]
  %v158 = vld [vmem:[%s1 + $0xac] sm:$0xf]
  %v159 = vld [vmem:[%s1 + $0xb0] sm:$0xf]
  %v160 = vld [vmem:[%s1 + $0xb4] sm:$0xf]
  %v161 = vld [vmem:[%s1 + $0xb8] sm:$0xf]
  %v162 = vld [vmem:[%s1 + $0xbc] sm:$0xf]
  %v163 = vld [vmem:[%s1 + $0xc0] sm:$0xf]
  %v164 = vld [vmem:[%s1 + $0xc4] sm:$0xf]
  %v165 = vld [vmem:[%s1 + $0xc8] sm:$0xf]
  %v166 = vld [vmem:[%s1 + $0xcc] sm:$0xf]
  %v167 = vld [vmem:[%s1 + $0xd0] sm:$0xf]
  %v168 = vld [vmem:[%s1 + $0xd4] sm:$0xf]
  %v169 = vld [vmem:[%s1 + $0xd8] sm:$0xf]
  %v170 = vld [vmem:[%s1 + $0xdc] sm:$0xf]
  %v171 = vld [vmem:[%s1 + $0xe0] sm:$0xf]
  %v172 = vld [vmem:[%s1 + $0xe4] sm:$0xf]
  %v173 = vld [vmem:[%s1 + $0xe8] sm:$0xf]
  %v174 = vld [vmem:[%s1 + $0xec] sm:$0xf]
  %v175 = vld [vmem:[%s1 + $0xf0] sm:$0xf]
  %v176 = vld [vmem:[%s1 + $0xf4] sm:$0xf]
  %v177 = vld [vmem:[%s1 + $0xf8] sm:$0xf]
  %v178 = vld [vmem:[%s1 + $0xfc] sm:$0xf]
  %v179 = vld [vmem:[%s1 + $0x100] sm:$0xf]
  %v180 = vld [vmem:[%s1 + $0x104] sm:$0xf]
  %v181 = vld [vmem:[%s1 + $0x108] sm:$0xf]
  %v182 = vld [vmem:[%s1 + $0x10c] sm:$0xf]
  %v183 = vld [vmem:[%s1 + $0x110] sm:$0xf]
  %v184 = vld [vmem:[%s1 + $0x114] sm:$0xf]
  %v185 = vld [vmem:[%s1 + $0x118] sm:$0xf]
  %v186 = vld [vmem:[%s1 + $0x11c] sm:$0xf]
  %v187 = vld [vmem:[%s2] sm:$0x1]
  %v189 = vlaneseq
  %v190 = vshrl.u32 %v189, 7
  %v191 = vsub.s32 0, %v190
  %v192 = vrot.slane %v187, %v191
  %v266 = vunpack.c.l.b16 %v115
  %v267 = vunpack.c.l.b16 %v116
  %v268 = vunpack.c.l.b16 %v117
  %v269 = vunpack.c.l.b16 %v118
  %v270 = vunpack.c.l.b16 %v119
  %v271 = vunpack.c.l.b16 %v120
  %v272 = vunpack.c.l.b16 %v121
  %v273 = vunpack.c.l.b16 %v122
  %v274 = vunpack.c.l.b16 %v123
  %v275 = vunpack.c.l.b16 %v124
  %v276 = vunpack.c.l.b16 %v125
  %v277 = vunpack.c.l.b16 %v126
  %v278 = vunpack.c.l.b16 %v127
  %v279 = vunpack.c.l.b16 %v128
  %v280 = vunpack.c.l.b16 %v129
  %v281 = vunpack.c.l.b16 %v130
  %v282 = vunpack.c.l.b16 %v131
  %v283 = vunpack.c.l.b16 %v132
  %v284 = vunpack.c.l.b16 %v133
  %v285 = vunpack.c.l.b16 %v134
  %v286 = vunpack.c.l.b16 %v135
  %v287 = vunpack.c.l.b16 %v136
  %v288 = vunpack.c.l.b16 %v137
  %v289 = vunpack.c.l.b16 %v138
  %v290 = vunpack.c.l.b16 %v139
  %v291 = vunpack.c.l.b16 %v140
  %v292 = vunpack.c.l.b16 %v141
  %v293 = vunpack.c.l.b16 %v142
  %v294 = vunpack.c.l.b16 %v143
  %v295 = vunpack.c.l.b16 %v144
  %v296 = vunpack.c.l.b16 %v145
  %v297 = vunpack.c.l.b16 %v146
  %v298 = vunpack.c.l.b16 %v147
  %v299 = vunpack.c.l.b16 %v148
  %v300 = vunpack.c.l.b16 %v149
  %v301 = vunpack.c.l.b16 %v150
  %v302 = vunpack.c.l.b16 %v151
  %v303 = vunpack.c.l.b16 %v152
  %v304 = vunpack.c.l.b16 %v153
  %v305 = vunpack.c.l.b16 %v154
  %v306 = vunpack.c.l.b16 %v155
  %v307 = vunpack.c.l.b16 %v156
  %v308 = vunpack.c.l.b16 %v157
  %v309 = vunpack.c.l.b16 %v158
  %v310 = vunpack.c.l.b16 %v159
  %v311 = vunpack.c.l.b16 %v160
  %v312 = vunpack.c.l.b16 %v161
  %v313 = vunpack.c.l.b16 %v162
  %v314 = vunpack.c.l.b16 %v163
  %v315 = vunpack.c.l.b16 %v164
  %v316 = vunpack.c.l.b16 %v165
  %v317 = vunpack.c.l.b16 %v166
  %v318 = vunpack.c.l.b16 %v167
  %v319 = vunpack.c.l.b16 %v168
  %v320 = vunpack.c.l.b16 %v169
  %v321 = vunpack.c.l.b16 %v170
  %v322 = vunpack.c.l.b16 %v171
  %v323 = vunpack.c.l.b16 %v172
  %v324 = vunpack.c.l.b16 %v173
  %v325 = vunpack.c.l.b16 %v174
  %v326 = vunpack.c.l.b16 %v175
  %v327 = vunpack.c.l.b16 %v176
  %v328 = vunpack.c.l.b16 %v177
  %v329 = vunpack.c.l.b16 %v178
  %v330 = vunpack.c.l.b16 %v179
  %v331 = vunpack.c.l.b16 %v180
  %v332 = vunpack.c.l.b16 %v181
  %v333 = vunpack.c.l.b16 %v182
  %v334 = vunpack.c.l.b16 %v183
  %v335 = vunpack.c.l.b16 %v184
  %v336 = vunpack.c.l.b16 %v185
  %v337 = vunpack.c.l.b16 %v186
  %v338 = vpack.c.b16 %v267, %v266
  %v339 = vpack.c.b16 %v269, %v268
  %v340 = vpack.c.b16 %v271, %v270
  %v341 = vpack.c.b16 %v273, %v272
  %v342 = vpack.c.b16 %v275, %v274
  %v343 = vpack.c.b16 %v277, %v276
  %v344 = vpack.c.b16 %v279, %v278
  %v345 = vpack.c.b16 %v281, %v280
  %v346 = vpack.c.b16 %v283, %v282
  %v347 = vpack.c.b16 %v285, %v284
  %v348 = vpack.c.b16 %v287, %v286
  %v349 = vpack.c.b16 %v289, %v288
  %v350 = vpack.c.b16 %v291, %v290
  %v351 = vpack.c.b16 %v293, %v292
  %v352 = vpack.c.b16 %v295, %v294
  %v353 = vpack.c.b16 %v297, %v296
  %v354 = vpack.c.b16 %v299, %v298
  %v355 = vpack.c.b16 %v301, %v300
  %v356 = vpack.c.b16 %v303, %v302
  %v357 = vpack.c.b16 %v305, %v304
  %v358 = vpack.c.b16 %v307, %v306
  %v359 = vpack.c.b16 %v309, %v308
  %v360 = vpack.c.b16 %v311, %v310
  %v361 = vpack.c.b16 %v313, %v312
  %v362 = vpack.c.b16 %v315, %v314
  %v363 = vpack.c.b16 %v317, %v316
  %v364 = vpack.c.b16 %v319, %v318
  %v365 = vpack.c.b16 %v321, %v320
  %v366 = vpack.c.b16 %v323, %v322
  %v367 = vpack.c.b16 %v325, %v324
  %v368 = vpack.c.b16 %v327, %v326
  %v369 = vpack.c.b16 %v329, %v328
  %v370 = vpack.c.b16 %v331, %v330
  %v371 = vpack.c.b16 %v333, %v332
  %v372 = vpack.c.b16 %v335, %v334
  %v373 = vpack.c.b16 %v337, %v336
  %vm410 = vcmask 523264
  %v412 = vsel %vm410, %v84, 0
  %v415 = vsel %vm410, %v89, 0
  %v418 = vsel %vm410, %v94, 0
  %v421 = vsel %vm410, %v99, 0
  %v424 = vsel %vm410, %v104, 0
  %v427 = vsel %vm410, %v109, 0
  %v430 = vsel %vm410, %v114, 0
  %432 = vmatprep.subr.bf16.mxu0 0
  %433 = vmatpush1.bf16.msra.mxu0 %v338
  %434 = vmatprep.subr.bf16.mxu0 0
  %435 = vmatpush1.bf16.msra.mxu0 %v339
  %436 = vmatprep.subr.bf16.mxu0 0
  %437 = vmatpush1.bf16.msra.mxu0 %v340
  %438 = vmatprep.subr.bf16.mxu0 0
  %439 = vmatpush1.bf16.msra.mxu0 %v341
  %440 = vmatprep.subr.bf16.mxu0 0
  %441 = vmatpush1.bf16.msra.mxu0 %v342
  %442 = vmatprep.subr.bf16.mxu0 0
  %443 = vmatpush1.bf16.msra.mxu0 %v343
  %444 = vmatprep.subr.bf16.mxu0 0
  %445 = vmatpush1.bf16.msra.mxu0 %v344
  %446 = vmatprep.subr.bf16.mxu0 0
  %447 = vmatpush1.bf16.msra.mxu0 %v345
  %448 = vmatprep.subr.bf16.mxu0 0
  %449 = vmatpush1.bf16.msra.mxu0 %v346
  %450 = vmatprep.subr.bf16.mxu0 0
  %451 = vmatpush1.bf16.msra.mxu0 %v347
  %452 = vmatprep.subr.bf16.mxu0 0
  %453 = vmatpush1.bf16.msra.mxu0 %v348
  %454 = vmatprep.subr.bf16.mxu0 0
  %455 = vmatpush1.bf16.msra.mxu0 %v349
  %456 = vmatprep.subr.bf16.mxu0 0
  %457 = vmatpush1.bf16.msra.mxu0 %v350
  %458 = vmatprep.subr.bf16.mxu0 0
  %459 = vmatpush1.bf16.msra.mxu0 %v351
  %460 = vmatprep.subr.bf16.mxu0 0
  %461 = vmatpush1.bf16.msra.mxu0 %v352
  %462 = vmatprep.subr.bf16.mxu0 0
  %463 = vmatpush1.bf16.msra.mxu0 %v353
  %464 = vmatprep.mubr.bf16.mxu0 %v81
  %465 = vmatmul.mubr.bf16.gmra.mrb[0].mxu0 %v80
  %v466 = vpop.f32.mrb[0].mxu0
  %v467 = vadd.f32 %v192, %v466
  %v468 = vpop.f32.mrb[0].mxu0
  %v469 = vpop.f32.mrb[0].mxu0
  %v470 = vadd.f32 %v192, %v469
  %v471 = vpop.f32.mrb[0].mxu0
  %472 = vmatprep.mubr.bf16.mxu0 %v86
  %473 = vmatmul.mubr.bf16.gmra.mrb[0].mxu0 %v85
  %v474 = vpop.f32.mrb[0].mxu0
  %v475 = vadd.f32 %v192, %v474
  %v476 = vpop.f32.mrb[0].mxu0
  %v477 = vpop.f32.mrb[0].mxu0
  %v478 = vadd.f32 %v192, %v477
  %v479 = vpop.f32.mrb[0].mxu0
  %480 = vmatprep.mubr.bf16.mxu0 %v91
  %481 = vmatmul.mubr.bf16.gmra.mrb[0].mxu0 %v90
  %v482 = vpop.f32.mrb[0].mxu0
  %v483 = vadd.f32 %v192, %v482
  %v484 = vpop.f32.mrb[0].mxu0
  %v485 = vpop.f32.mrb[0].mxu0
  %v486 = vadd.f32 %v192, %v485
  %v487 = vpop.f32.mrb[0].mxu0
  %488 = vmatprep.mubr.bf16.mxu0 %v96
  %489 = vmatmul.mubr.bf16.gmra.mrb[0].mxu0 %v95
  %v490 = vpop.f32.mrb[0].mxu0
  %v491 = vadd.f32 %v192, %v490
  %v492 = vpop.f32.mrb[0].mxu0
  %v493 = vpop.f32.mrb[0].mxu0
  %v494 = vadd.f32 %v192, %v493
  %v495 = vpop.f32.mrb[0].mxu0
  %496 = vmatprep.mubr.bf16.mxu0 %v101
  %497 = vmatmul.mubr.bf16.gmra.mrb[0].mxu0 %v100
  %v498 = vpop.f32.mrb[0].mxu0
  %v499 = vadd.f32 %v192, %v498
  %v500 = vpop.f32.mrb[0].mxu0
  %v501 = vpop.f32.mrb[0].mxu0
  %v502 = vadd.f32 %v192, %v501
  %v503 = vpop.f32.mrb[0].mxu0
  %504 = vmatprep.mubr.bf16.mxu0 %v106
  %505 = vmatmul.mubr.bf16.gmra.mrb[0].mxu0 %v105
  %v506 = vpop.f32.mrb[0].mxu0
  %v507 = vadd.f32 %v192, %v506
  %v508 = vpop.f32.mrb[0].mxu0
  %v509 = vpop.f32.mrb[0].mxu0
  %v510 = vadd.f32 %v192, %v509
  %v511 = vpop.f32.mrb[0].mxu0
  %512 = vmatprep.mubr.bf16.mxu0 %v111
  %513 = vmatmul.mubr.bf16.gmra.mrb[0].mxu0 %v110
  %v514 = vpop.f32.mrb[0].mxu0
  %v515 = vadd.f32 %v192, %v514
  %v516 = vpop.f32.mrb[0].mxu0
  %v517 = vpop.f32.mrb[0].mxu0
  %v518 = vpop.f32.mrb[0].mxu0
  %519 = vdwg.mxu0
  %520 = vmatprep.subr.bf16.mxu0 0
  %521 = vmatpush1.bf16.msra.mxu0 %v354
  %522 = vmatprep.subr.bf16.mxu0 0
  %523 = vmatpush1.bf16.msra.mxu0 %v355
  %524 = vmatprep.subr.bf16.mxu0 0
  %525 = vmatpush1.bf16.msra.mxu0 %v356
  %526 = vmatprep.subr.bf16.mxu0 0
  %527 = vmatpush1.bf16.msra.mxu0 %v357
  %528 = vmatprep.subr.bf16.mxu0 0
  %529 = vmatpush1.bf16.msra.mxu0 %v358
  %530 = vmatprep.subr.bf16.mxu0 0
  %531 = vmatpush1.bf16.msra.mxu0 %v359
  %532 = vmatprep.subr.bf16.mxu0 0
  %533 = vmatpush1.bf16.msra.mxu0 %v360
  %534 = vmatprep.subr.bf16.mxu0 0
  %535 = vmatpush1.bf16.msra.mxu0 %v361
  %536 = vmatprep.subr.bf16.mxu0 0
  %537 = vmatpush1.bf16.msra.mxu0 %v362
  %538 = vmatprep.subr.bf16.mxu0 0
  %539 = vmatpush1.bf16.msra.mxu0 %v363
  %540 = vmatprep.subr.bf16.mxu0 0
  %541 = vmatpush1.bf16.msra.mxu0 %v364
  %542 = vmatprep.subr.bf16.mxu0 0
  %543 = vmatpush1.bf16.msra.mxu0 %v365
  %544 = vmatprep.subr.bf16.mxu0 0
  %545 = vmatpush1.bf16.msra.mxu0 %v366
  %546 = vmatprep.subr.bf16.mxu0 0
  %547 = vmatpush1.bf16.msra.mxu0 %v367
  %548 = vmatprep.subr.bf16.mxu0 0
  %549 = vmatpush1.bf16.msra.mxu0 %v368
  %550 = vmatprep.subr.bf16.mxu0 0
  %551 = vmatpush1.bf16.msra.mxu0 %v369
  %552 = vmatprep.mubr.bf16.mxu0 %v83
  %553 = vmatmul.mubr.bf16.gmra.mrb[0].mxu0 %v82
  %v554 = vpop.f32.mrb[0].mxu0
  %v555 = vadd.f32 %v467, %v554
  %v556 = vpop.f32.mrb[0].mxu0
  %v557 = vpop.f32.mrb[0].mxu0
  %v558 = vadd.f32 %v470, %v557
  %v559 = vpop.f32.mrb[0].mxu0
  %560 = vmatprep.mubr.bf16.mxu0 %v88
  %561 = vmatmul.mubr.bf16.gmra.mrb[0].mxu0 %v87
  %v562 = vpop.f32.mrb[0].mxu0
  %v563 = vadd.f32 %v475, %v562
  %v564 = vpop.f32.mrb[0].mxu0
  %v565 = vpop.f32.mrb[0].mxu0
  %v566 = vadd.f32 %v478, %v565
  %v567 = vpop.f32.mrb[0].mxu0
  %568 = vmatprep.mubr.bf16.mxu0 %v93
  %569 = vmatmul.mubr.bf16.gmra.mrb[0].mxu0 %v92
  %v570 = vpop.f32.mrb[0].mxu0
  %v571 = vadd.f32 %v483, %v570
  %v572 = vpop.f32.mrb[0].mxu0
  %v573 = vpop.f32.mrb[0].mxu0
  %v574 = vadd.f32 %v486, %v573
  %v575 = vpop.f32.mrb[0].mxu0
  %576 = vmatprep.mubr.bf16.mxu0 %v98
  %577 = vmatmul.mubr.bf16.gmra.mrb[0].mxu0 %v97
  %v578 = vpop.f32.mrb[0].mxu0
  %v579 = vadd.f32 %v491, %v578
  %v580 = vpop.f32.mrb[0].mxu0
  %v581 = vpop.f32.mrb[0].mxu0
  %v582 = vadd.f32 %v494, %v581
  %v583 = vpop.f32.mrb[0].mxu0
  %584 = vmatprep.mubr.bf16.mxu0 %v103
  %585 = vmatmul.mubr.bf16.gmra.mrb[0].mxu0 %v102
  %v586 = vpop.f32.mrb[0].mxu0
  %v587 = vadd.f32 %v499, %v586
  %v588 = vpop.f32.mrb[0].mxu0
  %v589 = vpop.f32.mrb[0].mxu0
  %v590 = vadd.f32 %v502, %v589
  %v591 = vpop.f32.mrb[0].mxu0
  %592 = vmatprep.mubr.bf16.mxu0 %v108
  %593 = vmatmul.mubr.bf16.gmra.mrb[0].mxu0 %v107
  %v594 = vpop.f32.mrb[0].mxu0
  %v595 = vadd.f32 %v507, %v594
  %v596 = vpop.f32.mrb[0].mxu0
  %v597 = vpop.f32.mrb[0].mxu0
  %v598 = vadd.f32 %v510, %v597
  %v599 = vpop.f32.mrb[0].mxu0
  %600 = vmatprep.mubr.bf16.mxu0 %v113
  %601 = vmatmul.mubr.bf16.gmra.mrb[0].mxu0 %v112
  %v602 = vpop.f32.mrb[0].mxu0
  %v603 = vadd.f32 %v515, %v602
  %v604 = vpop.f32.mrb[0].mxu0
  %v605 = vpop.f32.mrb[0].mxu0
  %v606 = vpop.f32.mrb[0].mxu0
  %607 = vdwg.mxu0
  %608 = vmatprep.subr.bf16.mxu0 0
  %609 = vmatpush1.bf16.msra.mxu0 %v370
  %610 = vmatprep.subr.bf16.mxu0 0
  %611 = vmatpush1.bf16.msra.mxu0 %v371
  %612 = vmatprep.subr.bf16.mxu0 0
  %613 = vmatpush1.bf16.msra.mxu0 %v372
  %614 = vmatprep.subr.bf16.mxu0 0
  %615 = vmatpush1.bf16.msra.mxu0 %v373
  %616 = vmatprep.subr.bf16.mxu0 0
  %617 = vmatpush1.bf16.msra.mxu0 0
  %618 = vmatprep.subr.bf16.mxu0 0
  %619 = vmatpush1.bf16.msra.mxu0 0
  %620 = vmatprep.subr.bf16.mxu0 0
  %621 = vmatpush1.bf16.msra.mxu0 0
  %622 = vmatprep.subr.bf16.mxu0 0
  %623 = vmatpush1.bf16.msra.mxu0 0
  %624 = vmatprep.subr.bf16.mxu0 0
  %625 = vmatpush1.bf16.msra.mxu0 0
  %626 = vmatprep.subr.bf16.mxu0 0
  %627 = vmatpush1.bf16.msra.mxu0 0
  %628 = vmatprep.subr.bf16.mxu0 0
  %629 = vmatpush1.bf16.msra.mxu0 0
  %630 = vmatprep.subr.bf16.mxu0 0
  %631 = vmatpush1.bf16.msra.mxu0 0
  %632 = vmatprep.subr.bf16.mxu0 0
  %633 = vmatpush1.bf16.msra.mxu0 0
  %634 = vmatprep.subr.bf16.mxu0 0
  %635 = vmatpush1.bf16.msra.mxu0 0
  %636 = vmatprep.subr.bf16.mxu0 0
  %637 = vmatpush1.bf16.msra.mxu0 0
  %638 = vmatprep.subr.bf16.mxu0 0
  %639 = vmatpush1.bf16.msra.mxu0 0
  %640 = vmatprep.mubr.bf16.mxu0 0
  %641 = vmatmul.mubr.bf16.gmra.mrb[0].mxu0 %v412
  %v642 = vpop.f32.mrb[0].mxu0
  %v643 = vadd.f32 %v555, %v642
  %v644 = vpop.f32.mrb[0].mxu0
  %v645 = vpop.f32.mrb[0].mxu0
  %v646 = vadd.f32 %v558, %v645
  %v647 = vpop.f32.mrb[0].mxu0
  %648 = vmatprep.mubr.bf16.mxu0 0
  %649 = vmatmul.mubr.bf16.gmra.mrb[0].mxu0 %v415
  %v650 = vpop.f32.mrb[0].mxu0
  %v651 = vadd.f32 %v563, %v650
  %v652 = vpop.f32.mrb[0].mxu0
  %v653 = vpop.f32.mrb[0].mxu0
  %v654 = vadd.f32 %v566, %v653
  %v655 = vpop.f32.mrb[0].mxu0
  %656 = vmatprep.mubr.bf16.mxu0 0
  %657 = vmatmul.mubr.bf16.gmra.mrb[0].mxu0 %v418
  %v658 = vpop.f32.mrb[0].mxu0
  %v659 = vadd.f32 %v571, %v658
  %v660 = vpop.f32.mrb[0].mxu0
  %v661 = vpop.f32.mrb[0].mxu0
  %v662 = vadd.f32 %v574, %v661
  %v663 = vpop.f32.mrb[0].mxu0
  %664 = vmatprep.mubr.bf16.mxu0 0
  %665 = vmatmul.mubr.bf16.gmra.mrb[0].mxu0 %v421
  %v666 = vpop.f32.mrb[0].mxu0
  %v667 = vadd.f32 %v579, %v666
  %v668 = vpop.f32.mrb[0].mxu0
  %v669 = vpop.f32.mrb[0].mxu0
  %v670 = vadd.f32 %v582, %v669
  %v671 = vpop.f32.mrb[0].mxu0
  %672 = vmatprep.mubr.bf16.mxu0 0
  %673 = vmatmul.mubr.bf16.gmra.mrb[0].mxu0 %v424
  %v674 = vpop.f32.mrb[0].mxu0
  %v675 = vadd.f32 %v587, %v674
  %v676 = vpop.f32.mrb[0].mxu0
  %v677 = vpop.f32.mrb[0].mxu0
  %v678 = vadd.f32 %v590, %v677
  %v679 = vpop.f32.mrb[0].mxu0
  %680 = vmatprep.mubr.bf16.mxu0 0
  %681 = vmatmul.mubr.bf16.gmra.mrb[0].mxu0 %v427
  %v682 = vpop.f32.mrb[0].mxu0
  %v683 = vadd.f32 %v595, %v682
  %v684 = vpop.f32.mrb[0].mxu0
  %v685 = vpop.f32.mrb[0].mxu0
  %v686 = vadd.f32 %v598, %v685
  %v687 = vpop.f32.mrb[0].mxu0
  %688 = vmatprep.mubr.bf16.mxu0 0
  %689 = vmatmul.mubr.bf16.gmra.mrb[0].mxu0 %v430
  %v690 = vpop.f32.mrb[0].mxu0
  %v691 = vadd.f32 %v603, %v690
  %v692 = vpop.f32.mrb[0].mxu0
  %v693 = vpop.f32.mrb[0].mxu0
  %v694 = vpop.f32.mrb[0].mxu0
  %695 = vdwg.mxu0
  %v696 = vmax.f32 %v643, 0.0
  %v697 = vmax.f32 %v646, 0.0
  %v698 = vmax.f32 %v651, 0.0
  %v699 = vmax.f32 %v654, 0.0
  %v700 = vmax.f32 %v659, 0.0
  %v701 = vmax.f32 %v662, 0.0
  %v702 = vmax.f32 %v667, 0.0
  %v703 = vmax.f32 %v670, 0.0
  %v704 = vmax.f32 %v675, 0.0
  %v705 = vmax.f32 %v678, 0.0
  %v706 = vmax.f32 %v683, 0.0
  %v707 = vmax.f32 %v686, 0.0
  %v708 = vmax.f32 %v691, 0.0
  %709 = vst.msk [vmem:[%s3] sm:$0xff] %vm410, %v696
  %710 = vst.msk [vmem:[%s3 + $0x8] sm:$0xff] %vm410, %v697
  %711 = vst.msk [vmem:[%s3 + $0x10] sm:$0xff] %vm410, %v698
  %712 = vst.msk [vmem:[%s3 + $0x18] sm:$0xff] %vm410, %v699
  %713 = vst.msk [vmem:[%s3 + $0x20] sm:$0xff] %vm410, %v700
  %714 = vst.msk [vmem:[%s3 + $0x28] sm:$0xff] %vm410, %v701
  %715 = vst.msk [vmem:[%s3 + $0x30] sm:$0xff] %vm410, %v702
  %716 = vst.msk [vmem:[%s3 + $0x38] sm:$0xff] %vm410, %v703
  %717 = vst.msk [vmem:[%s3 + $0x40] sm:$0xff] %vm410, %v704
  %718 = vst.msk [vmem:[%s3 + $0x48] sm:$0xff] %vm410, %v705
  %719 = vst.msk [vmem:[%s3 + $0x50] sm:$0xff] %vm410, %v706
  %720 = vst.msk [vmem:[%s3 + $0x58] sm:$0xff] %vm410, %v707
  %vm721 = vcmask 517120
  %722 = vst.msk [vmem:[%s3 + $0x60] sm:$0x3] %vm721, %v708
  // Predicated region
  $region14: #{forward.7} parent=0 // pred_check
    _
  $region15: #{forward.7} parent=0 // pred_check_branch
    %724 = sbr.rel (0) target = $region17
  $region16: #{forward.7} parent=0 // pred_region
    _
  $region17: #{forward.7} parent=0 // pred_fallthru
    _
  // Predicated region
  $region18: #{forward.7} parent=0 // pred_check
    _
  $region19: #{forward.7} parent=0 // pred_check_branch
    %726 = sbr.rel (0) target = $region21
  $region20: #{forward.7} parent=0 // pred_region
    _
  $region21: #{forward.7} parent=0 // pred_fallthru
    _

// kernel: forward.8
$region0: #{forward.8}
  #allocation0 [shape = 'u32[]', space=smem, size = 0x4, offset = 0x4, fixed_abs, tag = 'smem constant byte address 0x4 - core index']
  #allocation1 [shape = 'u32[144,128]{1,0:T(1,128)}', space=vmem, size = 0x12000, scoped, tag = 'internal scratch']
  %s0 = inlined_call_operand.vmem [shape: f32[2,3200], index: 0, kind: input, shape index: {}]
  %s1 = inlined_call_operand.vmem [shape: bf16[3200,1024], index: 1, kind: input, shape index: {}]
  %s2 = inlined_call_operand.vmem [shape: f32[1,1024], index: 2, kind: input, shape index: {}]
  %s3 = inlined_call_operand.vmem [shape: f32[2,1024], index: 3, kind: output, shape index: {}]
  %s4 = sld [smem:[#allocation0]]
  $region76: #{forward.8} parent=0
    _
  %s6 = ssub.s32 1, %s4
  %s7 = scalar_select 0, %s6, %s4
  $region1: #{forward.8} parent=0
    #allocation2 [shape = 'u8[1310720]{0}', space=vmem, size = 0x140000, scoped, tag = 'input window, operand 1']
    loop: start=0, step=1, limit=12
    $region2: #{forward.8} parent=1 // loop_pre_header
      _
    $region3: #{forward.8} parent=1 // loop_header
      %s9 = sphi 0, %s13
      %p10 = scmp.ge.s32.totalorder %s9, 12
      %s16 = sphi 0, %s28
      %s17 = sphi 0, %s24
      %s18 = sphi 0, %s16
      %s19 = sphi 0, %s17
      %s20 = sphi 0, %s18
      %s21 = sphi 0, %s19
      %s31 = sphi 0, %s33
      %s34 = sphi 0, %s31
      %s35 = sphi 0, %s34
      %s51 = sphi 0, %s35
      %s59 = sphi 0, %s61
      %s62 = sphi 0, %s59
      %s63 = sphi 0, %s62
      %s79 = sphi 0, %s63
      %s85 = sphi 0, %s87
      %s88 = sphi 0, %s85
      %s89 = sphi 0, %s88
      %s105 = sphi 0, %s89
      %s111 = sphi 0, %s113
      %s114 = sphi 0, %s111
      %s115 = sphi 0, %s114
      %s131 = sphi 0, %s115
    $region4: #{forward.8} parent=1 // loop_header_branch
      %12 = sbr.rel (%p10) target = $region8
    $region5: #{forward.8} parent=1 // loop_body
      %s14 = ssub.s32 %s9, 1
      %s15 = ssub.s32 %s9, 2
      %s22 = sadd.s32 1, %s17
      %p23 = scmp.ge.s32.totalorder %s22, 5
      %s24 = scalar_select %p23, 0, %s22
      %s25 = sadd.s32 1, %s16
      %s26 = scalar_select %p23, %s25, %s16
      %p27 = scmp.ge.s32.totalorder %s26, 2
      %s28 = scalar_select %p27, 0, %s26
      %s29 = ssub.s32 %s17, %s24
      %p30 = scmp.eq.s32.totalorder %s29, 0
      %s32 = sadd.s32 %s31, 1
      %s33 = scalar_select %p30, %s31, %s32
      %p36 = pneg %p30
      %p37 = scmp.eq.s32.totalorder %s9, 9
      %p38 = por %p36, %p37
      %p39 = scmp.ne.s32.totalorder %s31, %s34
      %p40 = scmp.eq.s32.totalorder %s9, 0
      %p41 = por %p39, %p40
      %p42 = scmp.ne.s32.totalorder %s31, %s34
      %p43 = scmp.eq.s32.totalorder %s14, 9
      %p44 = por %p42, %p43
      %p45 = scmp.ne.s32.totalorder %s34, %s35
      %p46 = scmp.eq.s32.totalorder %s14, 0
      %p47 = por %p45, %p46
      %p48 = scmp.ne.s32.totalorder %s34, %s35
      %p49 = scmp.eq.s32.totalorder %s15, 9
      %p50 = por %p48, %p49
      %p52 = scmp.ne.s32.totalorder %s35, %s51
      %p53 = scmp.eq.s32.totalorder %s15, 0
      %p54 = por %p52, %p53
      %s55 = ssub.s32 %s17, %s24
      %s56 = ssub.s32 %s16, %s28
      %s57 = sor.u32 %s55, %s56
      %p58 = scmp.eq.s32.totalorder %s57, 0
      %s60 = sadd.s32 %s59, 1
      %s61 = scalar_select %p58, %s59, %s60
      %p64 = pneg %p58
      %p65 = scmp.eq.s32.totalorder %s9, 9
      %p66 = por %p64, %p65
      %p67 = scmp.ne.s32.totalorder %s59, %s62
      %p68 = scmp.eq.s32.totalorder %s9, 0
      %p69 = por %p67, %p68
      %p70 = scmp.ne.s32.totalorder %s59, %s62
      %p71 = scmp.eq.s32.totalorder %s14, 9
      %p72 = por %p70, %p71
      %p73 = scmp.ne.s32.totalorder %s62, %s63
      %p74 = scmp.eq.s32.totalorder %s14, 0
      %p75 = por %p73, %p74
      %p76 = scmp.ne.s32.totalorder %s62, %s63
      %p77 = scmp.eq.s32.totalorder %s15, 9
      %p78 = por %p76, %p77
      %p80 = scmp.ne.s32.totalorder %s63, %s79
      %p81 = scmp.eq.s32.totalorder %s15, 0
      %p82 = por %p80, %p81
      %s83 = ssub.s32 %s16, %s28
      %p84 = scmp.eq.s32.totalorder %s83, 0
      %s86 = sadd.s32 %s85, 1
      %s87 = scalar_select %p84, %s85, %s86
      %p90 = pneg %p84
      %p91 = scmp.eq.s32.totalorder %s9, 9
      %p92 = por %p90, %p91
      %p93 = scmp.ne.s32.totalorder %s85, %s88
      %p94 = scmp.eq.s32.totalorder %s9, 0
      %p95 = por %p93, %p94
      %p96 = scmp.ne.s32.totalorder %s85, %s88
      %p97 = scmp.eq.s32.totalorder %s14, 9
      %p98 = por %p96, %p97
      %p99 = scmp.ne.s32.totalorder %s88, %s89
      %p100 = scmp.eq.s32.totalorder %s14, 0
      %p101 = por %p99, %p100
      %p102 = scmp.ne.s32.totalorder %s88, %s89
      %p103 = scmp.eq.s32.totalorder %s15, 9
      %p104 = por %p102, %p103
      %p106 = scmp.ne.s32.totalorder %s89, %s105
      %p107 = scmp.eq.s32.totalorder %s15, 0
      %p108 = por %p106, %p107
      %s109 = ssub.s32 %s16, %s28
      %p110 = scmp.eq.s32.totalorder %s109, 0
      %s112 = sadd.s32 %s111, 1
      %s113 = scalar_select %p110, %s111, %s112
      %p116 = pneg %p110
      %p117 = scmp.eq.s32.totalorder %s9, 9
      %p118 = por %p116, %p117
      %p119 = scmp.ne.s32.totalorder %s111, %s114
      %p120 = scmp.eq.s32.totalorder %s9, 0
      %p121 = por %p119, %p120
      %p122 = scmp.ne.s32.totalorder %s111, %s114
      %p123 = scmp.eq.s32.totalorder %s14, 9
      %p124 = por %p122, %p123
      %p125 = scmp.ne.s32.totalorder %s114, %s115
      %p126 = scmp.eq.s32.totalorder %s14, 0
      %p127 = por %p125, %p126
      %p128 = scmp.ne.s32.totalorder %s114, %s115
      %p129 = scmp.eq.s32.totalorder %s15, 9
      %p130 = por %p128, %p129
      %p132 = scmp.ne.s32.totalorder %s115, %s131
      %p133 = scmp.eq.s32.totalorder %s15, 0
      %p134 = por %p132, %p133
      %p135 = scmp.le.s32.totalorder 1, %s9
      %p136 = scmp.lt.s32.totalorder %s9, 11
      %p137 = pnand %p135, %p136
      %p138 = pneg %p137
      // Predicated region
      $region9: #{forward.8} parent=5 // pred_check
        _
      $region10: #{forward.8} parent=5 // pred_check_branch
        %140 = sbr.rel (%p137) target = $region12
      $region11: #{forward.8} parent=5 // pred_region
        %s141 = ssub.s32 %s9, 1
      $region12: #{forward.8} parent=5 // pred_fallthru
        _
      %p142 = scmp.lt.s32.totalorder %s9, 10
      // Predicated region
      $region13: #{forward.8} parent=5 // pred_check
        %p143 = pneg %p142
      $region14: #{forward.8} parent=5 // pred_check_branch
        %145 = sbr.rel (%p143) target = $region16
      $region15: #{forward.8} parent=5 // pred_region
        // Predicated region
        $region17: #{forward.8} parent=15 // pred_check
          %p146 = pneg %p41
        $region18: #{forward.8} parent=15 // pred_check_branch
          %148 = sbr.rel (%p146) target = $region20
        $region19: #{forward.8} parent=15 // pred_region
          %s149 = smul.u32 5, %s17
          %p150 = scmp.lt.s32.totalorder %s149, 24
          %s151 = scalar_select %p150, %s149, 24
          %s152 = smul.addr %s151, 2
          %s153 = scalar_lea.vmem %s0, %s152
          %s154 = smul.u32 5, %s17
        $region20: #{forward.8} parent=15 // pred_fallthru
          _
        // Predicated region
        $region21: #{forward.8} parent=15 // pred_check
          %p155 = pneg %p69
        $region22: #{forward.8} parent=15 // pred_check_branch
          %157 = sbr.rel (%p155) target = $region24
        $region23: #{forward.8} parent=15 // pred_region
          %s158 = sand.u32 %s59, 1
          %s159 = sand.u32 %s59, 1
          %s160 = smul.addr %s159, 1280
          %s161 = scalar_lea.vmem [#allocation2], %s160
          %s162 = smul.u32 80, %s17
          %s163 = smul.u32 4, %s16
          %s164 = smul.addr %s162, 8
          %s165 = sadd.s32 %s163, %s164
          %s166 = smul.addr %s165, 4
          %s167 = scalar_lea.vmem %s1, %s166
          // Predicated region
          $region25: #{forward.8} parent=23 // pred_check
            _
          $region26: #{forward.8} parent=23 // pred_check_branch
            %169 = sbr.rel (0) target = $region28
          $region27: #{forward.8} parent=23 // pred_region
            // Predicated region
            $region29: #{forward.8} parent=27 // pred_check
              _
            $region30: #{forward.8} parent=27 // pred_check_branch
              %171 = sbr.rel (0) target = $region32
            $region31: #{forward.8} parent=27 // pred_region
              loop: start=0, step=1, limit=1
              $region33: #{forward.8} parent=31 // loop_pre_header
                _
              $region34: #{forward.8} parent=31 // loop_header
                %s173 = sphi 0, %s177
                %p174 = scmp.ge.s32.totalorder %s173, 1
                %s178 = sphi %s167, %s167
                %s179 = sphi %s161, %s161
              $region35: #{forward.8} parent=31 // loop_header_branch
                %176 = sbr.rel (%p174) target = $region39
              $region36: #{forward.8} parent=31 // loop_body
                %v180 = vld [vmem:[%s178] sm:$0xff]
                %181 = vst [vmem:[%s179] sm:$0xff] %v180
                %v182 = vld [vmem:[%s178 + $0x8] sm:$0xff]
                %183 = vst [vmem:[%s179 + $0x8] sm:$0xff] %v182
                %v184 = vld [vmem:[%s178 + $0x20] sm:$0xff]
                %185 = vst [vmem:[%s179 + $0x10] sm:$0xff] %v184
                %v186 = vld [vmem:[%s178 + $0x28] sm:$0xff]
                %187 = vst [vmem:[%s179 + $0x18] sm:$0xff] %v186
                %v188 = vld [vmem:[%s178 + $0x40] sm:$0xff]
                %189 = vst [vmem:[%s179 + $0x20] sm:$0xff] %v188
                %v190 = vld [vmem:[%s178 + $0x48] sm:$0xff]
                %191 = vst [vmem:[%s179 + $0x28] sm:$0xff] %v190
                %v192 = vld [vmem:[%s178 + $0x60] sm:$0xff]
                %193 = vst [vmem:[%s179 + $0x30] sm:$0xff] %v192
                %v194 = vld [vmem:[%s178 + $0x68] sm:$0xff]
                %195 = vst [vmem:[%s179 + $0x38] sm:$0xff] %v194
                %v196 = vld [vmem:[%s178 + $0x80] sm:$0xff]
                %197 = vst [vmem:[%s179 + $0x40] sm:$0xff] %v196
                %v198 = vld [vmem:[%s178 + $0x88] sm:$0xff]
                %199 = vst [vmem:[%s179 + $0x48] sm:$0xff] %v198
                %v200 = vld [vmem:[%s178 + $0xa0] sm:$0xff]
                %201 = vst [vmem:[%s179 + $0x50] sm:$0xff] %v200
                %v202 = vld [vmem:[%s178 + $0xa8] sm:$0xff]
                %203 = vst [vmem:[%s179 + $0x58] sm:$0xff] %v202
                %v204 = vld [vmem:[%s178 + $0xc0] sm:$0xff]
                %205 = vst [vmem:[%s179 + $0x60] sm:$0xff] %v204
                %v206 = vld [vmem:[%s178 + $0xc8] sm:$0xff]
                %207 = vst [vmem:[%s179 + $0x68] sm:$0xff] %v206
                %v208 = vld [vmem:[%s178 + $0xe0] sm:$0xff]
                %209 = vst [vmem:[%s179 + $0x70] sm:$0xff] %v208
                %v210 = vld [vmem:[%s178 + $0xe8] sm:$0xff]
                %211 = vst [vmem:[%s179 + $0x78] sm:$0xff] %v210
                %v212 = vld [vmem:[%s178 + $0x100] sm:$0xff]
                %213 = vst [vmem:[%s179 + $0x80] sm:$0xff] %v212
                %v214 = vld [vmem:[%s178 + $0x108] sm:$0xff]
                %215 = vst [vmem:[%s179 + $0x88] sm:$0xff] %v214
                %v216 = vld [vmem:[%s178 + $0x120] sm:$0xff]
                %217 = vst [vmem:[%s179 + $0x90] sm:$0xff] %v216
                %v218 = vld [vmem:[%s178 + $0x128] sm:$0xff]
                %219 = vst [vmem:[%s179 + $0x98] sm:$0xff] %v218
                %v220 = vld [vmem:[%s178 + $0x140] sm:$0xff]
                %221 = vst [vmem:[%s179 + $0xa0] sm:$0xff] %v220
                %v222 = vld [vmem:[%s178 + $0x148] sm:$0xff]
                %223 = vst [vmem:[%s179 + $0xa8] sm:$0xff] %v222
                %v224 = vld [vmem:[%s178 + $0x160] sm:$0xff]
                %225 = vst [vmem:[%s179 + $0xb0] sm:$0xff] %v224
                %v226 = vld [vmem:[%s178 + $0x168] sm:$0xff]
                %227 = vst [vmem:[%s179 + $0xb8] sm:$0xff] %v226
                %v228 = vld [vmem:[%s178 + $0x180] sm:$0xff]
                %229 = vst [vmem:[%s179 + $0xc0] sm:$0xff] %v228
                %v230 = vld [vmem:[%s178 + $0x188] sm:$0xff]
                %231 = vst [vmem:[%s179 + $0xc8] sm:$0xff] %v230
                %v232 = vld [vmem:[%s178 + $0x1a0] sm:$0xff]
                %233 = vst [vmem:[%s179 + $0xd0] sm:$0xff] %v232
                %v234 = vld [vmem:[%s178 + $0x1a8] sm:$0xff]
                %235 = vst [vmem:[%s179 + $0xd8] sm:$0xff] %v234
                %v236 = vld [vmem:[%s178 + $0x1c0] sm:$0xff]
                %237 = vst [vmem:[%s179 + $0xe0] sm:$0xff] %v236
                %v238 = vld [vmem:[%s178 + $0x1c8] sm:$0xff]
                %239 = vst [vmem:[%s179 + $0xe8] sm:$0xff] %v238
                %v240 = vld [vmem:[%s178 + $0x1e0] sm:$0xff]
                %241 = vst [vmem:[%s179 + $0xf0] sm:$0xff] %v240
                %v242 = vld [vmem:[%s178 + $0x1e8] sm:$0xff]
                %243 = vst [vmem:[%s179 + $0xf8] sm:$0xff] %v242
                %v244 = vld [vmem:[%s178 + $0x200] sm:$0xff]
                %245 = vst [vmem:[%s179 + $0x100] sm:$0xff] %v244
                %v246 = vld [vmem:[%s178 + $0x208] sm:$0xff]
                %247 = vst [vmem:[%s179 + $0x108] sm:$0xff] %v246
                %v248 = vld [vmem:[%s178 + $0x220] sm:$0xff]
                %249 = vst [vmem:[%s179 + $0x110] sm:$0xff] %v248
                %v250 = vld [vmem:[%s178 + $0x228] sm:$0xff]
                %251 = vst [vmem:[%s179 + $0x118] sm:$0xff] %v250
                %v252 = vld [vmem:[%s178 + $0x240] sm:$0xff]
                %253 = vst [vmem:[%s179 + $0x120] sm:$0xff] %v252
                %v254 = vld [vmem:[%s178 + $0x248] sm:$0xff]
                %255 = vst [vmem:[%s179 + $0x128] sm:$0xff] %v254
                %v256 = vld [vmem:[%s178 + $0x260] sm:$0xff]
                %257 = vst [vmem:[%s179 + $0x130] sm:$0xff] %v256
                %v258 = vld [vmem:[%s178 + $0x268] sm:$0xff]
                %259 = vst [vmem:[%s179 + $0x138] sm:$0xff] %v258
                %v260 = vld [vmem:[%s178 + $0x280] sm:$0xff]
                %261 = vst [vmem:[%s179 + $0x140] sm:$0xff] %v260
                %v262 = vld [vmem:[%s178 + $0x288] sm:$0xff]
                %263 = vst [vmem:[%s179 + $0x148] sm:$0xff] %v262
                %v264 = vld [vmem:[%s178 + $0x2a0] sm:$0xff]
                %265 = vst [vmem:[%s179 + $0x150] sm:$0xff] %v264
                %v266 = vld [vmem:[%s178 + $0x2a8] sm:$0xff]
                %267 = vst [vmem:[%s179 + $0x158] sm:$0xff] %v266
                %v268 = vld [vmem:[%s178 + $0x2c0] sm:$0xff]
                %269 = vst [vmem:[%s179 + $0x160] sm:$0xff] %v268
                %v270 = vld [vmem:[%s178 + $0x2c8] sm:$0xff]
                %271 = vst [vmem:[%s179 + $0x168] sm:$0xff] %v270
                %v272 = vld [vmem:[%s178 + $0x2e0] sm:$0xff]
                %273 = vst [vmem:[%s179 + $0x170] sm:$0xff] %v272
                %v274 = vld [vmem:[%s178 + $0x2e8] sm:$0xff]
                %275 = vst [vmem:[%s179 + $0x178] sm:$0xff] %v274
                %v276 = vld [vmem:[%s178 + $0x300] sm:$0xff]
                %277 = vst [vmem:[%s179 + $0x180] sm:$0xff] %v276
                %v278 = vld [vmem:[%s178 + $0x308] sm:$0xff]
                %279 = vst [vmem:[%s179 + $0x188] sm:$0xff] %v278
                %v280 = vld [vmem:[%s178 + $0x320] sm:$0xff]
                %281 = vst [vmem:[%s179 + $0x190] sm:$0xff] %v280
                %v282 = vld [vmem:[%s178 + $0x328] sm:$0xff]
                %283 = vst [vmem:[%s179 + $0x198] sm:$0xff] %v282
                %v284 = vld [vmem:[%s178 + $0x340] sm:$0xff]
                %285 = vst [vmem:[%s179 + $0x1a0] sm:$0xff] %v284
                %v286 = vld [vmem:[%s178 + $0x348] sm:$0xff]
                %287 = vst [vmem:[%s179 + $0x1a8] sm:$0xff] %v286
                %v288 = vld [vmem:[%s178 + $0x360] sm:$0xff]
                %289 = vst [vmem:[%s179 + $0x1b0] sm:$0xff] %v288
                %v290 = vld [vmem:[%s178 + $0x368] sm:$0xff]
                %291 = vst [vmem:[%s179 + $0x1b8] sm:$0xff] %v290
                %v292 = vld [vmem:[%s178 + $0x380] sm:$0xff]
                %293 = vst [vmem:[%s179 + $0x1c0] sm:$0xff] %v292
                %v294 = vld [vmem:[%s178 + $0x388] sm:$0xff]
                %295 = vst [vmem:[%s179 + $0x1c8] sm:$0xff] %v294
                %v296 = vld [vmem:[%s178 + $0x3a0] sm:$0xff]
                %297 = vst [vmem:[%s179 + $0x1d0] sm:$0xff] %v296
                %v298 = vld [vmem:[%s178 + $0x3a8] sm:$0xff]
                %299 = vst [vmem:[%s179 + $0x1d8] sm:$0xff] %v298
                %v300 = vld [vmem:[%s178 + $0x3c0] sm:$0xff]
                %301 = vst [vmem:[%s179 + $0x1e0] sm:$0xff] %v300
                %v302 = vld [vmem:[%s178 + $0x3c8] sm:$0xff]
                %303 = vst [vmem:[%s179 + $0x1e8] sm:$0xff] %v302
                %v304 = vld [vmem:[%s178 + $0x3e0] sm:$0xff]
                %305 = vst [vmem:[%s179 + $0x1f0] sm:$0xff] %v304
                %v306 = vld [vmem:[%s178 + $0x3e8] sm:$0xff]
                %307 = vst [vmem:[%s179 + $0x1f8] sm:$0xff] %v306
                %v308 = vld [vmem:[%s178 + $0x400] sm:$0xff]
                %309 = vst [vmem:[%s179 + $0x200] sm:$0xff] %v308
                %v310 = vld [vmem:[%s178 + $0x408] sm:$0xff]
                %311 = vst [vmem:[%s179 + $0x208] sm:$0xff] %v310
                %v312 = vld [vmem:[%s178 + $0x420] sm:$0xff]
                %313 = vst [vmem:[%s179 + $0x210] sm:$0xff] %v312
                %v314 = vld [vmem:[%s178 + $0x428] sm:$0xff]
                %315 = vst [vmem:[%s179 + $0x218] sm:$0xff] %v314
                %v316 = vld [vmem:[%s178 + $0x440] sm:$0xff]
                %317 = vst [vmem:[%s179 + $0x220] sm:$0xff] %v316
                %v318 = vld [vmem:[%s178 + $0x448] sm:$0xff]
                %319 = vst [vmem:[%s179 + $0x228] sm:$0xff] %v318
                %v320 = vld [vmem:[%s178 + $0x460] sm:$0xff]
                %321 = vst [vmem:[%s179 + $0x230] sm:$0xff] %v320
                %v322 = vld [vmem:[%s178 + $0x468] sm:$0xff]
                %323 = vst [vmem:[%s179 + $0x238] sm:$0xff] %v322
                %v324 = vld [vmem:[%s178 + $0x480] sm:$0xff]
                %325 = vst [vmem:[%s179 + $0x240] sm:$0xff] %v324
                %v326 = vld [vmem:[%s178 + $0x488] sm:$0xff]
                %327 = vst [vmem:[%s179 + $0x248] sm:$0xff] %v326
                %v328 = vld [vmem:[%s178 + $0x4a0] sm:$0xff]
                %329 = vst [vmem:[%s179 + $0x250] sm:$0xff] %v328
                %v330 = vld [vmem:[%s178 + $0x4a8] sm:$0xff]
                %331 = vst [vmem:[%s179 + $0x258] sm:$0xff] %v330
                %v332 = vld [vmem:[%s178 + $0x4c0] sm:$0xff]
                %333 = vst [vmem:[%s179 + $0x260] sm:$0xff] %v332
                %v334 = vld [vmem:[%s178 + $0x4c8] sm:$0xff]
                %335 = vst [vmem:[%s179 + $0x268] sm:$0xff] %v334
                %v336 = vld [vmem:[%s178 + $0x4e0] sm:$0xff]
                %337 = vst [vmem:[%s179 + $0x270] sm:$0xff] %v336
                %v338 = vld [vmem:[%s178 + $0x4e8] sm:$0xff]
                %339 = vst [vmem:[%s179 + $0x278] sm:$0xff] %v338
                %v340 = vld [vmem:[%s178 + $0x500] sm:$0xff]
                %341 = vst [vmem:[%s179 + $0x280] sm:$0xff] %v340
                %v342 = vld [vmem:[%s178 + $0x508] sm:$0xff]
                %343 = vst [vmem:[%s179 + $0x288] sm:$0xff] %v342
                %v344 = vld [vmem:[%s178 + $0x520] sm:$0xff]
                %345 = vst [vmem:[%s179 + $0x290] sm:$0xff] %v344
                %v346 = vld [vmem:[%s178 + $0x528] sm:$0xff]
                %347 = vst [vmem:[%s179 + $0x298] sm:$0xff] %v346
                %v348 = vld [vmem:[%s178 + $0x540] sm:$0xff]
                %349 = vst [vmem:[%s179 + $0x2a0] sm:$0xff] %v348
                %v350 = vld [vmem:[%s178 + $0x548] sm:$0xff]
                %351 = vst [vmem:[%s179 + $0x2a8] sm:$0xff] %v350
                %v352 = vld [vmem:[%s178 + $0x560] sm:$0xff]
                %353 = vst [vmem:[%s179 + $0x2b0] sm:$0xff] %v352
                %v354 = vld [vmem:[%s178 + $0x568] sm:$0xff]
                %355 = vst [vmem:[%s179 + $0x2b8] sm:$0xff] %v354
                %v356 = vld [vmem:[%s178 + $0x580] sm:$0xff]
                %357 = vst [vmem:[%s179 + $0x2c0] sm:$0xff] %v356
                %v358 = vld [vmem:[%s178 + $0x588] sm:$0xff]
                %359 = vst [vmem:[%s179 + $0x2c8] sm:$0xff] %v358
                %v360 = vld [vmem:[%s178 + $0x5a0] sm:$0xff]
                %361 = vst [vmem:[%s179 + $0x2d0] sm:$0xff] %v360
                %v362 = vld [vmem:[%s178 + $0x5a8] sm:$0xff]
                %363 = vst [vmem:[%s179 + $0x2d8] sm:$0xff] %v362
                %v364 = vld [vmem:[%s178 + $0x5c0] sm:$0xff]
                %365 = vst [vmem:[%s179 + $0x2e0] sm:$0xff] %v364
                %v366 = vld [vmem:[%s178 + $0x5c8] sm:$0xff]
                %367 = vst [vmem:[%s179 + $0x2e8] sm:$0xff] %v366
                %v368 = vld [vmem:[%s178 + $0x5e0] sm:$0xff]
                %369 = vst [vmem:[%s179 + $0x2f0] sm:$0xff] %v368
                %v370 = vld [vmem:[%s178 + $0x5e8] sm:$0xff]
                %371 = vst [vmem:[%s179 + $0x2f8] sm:$0xff] %v370
                %v372 = vld [vmem:[%s178 + $0x600] sm:$0xff]
                %373 = vst [vmem:[%s179 + $0x300] sm:$0xff] %v372
                %v374 = vld [vmem:[%s178 + $0x608] sm:$0xff]
                %375 = vst [vmem:[%s179 + $0x308] sm:$0xff] %v374
                %v376 = vld [vmem:[%s178 + $0x620] sm:$0xff]
                %377 = vst [vmem:[%s179 + $0x310] sm:$0xff] %v376
                %v378 = vld [vmem:[%s178 + $0x628] sm:$0xff]
                %379 = vst [vmem:[%s179 + $0x318] sm:$0xff] %v378
                %v380 = vld [vmem:[%s178 + $0x640] sm:$0xff]
                %381 = vst [vmem:[%s179 + $0x320] sm:$0xff] %v380
                %v382 = vld [vmem:[%s178 + $0x648] sm:$0xff]
                %383 = vst [vmem:[%s179 + $0x328] sm:$0xff] %v382
                %v384 = vld [vmem:[%s178 + $0x660] sm:$0xff]
                %385 = vst [vmem:[%s179 + $0x330] sm:$0xff] %v384
                %v386 = vld [vmem:[%s178 + $0x668] sm:$0xff]
                %387 = vst [vmem:[%s179 + $0x338] sm:$0xff] %v386
                %v388 = vld [vmem:[%s178 + $0x680] sm:$0xff]
                %389 = vst [vmem:[%s179 + $0x340] sm:$0xff] %v388
                %v390 = vld [vmem:[%s178 + $0x688] sm:$0xff]
                %391 = vst [vmem:[%s179 + $0x348] sm:$0xff] %v390
                %v392 = vld [vmem:[%s178 + $0x6a0] sm:$0xff]
                %393 = vst [vmem:[%s179 + $0x350] sm:$0xff] %v392
                %v394 = vld [vmem:[%s178 + $0x6a8] sm:$0xff]
                %395 = vst [vmem:[%s179 + $0x358] sm:$0xff] %v394
                %v396 = vld [vmem:[%s178 + $0x6c0] sm:$0xff]
                %397 = vst [vmem:[%s179 + $0x360] sm:$0xff] %v396
                %v398 = vld [vmem:[%s178 + $0x6c8] sm:$0xff]
                %399 = vst [vmem:[%s179 + $0x368] sm:$0xff] %v398
                %v400 = vld [vmem:[%s178 + $0x6e0] sm:$0xff]
                %401 = vst [vmem:[%s179 + $0x370] sm:$0xff] %v400
                %v402 = vld [vmem:[%s178 + $0x6e8] sm:$0xff]
                %403 = vst [vmem:[%s179 + $0x378] sm:$0xff] %v402
                %v404 = vld [vmem:[%s178 + $0x700] sm:$0xff]
                %405 = vst [vmem:[%s179 + $0x380] sm:$0xff] %v404
                %v406 = vld [vmem:[%s178 + $0x708] sm:$0xff]
                %407 = vst [vmem:[%s179 + $0x388] sm:$0xff] %v406
                %v408 = vld [vmem:[%s178 + $0x720] sm:$0xff]
                %409 = vst [vmem:[%s179 + $0x390] sm:$0xff] %v408
                %v410 = vld [vmem:[%s178 + $0x728] sm:$0xff]
                %411 = vst [vmem:[%s179 + $0x398] sm:$0xff] %v410
                %v412 = vld [vmem:[%s178 + $0x740] sm:$0xff]
                %413 = vst [vmem:[%s179 + $0x3a0] sm:$0xff] %v412
                %v414 = vld [vmem:[%s178 + $0x748] sm:$0xff]
                %415 = vst [vmem:[%s179 + $0x3a8] sm:$0xff] %v414
                %v416 = vld [vmem:[%s178 + $0x760] sm:$0xff]
                %417 = vst [vmem:[%s179 + $0x3b0] sm:$0xff] %v416
                %v418 = vld [vmem:[%s178 + $0x768] sm:$0xff]
                %419 = vst [vmem:[%s179 + $0x3b8] sm:$0xff] %v418
                %v420 = vld [vmem:[%s178 + $0x780] sm:$0xff]
                %421 = vst [vmem:[%s179 + $0x3c0] sm:$0xff] %v420
                %v422 = vld [vmem:[%s178 + $0x788] sm:$0xff]
                %423 = vst [vmem:[%s179 + $0x3c8] sm:$0xff] %v422
                %v424 = vld [vmem:[%s178 + $0x7a0] sm:$0xff]
                %425 = vst [vmem:[%s179 + $0x3d0] sm:$0xff] %v424
                %v426 = vld [vmem:[%s178 + $0x7a8] sm:$0xff]
                %427 = vst [vmem:[%s179 + $0x3d8] sm:$0xff] %v426
                %v428 = vld [vmem:[%s178 + $0x7c0] sm:$0xff]
                %429 = vst [vmem:[%s179 + $0x3e0] sm:$0xff] %v428
                %v430 = vld [vmem:[%s178 + $0x7c8] sm:$0xff]
                %431 = vst [vmem:[%s179 + $0x3e8] sm:$0xff] %v430
                %v432 = vld [vmem:[%s178 + $0x7e0] sm:$0xff]
                %433 = vst [vmem:[%s179 + $0x3f0] sm:$0xff] %v432
                %v434 = vld [vmem:[%s178 + $0x7e8] sm:$0xff]
                %435 = vst [vmem:[%s179 + $0x3f8] sm:$0xff] %v434
                %v436 = vld [vmem:[%s178 + $0x800] sm:$0xff]
                %437 = vst [vmem:[%s179 + $0x400] sm:$0xff] %v436
                %v438 = vld [vmem:[%s178 + $0x808] sm:$0xff]
                %439 = vst [vmem:[%s179 + $0x408] sm:$0xff] %v438
                %v440 = vld [vmem:[%s178 + $0x820] sm:$0xff]
                %441 = vst [vmem:[%s179 + $0x410] sm:$0xff] %v440
                %v442 = vld [vmem:[%s178 + $0x828] sm:$0xff]
                %443 = vst [vmem:[%s179 + $0x418] sm:$0xff] %v442
                %v444 = vld [vmem:[%s178 + $0x840] sm:$0xff]
                %445 = vst [vmem:[%s179 + $0x420] sm:$0xff] %v444
                %v446 = vld [vmem:[%s178 + $0x848] sm:$0xff]
                %447 = vst [vmem:[%s179 + $0x428] sm:$0xff] %v446
                %v448 = vld [vmem:[%s178 + $0x860] sm:$0xff]
                %449 = vst [vmem:[%s179 + $0x430] sm:$0xff] %v448
                %v450 = vld [vmem:[%s178 + $0x868] sm:$0xff]
                %451 = vst [vmem:[%s179 + $0x438] sm:$0xff] %v450
                %v452 = vld [vmem:[%s178 + $0x880] sm:$0xff]
                %453 = vst [vmem:[%s179 + $0x440] sm:$0xff] %v452
                %v454 = vld [vmem:[%s178 + $0x888] sm:$0xff]
                %455 = vst [vmem:[%s179 + $0x448] sm:$0xff] %v454
                %v456 = vld [vmem:[%s178 + $0x8a0] sm:$0xff]
                %457 = vst [vmem:[%s179 + $0x450] sm:$0xff] %v456
                %v458 = vld [vmem:[%s178 + $0x8a8] sm:$0xff]
                %459 = vst [vmem:[%s179 + $0x458] sm:$0xff] %v458
                %v460 = vld [vmem:[%s178 + $0x8c0] sm:$0xff]
                %461 = vst [vmem:[%s179 + $0x460] sm:$0xff] %v460
                %v462 = vld [vmem:[%s178 + $0x8c8] sm:$0xff]
                %463 = vst [vmem:[%s179 + $0x468] sm:$0xff] %v462
                %v464 = vld [vmem:[%s178 + $0x8e0] sm:$0xff]
                %465 = vst [vmem:[%s179 + $0x470] sm:$0xff] %v464
                %v466 = vld [vmem:[%s178 + $0x8e8] sm:$0xff]
                %467 = vst [vmem:[%s179 + $0x478] sm:$0xff] %v466
                %v468 = vld [vmem:[%s178 + $0x900] sm:$0xff]
                %469 = vst [vmem:[%s179 + $0x480] sm:$0xff] %v468
                %v470 = vld [vmem:[%s178 + $0x908] sm:$0xff]
                %471 = vst [vmem:[%s179 + $0x488] sm:$0xff] %v470
                %v472 = vld [vmem:[%s178 + $0x920] sm:$0xff]
                %473 = vst [vmem:[%s179 + $0x490] sm:$0xff] %v472
                %v474 = vld [vmem:[%s178 + $0x928] sm:$0xff]
                %475 = vst [vmem:[%s179 + $0x498] sm:$0xff] %v474
                %v476 = vld [vmem:[%s178 + $0x940] sm:$0xff]
                %477 = vst [vmem:[%s179 + $0x4a0] sm:$0xff] %v476
                %v478 = vld [vmem:[%s178 + $0x948] sm:$0xff]
                %479 = vst [vmem:[%s179 + $0x4a8] sm:$0xff] %v478
                %v480 = vld [vmem:[%s178 + $0x960] sm:$0xff]
                %481 = vst [vmem:[%s179 + $0x4b0] sm:$0xff] %v480
                %v482 = vld [vmem:[%s178 + $0x968] sm:$0xff]
                %483 = vst [vmem:[%s179 + $0x4b8] sm:$0xff] %v482
                %v484 = vld [vmem:[%s178 + $0x980] sm:$0xff]
                %485 = vst [vmem:[%s179 + $0x4c0] sm:$0xff] %v484
                %v486 = vld [vmem:[%s178 + $0x988] sm:$0xff]
                %487 = vst [vmem:[%s179 + $0x4c8] sm:$0xff] %v486
                %v488 = vld [vmem:[%s178 + $0x9a0] sm:$0xff]
                %489 = vst [vmem:[%s179 + $0x4d0] sm:$0xff] %v488
                %v490 = vld [vmem:[%s178 + $0x9a8] sm:$0xff]
                %491 = vst [vmem:[%s179 + $0x4d8] sm:$0xff] %v490
                %v492 = vld [vmem:[%s178 + $0x9c0] sm:$0xff]
                %493 = vst [vmem:[%s179 + $0x4e0] sm:$0xff] %v492
                %v494 = vld [vmem:[%s178 + $0x9c8] sm:$0xff]
                %495 = vst [vmem:[%s179 + $0x4e8] sm:$0xff] %v494
                %v496 = vld [vmem:[%s178 + $0x9e0] sm:$0xff]
                %497 = vst [vmem:[%s179 + $0x4f0] sm:$0xff] %v496
                %v498 = vld [vmem:[%s178 + $0x9e8] sm:$0xff]
                %499 = vst [vmem:[%s179 + $0x4f8] sm:$0xff] %v498
              $region37: #{forward.8} parent=31 // loop_footer
                %s177 = sadd.s32 1, %s173
              $region38: #{forward.8} parent=31 // loop_footer_branch
                %172 = sbr.rel target = $region34
              $region39: #{forward.8} parent=31 // loop_exit
                _
            $region32: #{forward.8} parent=27 // pred_fallthru
              _
            // Predicated region
            $region40: #{forward.8} parent=27 // pred_check
              _
            $region41: #{forward.8} parent=27 // pred_check_branch
              %501 = sbr.rel target = $region43
            $region42: #{forward.8} parent=27 // pred_region
              _
            $region43: #{forward.8} parent=27 // pred_fallthru
              _
          $region28: #{forward.8} parent=23 // pred_fallthru
            _
          %502 = vnop
        $region24: #{forward.8} parent=15 // pred_fallthru
          _
        // Predicated region
        $region44: #{forward.8} parent=15 // pred_check
          %p503 = pneg %p95
        $region45: #{forward.8} parent=15 // pred_check_branch
          %505 = sbr.rel (%p503) target = $region47
        $region46: #{forward.8} parent=15 // pred_region
          %s506 = smul.u32 4, %s16
          %p507 = scmp.lt.s32.totalorder %s506, 7
          %s508 = scalar_select %p507, %s506, 7
          %s509 = scalar_lea.vmem %s2, %s508
          %s510 = smul.u32 4, %s16
        $region47: #{forward.8} parent=15 // pred_fallthru
          _
      $region16: #{forward.8} parent=5 // pred_fallthru
        _
      %p511 = scmp.le.s32.totalorder 1, %s9
      %p512 = scmp.lt.s32.totalorder %s9, 11
      %p513 = pnand %p511, %p512
      %p514 = pneg %p513
      // Predicated region
      $region48: #{forward.8} parent=5 // pred_check
        _
      $region49: #{forward.8} parent=5 // pred_check_branch
        %516 = sbr.rel (%p513) target = $region51
      $region50: #{forward.8} parent=5 // pred_region
        %s517 = ssub.s32 %s9, 1
        %s518 = sand.u32 %s62, 1
        %s519 = sand.u32 %s62, 1
        %s520 = smul.addr %s519, 1280
        %s521 = scalar_lea.vmem [#allocation2], %s520
        // Predicated region
        $region52: #{forward.8} parent=50 // pred_check
          %p522 = pneg %p75
        $region53: #{forward.8} parent=50 // pred_check_branch
          %524 = sbr.rel (%p522) target = $region55
        $region54: #{forward.8} parent=50 // pred_region
          _
        $region55: #{forward.8} parent=50 // pred_fallthru
          _
        %s525 = smul.u32 5, %s19
        %p526 = scmp.lt.s32.totalorder %s525, 24
        %s527 = scalar_select %p526, %s525, 24
        %s528 = smul.addr %s527, 2
        %s529 = scalar_lea.vmem %s0, %s528
        %p530 = pneg %p47
        %p531 = pneg %p44
        %s532 = sand.u32 %s62, 1
        %s533 = sand.u32 %s62, 1
        %s534 = smul.addr %s533, 1280
        %s535 = scalar_lea.vmem [#allocation2], %s534
        %p536 = pneg %p75
        %p537 = pneg %p72
        %s538 = smul.u32 4, %s18
        %p539 = scmp.lt.s32.totalorder %s538, 7
        %s540 = scalar_select %p539, %s538, 7
        %s541 = scalar_lea.vmem %s2, %s540
        %p542 = pneg %p101
        %p543 = pneg %p98
        %p544 = pneg %p127
        %p545 = pneg %p124
        %s546 = smul.u32 4, %s18
        %p547 = scmp.lt.s32.totalorder %s546, 7
        %s548 = scalar_select %p547, %s546, 7
        %s549 = smul.addr %s548, 2
        %s550 = scalar_lea.vmem %s3, %s549
        %s551 = smul.u32 5, %s19
        %p552 = scmp.lt.s32.totalorder %s551, 24
        %s553 = scalar_select %p552, %s551, 24
        %s554 = smul.addr %s553, 2
        %s555 = scalar_lea.vmem %s0, %s554
        %s556 = smul.u32 5, %s19
        %s557 = smul.u32 80, %s19
        %s558 = smul.u32 4, %s18
        %s559 = smul.u32 4, %s18
        %p560 = scmp.lt.s32.totalorder %s559, 7
        %s561 = scalar_select %p560, %s559, 7
        %s562 = scalar_lea.vmem %s2, %s561
        %s563 = smul.u32 4, %s18
        %s564 = smul.u32 4, %s18
        %p565 = scmp.lt.s32.totalorder %s564, 7
        %s566 = scalar_select %p565, %s564, 7
        %s567 = smul.addr %s566, 2
        %s568 = scalar_lea.vmem %s3, %s567
        %s569 = smul.u32 4, %s18
        %p571 = scmp.eq.s32.totalorder %s19, 0
        // Predicated region
        $region56: #{forward.8} parent=50 // pred_check
          %p572 = pneg %p571
        $region57: #{forward.8} parent=50 // pred_check_branch
          %574 = sbr.rel (%p572) target = $region59
        $region58: #{forward.8} parent=50 // pred_region
          %575 = vst [vmem:[%s568] sm:$0xff] 0.0
        $region59: #{forward.8} parent=50 // pred_fallthru
          _
        %v576 = vld [vmem:[%s568] sm:$0xff]
        %v577 = vld [vmem:[%s555] sm:$0xff]
        %v578 = vld [vmem:[%s555 + $0x8] sm:$0x3]
        %v581 = vcombine.high %v577, %v577
        %v583 = vunpack.c.l.s4 1983009808
        %v584 = vunpack.c.0.s8 %v583
        %v585 = vlaneseq
        %v586 = vshrl.u32 %v585, 7
        %v587 = vsub.s32 %v584, %v586
        %v588 = vrot.slane %v577, %v587
        %v590 = vunpack.c.l.s4 1983009808
        %v591 = vunpack.c.0.s8 %v590
        %v592 = vlaneseq
        %v593 = vshrl.u32 %v592, 7
        %v594 = vsub.s32 %v591, %v593
        %v595 = vrot.slane %v581, %v594
        %v596 = vcombine.high %v588, %v588
        %v597 = vcombine.high %v595, %v595
        %v599 = vunpack.c.l.s4 1983009808
        %v600 = vunpack.c.0.s8 %v599
        %v601 = vlaneseq
        %v602 = vshrl.u32 %v601, 7
        %v603 = vsub.s32 %v600, %v602
        %v604 = vrot.slane %v578, %v603
        %v610 = vpack.c.bf16 %v588, %v588
        %v611 = vpack.c.bf16 %v596, %v596
        %v612 = vpack.c.bf16 %v595, %v595
        %v613 = vpack.c.bf16 %v597, %v597
        %v614 = vpack.c.bf16 %v604, %v604
        %v615 = vld [vmem:[%s521] sm:$0xff]
        %v616 = vld [vmem:[%s521 + $0x8] sm:$0xff]
        %v617 = vld [vmem:[%s521 + $0x10] sm:$0xff]
        %v618 = vld [vmem:[%s521 + $0x18] sm:$0xff]
        %v619 = vld [vmem:[%s521 + $0x20] sm:$0xff]
        %v620 = vld [vmem:[%s521 + $0x28] sm:$0xff]
        %v621 = vld [vmem:[%s521 + $0x30] sm:$0xff]
        %v622 = vld [vmem:[%s521 + $0x38] sm:$0xff]
        %v623 = vld [vmem:[%s521 + $0x40] sm:$0xff]
        %v624 = vld [vmem:[%s521 + $0x48] sm:$0xff]
        %v625 = vld [vmem:[%s521 + $0x50] sm:$0xff]
        %v626 = vld [vmem:[%s521 + $0x58] sm:$0xff]
        %v627 = vld [vmem:[%s521 + $0x60] sm:$0xff]
        %v628 = vld [vmem:[%s521 + $0x68] sm:$0xff]
        %v629 = vld [vmem:[%s521 + $0x70] sm:$0xff]
        %v630 = vld [vmem:[%s521 + $0x78] sm:$0xff]
        %v631 = vld [vmem:[%s521 + $0x80] sm:$0xff]
        %v632 = vld [vmem:[%s521 + $0x88] sm:$0xff]
        %v633 = vld [vmem:[%s521 + $0x90] sm:$0xff]
        %v634 = vld [vmem:[%s521 + $0x98] sm:$0xff]
        %v635 = vld [vmem:[%s521 + $0xa0] sm:$0xff]
        %v636 = vld [vmem:[%s521 + $0xa8] sm:$0xff]
        %v637 = vld [vmem:[%s521 + $0xb0] sm:$0xff]
        %v638 = vld [vmem:[%s521 + $0xb8] sm:$0xff]
        %v639 = vld [vmem:[%s521 + $0xc0] sm:$0xff]
        %v640 = vld [vmem:[%s521 + $0xc8] sm:$0xff]
        %v641 = vld [vmem:[%s521 + $0xd0] sm:$0xff]
        %v642 = vld [vmem:[%s521 + $0xd8] sm:$0xff]
        %v643 = vld [vmem:[%s521 + $0xe0] sm:$0xff]
        %v644 = vld [vmem:[%s521 + $0xe8] sm:$0xff]
        %v645 = vld [vmem:[%s521 + $0xf0] sm:$0xff]
        %v646 = vld [vmem:[%s521 + $0xf8] sm:$0xff]
        %v647 = vld [vmem:[%s521 + $0x100] sm:$0xff]
        %v648 = vld [vmem:[%s521 + $0x108] sm:$0xff]
        %v649 = vld [vmem:[%s521 + $0x110] sm:$0xff]
        %v650 = vld [vmem:[%s521 + $0x118] sm:$0xff]
        %v651 = vld [vmem:[%s521 + $0x120] sm:$0xff]
        %v652 = vld [vmem:[%s521 + $0x128] sm:$0xff]
        %v653 = vld [vmem:[%s521 + $0x130] sm:$0xff]
        %v654 = vld [vmem:[%s521 + $0x138] sm:$0xff]
        %v655 = vld [vmem:[%s521 + $0x140] sm:$0xff]
        %v656 = vld [vmem:[%s521 + $0x148] sm:$0xff]
        %v657 = vld [vmem:[%s521 + $0x150] sm:$0xff]
        %v658 = vld [vmem:[%s521 + $0x158] sm:$0xff]
        %v659 = vld [vmem:[%s521 + $0x160] sm:$0xff]
        %v660 = vld [vmem:[%s521 + $0x168] sm:$0xff]
        %v661 = vld [vmem:[%s521 + $0x170] sm:$0xff]
        %v662 = vld [vmem:[%s521 + $0x178] sm:$0xff]
        %v663 = vld [vmem:[%s521 + $0x180] sm:$0xff]
        %v664 = vld [vmem:[%s521 + $0x188] sm:$0xff]
        %v665 = vld [vmem:[%s521 + $0x190] sm:$0xff]
        %v666 = vld [vmem:[%s521 + $0x198] sm:$0xff]
        %v667 = vld [vmem:[%s521 + $0x1a0] sm:$0xff]
        %v668 = vld [vmem:[%s521 + $0x1a8] sm:$0xff]
        %v669 = vld [vmem:[%s521 + $0x1b0] sm:$0xff]
        %v670 = vld [vmem:[%s521 + $0x1b8] sm:$0xff]
        %v671 = vld [vmem:[%s521 + $0x1c0] sm:$0xff]
        %v672 = vld [vmem:[%s521 + $0x1c8] sm:$0xff]
        %v673 = vld [vmem:[%s521 + $0x1d0] sm:$0xff]
        %v674 = vld [vmem:[%s521 + $0x1d8] sm:$0xff]
        %v675 = vld [vmem:[%s521 + $0x1e0] sm:$0xff]
        %v676 = vld [vmem:[%s521 + $0x1e8] sm:$0xff]
        %v677 = vld [vmem:[%s521 + $0x1f0] sm:$0xff]
        %v678 = vld [vmem:[%s521 + $0x1f8] sm:$0xff]
        %v679 = vld [vmem:[%s521 + $0x200] sm:$0xff]
        %v680 = vld [vmem:[%s521 + $0x208] sm:$0xff]
        %v681 = vld [vmem:[%s521 + $0x210] sm:$0xff]
        %v682 = vld [vmem:[%s521 + $0x218] sm:$0xff]
        %v683 = vld [vmem:[%s521 + $0x220] sm:$0xff]
        %v684 = vld [vmem:[%s521 + $0x228] sm:$0xff]
        %v685 = vld [vmem:[%s521 + $0x230] sm:$0xff]
        %v686 = vld [vmem:[%s521 + $0x238] sm:$0xff]
        %v687 = vld [vmem:[%s521 + $0x240] sm:$0xff]
        %v688 = vld [vmem:[%s521 + $0x248] sm:$0xff]
        %v689 = vld [vmem:[%s521 + $0x250] sm:$0xff]
        %v690 = vld [vmem:[%s521 + $0x258] sm:$0xff]
        %v691 = vld [vmem:[%s521 + $0x260] sm:$0xff]
        %v692 = vld [vmem:[%s521 + $0x268] sm:$0xff]
        %v693 = vld [vmem:[%s521 + $0x270] sm:$0xff]
        %v694 = vld [vmem:[%s521 + $0x278] sm:$0xff]
        %v695 = vld [vmem:[%s521 + $0x280] sm:$0xff]
        %v696 = vld [vmem:[%s521 + $0x288] sm:$0xff]
        %v697 = vld [vmem:[%s521 + $0x290] sm:$0xff]
        %v698 = vld [vmem:[%s521 + $0x298] sm:$0xff]
        %v699 = vld [vmem:[%s521 + $0x2a0] sm:$0xff]
        %v700 = vld [vmem:[%s521 + $0x2a8] sm:$0xff]
        %v701 = vld [vmem:[%s521 + $0x2b0] sm:$0xff]
        %v702 = vld [vmem:[%s521 + $0x2b8] sm:$0xff]
        %v703 = vld [vmem:[%s521 + $0x2c0] sm:$0xff]
        %v704 = vld [vmem:[%s521 + $0x2c8] sm:$0xff]
        %v705 = vld [vmem:[%s521 + $0x2d0] sm:$0xff]
        %v706 = vld [vmem:[%s521 + $0x2d8] sm:$0xff]
        %v707 = vld [vmem:[%s521 + $0x2e0] sm:$0xff]
        %v708 = vld [vmem:[%s521 + $0x2e8] sm:$0xff]
        %v709 = vld [vmem:[%s521 + $0x2f0] sm:$0xff]
        %v710 = vld [vmem:[%s521 + $0x2f8] sm:$0xff]
        %v711 = vld [vmem:[%s521 + $0x300] sm:$0xff]
        %v712 = vld [vmem:[%s521 + $0x308] sm:$0xff]
        %v713 = vld [vmem:[%s521 + $0x310] sm:$0xff]
        %v714 = vld [vmem:[%s521 + $0x318] sm:$0xff]
        %v715 = vld [vmem:[%s521 + $0x320] sm:$0xff]
        %v716 = vld [vmem:[%s521 + $0x328] sm:$0xff]
        %v717 = vld [vmem:[%s521 + $0x330] sm:$0xff]
        %v718 = vld [vmem:[%s521 + $0x338] sm:$0xff]
        %v719 = vld [vmem:[%s521 + $0x340] sm:$0xff]
        %v720 = vld [vmem:[%s521 + $0x348] sm:$0xff]
        %v721 = vld [vmem:[%s521 + $0x350] sm:$0xff]
        %v722 = vld [vmem:[%s521 + $0x358] sm:$0xff]
        %v723 = vld [vmem:[%s521 + $0x360] sm:$0xff]
        %v724 = vld [vmem:[%s521 + $0x368] sm:$0xff]
        %v725 = vld [vmem:[%s521 + $0x370] sm:$0xff]
        %v726 = vld [vmem:[%s521 + $0x378] sm:$0xff]
        %v727 = vld [vmem:[%s521 + $0x380] sm:$0xff]
        %v728 = vld [vmem:[%s521 + $0x388] sm:$0xff]
        %v729 = vld [vmem:[%s521 + $0x390] sm:$0xff]
        %v730 = vld [vmem:[%s521 + $0x398] sm:$0xff]
        %v731 = vld [vmem:[%s521 + $0x3a0] sm:$0xff]
        %v732 = vld [vmem:[%s521 + $0x3a8] sm:$0xff]
        %v733 = vld [vmem:[%s521 + $0x3b0] sm:$0xff]
        %v734 = vld [vmem:[%s521 + $0x3b8] sm:$0xff]
        %v735 = vld [vmem:[%s521 + $0x3c0] sm:$0xff]
        %v736 = vld [vmem:[%s521 + $0x3c8] sm:$0xff]
        %v737 = vld [vmem:[%s521 + $0x3d0] sm:$0xff]
        %v738 = vld [vmem:[%s521 + $0x3d8] sm:$0xff]
        %v739 = vld [vmem:[%s521 + $0x3e0] sm:$0xff]
        %v740 = vld [vmem:[%s521 + $0x3e8] sm:$0xff]
        %v741 = vld [vmem:[%s521 + $0x3f0] sm:$0xff]
        %v742 = vld [vmem:[%s521 + $0x3f8] sm:$0xff]
        %v743 = vld [vmem:[%s521 + $0x400] sm:$0xff]
        %v744 = vld [vmem:[%s521 + $0x408] sm:$0xff]
        %v745 = vld [vmem:[%s521 + $0x410] sm:$0xff]
        %v746 = vld [vmem:[%s521 + $0x418] sm:$0xff]
        %v747 = vld [vmem:[%s521 + $0x420] sm:$0xff]
        %v748 = vld [vmem:[%s521 + $0x428] sm:$0xff]
        %v749 = vld [vmem:[%s521 + $0x430] sm:$0xff]
        %v750 = vld [vmem:[%s521 + $0x438] sm:$0xff]
        %v751 = vld [vmem:[%s521 + $0x440] sm:$0xff]
        %v752 = vld [vmem:[%s521 + $0x448] sm:$0xff]
        %v753 = vld [vmem:[%s521 + $0x450] sm:$0xff]
        %v754 = vld [vmem:[%s521 + $0x458] sm:$0xff]
        %v755 = vld [vmem:[%s521 + $0x460] sm:$0xff]
        %v756 = vld [vmem:[%s521 + $0x468] sm:$0xff]
        %v757 = vld [vmem:[%s521 + $0x470] sm:$0xff]
        %v758 = vld [vmem:[%s521 + $0x478] sm:$0xff]
        %v759 = vld [vmem:[%s521 + $0x480] sm:$0xff]
        %v760 = vld [vmem:[%s521 + $0x488] sm:$0xff]
        %v761 = vld [vmem:[%s521 + $0x490] sm:$0xff]
        %v762 = vld [vmem:[%s521 + $0x498] sm:$0xff]
        %v763 = vld [vmem:[%s521 + $0x4a0] sm:$0xff]
        %v764 = vld [vmem:[%s521 + $0x4a8] sm:$0xff]
        %v765 = vld [vmem:[%s521 + $0x4b0] sm:$0xff]
        %v766 = vld [vmem:[%s521 + $0x4b8] sm:$0xff]
        %v767 = vld [vmem:[%s521 + $0x4c0] sm:$0xff]
        %v768 = vld [vmem:[%s521 + $0x4c8] sm:$0xff]
        %v769 = vld [vmem:[%s521 + $0x4d0] sm:$0xff]
        %v770 = vld [vmem:[%s521 + $0x4d8] sm:$0xff]
        %v771 = vld [vmem:[%s521 + $0x4e0] sm:$0xff]
        %v772 = vld [vmem:[%s521 + $0x4e8] sm:$0xff]
        %v773 = vld [vmem:[%s521 + $0x4f0] sm:$0xff]
        %v774 = vld [vmem:[%s521 + $0x4f8] sm:$0xff]
        %v935 = vunpack.c.l.b16 %v615
        %v936 = vunpack.c.h.b16 %v615
        %v937 = vunpack.c.l.b16 %v616
        %v938 = vunpack.c.h.b16 %v616
        %v939 = vunpack.c.l.b16 %v617
        %v940 = vunpack.c.h.b16 %v617
        %v941 = vunpack.c.l.b16 %v618
        %v942 = vunpack.c.h.b16 %v618
        %v943 = vunpack.c.l.b16 %v619
        %v944 = vunpack.c.h.b16 %v619
        %v945 = vunpack.c.l.b16 %v620
        %v946 = vunpack.c.h.b16 %v620
        %v947 = vunpack.c.l.b16 %v621
        %v948 = vunpack.c.h.b16 %v621
        %v949 = vunpack.c.l.b16 %v622
        %v950 = vunpack.c.h.b16 %v622
        %v951 = vunpack.c.l.b16 %v623
        %v952 = vunpack.c.h.b16 %v623
        %v953 = vunpack.c.l.b16 %v624
        %v954 = vunpack.c.h.b16 %v624
        %v955 = vunpack.c.l.b16 %v625
        %v956 = vunpack.c.h.b16 %v625
        %v957 = vunpack.c.l.b16 %v626
        %v958 = vunpack.c.h.b16 %v626
        %v959 = vunpack.c.l.b16 %v627
        %v960 = vunpack.c.h.b16 %v627
        %v961 = vunpack.c.l.b16 %v628
        %v962 = vunpack.c.h.b16 %v628
        %v963 = vunpack.c.l.b16 %v629
        %v964 = vunpack.c.h.b16 %v629
        %v965 = vunpack.c.l.b16 %v630
        %v966 = vunpack.c.h.b16 %v630
        %v967 = vunpack.c.l.b16 %v631
        %v968 = vunpack.c.h.b16 %v631
        %v969 = vunpack.c.l.b16 %v632
        %v970 = vunpack.c.h.b16 %v632
        %v971 = vunpack.c.l.b16 %v633
        %v972 = vunpack.c.h.b16 %v633
        %v973 = vunpack.c.l.b16 %v634
        %v974 = vunpack.c.h.b16 %v634
        %v975 = vunpack.c.l.b16 %v635
        %v976 = vunpack.c.h.b16 %v635
        %v977 = vunpack.c.l.b16 %v636
        %v978 = vunpack.c.h.b16 %v636
        %v979 = vunpack.c.l.b16 %v637
        %v980 = vunpack.c.h.b16 %v637
        %v981 = vunpack.c.l.b16 %v638
        %v982 = vunpack.c.h.b16 %v638
        %v983 = vunpack.c.l.b16 %v639
        %v984 = vunpack.c.h.b16 %v639
        %v985 = vunpack.c.l.b16 %v640
        %v986 = vunpack.c.h.b16 %v640
        %v987 = vunpack.c.l.b16 %v641
        %v988 = vunpack.c.h.b16 %v641
        %v989 = vunpack.c.l.b16 %v642
        %v990 = vunpack.c.h.b16 %v642
        %v991 = vunpack.c.l.b16 %v643
        %v992 = vunpack.c.h.b16 %v643
        %v993 = vunpack.c.l.b16 %v644
        %v994 = vunpack.c.h.b16 %v644
        %v995 = vunpack.c.l.b16 %v645
        %v996 = vunpack.c.h.b16 %v645
        %v997 = vunpack.c.l.b16 %v646
        %v998 = vunpack.c.h.b16 %v646
        %v999 = vunpack.c.l.b16 %v647
        %v1000 = vunpack.c.h.b16 %v647
        %v1001 = vunpack.c.l.b16 %v648
        %v1002 = vunpack.c.h.b16 %v648
        %v1003 = vunpack.c.l.b16 %v649
        %v1004 = vunpack.c.h.b16 %v649
        %v1005 = vunpack.c.l.b16 %v650
        %v1006 = vunpack.c.h.b16 %v650
        %v1007 = vunpack.c.l.b16 %v651
        %v1008 = vunpack.c.h.b16 %v651
        %v1009 = vunpack.c.l.b16 %v652
        %v1010 = vunpack.c.h.b16 %v652
        %v1011 = vunpack.c.l.b16 %v653
        %v1012 = vunpack.c.h.b16 %v653
        %v1013 = vunpack.c.l.b16 %v654
        %v1014 = vunpack.c.h.b16 %v654
        %v1015 = vunpack.c.l.b16 %v655
        %v1016 = vunpack.c.h.b16 %v655
        %v1017 = vunpack.c.l.b16 %v656
        %v1018 = vunpack.c.h.b16 %v656
        %v1019 = vunpack.c.l.b16 %v657
        %v1020 = vunpack.c.h.b16 %v657
        %v1021 = vunpack.c.l.b16 %v658
        %v1022 = vunpack.c.h.b16 %v658
        %v1023 = vunpack.c.l.b16 %v659
        %v1024 = vunpack.c.h.b16 %v659
        %v1025 = vunpack.c.l.b16 %v660
        %v1026 = vunpack.c.h.b16 %v660
        %v1027 = vunpack.c.l.b16 %v661
        %v1028 = vunpack.c.h.b16 %v661
        %v1029 = vunpack.c.l.b16 %v662
        %v1030 = vunpack.c.h.b16 %v662
        %v1031 = vunpack.c.l.b16 %v663
        %v1032 = vunpack.c.h.b16 %v663
        %v1033 = vunpack.c.l.b16 %v664
        %v1034 = vunpack.c.h.b16 %v664
        %v1035 = vunpack.c.l.b16 %v665
        %v1036 = vunpack.c.h.b16 %v665
        %v1037 = vunpack.c.l.b16 %v666
        %v1038 = vunpack.c.h.b16 %v666
        %v1039 = vunpack.c.l.b16 %v667
        %v1040 = vunpack.c.h.b16 %v667
        %v1041 = vunpack.c.l.b16 %v668
        %v1042 = vunpack.c.h.b16 %v668
        %v1043 = vunpack.c.l.b16 %v669
        %v1044 = vunpack.c.h.b16 %v669
        %v1045 = vunpack.c.l.b16 %v670
        %v1046 = vunpack.c.h.b16 %v670
        %v1047 = vunpack.c.l.b16 %v671
        %v1048 = vunpack.c.h.b16 %v671
        %v1049 = vunpack.c.l.b16 %v672
        %v1050 = vunpack.c.h.b16 %v672
        %v1051 = vunpack.c.l.b16 %v673
        %v1052 = vunpack.c.h.b16 %v673
        %v1053 = vunpack.c.l.b16 %v674
        %v1054 = vunpack.c.h.b16 %v674
        %v1055 = vunpack.c.l.b16 %v675
        %v1056 = vunpack.c.h.b16 %v675
        %v1057 = vunpack.c.l.b16 %v676
        %v1058 = vunpack.c.h.b16 %v676
        %v1059 = vunpack.c.l.b16 %v677
        %v1060 = vunpack.c.h.b16 %v677
        %v1061 = vunpack.c.l.b16 %v678
        %v1062 = vunpack.c.h.b16 %v678
        %v1063 = vunpack.c.l.b16 %v679
        %v1064 = vunpack.c.h.b16 %v679
        %v1065 = vunpack.c.l.b16 %v680
        %v1066 = vunpack.c.h.b16 %v680
        %v1067 = vunpack.c.l.b16 %v681
        %v1068 = vunpack.c.h.b16 %v681
        %v1069 = vunpack.c.l.b16 %v682
        %v1070 = vunpack.c.h.b16 %v682
        %v1071 = vunpack.c.l.b16 %v683
        %v1072 = vunpack.c.h.b16 %v683
        %v1073 = vunpack.c.l.b16 %v684
        %v1074 = vunpack.c.h.b16 %v684
        %v1075 = vunpack.c.l.b16 %v685
        %v1076 = vunpack.c.h.b16 %v685
        %v1077 = vunpack.c.l.b16 %v686
        %v1078 = vunpack.c.h.b16 %v686
        %v1079 = vunpack.c.l.b16 %v687
        %v1080 = vunpack.c.h.b16 %v687
        %v1081 = vunpack.c.l.b16 %v688
        %v1082 = vunpack.c.h.b16 %v688
        %v1083 = vunpack.c.l.b16 %v689
        %v1084 = vunpack.c.h.b16 %v689
        %v1085 = vunpack.c.l.b16 %v690
        %v1086 = vunpack.c.h.b16 %v690
        %v1087 = vunpack.c.l.b16 %v691
        %v1088 = vunpack.c.h.b16 %v691
        %v1089 = vunpack.c.l.b16 %v692
        %v1090 = vunpack.c.h.b16 %v692
        %v1091 = vunpack.c.l.b16 %v693
        %v1092 = vunpack.c.h.b16 %v693
        %v1093 = vunpack.c.l.b16 %v694
        %v1094 = vunpack.c.h.b16 %v694
        %v1095 = vunpack.c.l.b16 %v695
        %v1096 = vunpack.c.h.b16 %v695
        %v1097 = vunpack.c.l.b16 %v696
        %v1098 = vunpack.c.h.b16 %v696
        %v1099 = vunpack.c.l.b16 %v697
        %v1100 = vunpack.c.h.b16 %v697
        %v1101 = vunpack.c.l.b16 %v698
        %v1102 = vunpack.c.h.b16 %v698
        %v1103 = vunpack.c.l.b16 %v699
        %v1104 = vunpack.c.h.b16 %v699
        %v1105 = vunpack.c.l.b16 %v700
        %v1106 = vunpack.c.h.b16 %v700
        %v1107 = vunpack.c.l.b16 %v701
        %v1108 = vunpack.c.h.b16 %v701
        %v1109 = vunpack.c.l.b16 %v702
        %v1110 = vunpack.c.h.b16 %v702
        %v1111 = vunpack.c.l.b16 %v703
        %v1112 = vunpack.c.h.b16 %v703
        %v1113 = vunpack.c.l.b16 %v704
        %v1114 = vunpack.c.h.b16 %v704
        %v1115 = vunpack.c.l.b16 %v705
        %v1116 = vunpack.c.h.b16 %v705
        %v1117 = vunpack.c.l.b16 %v706
        %v1118 = vunpack.c.h.b16 %v706
        %v1119 = vunpack.c.l.b16 %v707
        %v1120 = vunpack.c.h.b16 %v707
        %v1121 = vunpack.c.l.b16 %v708
        %v1122 = vunpack.c.h.b16 %v708
        %v1123 = vunpack.c.l.b16 %v709
        %v1124 = vunpack.c.h.b16 %v709
        %v1125 = vunpack.c.l.b16 %v710
        %v1126 = vunpack.c.h.b16 %v710
        %v1127 = vunpack.c.l.b16 %v711
        %v1128 = vunpack.c.h.b16 %v711
        %v1129 = vunpack.c.l.b16 %v712
        %v1130 = vunpack.c.h.b16 %v712
        %v1131 = vunpack.c.l.b16 %v713
        %v1132 = vunpack.c.h.b16 %v713
        %v1133 = vunpack.c.l.b16 %v714
        %v1134 = vunpack.c.h.b16 %v714
        %v1135 = vunpack.c.l.b16 %v715
        %v1136 = vunpack.c.h.b16 %v715
        %v1137 = vunpack.c.l.b16 %v716
        %v1138 = vunpack.c.h.b16 %v716
        %v1139 = vunpack.c.l.b16 %v717
        %v1140 = vunpack.c.h.b16 %v717
        %v1141 = vunpack.c.l.b16 %v718
        %v1142 = vunpack.c.h.b16 %v718
        %v1143 = vunpack.c.l.b16 %v719
        %v1144 = vunpack.c.h.b16 %v719
        %v1145 = vunpack.c.l.b16 %v720
        %v1146 = vunpack.c.h.b16 %v720
        %v1147 = vunpack.c.l.b16 %v721
        %v1148 = vunpack.c.h.b16 %v721
        %v1149 = vunpack.c.l.b16 %v722
        %v1150 = vunpack.c.h.b16 %v722
        %v1151 = vunpack.c.l.b16 %v723
        %v1152 = vunpack.c.h.b16 %v723
        %v1153 = vunpack.c.l.b16 %v724
        %v1154 = vunpack.c.h.b16 %v724
        %v1155 = vunpack.c.l.b16 %v725
        %v1156 = vunpack.c.h.b16 %v725
        %v1157 = vunpack.c.l.b16 %v726
        %v1158 = vunpack.c.h.b16 %v726
        %v1159 = vunpack.c.l.b16 %v727
        %v1160 = vunpack.c.h.b16 %v727
        %v1161 = vunpack.c.l.b16 %v728
        %v1162 = vunpack.c.h.b16 %v728
        %v1163 = vunpack.c.l.b16 %v729
        %v1164 = vunpack.c.h.b16 %v729
        %v1165 = vunpack.c.l.b16 %v730
        %v1166 = vunpack.c.h.b16 %v730
        %v1167 = vunpack.c.l.b16 %v731
        %v1168 = vunpack.c.h.b16 %v731
        %v1169 = vunpack.c.l.b16 %v732
        %v1170 = vunpack.c.h.b16 %v732
        %v1171 = vunpack.c.l.b16 %v733
        %v1172 = vunpack.c.h.b16 %v733
        %v1173 = vunpack.c.l.b16 %v734
        %v1174 = vunpack.c.h.b16 %v734
        %v1175 = vunpack.c.l.b16 %v735
        %v1176 = vunpack.c.h.b16 %v735
        %v1177 = vunpack.c.l.b16 %v736
        %v1178 = vunpack.c.h.b16 %v736
        %v1179 = vunpack.c.l.b16 %v737
        %v1180 = vunpack.c.h.b16 %v737
        %v1181 = vunpack.c.l.b16 %v738
        %v1182 = vunpack.c.h.b16 %v738
        %v1183 = vunpack.c.l.b16 %v739
        %v1184 = vunpack.c.h.b16 %v739
        %v1185 = vunpack.c.l.b16 %v740
        %v1186 = vunpack.c.h.b16 %v740
        %v1187 = vunpack.c.l.b16 %v741
        %v1188 = vunpack.c.h.b16 %v741
        %v1189 = vunpack.c.l.b16 %v742
        %v1190 = vunpack.c.h.b16 %v742
        %v1191 = vunpack.c.l.b16 %v743
        %v1192 = vunpack.c.h.b16 %v743
        %v1193 = vunpack.c.l.b16 %v744
        %v1194 = vunpack.c.h.b16 %v744
        %v1195 = vunpack.c.l.b16 %v745
        %v1196 = vunpack.c.h.b16 %v745
        %v1197 = vunpack.c.l.b16 %v746
        %v1198 = vunpack.c.h.b16 %v746
        %v1199 = vunpack.c.l.b16 %v747
        %v1200 = vunpack.c.h.b16 %v747
        %v1201 = vunpack.c.l.b16 %v748
        %v1202 = vunpack.c.h.b16 %v748
        %v1203 = vunpack.c.l.b16 %v749
        %v1204 = vunpack.c.h.b16 %v749
        %v1205 = vunpack.c.l.b16 %v750
        %v1206 = vunpack.c.h.b16 %v750
        %v1207 = vunpack.c.l.b16 %v751
        %v1208 = vunpack.c.h.b16 %v751
        %v1209 = vunpack.c.l.b16 %v752
        %v1210 = vunpack.c.h.b16 %v752
        %v1211 = vunpack.c.l.b16 %v753
        %v1212 = vunpack.c.h.b16 %v753
        %v1213 = vunpack.c.l.b16 %v754
        %v1214 = vunpack.c.h.b16 %v754
        %v1215 = vunpack.c.l.b16 %v755
        %v1216 = vunpack.c.h.b16 %v755
        %v1217 = vunpack.c.l.b16 %v756
        %v1218 = vunpack.c.h.b16 %v756
        %v1219 = vunpack.c.l.b16 %v757
        %v1220 = vunpack.c.h.b16 %v757
        %v1221 = vunpack.c.l.b16 %v758
        %v1222 = vunpack.c.h.b16 %v758
        %v1223 = vunpack.c.l.b16 %v759
        %v1224 = vunpack.c.h.b16 %v759
        %v1225 = vunpack.c.l.b16 %v760
        %v1226 = vunpack.c.h.b16 %v760
        %v1227 = vunpack.c.l.b16 %v761
        %v1228 = vunpack.c.h.b16 %v761
        %v1229 = vunpack.c.l.b16 %v762
        %v1230 = vunpack.c.h.b16 %v762
        %v1231 = vunpack.c.l.b16 %v763
        %v1232 = vunpack.c.h.b16 %v763
        %v1233 = vunpack.c.l.b16 %v764
        %v1234 = vunpack.c.h.b16 %v764
        %v1235 = vunpack.c.l.b16 %v765
        %v1236 = vunpack.c.h.b16 %v765
        %v1237 = vunpack.c.l.b16 %v766
        %v1238 = vunpack.c.h.b16 %v766
        %v1239 = vunpack.c.l.b16 %v767
        %v1240 = vunpack.c.h.b16 %v767
        %v1241 = vunpack.c.l.b16 %v768
        %v1242 = vunpack.c.h.b16 %v768
        %v1243 = vunpack.c.l.b16 %v769
        %v1244 = vunpack.c.h.b16 %v769
        %v1245 = vunpack.c.l.b16 %v770
        %v1246 = vunpack.c.h.b16 %v770
        %v1247 = vunpack.c.l.b16 %v771
        %v1248 = vunpack.c.h.b16 %v771
        %v1249 = vunpack.c.l.b16 %v772
        %v1250 = vunpack.c.h.b16 %v772
        %v1251 = vunpack.c.l.b16 %v773
        %v1252 = vunpack.c.h.b16 %v773
        %v1253 = vunpack.c.l.b16 %v774
        %v1254 = vunpack.c.h.b16 %v774
        %v1255 = vpack.c.b16 %v939, %v935
        %v1256 = vpack.c.b16 %v940, %v936
        %v1257 = vpack.c.b16 %v941, %v937
        %v1258 = vpack.c.b16 %v942, %v938
        %v1259 = vpack.c.b16 %v947, %v943
        %v1260 = vpack.c.b16 %v948, %v944
        %v1261 = vpack.c.b16 %v949, %v945
        %v1262 = vpack.c.b16 %v950, %v946
        %v1263 = vpack.c.b16 %v955, %v951
        %v1264 = vpack.c.b16 %v956, %v952
        %v1265 = vpack.c.b16 %v957, %v953
        %v1266 = vpack.c.b16 %v958, %v954
        %v1267 = vpack.c.b16 %v963, %v959
        %v1268 = vpack.c.b16 %v964, %v960
        %v1269 = vpack.c.b16 %v965, %v961
        %v1270 = vpack.c.b16 %v966, %v962
        %v1271 = vpack.c.b16 %v971, %v967
        %v1272 = vpack.c.b16 %v972, %v968
        %v1273 = vpack.c.b16 %v973, %v969
        %v1274 = vpack.c.b16 %v974, %v970
        %v1275 = vpack.c.b16 %v979, %v975
        %v1276 = vpack.c.b16 %v980, %v976
        %v1277 = vpack.c.b16 %v981, %v977
        %v1278 = vpack.c.b16 %v982, %v978
        %v1279 = vpack.c.b16 %v987, %v983
        %v1280 = vpack.c.b16 %v988, %v984
        %v1281 = vpack.c.b16 %v989, %v985
        %v1282 = vpack.c.b16 %v990, %v986
        %v1283 = vpack.c.b16 %v995, %v991
        %v1284 = vpack.c.b16 %v996, %v992
        %v1285 = vpack.c.b16 %v997, %v993
        %v1286 = vpack.c.b16 %v998, %v994
        %v1287 = vpack.c.b16 %v1003, %v999
        %v1288 = vpack.c.b16 %v1004, %v1000
        %v1289 = vpack.c.b16 %v1005, %v1001
        %v1290 = vpack.c.b16 %v1006, %v1002
        %v1291 = vpack.c.b16 %v1011, %v1007
        %v1292 = vpack.c.b16 %v1012, %v1008
        %v1293 = vpack.c.b16 %v1013, %v1009
        %v1294 = vpack.c.b16 %v1014, %v1010
        %v1295 = vpack.c.b16 %v1019, %v1015
        %v1296 = vpack.c.b16 %v1020, %v1016
        %v1297 = vpack.c.b16 %v1021, %v1017
        %v1298 = vpack.c.b16 %v1022, %v1018
        %v1299 = vpack.c.b16 %v1027, %v1023
        %v1300 = vpack.c.b16 %v1028, %v1024
        %v1301 = vpack.c.b16 %v1029, %v1025
        %v1302 = vpack.c.b16 %v1030, %v1026
        %v1303 = vpack.c.b16 %v1035, %v1031
        %v1304 = vpack.c.b16 %v1036, %v1032
        %v1305 = vpack.c.b16 %v1037, %v1033
        %v1306 = vpack.c.b16 %v1038, %v1034
        %v1307 = vpack.c.b16 %v1043, %v1039
        %v1308 = vpack.c.b16 %v1044, %v1040
        %v1309 = vpack.c.b16 %v1045, %v1041
        %v1310 = vpack.c.b16 %v1046, %v1042
        %v1311 = vpack.c.b16 %v1051, %v1047
        %v1312 = vpack.c.b16 %v1052, %v1048
        %v1313 = vpack.c.b16 %v1053, %v1049
        %v1314 = vpack.c.b16 %v1054, %v1050
        %v1315 = vpack.c.b16 %v1059, %v1055
        %v1316 = vpack.c.b16 %v1060, %v1056
        %v1317 = vpack.c.b16 %v1061, %v1057
        %v1318 = vpack.c.b16 %v1062, %v1058
        %v1319 = vpack.c.b16 %v1067, %v1063
        %v1320 = vpack.c.b16 %v1068, %v1064
        %v1321 = vpack.c.b16 %v1069, %v1065
        %v1322 = vpack.c.b16 %v1070, %v1066
        %v1323 = vpack.c.b16 %v1075, %v1071
        %v1324 = vpack.c.b16 %v1076, %v1072
        %v1325 = vpack.c.b16 %v1077, %v1073
        %v1326 = vpack.c.b16 %v1078, %v1074
        %v1327 = vpack.c.b16 %v1083, %v1079
        %v1328 = vpack.c.b16 %v1084, %v1080
        %v1329 = vpack.c.b16 %v1085, %v1081
        %v1330 = vpack.c.b16 %v1086, %v1082
        %v1331 = vpack.c.b16 %v1091, %v1087
        %v1332 = vpack.c.b16 %v1092, %v1088
        %v1333 = vpack.c.b16 %v1093, %v1089
        %v1334 = vpack.c.b16 %v1094, %v1090
        %v1335 = vpack.c.b16 %v1099, %v1095
        %v1336 = vpack.c.b16 %v1100, %v1096
        %v1337 = vpack.c.b16 %v1101, %v1097
        %v1338 = vpack.c.b16 %v1102, %v1098
        %v1339 = vpack.c.b16 %v1107, %v1103
        %v1340 = vpack.c.b16 %v1108, %v1104
        %v1341 = vpack.c.b16 %v1109, %v1105
        %v1342 = vpack.c.b16 %v1110, %v1106
        %v1343 = vpack.c.b16 %v1115, %v1111
        %v1344 = vpack.c.b16 %v1116, %v1112
        %v1345 = vpack.c.b16 %v1117, %v1113
        %v1346 = vpack.c.b16 %v1118, %v1114
        %v1347 = vpack.c.b16 %v1123, %v1119
        %v1348 = vpack.c.b16 %v1124, %v1120
        %v1349 = vpack.c.b16 %v1125, %v1121
        %v1350 = vpack.c.b16 %v1126, %v1122
        %v1351 = vpack.c.b16 %v1131, %v1127
        %v1352 = vpack.c.b16 %v1132, %v1128
        %v1353 = vpack.c.b16 %v1133, %v1129
        %v1354 = vpack.c.b16 %v1134, %v1130
        %v1355 = vpack.c.b16 %v1139, %v1135
        %v1356 = vpack.c.b16 %v1140, %v1136
        %v1357 = vpack.c.b16 %v1141, %v1137
        %v1358 = vpack.c.b16 %v1142, %v1138
        %v1359 = vpack.c.b16 %v1147, %v1143
        %v1360 = vpack.c.b16 %v1148, %v1144
        %v1361 = vpack.c.b16 %v1149, %v1145
        %v1362 = vpack.c.b16 %v1150, %v1146
        %v1363 = vpack.c.b16 %v1155, %v1151
        %v1364 = vpack.c.b16 %v1156, %v1152
        %v1365 = vpack.c.b16 %v1157, %v1153
        %v1366 = vpack.c.b16 %v1158, %v1154
        %v1367 = vpack.c.b16 %v1163, %v1159
        %v1368 = vpack.c.b16 %v1164, %v1160
        %v1369 = vpack.c.b16 %v1165, %v1161
        %v1370 = vpack.c.b16 %v1166, %v1162
        %v1371 = vpack.c.b16 %v1171, %v1167
        %v1372 = vpack.c.b16 %v1172, %v1168
        %v1373 = vpack.c.b16 %v1173, %v1169
        %v1374 = vpack.c.b16 %v1174, %v1170
        %v1375 = vpack.c.b16 %v1179, %v1175
        %v1376 = vpack.c.b16 %v1180, %v1176
        %v1377 = vpack.c.b16 %v1181, %v1177
        %v1378 = vpack.c.b16 %v1182, %v1178
        %v1379 = vpack.c.b16 %v1187, %v1183
        %v1380 = vpack.c.b16 %v1188, %v1184
        %v1381 = vpack.c.b16 %v1189, %v1185
        %v1382 = vpack.c.b16 %v1190, %v1186
        %v1383 = vpack.c.b16 %v1195, %v1191
        %v1384 = vpack.c.b16 %v1196, %v1192
        %v1385 = vpack.c.b16 %v1197, %v1193
        %v1386 = vpack.c.b16 %v1198, %v1194
        %v1387 = vpack.c.b16 %v1203, %v1199
        %v1388 = vpack.c.b16 %v1204, %v1200
        %v1389 = vpack.c.b16 %v1205, %v1201
        %v1390 = vpack.c.b16 %v1206, %v1202
        %v1391 = vpack.c.b16 %v1211, %v1207
        %v1392 = vpack.c.b16 %v1212, %v1208
        %v1393 = vpack.c.b16 %v1213, %v1209
        %v1394 = vpack.c.b16 %v1214, %v1210
        %v1395 = vpack.c.b16 %v1219, %v1215
        %v1396 = vpack.c.b16 %v1220, %v1216
        %v1397 = vpack.c.b16 %v1221, %v1217
        %v1398 = vpack.c.b16 %v1222, %v1218
        %v1399 = vpack.c.b16 %v1227, %v1223
        %v1400 = vpack.c.b16 %v1228, %v1224
        %v1401 = vpack.c.b16 %v1229, %v1225
        %v1402 = vpack.c.b16 %v1230, %v1226
        %v1403 = vpack.c.b16 %v1235, %v1231
        %v1404 = vpack.c.b16 %v1236, %v1232
        %v1405 = vpack.c.b16 %v1237, %v1233
        %v1406 = vpack.c.b16 %v1238, %v1234
        %v1407 = vpack.c.b16 %v1243, %v1239
        %v1408 = vpack.c.b16 %v1244, %v1240
        %v1409 = vpack.c.b16 %v1245, %v1241
        %v1410 = vpack.c.b16 %v1246, %v1242
        %v1411 = vpack.c.b16 %v1251, %v1247
        %v1412 = vpack.c.b16 %v1252, %v1248
        %v1413 = vpack.c.b16 %v1253, %v1249
        %v1414 = vpack.c.b16 %v1254, %v1250
        %1575 = vmatprep.subr.bf16.mxu0 %v1256
        %1576 = vmatpush1.bf16.msra.mxu0 %v1255
        %1577 = vmatprep.subr.bf16.mxu0 %v1260
        %1578 = vmatpush1.bf16.msra.mxu0 %v1259
        %1579 = vmatprep.subr.bf16.mxu0 %v1264
        %1580 = vmatpush1.bf16.msra.mxu0 %v1263
        %1581 = vmatprep.subr.bf16.mxu0 %v1268
        %1582 = vmatpush1.bf16.msra.mxu0 %v1267
        %1583 = vmatprep.subr.bf16.mxu0 %v1272
        %1584 = vmatpush1.bf16.msra.mxu0 %v1271
        %1585 = vmatprep.subr.bf16.mxu0 %v1276
        %1586 = vmatpush1.bf16.msra.mxu0 %v1275
        %1587 = vmatprep.subr.bf16.mxu0 %v1280
        %1588 = vmatpush1.bf16.msra.mxu0 %v1279
        %1589 = vmatprep.subr.bf16.mxu0 %v1284
        %1590 = vmatpush1.bf16.msra.mxu0 %v1283
        %1591 = vmatprep.subr.bf16.mxu0 %v1288
        %1592 = vmatpush1.bf16.msra.mxu0 %v1287
        %1593 = vmatprep.subr.bf16.mxu0 %v1292
        %1594 = vmatpush1.bf16.msra.mxu0 %v1291
        %1595 = vmatprep.subr.bf16.mxu0 %v1296
        %1596 = vmatpush1.bf16.msra.mxu0 %v1295
        %1597 = vmatprep.subr.bf16.mxu0 %v1300
        %1598 = vmatpush1.bf16.msra.mxu0 %v1299
        %1599 = vmatprep.subr.bf16.mxu0 %v1304
        %1600 = vmatpush1.bf16.msra.mxu0 %v1303
        %1601 = vmatprep.subr.bf16.mxu0 %v1308
        %1602 = vmatpush1.bf16.msra.mxu0 %v1307
        %1603 = vmatprep.subr.bf16.mxu0 %v1312
        %1604 = vmatpush1.bf16.msra.mxu0 %v1311
        %1605 = vmatprep.subr.bf16.mxu0 %v1316
        %1606 = vmatpush1.bf16.msra.mxu0 %v1315
        %1607 = vmatprep.mubr.bf16.mxu0 %v611
        %1608 = vmatmul.mubr.bf16.gmra.mrb[0].mxu0 %v610
        %v1609 = vpop.f32.mrb[0].mxu0
        %v1610 = vadd.f32 0.0, %v1609
        %v1611 = vpop.f32.mrb[0].mxu0
        %v1612 = vadd.f32 0.0, %v1611
        %v1613 = vpop.f32.mrb[0].mxu0
        %v1614 = vpop.f32.mrb[0].mxu0
        %1615 = vdwg.mxu0
        %1616 = vmatprep.subr.bf16.mxu0 %v1320
        %1617 = vmatpush1.bf16.msra.mxu0 %v1319
        %1618 = vmatprep.subr.bf16.mxu0 %v1324
        %1619 = vmatpush1.bf16.msra.mxu0 %v1323
        %1620 = vmatprep.subr.bf16.mxu0 %v1328
        %1621 = vmatpush1.bf16.msra.mxu0 %v1327
        %1622 = vmatprep.subr.bf16.mxu0 %v1332
        %1623 = vmatpush1.bf16.msra.mxu0 %v1331
        %1624 = vmatprep.subr.bf16.mxu0 %v1336
        %1625 = vmatpush1.bf16.msra.mxu0 %v1335
        %1626 = vmatprep.subr.bf16.mxu0 %v1340
        %1627 = vmatpush1.bf16.msra.mxu0 %v1339
        %1628 = vmatprep.subr.bf16.mxu0 %v1344
        %1629 = vmatpush1.bf16.msra.mxu0 %v1343
        %1630 = vmatprep.subr.bf16.mxu0 %v1348
        %1631 = vmatpush1.bf16.msra.mxu0 %v1347
        %1632 = vmatprep.subr.bf16.mxu0 %v1352
        %1633 = vmatpush1.bf16.msra.mxu0 %v1351
        %1634 = vmatprep.subr.bf16.mxu0 %v1356
        %1635 = vmatpush1.bf16.msra.mxu0 %v1355
        %1636 = vmatprep.subr.bf16.mxu0 %v1360
        %1637 = vmatpush1.bf16.msra.mxu0 %v1359
        %1638 = vmatprep.subr.bf16.mxu0 %v1364
        %1639 = vmatpush1.bf16.msra.mxu0 %v1363
        %1640 = vmatprep.subr.bf16.mxu0 %v1368
        %1641 = vmatpush1.bf16.msra.mxu0 %v1367
        %1642 = vmatprep.subr.bf16.mxu0 %v1372
        %1643 = vmatpush1.bf16.msra.mxu0 %v1371
        %1644 = vmatprep.subr.bf16.mxu0 %v1376
        %1645 = vmatpush1.bf16.msra.mxu0 %v1375
        %1646 = vmatprep.subr.bf16.mxu0 %v1380
        %1647 = vmatpush1.bf16.msra.mxu0 %v1379
        %1648 = vmatprep.mubr.bf16.mxu0 %v613
        %1649 = vmatmul.mubr.bf16.gmra.mrb[0].mxu0 %v612
        %v1650 = vpop.f32.mrb[0].mxu0
        %v1651 = vadd.f32 %v1610, %v1650
        %v1652 = vpop.f32.mrb[0].mxu0
        %v1653 = vadd.f32 %v1612, %v1652
        %v1654 = vpop.f32.mrb[0].mxu0
        %v1655 = vpop.f32.mrb[0].mxu0
        %1656 = vdwg.mxu0
        %1657 = vmatprep.subr.bf16.mxu0 %v1384
        %1658 = vmatpush1.bf16.msra.mxu0 %v1383
        %1659 = vmatprep.subr.bf16.mxu0 %v1388
        %1660 = vmatpush1.bf16.msra.mxu0 %v1387
        %1661 = vmatprep.subr.bf16.mxu0 %v1392
        %1662 = vmatpush1.bf16.msra.mxu0 %v1391
        %1663 = vmatprep.subr.bf16.mxu0 %v1396
        %1664 = vmatpush1.bf16.msra.mxu0 %v1395
        %1665 = vmatprep.subr.bf16.mxu0 %v1400
        %1666 = vmatpush1.bf16.msra.mxu0 %v1399
        %1667 = vmatprep.subr.bf16.mxu0 %v1404
        %1668 = vmatpush1.bf16.msra.mxu0 %v1403
        %1669 = vmatprep.subr.bf16.mxu0 %v1408
        %1670 = vmatpush1.bf16.msra.mxu0 %v1407
        %1671 = vmatprep.subr.bf16.mxu0 %v1412
        %1672 = vmatpush1.bf16.msra.mxu0 %v1411
        %1673 = vmatprep.subr.bf16.mxu0 0
        %1674 = vmatpush1.bf16.msra.mxu0 0
        %1675 = vmatprep.subr.bf16.mxu0 0
        %1676 = vmatpush1.bf16.msra.mxu0 0
        %1677 = vmatprep.subr.bf16.mxu0 0
        %1678 = vmatpush1.bf16.msra.mxu0 0
        %1679 = vmatprep.subr.bf16.mxu0 0
        %1680 = vmatpush1.bf16.msra.mxu0 0
        %1681 = vmatprep.subr.bf16.mxu0 0
        %1682 = vmatpush1.bf16.msra.mxu0 0
        %1683 = vmatprep.subr.bf16.mxu0 0
        %1684 = vmatpush1.bf16.msra.mxu0 0
        %1685 = vmatprep.subr.bf16.mxu0 0
        %1686 = vmatpush1.bf16.msra.mxu0 0
        %1687 = vmatprep.subr.bf16.mxu0 0
        %1688 = vmatpush1.bf16.msra.mxu0 0
        %1689 = vmatprep.mubr.bf16.mxu0 0
        %1690 = vmatmul.mubr.bf16.gmra.mrb[0].mxu0 %v614
        %v1691 = vpop.f32.mrb[0].mxu0
        %v1692 = vadd.f32 %v1651, %v1691
        %v1693 = vpop.f32.mrb[0].mxu0
        %v1694 = vadd.f32 %v1653, %v1693
        %v1695 = vpop.f32.mrb[0].mxu0
        %v1696 = vpop.f32.mrb[0].mxu0
        %1697 = vdwg.mxu0
        %1698 = vmatprep.subr.bf16.mxu0 %v1258
        %1699 = vmatpush1.bf16.msra.mxu0 %v1257
        %1700 = vmatprep.subr.bf16.mxu0 %v1262
        %1701 = vmatpush1.bf16.msra.mxu0 %v1261
        %1702 = vmatprep.subr.bf16.mxu0 %v1266
        %1703 = vmatpush1.bf16.msra.mxu0 %v1265
        %1704 = vmatprep.subr.bf16.mxu0 %v1270
        %1705 = vmatpush1.bf16.msra.mxu0 %v1269
        %1706 = vmatprep.subr.bf16.mxu0 %v1274
        %1707 = vmatpush1.bf16.msra.mxu0 %v1273
        %1708 = vmatprep.subr.bf16.mxu0 %v1278
        %1709 = vmatpush1.bf16.msra.mxu0 %v1277
        %1710 = vmatprep.subr.bf16.mxu0 %v1282
        %1711 = vmatpush1.bf16.msra.mxu0 %v1281
        %1712 = vmatprep.subr.bf16.mxu0 %v1286
        %1713 = vmatpush1.bf16.msra.mxu0 %v1285
        %1714 = vmatprep.subr.bf16.mxu0 %v1290
        %1715 = vmatpush1.bf16.msra.mxu0 %v1289
        %1716 = vmatprep.subr.bf16.mxu0 %v1294
        %1717 = vmatpush1.bf16.msra.mxu0 %v1293
        %1718 = vmatprep.subr.bf16.mxu0 %v1298
        %1719 = vmatpush1.bf16.msra.mxu0 %v1297
        %1720 = vmatprep.subr.bf16.mxu0 %v1302
        %1721 = vmatpush1.bf16.msra.mxu0 %v1301
        %1722 = vmatprep.subr.bf16.mxu0 %v1306
        %1723 = vmatpush1.bf16.msra.mxu0 %v1305
        %1724 = vmatprep.subr.bf16.mxu0 %v1310
        %1725 = vmatpush1.bf16.msra.mxu0 %v1309
        %1726 = vmatprep.subr.bf16.mxu0 %v1314
        %1727 = vmatpush1.bf16.msra.mxu0 %v1313
        %1728 = vmatprep.subr.bf16.mxu0 %v1318
        %1729 = vmatpush1.bf16.msra.mxu0 %v1317
        %1730 = vmatprep.mubr.bf16.mxu0 %v611
        %1731 = vmatmul.mubr.bf16.gmra.mrb[0].mxu0 %v610
        %v1732 = vpop.f32.mrb[0].mxu0
        %v1733 = vadd.f32 0.0, %v1732
        %v1734 = vpop.f32.mrb[0].mxu0
        %v1735 = vadd.f32 0.0, %v1734
        %v1736 = vpop.f32.mrb[0].mxu0
        %v1737 = vpop.f32.mrb[0].mxu0
        %1738 = vdwg.mxu0
        %1739 = vmatprep.subr.bf16.mxu0 %v1322
        %1740 = vmatpush1.bf16.msra.mxu0 %v1321
        %1741 = vmatprep.subr.bf16.mxu0 %v1326
        %1742 = vmatpush1.bf16.msra.mxu0 %v1325
        %1743 = vmatprep.subr.bf16.mxu0 %v1330
        %1744 = vmatpush1.bf16.msra.mxu0 %v1329
        %1745 = vmatprep.subr.bf16.mxu0 %v1334
        %1746 = vmatpush1.bf16.msra.mxu0 %v1333
        %1747 = vmatprep.subr.bf16.mxu0 %v1338
        %1748 = vmatpush1.bf16.msra.mxu0 %v1337
        %1749 = vmatprep.subr.bf16.mxu0 %v1342
        %1750 = vmatpush1.bf16.msra.mxu0 %v1341
        %1751 = vmatprep.subr.bf16.mxu0 %v1346
        %1752 = vmatpush1.bf16.msra.mxu0 %v1345
        %1753 = vmatprep.subr.bf16.mxu0 %v1350
        %1754 = vmatpush1.bf16.msra.mxu0 %v1349
        %1755 = vmatprep.subr.bf16.mxu0 %v1354
        %1756 = vmatpush1.bf16.msra.mxu0 %v1353
        %1757 = vmatprep.subr.bf16.mxu0 %v1358
        %1758 = vmatpush1.bf16.msra.mxu0 %v1357
        %1759 = vmatprep.subr.bf16.mxu0 %v1362
        %1760 = vmatpush1.bf16.msra.mxu0 %v1361
        %1761 = vmatprep.subr.bf16.mxu0 %v1366
        %1762 = vmatpush1.bf16.msra.mxu0 %v1365
        %1763 = vmatprep.subr.bf16.mxu0 %v1370
        %1764 = vmatpush1.bf16.msra.mxu0 %v1369
        %1765 = vmatprep.subr.bf16.mxu0 %v1374
        %1766 = vmatpush1.bf16.msra.mxu0 %v1373
        %1767 = vmatprep.subr.bf16.mxu0 %v1378
        %1768 = vmatpush1.bf16.msra.mxu0 %v1377
        %1769 = vmatprep.subr.bf16.mxu0 %v1382
        %1770 = vmatpush1.bf16.msra.mxu0 %v1381
        %1771 = vmatprep.mubr.bf16.mxu0 %v613
        %1772 = vmatmul.mubr.bf16.gmra.mrb[0].mxu0 %v612
        %v1773 = vpop.f32.mrb[0].mxu0
        %v1774 = vadd.f32 %v1733, %v1773
        %v1775 = vpop.f32.mrb[0].mxu0
        %v1776 = vadd.f32 %v1735, %v1775
        %v1777 = vpop.f32.mrb[0].mxu0
        %v1778 = vpop.f32.mrb[0].mxu0
        %1779 = vdwg.mxu0
        %1780 = vmatprep.subr.bf16.mxu0 %v1386
        %1781 = vmatpush1.bf16.msra.mxu0 %v1385
        %1782 = vmatprep.subr.bf16.mxu0 %v1390
        %1783 = vmatpush1.bf16.msra.mxu0 %v1389
        %1784 = vmatprep.subr.bf16.mxu0 %v1394
        %1785 = vmatpush1.bf16.msra.mxu0 %v1393
        %1786 = vmatprep.subr.bf16.mxu0 %v1398
        %1787 = vmatpush1.bf16.msra.mxu0 %v1397
        %1788 = vmatprep.subr.bf16.mxu0 %v1402
        %1789 = vmatpush1.bf16.msra.mxu0 %v1401
        %1790 = vmatprep.subr.bf16.mxu0 %v1406
        %1791 = vmatpush1.bf16.msra.mxu0 %v1405
        %1792 = vmatprep.subr.bf16.mxu0 %v1410
        %1793 = vmatpush1.bf16.msra.mxu0 %v1409
        %1794 = vmatprep.subr.bf16.mxu0 %v1414
        %1795 = vmatpush1.bf16.msra.mxu0 %v1413
        %1796 = vmatprep.subr.bf16.mxu0 0
        %1797 = vmatpush1.bf16.msra.mxu0 0
        %1798 = vmatprep.subr.bf16.mxu0 0
        %1799 = vmatpush1.bf16.msra.mxu0 0
        %1800 = vmatprep.subr.bf16.mxu0 0
        %1801 = vmatpush1.bf16.msra.mxu0 0
        %1802 = vmatprep.subr.bf16.mxu0 0
        %1803 = vmatpush1.bf16.msra.mxu0 0
        %1804 = vmatprep.subr.bf16.mxu0 0
        %1805 = vmatpush1.bf16.msra.mxu0 0
        %1806 = vmatprep.subr.bf16.mxu0 0
        %1807 = vmatpush1.bf16.msra.mxu0 0
        %1808 = vmatprep.subr.bf16.mxu0 0
        %1809 = vmatpush1.bf16.msra.mxu0 0
        %1810 = vmatprep.subr.bf16.mxu0 0
        %1811 = vmatpush1.bf16.msra.mxu0 0
        %1812 = vmatprep.mubr.bf16.mxu0 0
        %1813 = vmatmul.mubr.bf16.gmra.mrb[0].mxu0 %v614
        %v1814 = vpop.f32.mrb[0].mxu0
        %v1815 = vadd.f32 %v1774, %v1814
        %v1816 = vpop.f32.mrb[0].mxu0
        %v1817 = vadd.f32 %v1776, %v1816
        %v1818 = vpop.f32.mrb[0].mxu0
        %v1819 = vpop.f32.mrb[0].mxu0
        %1820 = vdwg.mxu0
        %v1825 = vcombine.low %v1692, %v1694
        %v1826 = vcombine.low %v1815, %v1817
        %v1828 = vunpack.c.l.s4 1983009808
        %v1829 = vunpack.c.0.s8 %v1828
        %v1830 = vlaneseq
        %v1831 = vshrl.u32 %v1830, 7
        %v1832 = vsub.s32 %v1829, %v1831
        %v1833 = vrot.slane %v1825, %v1832
        %v1835 = vunpack.c.l.s4 1983009808
        %v1836 = vunpack.c.0.s8 %v1835
        %v1837 = vlaneseq
        %v1838 = vshrl.u32 %v1837, 7
        %v1839 = vsub.s32 %v1836, %v1838
        %v1840 = vrot.slane %v1826, %v1839
        %v1841 = vcombine.low %v1833, %v1840
        %v1843 = vadd.f32 %v576, %v1841
        %1844 = vst [vmem:[%s568] sm:$0xff] %v1843
        %p1845 = scmp.eq.s32.totalorder %s19, 4
        // Predicated region
        $region60: #{forward.8} parent=50 // pred_check
          %p1846 = pneg %p1845
        $region61: #{forward.8} parent=50 // pred_check_branch
          %1848 = sbr.rel (%p1846) target = $region63
        $region62: #{forward.8} parent=50 // pred_region
          %v1849 = vld [vmem:[%s568] sm:$0xff]
          %v1850 = vld [vmem:[%s562] sm:$0xf]
          %v1852 = vlaneseq
          %v1853 = vshrl.u32 %v1852, 7
          %v1854 = vsub.s32 0, %v1853
          %v1855 = vrot.slane %v1850, %v1854
          %v1856 = vlaneseq
          %v1857 = vshrl.u32 %v1856, 7
          %v1858 = vsub.s32 1, %v1857
          %v1859 = vrot.slane %v1850, %v1858
          %v1860 = vlaneseq
          %v1861 = vshrl.u32 %v1860, 7
          %v1862 = vsub.s32 2, %v1861
          %v1863 = vrot.slane %v1850, %v1862
          %v1864 = vlaneseq
          %v1865 = vshrl.u32 %v1864, 7
          %v1866 = vsub.s32 3, %v1865
          %v1867 = vrot.slane %v1850, %v1866
          %v1868 = vcombine.low %v1855, %v1859
          %v1869 = vcombine.low %v1863, %v1867
          %v1871 = vunpack.c.l.s4 1983009808
          %v1872 = vunpack.c.0.s8 %v1871
          %v1873 = vlaneseq
          %v1874 = vshrl.u32 %v1873, 7
          %v1875 = vsub.s32 %v1872, %v1874
          %v1876 = vrot.slane %v1868, %v1875
          %v1878 = vunpack.c.l.s4 1983009808
          %v1879 = vunpack.c.0.s8 %v1878
          %v1880 = vlaneseq
          %v1881 = vshrl.u32 %v1880, 7
          %v1882 = vsub.s32 %v1879, %v1881
          %v1883 = vrot.slane %v1869, %v1882
          %v1884 = vcombine.low %v1876, %v1883
          %v1886 = vadd.f32 %v1849, %v1884
          %v1887 = vmax.f32 %v1886, 0.0
          %1888 = vst [vmem:[%s568] sm:$0xff] %v1887
        $region63: #{forward.8} parent=50 // pred_fallthru
          _
        %s1889 = smul.u32 4, %s18
        %p1890 = scmp.lt.s32.totalorder %s1889, 7
        %s1891 = scalar_select %p1890, %s1889, 7
        %s1892 = smul.addr %s1891, 2
        %s1893 = scalar_lea.vmem %s3, %s1892
        // Predicated region
        $region64: #{forward.8} parent=50 // pred_check
          %p1894 = pneg %p124
        $region65: #{forward.8} parent=50 // pred_check_branch
          %1896 = sbr.rel (%p1894) target = $region67
        $region66: #{forward.8} parent=50 // pred_region
          %s1897 = smul.u32 4, %s18
        $region67: #{forward.8} parent=50 // pred_fallthru
          _
      $region51: #{forward.8} parent=5 // pred_fallthru
        _
      %p1898 = scmp.le.s32.totalorder 2, %s9
      // Predicated region
      $region68: #{forward.8} parent=5 // pred_check
        %p1899 = pneg %p1898
      $region69: #{forward.8} parent=5 // pred_check_branch
        %1901 = sbr.rel (%p1899) target = $region71
      $region70: #{forward.8} parent=5 // pred_region
        %s1902 = ssub.s32 %s9, 2
        // Predicated region
        $region72: #{forward.8} parent=70 // pred_check
          %p1903 = pneg %p130
        $region73: #{forward.8} parent=70 // pred_check_branch
          %1905 = sbr.rel (%p1903) target = $region75
        $region74: #{forward.8} parent=70 // pred_region
          %s1906 = smul.u32 4, %s20
          %p1907 = scmp.lt.s32.totalorder %s1906, 7
          %s1908 = scalar_select %p1907, %s1906, 7
          %s1909 = smul.addr %s1908, 2
          %s1910 = scalar_lea.vmem %s3, %s1909
        $region75: #{forward.8} parent=70 // pred_fallthru
          _
      $region71: #{forward.8} parent=5 // pred_fallthru
        _
    $region6: #{forward.8} parent=1 // loop_footer
      %s13 = sadd.s32 1, %s9
    $region7: #{forward.8} parent=1 // loop_footer_branch
      %8 = sbr.rel target = $region3
    $region8: #{forward.8} parent=1 // loop_exit
      _

// kernel: forward.9
$region0: #{forward.9}
  #allocation0 [shape = 'u32[]', space=smem, size = 0x4, offset = 0x4, fixed_abs, tag = 'smem constant byte address 0x4 - core index']
  #allocation1 [shape = 'u32[144,128]{1,0:T(1,128)}', space=vmem, size = 0x12000, scoped, tag = 'internal scratch']
  %s0 = inlined_call_operand.vmem [shape: f32[2,1024], index: 0, kind: input, shape index: {}]
  %s1 = inlined_call_operand.vmem [shape: bf16[512,51], index: 1, kind: input, shape index: {}]
  %s2 = inlined_call_operand.vmem [shape: f32[1,51], index: 2, kind: input, shape index: {}]
  %s3 = inlined_call_operand.vmem [shape: bf16[12,512,51], index: 3, kind: input, shape index: {}]
  %s4 = inlined_call_operand.vmem [shape: f32[12,1,51], index: 4, kind: input, shape index: {}]
  %s5 = inlined_call_operand.hbm [shape: f32[12,2,51], index: 5, kind: output, shape index: {}]
  %s6 = sld [smem:[#allocation0]]
  $region30: #{forward.9} parent=0
    _
  %s8 = ssub.s32 1, %s6
  %s9 = scalar_select 0, %s8, %s6
  $region1: #{forward.9} parent=0
    #allocation2 [shape = 'u8[12288]{0}', space=vmem, size = 0x3000, scoped, tag = 'output window, operand 0, single buffered']
    #allocation3 [shape = 's32[1]{0}', space=sflag, size = 0x4, scoped, tag = 'scoped memory for forward.9']
    %10 = vsyncpa [#allocation3], 0
    // Predicated region
    $region2: #{forward.9} parent=1 // pred_check
      _
    $region3: #{forward.9} parent=1 // pred_check_branch
      %12 = sbr.rel (0) target = $region5
    $region4: #{forward.9} parent=1 // pred_region
      _
    $region5: #{forward.9} parent=1 // pred_fallthru
      _
    // Predicated region
    $region6: #{forward.9} parent=1 // pred_check
      _
    $region7: #{forward.9} parent=1 // pred_check_branch
      %14 = sbr.rel (0) target = $region9
    $region8: #{forward.9} parent=1 // pred_region
      _
    $region9: #{forward.9} parent=1 // pred_fallthru
      _
    // Predicated region
    $region10: #{forward.9} parent=1 // pred_check
      _
    $region11: #{forward.9} parent=1 // pred_check_branch
      %16 = sbr.rel (0) target = $region13
    $region12: #{forward.9} parent=1 // pred_region
      _
    $region13: #{forward.9} parent=1 // pred_fallthru
      _
    // Predicated region
    $region14: #{forward.9} parent=1 // pred_check
      _
    $region15: #{forward.9} parent=1 // pred_check_branch
      %18 = sbr.rel (0) target = $region17
    $region16: #{forward.9} parent=1 // pred_region
      _
    $region17: #{forward.9} parent=1 // pred_fallthru
      _
    // Predicated region
    $region18: #{forward.9} parent=1 // pred_check
      _
    $region19: #{forward.9} parent=1 // pred_check_branch
      %20 = sbr.rel (0) target = $region21
    $region20: #{forward.9} parent=1 // pred_region
      _
    $region21: #{forward.9} parent=1 // pred_fallthru
      _
    %v22 = vld [vmem:[%s0] sm:$0xff]
    %v23 = vld [vmem:[%s0 + $0x8] sm:$0xff]
    %v25 = vcombine.high %v22, %v22
    %v27 = vunpack.c.l.s4 1983009808
    %v28 = vunpack.c.0.s8 %v27
    %v29 = vlaneseq
    %v30 = vshrl.u32 %v29, 7
    %v31 = vsub.s32 %v28, %v30
    %v32 = vrot.slane %v22, %v31
    %v34 = vunpack.c.l.s4 1983009808
    %v35 = vunpack.c.0.s8 %v34
    %v36 = vlaneseq
    %v37 = vshrl.u32 %v36, 7
    %v38 = vsub.s32 %v35, %v37
    %v39 = vrot.slane %v25, %v38
    %v40 = vcombine.high %v32, %v32
    %v41 = vcombine.high %v39, %v39
    %v46 = vpack.c.bf16 %v32, %v32
    %v47 = vpack.c.bf16 %v40, %v40
    %v48 = vpack.c.bf16 %v39, %v39
    %v49 = vpack.c.bf16 %v41, %v41
    %v51 = vcombine.high %v23, %v23
    %v53 = vunpack.c.l.s4 1983009808
    %v54 = vunpack.c.0.s8 %v53
    %v55 = vlaneseq
    %v56 = vshrl.u32 %v55, 7
    %v57 = vsub.s32 %v54, %v56
    %v58 = vrot.slane %v23, %v57
    %v60 = vunpack.c.l.s4 1983009808
    %v61 = vunpack.c.0.s8 %v60
    %v62 = vlaneseq
    %v63 = vshrl.u32 %v62, 7
    %v64 = vsub.s32 %v61, %v63
    %v65 = vrot.slane %v51, %v64
    %v66 = vcombine.high %v58, %v58
    %v67 = vcombine.high %v65, %v65
    %v72 = vpack.c.bf16 %v58, %v58
    %v73 = vpack.c.bf16 %v66, %v66
    %v74 = vpack.c.bf16 %v65, %v65
    %v75 = vpack.c.bf16 %v67, %v67
    %v76 = vld [vmem:[%s1] sm:$0xf]
    %v77 = vld [vmem:[%s1 + $0x4] sm:$0xf]
    %v78 = vld [vmem:[%s1 + $0x8] sm:$0xf]
    %v79 = vld [vmem:[%s1 + $0xc] sm:$0xf]
    %v80 = vld [vmem:[%s1 + $0x10] sm:$0xf]
    %v81 = vld [vmem:[%s1 + $0x14] sm:$0xf]
    %v82 = vld [vmem:[%s1 + $0x18] sm:$0xf]
    %v83 = vld [vmem:[%s1 + $0x1c] sm:$0xf]
    %v84 = vld [vmem:[%s1 + $0x20] sm:$0xf]
    %v85 = vld [vmem:[%s1 + $0x24] sm:$0xf]
    %v86 = vld [vmem:[%s1 + $0x28] sm:$0xf]
    %v87 = vld [vmem:[%s1 + $0x2c] sm:$0xf]
    %v88 = vld [vmem:[%s1 + $0x30] sm:$0xf]
    %v89 = vld [vmem:[%s1 + $0x34] sm:$0xf]
    %v90 = vld [vmem:[%s1 + $0x38] sm:$0xf]
    %v91 = vld [vmem:[%s1 + $0x3c] sm:$0xf]
    %v92 = vld [vmem:[%s1 + $0x40] sm:$0xf]
    %v93 = vld [vmem:[%s1 + $0x44] sm:$0xf]
    %v94 = vld [vmem:[%s1 + $0x48] sm:$0xf]
    %v95 = vld [vmem:[%s1 + $0x4c] sm:$0xf]
    %v96 = vld [vmem:[%s1 + $0x50] sm:$0xf]
    %v97 = vld [vmem:[%s1 + $0x54] sm:$0xf]
    %v98 = vld [vmem:[%s1 + $0x58] sm:$0xf]
    %v99 = vld [vmem:[%s1 + $0x5c] sm:$0xf]
    %v100 = vld [vmem:[%s1 + $0x60] sm:$0xf]
    %v101 = vld [vmem:[%s1 + $0x64] sm:$0xf]
    %v102 = vld [vmem:[%s1 + $0x68] sm:$0xf]
    %v103 = vld [vmem:[%s1 + $0x6c] sm:$0xf]
    %v104 = vld [vmem:[%s1 + $0x70] sm:$0xf]
    %v105 = vld [vmem:[%s1 + $0x74] sm:$0xf]
    %v106 = vld [vmem:[%s1 + $0x78] sm:$0xf]
    %v107 = vld [vmem:[%s1 + $0x7c] sm:$0xf]
    %v108 = vld [vmem:[%s1 + $0x80] sm:$0xf]
    %v109 = vld [vmem:[%s1 + $0x84] sm:$0xf]
    %v110 = vld [vmem:[%s1 + $0x88] sm:$0xf]
    %v111 = vld [vmem:[%s1 + $0x8c] sm:$0xf]
    %v112 = vld [vmem:[%s1 + $0x90] sm:$0xf]
    %v113 = vld [vmem:[%s1 + $0x94] sm:$0xf]
    %v114 = vld [vmem:[%s1 + $0x98] sm:$0xf]
    %v115 = vld [vmem:[%s1 + $0x9c] sm:$0xf]
    %v116 = vld [vmem:[%s1 + $0xa0] sm:$0xf]
    %v117 = vld [vmem:[%s1 + $0xa4] sm:$0xf]
    %v118 = vld [vmem:[%s1 + $0xa8] sm:$0xf]
    %v119 = vld [vmem:[%s1 + $0xac] sm:$0xf]
    %v120 = vld [vmem:[%s1 + $0xb0] sm:$0xf]
    %v121 = vld [vmem:[%s1 + $0xb4] sm:$0xf]
    %v122 = vld [vmem:[%s1 + $0xb8] sm:$0xf]
    %v123 = vld [vmem:[%s1 + $0xbc] sm:$0xf]
    %v124 = vld [vmem:[%s1 + $0xc0] sm:$0xf]
    %v125 = vld [vmem:[%s1 + $0xc4] sm:$0xf]
    %v126 = vld [vmem:[%s1 + $0xc8] sm:$0xf]
    %v127 = vld [vmem:[%s1 + $0xcc] sm:$0xf]
    %v128 = vld [vmem:[%s1 + $0xd0] sm:$0xf]
    %v129 = vld [vmem:[%s1 + $0xd4] sm:$0xf]
    %v130 = vld [vmem:[%s1 + $0xd8] sm:$0xf]
    %v131 = vld [vmem:[%s1 + $0xdc] sm:$0xf]
    %v132 = vld [vmem:[%s1 + $0xe0] sm:$0xf]
    %v133 = vld [vmem:[%s1 + $0xe4] sm:$0xf]
    %v134 = vld [vmem:[%s1 + $0xe8] sm:$0xf]
    %v135 = vld [vmem:[%s1 + $0xec] sm:$0xf]
    %v136 = vld [vmem:[%s1 + $0xf0] sm:$0xf]
    %v137 = vld [vmem:[%s1 + $0xf4] sm:$0xf]
    %v138 = vld [vmem:[%s1 + $0xf8] sm:$0xf]
    %v139 = vld [vmem:[%s1 + $0xfc] sm:$0xf]
    %v140 = vld [vmem:[%s2] sm:$0x1]
    %v142 = vlaneseq
    %v143 = vshrl.u32 %v142, 7
    %v144 = vsub.s32 0, %v143
    %v145 = vrot.slane %v140, %v144
    %v211 = vunpack.c.l.b16 %v76
    %v212 = vunpack.c.l.b16 %v77
    %v213 = vunpack.c.l.b16 %v78
    %v214 = vunpack.c.l.b16 %v79
    %v215 = vunpack.c.l.b16 %v80
    %v216 = vunpack.c.l.b16 %v81
    %v217 = vunpack.c.l.b16 %v82
    %v218 = vunpack.c.l.b16 %v83
    %v219 = vunpack.c.l.b16 %v84
    %v220 = vunpack.c.l.b16 %v85
    %v221 = vunpack.c.l.b16 %v86
    %v222 = vunpack.c.l.b16 %v87
    %v223 = vunpack.c.l.b16 %v88
    %v224 = vunpack.c.l.b16 %v89
    %v225 = vunpack.c.l.b16 %v90
    %v226 = vunpack.c.l.b16 %v91
    %v227 = vunpack.c.l.b16 %v92
    %v228 = vunpack.c.l.b16 %v93
    %v229 = vunpack.c.l.b16 %v94
    %v230 = vunpack.c.l.b16 %v95
    %v231 = vunpack.c.l.b16 %v96
    %v232 = vunpack.c.l.b16 %v97
    %v233 = vunpack.c.l.b16 %v98
    %v234 = vunpack.c.l.b16 %v99
    %v235 = vunpack.c.l.b16 %v100
    %v236 = vunpack.c.l.b16 %v101
    %v237 = vunpack.c.l.b16 %v102
    %v238 = vunpack.c.l.b16 %v103
    %v239 = vunpack.c.l.b16 %v104
    %v240 = vunpack.c.l.b16 %v105
    %v241 = vunpack.c.l.b16 %v106
    %v242 = vunpack.c.l.b16 %v107
    %v243 = vunpack.c.l.b16 %v108
    %v244 = vunpack.c.l.b16 %v109
    %v245 = vunpack.c.l.b16 %v110
    %v246 = vunpack.c.l.b16 %v111
    %v247 = vunpack.c.l.b16 %v112
    %v248 = vunpack.c.l.b16 %v113
    %v249 = vunpack.c.l.b16 %v114
    %v250 = vunpack.c.l.b16 %v115
    %v251 = vunpack.c.l.b16 %v116
    %v252 = vunpack.c.l.b16 %v117
    %v253 = vunpack.c.l.b16 %v118
    %v254 = vunpack.c.l.b16 %v119
    %v255 = vunpack.c.l.b16 %v120
    %v256 = vunpack.c.l.b16 %v121
    %v257 = vunpack.c.l.b16 %v122
    %v258 = vunpack.c.l.b16 %v123
    %v259 = vunpack.c.l.b16 %v124
    %v260 = vunpack.c.l.b16 %v125
    %v261 = vunpack.c.l.b16 %v126
    %v262 = vunpack.c.l.b16 %v127
    %v263 = vunpack.c.l.b16 %v128
    %v264 = vunpack.c.l.b16 %v129
    %v265 = vunpack.c.l.b16 %v130
    %v266 = vunpack.c.l.b16 %v131
    %v267 = vunpack.c.l.b16 %v132
    %v268 = vunpack.c.l.b16 %v133
    %v269 = vunpack.c.l.b16 %v134
    %v270 = vunpack.c.l.b16 %v135
    %v271 = vunpack.c.l.b16 %v136
    %v272 = vunpack.c.l.b16 %v137
    %v273 = vunpack.c.l.b16 %v138
    %v274 = vunpack.c.l.b16 %v139
    %v275 = vpack.c.b16 %v212, %v211
    %v276 = vpack.c.b16 %v214, %v213
    %v277 = vpack.c.b16 %v216, %v215
    %v278 = vpack.c.b16 %v218, %v217
    %v279 = vpack.c.b16 %v220, %v219
    %v280 = vpack.c.b16 %v222, %v221
    %v281 = vpack.c.b16 %v224, %v223
    %v282 = vpack.c.b16 %v226, %v225
    %v283 = vpack.c.b16 %v228, %v227
    %v284 = vpack.c.b16 %v230, %v229
    %v285 = vpack.c.b16 %v232, %v231
    %v286 = vpack.c.b16 %v234, %v233
    %v287 = vpack.c.b16 %v236, %v235
    %v288 = vpack.c.b16 %v238, %v237
    %v289 = vpack.c.b16 %v240, %v239
    %v290 = vpack.c.b16 %v242, %v241
    %v291 = vpack.c.b16 %v244, %v243
    %v292 = vpack.c.b16 %v246, %v245
    %v293 = vpack.c.b16 %v248, %v247
    %v294 = vpack.c.b16 %v250, %v249
    %v295 = vpack.c.b16 %v252, %v251
    %v296 = vpack.c.b16 %v254, %v253
    %v297 = vpack.c.b16 %v256, %v255
    %v298 = vpack.c.b16 %v258, %v257
    %v299 = vpack.c.b16 %v260, %v259
    %v300 = vpack.c.b16 %v262, %v261
    %v301 = vpack.c.b16 %v264, %v263
    %v302 = vpack.c.b16 %v266, %v265
    %v303 = vpack.c.b16 %v268, %v267
    %v304 = vpack.c.b16 %v270, %v269
    %v305 = vpack.c.b16 %v272, %v271
    %v306 = vpack.c.b16 %v274, %v273
    %339 = vmatprep.subr.bf16.mxu0 0
    %340 = vmatpush1.bf16.msra.mxu0 %v275
    %341 = vmatprep.subr.bf16.mxu0 0
    %342 = vmatpush1.bf16.msra.mxu0 %v276
    %343 = vmatprep.subr.bf16.mxu0 0
    %344 = vmatpush1.bf16.msra.mxu0 %v277
    %345 = vmatprep.subr.bf16.mxu0 0
    %346 = vmatpush1.bf16.msra.mxu0 %v278
    %347 = vmatprep.subr.bf16.mxu0 0
    %348 = vmatpush1.bf16.msra.mxu0 %v279
    %349 = vmatprep.subr.bf16.mxu0 0
    %350 = vmatpush1.bf16.msra.mxu0 %v280
    %351 = vmatprep.subr.bf16.mxu0 0
    %352 = vmatpush1.bf16.msra.mxu0 %v281
    %353 = vmatprep.subr.bf16.mxu0 0
    %354 = vmatpush1.bf16.msra.mxu0 %v282
    %355 = vmatprep.subr.bf16.mxu0 0
    %356 = vmatpush1.bf16.msra.mxu0 %v283
    %357 = vmatprep.subr.bf16.mxu0 0
    %358 = vmatpush1.bf16.msra.mxu0 %v284
    %359 = vmatprep.subr.bf16.mxu0 0
    %360 = vmatpush1.bf16.msra.mxu0 %v285
    %361 = vmatprep.subr.bf16.mxu0 0
    %362 = vmatpush1.bf16.msra.mxu0 %v286
    %363 = vmatprep.subr.bf16.mxu0 0
    %364 = vmatpush1.bf16.msra.mxu0 %v287
    %365 = vmatprep.subr.bf16.mxu0 0
    %366 = vmatpush1.bf16.msra.mxu0 %v288
    %367 = vmatprep.subr.bf16.mxu0 0
    %368 = vmatpush1.bf16.msra.mxu0 %v289
    %369 = vmatprep.subr.bf16.mxu0 0
    %370 = vmatpush1.bf16.msra.mxu0 %v290
    %371 = vmatprep.mubr.bf16.mxu0 %v47
    %372 = vmatmul.mubr.bf16.gmra.mrb[0].mxu0 %v46
    %v373 = vpop.f32.mrb[0].mxu0
    %v374 = vadd.f32 %v145, %v373
    %v375 = vpop.f32.mrb[0].mxu0
    %v376 = vpop.f32.mrb[0].mxu0
    %v377 = vpop.f32.mrb[0].mxu0
    %378 = vdwg.mxu0
    %379 = vmatprep.subr.bf16.mxu0 0
    %380 = vmatpush1.bf16.msra.mxu0 %v291
    %381 = vmatprep.subr.bf16.mxu0 0
    %382 = vmatpush1.bf16.msra.mxu0 %v292
    %383 = vmatprep.subr.bf16.mxu0 0
    %384 = vmatpush1.bf16.msra.mxu0 %v293
    %385 = vmatprep.subr.bf16.mxu0 0
    %386 = vmatpush1.bf16.msra.mxu0 %v294
    %387 = vmatprep.subr.bf16.mxu0 0
    %388 = vmatpush1.bf16.msra.mxu0 %v295
    %389 = vmatprep.subr.bf16.mxu0 0
    %390 = vmatpush1.bf16.msra.mxu0 %v296
    %391 = vmatprep.subr.bf16.mxu0 0
    %392 = vmatpush1.bf16.msra.mxu0 %v297
    %393 = vmatprep.subr.bf16.mxu0 0
    %394 = vmatpush1.bf16.msra.mxu0 %v298
    %395 = vmatprep.subr.bf16.mxu0 0
    %396 = vmatpush1.bf16.msra.mxu0 %v299
    %397 = vmatprep.subr.bf16.mxu0 0
    %398 = vmatpush1.bf16.msra.mxu0 %v300
    %399 = vmatprep.subr.bf16.mxu0 0
    %400 = vmatpush1.bf16.msra.mxu0 %v301
    %401 = vmatprep.subr.bf16.mxu0 0
    %402 = vmatpush1.bf16.msra.mxu0 %v302
    %403 = vmatprep.subr.bf16.mxu0 0
    %404 = vmatpush1.bf16.msra.mxu0 %v303
    %405 = vmatprep.subr.bf16.mxu0 0
    %406 = vmatpush1.bf16.msra.mxu0 %v304
    %407 = vmatprep.subr.bf16.mxu0 0
    %408 = vmatpush1.bf16.msra.mxu0 %v305
    %409 = vmatprep.subr.bf16.mxu0 0
    %410 = vmatpush1.bf16.msra.mxu0 %v306
    %411 = vmatprep.mubr.bf16.mxu0 %v49
    %412 = vmatmul.mubr.bf16.gmra.mrb[0].mxu0 %v48
    %v413 = vpop.f32.mrb[0].mxu0
    %v414 = vadd.f32 %v374, %v413
    %v415 = vpop.f32.mrb[0].mxu0
    %v416 = vpop.f32.mrb[0].mxu0
    %v417 = vpop.f32.mrb[0].mxu0
    %418 = vdwg.mxu0
    %v419 = vld [vmem:[%s3] sm:$0xf]
    %v420 = vld [vmem:[%s3 + $0x4] sm:$0xf]
    %v421 = vld [vmem:[%s3 + $0x8] sm:$0xf]
    %v422 = vld [vmem:[%s3 + $0xc] sm:$0xf]
    %v423 = vld [vmem:[%s3 + $0x10] sm:$0xf]
    %v424 = vld [vmem:[%s3 + $0x14] sm:$0xf]
    %v425 = vld [vmem:[%s3 + $0x18] sm:$0xf]
    %v426 = vld [vmem:[%s3 + $0x1c] sm:$0xf]
    %v427 = vld [vmem:[%s3 + $0x20] sm:$0xf]
    %v428 = vld [vmem:[%s3 + $0x24] sm:$0xf]
    %v429 = vld [vmem:[%s3 + $0x28] sm:$0xf]
    %v430 = vld [vmem:[%s3 + $0x2c] sm:$0xf]
    %v431 = vld [vmem:[%s3 + $0x30] sm:$0xf]
    %v432 = vld [vmem:[%s3 + $0x34] sm:$0xf]
    %v433 = vld [vmem:[%s3 + $0x38] sm:$0xf]
    %v434 = vld [vmem:[%s3 + $0x3c] sm:$0xf]
    %v435 = vld [vmem:[%s3 + $0x40] sm:$0xf]
    %v436 = vld [vmem:[%s3 + $0x44] sm:$0xf]
    %v437 = vld [vmem:[%s3 + $0x48] sm:$0xf]
    %v438 = vld [vmem:[%s3 + $0x4c] sm:$0xf]
    %v439 = vld [vmem:[%s3 + $0x50] sm:$0xf]
    %v440 = vld [vmem:[%s3 + $0x54] sm:$0xf]
    %v441 = vld [vmem:[%s3 + $0x58] sm:$0xf]
    %v442 = vld [vmem:[%s3 + $0x5c] sm:$0xf]
    %v443 = vld [vmem:[%s3 + $0x60] sm:$0xf]
    %v444 = vld [vmem:[%s3 + $0x64] sm:$0xf]
    %v445 = vld [vmem:[%s3 + $0x68] sm:$0xf]
    %v446 = vld [vmem:[%s3 + $0x6c] sm:$0xf]
    %v447 = vld [vmem:[%s3 + $0x70] sm:$0xf]
    %v448 = vld [vmem:[%s3 + $0x74] sm:$0xf]
    %v449 = vld [vmem:[%s3 + $0x78] sm:$0xf]
    %v450 = vld [vmem:[%s3 + $0x7c] sm:$0xf]
    %v451 = vld [vmem:[%s3 + $0x80] sm:$0xf]
    %v452 = vld [vmem:[%s3 + $0x84] sm:$0xf]
    %v453 = vld [vmem:[%s3 + $0x88] sm:$0xf]
    %v454 = vld [vmem:[%s3 + $0x8c] sm:$0xf]
    %v455 = vld [vmem:[%s3 + $0x90] sm:$0xf]
    %v456 = vld [vmem:[%s3 + $0x94] sm:$0xf]
    %v457 = vld [vmem:[%s3 + $0x98] sm:$0xf]
    %v458 = vld [vmem:[%s3 + $0x9c] sm:$0xf]
    %v459 = vld [vmem:[%s3 + $0xa0] sm:$0xf]
    %v460 = vld [vmem:[%s3 + $0xa4] sm:$0xf]
    %v461 = vld [vmem:[%s3 + $0xa8] sm:$0xf]
    %v462 = vld [vmem:[%s3 + $0xac] sm:$0xf]
    %v463 = vld [vmem:[%s3 + $0xb0] sm:$0xf]
    %v464 = vld [vmem:[%s3 + $0xb4] sm:$0xf]
    %v465 = vld [vmem:[%s3 + $0xb8] sm:$0xf]
    %v466 = vld [vmem:[%s3 + $0xbc] sm:$0xf]
    %v467 = vld [vmem:[%s3 + $0xc0] sm:$0xf]
    %v468 = vld [vmem:[%s3 + $0xc4] sm:$0xf]
    %v469 = vld [vmem:[%s3 + $0xc8] sm:$0xf]
    %v470 = vld [vmem:[%s3 + $0xcc] sm:$0xf]
    %v471 = vld [vmem:[%s3 + $0xd0] sm:$0xf]
    %v472 = vld [vmem:[%s3 + $0xd4] sm:$0xf]
    %v473 = vld [vmem:[%s3 + $0xd8] sm:$0xf]
    %v474 = vld [vmem:[%s3 + $0xdc] sm:$0xf]
    %v475 = vld [vmem:[%s3 + $0xe0] sm:$0xf]
    %v476 = vld [vmem:[%s3 + $0xe4] sm:$0xf]
    %v477 = vld [vmem:[%s3 + $0xe8] sm:$0xf]
    %v478 = vld [vmem:[%s3 + $0xec] sm:$0xf]
    %v479 = vld [vmem:[%s3 + $0xf0] sm:$0xf]
    %v480 = vld [vmem:[%s3 + $0xf4] sm:$0xf]
    %v481 = vld [vmem:[%s3 + $0xf8] sm:$0xf]
    %v482 = vld [vmem:[%s3 + $0xfc] sm:$0xf]
    %v483 = vld [vmem:[%s4] sm:$0x1]
    %v485 = vlaneseq
    %v486 = vshrl.u32 %v485, 7
    %v487 = vsub.s32 0, %v486
    %v488 = vrot.slane %v483, %v487
    %v554 = vunpack.c.l.b16 %v419
    %v555 = vunpack.c.l.b16 %v420
    %v556 = vunpack.c.l.b16 %v421
    %v557 = vunpack.c.l.b16 %v422
    %v558 = vunpack.c.l.b16 %v423
    %v559 = vunpack.c.l.b16 %v424
    %v560 = vunpack.c.l.b16 %v425
    %v561 = vunpack.c.l.b16 %v426
    %v562 = vunpack.c.l.b16 %v427
    %v563 = vunpack.c.l.b16 %v428
    %v564 = vunpack.c.l.b16 %v429
    %v565 = vunpack.c.l.b16 %v430
    %v566 = vunpack.c.l.b16 %v431
    %v567 = vunpack.c.l.b16 %v432
    %v568 = vunpack.c.l.b16 %v433
    %v569 = vunpack.c.l.b16 %v434
    %v570 = vunpack.c.l.b16 %v435
    %v571 = vunpack.c.l.b16 %v436
    %v572 = vunpack.c.l.b16 %v437
    %v573 = vunpack.c.l.b16 %v438
    %v574 = vunpack.c.l.b16 %v439
    %v575 = vunpack.c.l.b16 %v440
    %v576 = vunpack.c.l.b16 %v441
    %v577 = vunpack.c.l.b16 %v442
    %v578 = vunpack.c.l.b16 %v443
    %v579 = vunpack.c.l.b16 %v444
    %v580 = vunpack.c.l.b16 %v445
    %v581 = vunpack.c.l.b16 %v446
    %v582 = vunpack.c.l.b16 %v447
    %v583 = vunpack.c.l.b16 %v448
    %v584 = vunpack.c.l.b16 %v449
    %v585 = vunpack.c.l.b16 %v450
    %v586 = vunpack.c.l.b16 %v451
    %v587 = vunpack.c.l.b16 %v452
    %v588 = vunpack.c.l.b16 %v453
    %v589 = vunpack.c.l.b16 %v454
    %v590 = vunpack.c.l.b16 %v455
    %v591 = vunpack.c.l.b16 %v456
    %v592 = vunpack.c.l.b16 %v457
    %v593 = vunpack.c.l.b16 %v458
    %v594 = vunpack.c.l.b16 %v459
    %v595 = vunpack.c.l.b16 %v460
    %v596 = vunpack.c.l.b16 %v461
    %v597 = vunpack.c.l.b16 %v462
    %v598 = vunpack.c.l.b16 %v463
    %v599 = vunpack.c.l.b16 %v464
    %v600 = vunpack.c.l.b16 %v465
    %v601 = vunpack.c.l.b16 %v466
    %v602 = vunpack.c.l.b16 %v467
    %v603 = vunpack.c.l.b16 %v468
    %v604 = vunpack.c.l.b16 %v469
    %v605 = vunpack.c.l.b16 %v470
    %v606 = vunpack.c.l.b16 %v471
    %v607 = vunpack.c.l.b16 %v472
    %v608 = vunpack.c.l.b16 %v473
    %v609 = vunpack.c.l.b16 %v474
    %v610 = vunpack.c.l.b16 %v475
    %v611 = vunpack.c.l.b16 %v476
    %v612 = vunpack.c.l.b16 %v477
    %v613 = vunpack.c.l.b16 %v478
    %v614 = vunpack.c.l.b16 %v479
    %v615 = vunpack.c.l.b16 %v480
    %v616 = vunpack.c.l.b16 %v481
    %v617 = vunpack.c.l.b16 %v482
    %v618 = vpack.c.b16 %v555, %v554
    %v619 = vpack.c.b16 %v557, %v556
    %v620 = vpack.c.b16 %v559, %v558
    %v621 = vpack.c.b16 %v561, %v560
    %v622 = vpack.c.b16 %v563, %v562
    %v623 = vpack.c.b16 %v565, %v564
    %v624 = vpack.c.b16 %v567, %v566
    %v625 = vpack.c.b16 %v569, %v568
    %v626 = vpack.c.b16 %v571, %v570
    %v627 = vpack.c.b16 %v573, %v572
    %v628 = vpack.c.b16 %v575, %v574
    %v629 = vpack.c.b16 %v577, %v576
    %v630 = vpack.c.b16 %v579, %v578
    %v631 = vpack.c.b16 %v581, %v580
    %v632 = vpack.c.b16 %v583, %v582
    %v633 = vpack.c.b16 %v585, %v584
    %v634 = vpack.c.b16 %v587, %v586
    %v635 = vpack.c.b16 %v589, %v588
    %v636 = vpack.c.b16 %v591, %v590
    %v637 = vpack.c.b16 %v593, %v592
    %v638 = vpack.c.b16 %v595, %v594
    %v639 = vpack.c.b16 %v597, %v596
    %v640 = vpack.c.b16 %v599, %v598
    %v641 = vpack.c.b16 %v601, %v600
    %v642 = vpack.c.b16 %v603, %v602
    %v643 = vpack.c.b16 %v605, %v604
    %v644 = vpack.c.b16 %v607, %v606
    %v645 = vpack.c.b16 %v609, %v608
    %v646 = vpack.c.b16 %v611, %v610
    %v647 = vpack.c.b16 %v613, %v612
    %v648 = vpack.c.b16 %v615, %v614
    %v649 = vpack.c.b16 %v617, %v616
    %682 = vmatprep.subr.bf16.mxu0 0
    %683 = vmatpush1.bf16.msra.mxu0 %v618
    %684 = vmatprep.subr.bf16.mxu0 0
    %685 = vmatpush1.bf16.msra.mxu0 %v619
    %686 = vmatprep.subr.bf16.mxu0 0
    %687 = vmatpush1.bf16.msra.mxu0 %v620
    %688 = vmatprep.subr.bf16.mxu0 0
    %689 = vmatpush1.bf16.msra.mxu0 %v621
    %690 = vmatprep.subr.bf16.mxu0 0
    %691 = vmatpush1.bf16.msra.mxu0 %v622
    %692 = vmatprep.subr.bf16.mxu0 0
    %693 = vmatpush1.bf16.msra.mxu0 %v623
    %694 = vmatprep.subr.bf16.mxu0 0
    %695 = vmatpush1.bf16.msra.mxu0 %v624
    %696 = vmatprep.subr.bf16.mxu0 0
    %697 = vmatpush1.bf16.msra.mxu0 %v625
    %698 = vmatprep.subr.bf16.mxu0 0
    %699 = vmatpush1.bf16.msra.mxu0 %v626
    %700 = vmatprep.subr.bf16.mxu0 0
    %701 = vmatpush1.bf16.msra.mxu0 %v627
    %702 = vmatprep.subr.bf16.mxu0 0
    %703 = vmatpush1.bf16.msra.mxu0 %v628
    %704 = vmatprep.subr.bf16.mxu0 0
    %705 = vmatpush1.bf16.msra.mxu0 %v629
    %706 = vmatprep.subr.bf16.mxu0 0
    %707 = vmatpush1.bf16.msra.mxu0 %v630
    %708 = vmatprep.subr.bf16.mxu0 0
    %709 = vmatpush1.bf16.msra.mxu0 %v631
    %710 = vmatprep.subr.bf16.mxu0 0
    %711 = vmatpush1.bf16.msra.mxu0 %v632
    %712 = vmatprep.subr.bf16.mxu0 0
    %713 = vmatpush1.bf16.msra.mxu0 %v633
    %714 = vmatprep.mubr.bf16.mxu0 %v73
    %715 = vmatmul.mubr.bf16.gmra.mrb[0].mxu0 %v72
    %v716 = vpop.f32.mrb[0].mxu0
    %v717 = vadd.f32 %v488, %v716
    %v718 = vpop.f32.mrb[0].mxu0
    %v719 = vpop.f32.mrb[0].mxu0
    %v720 = vpop.f32.mrb[0].mxu0
    %721 = vdwg.mxu0
    %722 = vmatprep.subr.bf16.mxu0 0
    %723 = vmatpush1.bf16.msra.mxu0 %v634
    %724 = vmatprep.subr.bf16.mxu0 0
    %725 = vmatpush1.bf16.msra.mxu0 %v635
    %726 = vmatprep.subr.bf16.mxu0 0
    %727 = vmatpush1.bf16.msra.mxu0 %v636
    %728 = vmatprep.subr.bf16.mxu0 0
    %729 = vmatpush1.bf16.msra.mxu0 %v637
    %730 = vmatprep.subr.bf16.mxu0 0
    %731 = vmatpush1.bf16.msra.mxu0 %v638
    %732 = vmatprep.subr.bf16.mxu0 0
    %733 = vmatpush1.bf16.msra.mxu0 %v639
    %734 = vmatprep.subr.bf16.mxu0 0
    %735 = vmatpush1.bf16.msra.mxu0 %v640
    %736 = vmatprep.subr.bf16.mxu0 0
    %737 = vmatpush1.bf16.msra.mxu0 %v641
    %738 = vmatprep.subr.bf16.mxu0 0
    %739 = vmatpush1.bf16.msra.mxu0 %v642
    %740 = vmatprep.subr.bf16.mxu0 0
    %741 = vmatpush1.bf16.msra.mxu0 %v643
    %742 = vmatprep.subr.bf16.mxu0 0
    %743 = vmatpush1.bf16.msra.mxu0 %v644
    %744 = vmatprep.subr.bf16.mxu0 0
    %745 = vmatpush1.bf16.msra.mxu0 %v645
    %746 = vmatprep.subr.bf16.mxu0 0
    %747 = vmatpush1.bf16.msra.mxu0 %v646
    %748 = vmatprep.subr.bf16.mxu0 0
    %749 = vmatpush1.bf16.msra.mxu0 %v647
    %750 = vmatprep.subr.bf16.mxu0 0
    %751 = vmatpush1.bf16.msra.mxu0 %v648
    %752 = vmatprep.subr.bf16.mxu0 0
    %753 = vmatpush1.bf16.msra.mxu0 %v649
    %754 = vmatprep.mubr.bf16.mxu0 %v75
    %755 = vmatmul.mubr.bf16.gmra.mrb[0].mxu0 %v74
    %v756 = vpop.f32.mrb[0].mxu0
    %v757 = vadd.f32 %v717, %v756
    %v758 = vpop.f32.mrb[0].mxu0
    %v759 = vpop.f32.mrb[0].mxu0
    %v760 = vpop.f32.mrb[0].mxu0
    %761 = vdwg.mxu0
    %s762 = scalar_lea.vmem %s3, 256
    %v763 = vld [vmem:[%s762] sm:$0xf]
    %v764 = vld [vmem:[%s762 + $0x4] sm:$0xf]
    %v765 = vld [vmem:[%s762 + $0x8] sm:$0xf]
    %v766 = vld [vmem:[%s762 + $0xc] sm:$0xf]
    %v767 = vld [vmem:[%s762 + $0x10] sm:$0xf]
    %v768 = vld [vmem:[%s762 + $0x14] sm:$0xf]
    %v769 = vld [vmem:[%s762 + $0x18] sm:$0xf]
    %v770 = vld [vmem:[%s762 + $0x1c] sm:$0xf]
    %v771 = vld [vmem:[%s762 + $0x20] sm:$0xf]
    %v772 = vld [vmem:[%s762 + $0x24] sm:$0xf]
    %v773 = vld [vmem:[%s762 + $0x28] sm:$0xf]
    %v774 = vld [vmem:[%s762 + $0x2c] sm:$0xf]
    %v775 = vld [vmem:[%s762 + $0x30] sm:$0xf]
    %v776 = vld [vmem:[%s762 + $0x34] sm:$0xf]
    %v777 = vld [vmem:[%s762 + $0x38] sm:$0xf]
    %v778 = vld [vmem:[%s762 + $0x3c] sm:$0xf]
    %v779 = vld [vmem:[%s762 + $0x40] sm:$0xf]
    %v780 = vld [vmem:[%s762 + $0x44] sm:$0xf]
    %v781 = vld [vmem:[%s762 + $0x48] sm:$0xf]
    %v782 = vld [vmem:[%s762 + $0x4c] sm:$0xf]
    %v783 = vld [vmem:[%s762 + $0x50] sm:$0xf]
    %v784 = vld [vmem:[%s762 + $0x54] sm:$0xf]
    %v785 = vld [vmem:[%s762 + $0x58] sm:$0xf]
    %v786 = vld [vmem:[%s762 + $0x5c] sm:$0xf]
    %v787 = vld [vmem:[%s762 + $0x60] sm:$0xf]
    %v788 = vld [vmem:[%s762 + $0x64] sm:$0xf]
    %v789 = vld [vmem:[%s762 + $0x68] sm:$0xf]
    %v790 = vld [vmem:[%s762 + $0x6c] sm:$0xf]
    %v791 = vld [vmem:[%s762 + $0x70] sm:$0xf]
    %v792 = vld [vmem:[%s762 + $0x74] sm:$0xf]
    %v793 = vld [vmem:[%s762 + $0x78] sm:$0xf]
    %v794 = vld [vmem:[%s762 + $0x7c] sm:$0xf]
    %v795 = vld [vmem:[%s762 + $0x80] sm:$0xf]
    %v796 = vld [vmem:[%s762 + $0x84] sm:$0xf]
    %v797 = vld [vmem:[%s762 + $0x88] sm:$0xf]
    %v798 = vld [vmem:[%s762 + $0x8c] sm:$0xf]
    %v799 = vld [vmem:[%s762 + $0x90] sm:$0xf]
    %v800 = vld [vmem:[%s762 + $0x94] sm:$0xf]
    %v801 = vld [vmem:[%s762 + $0x98] sm:$0xf]
    %v802 = vld [vmem:[%s762 + $0x9c] sm:$0xf]
    %v803 = vld [vmem:[%s762 + $0xa0] sm:$0xf]
    %v804 = vld [vmem:[%s762 + $0xa4] sm:$0xf]
    %v805 = vld [vmem:[%s762 + $0xa8] sm:$0xf]
    %v806 = vld [vmem:[%s762 + $0xac] sm:$0xf]
    %v807 = vld [vmem:[%s762 + $0xb0] sm:$0xf]
    %v808 = vld [vmem:[%s762 + $0xb4] sm:$0xf]
    %v809 = vld [vmem:[%s762 + $0xb8] sm:$0xf]
    %v810 = vld [vmem:[%s762 + $0xbc] sm:$0xf]
    %v811 = vld [vmem:[%s762 + $0xc0] sm:$0xf]
    %v812 = vld [vmem:[%s762 + $0xc4] sm:$0xf]
    %v813 = vld [vmem:[%s762 + $0xc8] sm:$0xf]
    %v814 = vld [vmem:[%s762 + $0xcc] sm:$0xf]
    %v815 = vld [vmem:[%s762 + $0xd0] sm:$0xf]
    %v816 = vld [vmem:[%s762 + $0xd4] sm:$0xf]
    %v817 = vld [vmem:[%s762 + $0xd8] sm:$0xf]
    %v818 = vld [vmem:[%s762 + $0xdc] sm:$0xf]
    %v819 = vld [vmem:[%s762 + $0xe0] sm:$0xf]
    %v820 = vld [vmem:[%s762 + $0xe4] sm:$0xf]
    %v821 = vld [vmem:[%s762 + $0xe8] sm:$0xf]
    %v822 = vld [vmem:[%s762 + $0xec] sm:$0xf]
    %v823 = vld [vmem:[%s762 + $0xf0] sm:$0xf]
    %v824 = vld [vmem:[%s762 + $0xf4] sm:$0xf]
    %v825 = vld [vmem:[%s762 + $0xf8] sm:$0xf]
    %v826 = vld [vmem:[%s762 + $0xfc] sm:$0xf]
    %s827 = scalar_lea.vmem %s4, 1
    %v828 = vld [vmem:[%s827] sm:$0x1]
    %v830 = vlaneseq
    %v831 = vshrl.u32 %v830, 7
    %v832 = vsub.s32 0, %v831
    %v833 = vrot.slane %v828, %v832
    %v899 = vunpack.c.l.b16 %v763
    %v900 = vunpack.c.l.b16 %v764
    %v901 = vunpack.c.l.b16 %v765
    %v902 = vunpack.c.l.b16 %v766
    %v903 = vunpack.c.l.b16 %v767
    %v904 = vunpack.c.l.b16 %v768
    %v905 = vunpack.c.l.b16 %v769
    %v906 = vunpack.c.l.b16 %v770
    %v907 = vunpack.c.l.b16 %v771
    %v908 = vunpack.c.l.b16 %v772
    %v909 = vunpack.c.l.b16 %v773
    %v910 = vunpack.c.l.b16 %v774
    %v911 = vunpack.c.l.b16 %v775
    %v912 = vunpack.c.l.b16 %v776
    %v913 = vunpack.c.l.b16 %v777
    %v914 = vunpack.c.l.b16 %v778
    %v915 = vunpack.c.l.b16 %v779
    %v916 = vunpack.c.l.b16 %v780
    %v917 = vunpack.c.l.b16 %v781
    %v918 = vunpack.c.l.b16 %v782
    %v919 = vunpack.c.l.b16 %v783
    %v920 = vunpack.c.l.b16 %v784
    %v921 = vunpack.c.l.b16 %v785
    %v922 = vunpack.c.l.b16 %v786
    %v923 = vunpack.c.l.b16 %v787
    %v924 = vunpack.c.l.b16 %v788
    %v925 = vunpack.c.l.b16 %v789
    %v926 = vunpack.c.l.b16 %v790
    %v927 = vunpack.c.l.b16 %v791
    %v928 = vunpack.c.l.b16 %v792
    %v929 = vunpack.c.l.b16 %v793
    %v930 = vunpack.c.l.b16 %v794
    %v931 = vunpack.c.l.b16 %v795
    %v932 = vunpack.c.l.b16 %v796
    %v933 = vunpack.c.l.b16 %v797
    %v934 = vunpack.c.l.b16 %v798
    %v935 = vunpack.c.l.b16 %v799
    %v936 = vunpack.c.l.b16 %v800
    %v937 = vunpack.c.l.b16 %v801
    %v938 = vunpack.c.l.b16 %v802
    %v939 = vunpack.c.l.b16 %v803
    %v940 = vunpack.c.l.b16 %v804
    %v941 = vunpack.c.l.b16 %v805
    %v942 = vunpack.c.l.b16 %v806
    %v943 = vunpack.c.l.b16 %v807
    %v944 = vunpack.c.l.b16 %v808
    %v945 = vunpack.c.l.b16 %v809
    %v946 = vunpack.c.l.b16 %v810
    %v947 = vunpack.c.l.b16 %v811
    %v948 = vunpack.c.l.b16 %v812
    %v949 = vunpack.c.l.b16 %v813
    %v950 = vunpack.c.l.b16 %v814
    %v951 = vunpack.c.l.b16 %v815
    %v952 = vunpack.c.l.b16 %v816
    %v953 = vunpack.c.l.b16 %v817
    %v954 = vunpack.c.l.b16 %v818
    %v955 = vunpack.c.l.b16 %v819
    %v956 = vunpack.c.l.b16 %v820
    %v957 = vunpack.c.l.b16 %v821
    %v958 = vunpack.c.l.b16 %v822
    %v959 = vunpack.c.l.b16 %v823
    %v960 = vunpack.c.l.b16 %v824
    %v961 = vunpack.c.l.b16 %v825
    %v962 = vunpack.c.l.b16 %v826
    %v963 = vpack.c.b16 %v900, %v899
    %v964 = vpack.c.b16 %v902, %v901
    %v965 = vpack.c.b16 %v904, %v903
    %v966 = vpack.c.b16 %v906, %v905
    %v967 = vpack.c.b16 %v908, %v907
    %v968 = vpack.c.b16 %v910, %v909
    %v969 = vpack.c.b16 %v912, %v911
    %v970 = vpack.c.b16 %v914, %v913
    %v971 = vpack.c.b16 %v916, %v915
    %v972 = vpack.c.b16 %v918, %v917
    %v973 = vpack.c.b16 %v920, %v919
    %v974 = vpack.c.b16 %v922, %v921
    %v975 = vpack.c.b16 %v924, %v923
    %v976 = vpack.c.b16 %v926, %v925
    %v977 = vpack.c.b16 %v928, %v927
    %v978 = vpack.c.b16 %v930, %v929
    %v979 = vpack.c.b16 %v932, %v931
    %v980 = vpack.c.b16 %v934, %v933
    %v981 = vpack.c.b16 %v936, %v935
    %v982 = vpack.c.b16 %v938, %v937
    %v983 = vpack.c.b16 %v940, %v939
    %v984 = vpack.c.b16 %v942, %v941
    %v985 = vpack.c.b16 %v944, %v943
    %v986 = vpack.c.b16 %v946, %v945
    %v987 = vpack.c.b16 %v948, %v947
    %v988 = vpack.c.b16 %v950, %v949
    %v989 = vpack.c.b16 %v952, %v951
    %v990 = vpack.c.b16 %v954, %v953
    %v991 = vpack.c.b16 %v956, %v955
    %v992 = vpack.c.b16 %v958, %v957
    %v993 = vpack.c.b16 %v960, %v959
    %v994 = vpack.c.b16 %v962, %v961
    %1027 = vmatprep.subr.bf16.mxu0 0
    %1028 = vmatpush1.bf16.msra.mxu0 %v963
    %1029 = vmatprep.subr.bf16.mxu0 0
    %1030 = vmatpush1.bf16.msra.mxu0 %v964
    %1031 = vmatprep.subr.bf16.mxu0 0
    %1032 = vmatpush1.bf16.msra.mxu0 %v965
    %1033 = vmatprep.subr.bf16.mxu0 0
    %1034 = vmatpush1.bf16.msra.mxu0 %v966
    %1035 = vmatprep.subr.bf16.mxu0 0
    %1036 = vmatpush1.bf16.msra.mxu0 %v967
    %1037 = vmatprep.subr.bf16.mxu0 0
    %1038 = vmatpush1.bf16.msra.mxu0 %v968
    %1039 = vmatprep.subr.bf16.mxu0 0
    %1040 = vmatpush1.bf16.msra.mxu0 %v969
    %1041 = vmatprep.subr.bf16.mxu0 0
    %1042 = vmatpush1.bf16.msra.mxu0 %v970
    %1043 = vmatprep.subr.bf16.mxu0 0
    %1044 = vmatpush1.bf16.msra.mxu0 %v971
    %1045 = vmatprep.subr.bf16.mxu0 0
    %1046 = vmatpush1.bf16.msra.mxu0 %v972
    %1047 = vmatprep.subr.bf16.mxu0 0
    %1048 = vmatpush1.bf16.msra.mxu0 %v973
    %1049 = vmatprep.subr.bf16.mxu0 0
    %1050 = vmatpush1.bf16.msra.mxu0 %v974
    %1051 = vmatprep.subr.bf16.mxu0 0
    %1052 = vmatpush1.bf16.msra.mxu0 %v975
    %1053 = vmatprep.subr.bf16.mxu0 0
    %1054 = vmatpush1.bf16.msra.mxu0 %v976
    %1055 = vmatprep.subr.bf16.mxu0 0
    %1056 = vmatpush1.bf16.msra.mxu0 %v977
    %1057 = vmatprep.subr.bf16.mxu0 0
    %1058 = vmatpush1.bf16.msra.mxu0 %v978
    %1059 = vmatprep.mubr.bf16.mxu0 %v73
    %1060 = vmatmul.mubr.bf16.gmra.mrb[0].mxu0 %v72
    %v1061 = vpop.f32.mrb[0].mxu0
    %v1062 = vadd.f32 %v833, %v1061
    %v1063 = vpop.f32.mrb[0].mxu0
    %v1064 = vpop.f32.mrb[0].mxu0
    %v1065 = vpop.f32.mrb[0].mxu0
    %1066 = vdwg.mxu0
    %1067 = vmatprep.subr.bf16.mxu0 0
    %1068 = vmatpush1.bf16.msra.mxu0 %v979
    %1069 = vmatprep.subr.bf16.mxu0 0
    %1070 = vmatpush1.bf16.msra.mxu0 %v980
    %1071 = vmatprep.subr.bf16.mxu0 0
    %1072 = vmatpush1.bf16.msra.mxu0 %v981
    %1073 = vmatprep.subr.bf16.mxu0 0
    %1074 = vmatpush1.bf16.msra.mxu0 %v982
    %1075 = vmatprep.subr.bf16.mxu0 0
    %1076 = vmatpush1.bf16.msra.mxu0 %v983
    %1077 = vmatprep.subr.bf16.mxu0 0
    %1078 = vmatpush1.bf16.msra.mxu0 %v984
    %1079 = vmatprep.subr.bf16.mxu0 0
    %1080 = vmatpush1.bf16.msra.mxu0 %v985
    %1081 = vmatprep.subr.bf16.mxu0 0
    %1082 = vmatpush1.bf16.msra.mxu0 %v986
    %1083 = vmatprep.subr.bf16.mxu0 0
    %1084 = vmatpush1.bf16.msra.mxu0 %v987
    %1085 = vmatprep.subr.bf16.mxu0 0
    %1086 = vmatpush1.bf16.msra.mxu0 %v988
    %1087 = vmatprep.subr.bf16.mxu0 0
    %1088 = vmatpush1.bf16.msra.mxu0 %v989
    %1089 = vmatprep.subr.bf16.mxu0 0
    %1090 = vmatpush1.bf16.msra.mxu0 %v990
    %1091 = vmatprep.subr.bf16.mxu0 0
    %1092 = vmatpush1.bf16.msra.mxu0 %v991
    %1093 = vmatprep.subr.bf16.mxu0 0
    %1094 = vmatpush1.bf16.msra.mxu0 %v992
    %1095 = vmatprep.subr.bf16.mxu0 0
    %1096 = vmatpush1.bf16.msra.mxu0 %v993
    %1097 = vmatprep.subr.bf16.mxu0 0
    %1098 = vmatpush1.bf16.msra.mxu0 %v994
    %1099 = vmatprep.mubr.bf16.mxu0 %v75
    %1100 = vmatmul.mubr.bf16.gmra.mrb[0].mxu0 %v74
    %v1101 = vpop.f32.mrb[0].mxu0
    %v1102 = vadd.f32 %v1062, %v1101
    %v1103 = vpop.f32.mrb[0].mxu0
    %v1104 = vpop.f32.mrb[0].mxu0
    %v1105 = vpop.f32.mrb[0].mxu0
    %1106 = vdwg.mxu0
    %s1107 = scalar_lea.vmem %s3, 512
    %v1108 = vld [vmem:[%s1107] sm:$0xf]
    %v1109 = vld [vmem:[%s1107 + $0x4] sm:$0xf]
    %v1110 = vld [vmem:[%s1107 + $0x8] sm:$0xf]
    %v1111 = vld [vmem:[%s1107 + $0xc] sm:$0xf]
    %v1112 = vld [vmem:[%s1107 + $0x10] sm:$0xf]
    %v1113 = vld [vmem:[%s1107 + $0x14] sm:$0xf]
    %v1114 = vld [vmem:[%s1107 + $0x18] sm:$0xf]
    %v1115 = vld [vmem:[%s1107 + $0x1c] sm:$0xf]
    %v1116 = vld [vmem:[%s1107 + $0x20] sm:$0xf]
    %v1117 = vld [vmem:[%s1107 + $0x24] sm:$0xf]
    %v1118 = vld [vmem:[%s1107 + $0x28] sm:$0xf]
    %v1119 = vld [vmem:[%s1107 + $0x2c] sm:$0xf]
    %v1120 = vld [vmem:[%s1107 + $0x30] sm:$0xf]
    %v1121 = vld [vmem:[%s1107 + $0x34] sm:$0xf]
    %v1122 = vld [vmem:[%s1107 + $0x38] sm:$0xf]
    %v1123 = vld [vmem:[%s1107 + $0x3c] sm:$0xf]
    %v1124 = vld [vmem:[%s1107 + $0x40] sm:$0xf]
    %v1125 = vld [vmem:[%s1107 + $0x44] sm:$0xf]
    %v1126 = vld [vmem:[%s1107 + $0x48] sm:$0xf]
    %v1127 = vld [vmem:[%s1107 + $0x4c] sm:$0xf]
    %v1128 = vld [vmem:[%s1107 + $0x50] sm:$0xf]
    %v1129 = vld [vmem:[%s1107 + $0x54] sm:$0xf]
    %v1130 = vld [vmem:[%s1107 + $0x58] sm:$0xf]
    %v1131 = vld [vmem:[%s1107 + $0x5c] sm:$0xf]
    %v1132 = vld [vmem:[%s1107 + $0x60] sm:$0xf]
    %v1133 = vld [vmem:[%s1107 + $0x64] sm:$0xf]
    %v1134 = vld [vmem:[%s1107 + $0x68] sm:$0xf]
    %v1135 = vld [vmem:[%s1107 + $0x6c] sm:$0xf]
    %v1136 = vld [vmem:[%s1107 + $0x70] sm:$0xf]
    %v1137 = vld [vmem:[%s1107 + $0x74] sm:$0xf]
    %v1138 = vld [vmem:[%s1107 + $0x78] sm:$0xf]
    %v1139 = vld [vmem:[%s1107 + $0x7c] sm:$0xf]
    %v1140 = vld [vmem:[%s1107 + $0x80] sm:$0xf]
    %v1141 = vld [vmem:[%s1107 + $0x84] sm:$0xf]
    %v1142 = vld [vmem:[%s1107 + $0x88] sm:$0xf]
    %v1143 = vld [vmem:[%s1107 + $0x8c] sm:$0xf]
    %v1144 = vld [vmem:[%s1107 + $0x90] sm:$0xf]
    %v1145 = vld [vmem:[%s1107 + $0x94] sm:$0xf]
    %v1146 = vld [vmem:[%s1107 + $0x98] sm:$0xf]
    %v1147 = vld [vmem:[%s1107 + $0x9c] sm:$0xf]
    %v1148 = vld [vmem:[%s1107 + $0xa0] sm:$0xf]
    %v1149 = vld [vmem:[%s1107 + $0xa4] sm:$0xf]
    %v1150 = vld [vmem:[%s1107 + $0xa8] sm:$0xf]
    %v1151 = vld [vmem:[%s1107 + $0xac] sm:$0xf]
    %v1152 = vld [vmem:[%s1107 + $0xb0] sm:$0xf]
    %v1153 = vld [vmem:[%s1107 + $0xb4] sm:$0xf]
    %v1154 = vld [vmem:[%s1107 + $0xb8] sm:$0xf]
    %v1155 = vld [vmem:[%s1107 + $0xbc] sm:$0xf]
    %v1156 = vld [vmem:[%s1107 + $0xc0] sm:$0xf]
    %v1157 = vld [vmem:[%s1107 + $0xc4] sm:$0xf]
    %v1158 = vld [vmem:[%s1107 + $0xc8] sm:$0xf]
    %v1159 = vld [vmem:[%s1107 + $0xcc] sm:$0xf]
    %v1160 = vld [vmem:[%s1107 + $0xd0] sm:$0xf]
    %v1161 = vld [vmem:[%s1107 + $0xd4] sm:$0xf]
    %v1162 = vld [vmem:[%s1107 + $0xd8] sm:$0xf]
    %v1163 = vld [vmem:[%s1107 + $0xdc] sm:$0xf]
    %v1164 = vld [vmem:[%s1107 + $0xe0] sm:$0xf]
    %v1165 = vld [vmem:[%s1107 + $0xe4] sm:$0xf]
    %v1166 = vld [vmem:[%s1107 + $0xe8] sm:$0xf]
    %v1167 = vld [vmem:[%s1107 + $0xec] sm:$0xf]
    %v1168 = vld [vmem:[%s1107 + $0xf0] sm:$0xf]
    %v1169 = vld [vmem:[%s1107 + $0xf4] sm:$0xf]
    %v1170 = vld [vmem:[%s1107 + $0xf8] sm:$0xf]
    %v1171 = vld [vmem:[%s1107 + $0xfc] sm:$0xf]
    %s1172 = scalar_lea.vmem %s4, 2
    %v1173 = vld [vmem:[%s1172] sm:$0x1]
    %v1175 = vlaneseq
    %v1176 = vshrl.u32 %v1175, 7
    %v1177 = vsub.s32 0, %v1176
    %v1178 = vrot.slane %v1173, %v1177
    %v1244 = vunpack.c.l.b16 %v1108
    %v1245 = vunpack.c.l.b16 %v1109
    %v1246 = vunpack.c.l.b16 %v1110
    %v1247 = vunpack.c.l.b16 %v1111
    %v1248 = vunpack.c.l.b16 %v1112
    %v1249 = vunpack.c.l.b16 %v1113
    %v1250 = vunpack.c.l.b16 %v1114
    %v1251 = vunpack.c.l.b16 %v1115
    %v1252 = vunpack.c.l.b16 %v1116
    %v1253 = vunpack.c.l.b16 %v1117
    %v1254 = vunpack.c.l.b16 %v1118
    %v1255 = vunpack.c.l.b16 %v1119
    %v1256 = vunpack.c.l.b16 %v1120
    %v1257 = vunpack.c.l.b16 %v1121
    %v1258 = vunpack.c.l.b16 %v1122
    %v1259 = vunpack.c.l.b16 %v1123
    %v1260 = vunpack.c.l.b16 %v1124
    %v1261 = vunpack.c.l.b16 %v1125
    %v1262 = vunpack.c.l.b16 %v1126
    %v1263 = vunpack.c.l.b16 %v1127
    %v1264 = vunpack.c.l.b16 %v1128
    %v1265 = vunpack.c.l.b16 %v1129
    %v1266 = vunpack.c.l.b16 %v1130
    %v1267 = vunpack.c.l.b16 %v1131
    %v1268 = vunpack.c.l.b16 %v1132
    %v1269 = vunpack.c.l.b16 %v1133
    %v1270 = vunpack.c.l.b16 %v1134
    %v1271 = vunpack.c.l.b16 %v1135
    %v1272 = vunpack.c.l.b16 %v1136
    %v1273 = vunpack.c.l.b16 %v1137
    %v1274 = vunpack.c.l.b16 %v1138
    %v1275 = vunpack.c.l.b16 %v1139
    %v1276 = vunpack.c.l.b16 %v1140
    %v1277 = vunpack.c.l.b16 %v1141
    %v1278 = vunpack.c.l.b16 %v1142
    %v1279 = vunpack.c.l.b16 %v1143
    %v1280 = vunpack.c.l.b16 %v1144
    %v1281 = vunpack.c.l.b16 %v1145
    %v1282 = vunpack.c.l.b16 %v1146
    %v1283 = vunpack.c.l.b16 %v1147
    %v1284 = vunpack.c.l.b16 %v1148
    %v1285 = vunpack.c.l.b16 %v1149
    %v1286 = vunpack.c.l.b16 %v1150
    %v1287 = vunpack.c.l.b16 %v1151
    %v1288 = vunpack.c.l.b16 %v1152
    %v1289 = vunpack.c.l.b16 %v1153
    %v1290 = vunpack.c.l.b16 %v1154
    %v1291 = vunpack.c.l.b16 %v1155
    %v1292 = vunpack.c.l.b16 %v1156
    %v1293 = vunpack.c.l.b16 %v1157
    %v1294 = vunpack.c.l.b16 %v1158
    %v1295 = vunpack.c.l.b16 %v1159
    %v1296 = vunpack.c.l.b16 %v1160
    %v1297 = vunpack.c.l.b16 %v1161
    %v1298 = vunpack.c.l.b16 %v1162
    %v1299 = vunpack.c.l.b16 %v1163
    %v1300 = vunpack.c.l.b16 %v1164
    %v1301 = vunpack.c.l.b16 %v1165
    %v1302 = vunpack.c.l.b16 %v1166
    %v1303 = vunpack.c.l.b16 %v1167
    %v1304 = vunpack.c.l.b16 %v1168
    %v1305 = vunpack.c.l.b16 %v1169
    %v1306 = vunpack.c.l.b16 %v1170
    %v1307 = vunpack.c.l.b16 %v1171
    %v1308 = vpack.c.b16 %v1245, %v1244
    %v1309 = vpack.c.b16 %v1247, %v1246
    %v1310 = vpack.c.b16 %v1249, %v1248
    %v1311 = vpack.c.b16 %v1251, %v1250
    %v1312 = vpack.c.b16 %v1253, %v1252
    %v1313 = vpack.c.b16 %v1255, %v1254
    %v1314 = vpack.c.b16 %v1257, %v1256
    %v1315 = vpack.c.b16 %v1259, %v1258
    %v1316 = vpack.c.b16 %v1261, %v1260
    %v1317 = vpack.c.b16 %v1263, %v1262
    %v1318 = vpack.c.b16 %v1265, %v1264
    %v1319 = vpack.c.b16 %v1267, %v1266
    %v1320 = vpack.c.b16 %v1269, %v1268
    %v1321 = vpack.c.b16 %v1271, %v1270
    %v1322 = vpack.c.b16 %v1273, %v1272
    %v1323 = vpack.c.b16 %v1275, %v1274
    %v1324 = vpack.c.b16 %v1277, %v1276
    %v1325 = vpack.c.b16 %v1279, %v1278
    %v1326 = vpack.c.b16 %v1281, %v1280
    %v1327 = vpack.c.b16 %v1283, %v1282
    %v1328 = vpack.c.b16 %v1285, %v1284
    %v1329 = vpack.c.b16 %v1287, %v1286
    %v1330 = vpack.c.b16 %v1289, %v1288
    %v1331 = vpack.c.b16 %v1291, %v1290
    %v1332 = vpack.c.b16 %v1293, %v1292
    %v1333 = vpack.c.b16 %v1295, %v1294
    %v1334 = vpack.c.b16 %v1297, %v1296
    %v1335 = vpack.c.b16 %v1299, %v1298
    %v1336 = vpack.c.b16 %v1301, %v1300
    %v1337 = vpack.c.b16 %v1303, %v1302
    %v1338 = vpack.c.b16 %v1305, %v1304
    %v1339 = vpack.c.b16 %v1307, %v1306
    %1372 = vmatprep.subr.bf16.mxu0 0
    %1373 = vmatpush1.bf16.msra.mxu0 %v1308
    %1374 = vmatprep.subr.bf16.mxu0 0
    %1375 = vmatpush1.bf16.msra.mxu0 %v1309
    %1376 = vmatprep.subr.bf16.mxu0 0
    %1377 = vmatpush1.bf16.msra.mxu0 %v1310
    %1378 = vmatprep.subr.bf16.mxu0 0
    %1379 = vmatpush1.bf16.msra.mxu0 %v1311
    %1380 = vmatprep.subr.bf16.mxu0 0
    %1381 = vmatpush1.bf16.msra.mxu0 %v1312
    %1382 = vmatprep.subr.bf16.mxu0 0
    %1383 = vmatpush1.bf16.msra.mxu0 %v1313
    %1384 = vmatprep.subr.bf16.mxu0 0
    %1385 = vmatpush1.bf16.msra.mxu0 %v1314
    %1386 = vmatprep.subr.bf16.mxu0 0
    %1387 = vmatpush1.bf16.msra.mxu0 %v1315
    %1388 = vmatprep.subr.bf16.mxu0 0
    %1389 = vmatpush1.bf16.msra.mxu0 %v1316
    %1390 = vmatprep.subr.bf16.mxu0 0
    %1391 = vmatpush1.bf16.msra.mxu0 %v1317
    %1392 = vmatprep.subr.bf16.mxu0 0
    %1393 = vmatpush1.bf16.msra.mxu0 %v1318
    %1394 = vmatprep.subr.bf16.mxu0 0
    %1395 = vmatpush1.bf16.msra.mxu0 %v1319
    %1396 = vmatprep.subr.bf16.mxu0 0
    %1397 = vmatpush1.bf16.msra.mxu0 %v1320
    %1398 = vmatprep.subr.bf16.mxu0 0
    %1399 = vmatpush1.bf16.msra.mxu0 %v1321
    %1400 = vmatprep.subr.bf16.mxu0 0
    %1401 = vmatpush1.bf16.msra.mxu0 %v1322
    %1402 = vmatprep.subr.bf16.mxu0 0
    %1403 = vmatpush1.bf16.msra.mxu0 %v1323
    %1404 = vmatprep.mubr.bf16.mxu0 %v73
    %1405 = vmatmul.mubr.bf16.gmra.mrb[0].mxu0 %v72
    %v1406 = vpop.f32.mrb[0].mxu0
    %v1407 = vadd.f32 %v1178, %v1406
    %v1408 = vpop.f32.mrb[0].mxu0
    %v1409 = vpop.f32.mrb[0].mxu0
    %v1410 = vpop.f32.mrb[0].mxu0
    %1411 = vdwg.mxu0
    %1412 = vmatprep.subr.bf16.mxu0 0
    %1413 = vmatpush1.bf16.msra.mxu0 %v1324
    %1414 = vmatprep.subr.bf16.mxu0 0
    %1415 = vmatpush1.bf16.msra.mxu0 %v1325
    %1416 = vmatprep.subr.bf16.mxu0 0
    %1417 = vmatpush1.bf16.msra.mxu0 %v1326
    %1418 = vmatprep.subr.bf16.mxu0 0
    %1419 = vmatpush1.bf16.msra.mxu0 %v1327
    %1420 = vmatprep.subr.bf16.mxu0 0
    %1421 = vmatpush1.bf16.msra.mxu0 %v1328
    %1422 = vmatprep.subr.bf16.mxu0 0
    %1423 = vmatpush1.bf16.msra.mxu0 %v1329
    %1424 = vmatprep.subr.bf16.mxu0 0
    %1425 = vmatpush1.bf16.msra.mxu0 %v1330
    %1426 = vmatprep.subr.bf16.mxu0 0
    %1427 = vmatpush1.bf16.msra.mxu0 %v1331
    %1428 = vmatprep.subr.bf16.mxu0 0
    %1429 = vmatpush1.bf16.msra.mxu0 %v1332
    %1430 = vmatprep.subr.bf16.mxu0 0
    %1431 = vmatpush1.bf16.msra.mxu0 %v1333
    %1432 = vmatprep.subr.bf16.mxu0 0
    %1433 = vmatpush1.bf16.msra.mxu0 %v1334
    %1434 = vmatprep.subr.bf16.mxu0 0
    %1435 = vmatpush1.bf16.msra.mxu0 %v1335
    %1436 = vmatprep.subr.bf16.mxu0 0
    %1437 = vmatpush1.bf16.msra.mxu0 %v1336
    %1438 = vmatprep.subr.bf16.mxu0 0
    %1439 = vmatpush1.bf16.msra.mxu0 %v1337
    %1440 = vmatprep.subr.bf16.mxu0 0
    %1441 = vmatpush1.bf16.msra.mxu0 %v1338
    %1442 = vmatprep.subr.bf16.mxu0 0
    %1443 = vmatpush1.bf16.msra.mxu0 %v1339
    %1444 = vmatprep.mubr.bf16.mxu0 %v75
    %1445 = vmatmul.mubr.bf16.gmra.mrb[0].mxu0 %v74
    %v1446 = vpop.f32.mrb[0].mxu0
    %v1447 = vadd.f32 %v1407, %v1446
    %v1448 = vpop.f32.mrb[0].mxu0
    %v1449 = vpop.f32.mrb[0].mxu0
    %v1450 = vpop.f32.mrb[0].mxu0
    %1451 = vdwg.mxu0
    %s1452 = scalar_lea.vmem %s3, 768
    %v1453 = vld [vmem:[%s1452] sm:$0xf]
    %v1454 = vld [vmem:[%s1452 + $0x4] sm:$0xf]
    %v1455 = vld [vmem:[%s1452 + $0x8] sm:$0xf]
    %v1456 = vld [vmem:[%s1452 + $0xc] sm:$0xf]
    %v1457 = vld [vmem:[%s1452 + $0x10] sm:$0xf]
    %v1458 = vld [vmem:[%s1452 + $0x14] sm:$0xf]
    %v1459 = vld [vmem:[%s1452 + $0x18] sm:$0xf]
    %v1460 = vld [vmem:[%s1452 + $0x1c] sm:$0xf]
    %v1461 = vld [vmem:[%s1452 + $0x20] sm:$0xf]
    %v1462 = vld [vmem:[%s1452 + $0x24] sm:$0xf]
    %v1463 = vld [vmem:[%s1452 + $0x28] sm:$0xf]
    %v1464 = vld [vmem:[%s1452 + $0x2c] sm:$0xf]
    %v1465 = vld [vmem:[%s1452 + $0x30] sm:$0xf]
    %v1466 = vld [vmem:[%s1452 + $0x34] sm:$0xf]
    %v1467 = vld [vmem:[%s1452 + $0x38] sm:$0xf]
    %v1468 = vld [vmem:[%s1452 + $0x3c] sm:$0xf]
    %v1469 = vld [vmem:[%s1452 + $0x40] sm:$0xf]
    %v1470 = vld [vmem:[%s1452 + $0x44] sm:$0xf]
    %v1471 = vld [vmem:[%s1452 + $0x48] sm:$0xf]
    %v1472 = vld [vmem:[%s1452 + $0x4c] sm:$0xf]
    %v1473 = vld [vmem:[%s1452 + $0x50] sm:$0xf]
    %v1474 = vld [vmem:[%s1452 + $0x54] sm:$0xf]
    %v1475 = vld [vmem:[%s1452 + $0x58] sm:$0xf]
    %v1476 = vld [vmem:[%s1452 + $0x5c] sm:$0xf]
    %v1477 = vld [vmem:[%s1452 + $0x60] sm:$0xf]
    %v1478 = vld [vmem:[%s1452 + $0x64] sm:$0xf]
    %v1479 = vld [vmem:[%s1452 + $0x68] sm:$0xf]
    %v1480 = vld [vmem:[%s1452 + $0x6c] sm:$0xf]
    %v1481 = vld [vmem:[%s1452 + $0x70] sm:$0xf]
    %v1482 = vld [vmem:[%s1452 + $0x74] sm:$0xf]
    %v1483 = vld [vmem:[%s1452 + $0x78] sm:$0xf]
    %v1484 = vld [vmem:[%s1452 + $0x7c] sm:$0xf]
    %v1485 = vld [vmem:[%s1452 + $0x80] sm:$0xf]
    %v1486 = vld [vmem:[%s1452 + $0x84] sm:$0xf]
    %v1487 = vld [vmem:[%s1452 + $0x88] sm:$0xf]
    %v1488 = vld [vmem:[%s1452 + $0x8c] sm:$0xf]
    %v1489 = vld [vmem:[%s1452 + $0x90] sm:$0xf]
    %v1490 = vld [vmem:[%s1452 + $0x94] sm:$0xf]
    %v1491 = vld [vmem:[%s1452 + $0x98] sm:$0xf]
    %v1492 = vld [vmem:[%s1452 + $0x9c] sm:$0xf]
    %v1493 = vld [vmem:[%s1452 + $0xa0] sm:$0xf]
    %v1494 = vld [vmem:[%s1452 + $0xa4] sm:$0xf]
    %v1495 = vld [vmem:[%s1452 + $0xa8] sm:$0xf]
    %v1496 = vld [vmem:[%s1452 + $0xac] sm:$0xf]
    %v1497 = vld [vmem:[%s1452 + $0xb0] sm:$0xf]
    %v1498 = vld [vmem:[%s1452 + $0xb4] sm:$0xf]
    %v1499 = vld [vmem:[%s1452 + $0xb8] sm:$0xf]
    %v1500 = vld [vmem:[%s1452 + $0xbc] sm:$0xf]
    %v1501 = vld [vmem:[%s1452 + $0xc0] sm:$0xf]
    %v1502 = vld [vmem:[%s1452 + $0xc4] sm:$0xf]
    %v1503 = vld [vmem:[%s1452 + $0xc8] sm:$0xf]
    %v1504 = vld [vmem:[%s1452 + $0xcc] sm:$0xf]
    %v1505 = vld [vmem:[%s1452 + $0xd0] sm:$0xf]
    %v1506 = vld [vmem:[%s1452 + $0xd4] sm:$0xf]
    %v1507 = vld [vmem:[%s1452 + $0xd8] sm:$0xf]
    %v1508 = vld [vmem:[%s1452 + $0xdc] sm:$0xf]
    %v1509 = vld [vmem:[%s1452 + $0xe0] sm:$0xf]
    %v1510 = vld [vmem:[%s1452 + $0xe4] sm:$0xf]
    %v1511 = vld [vmem:[%s1452 + $0xe8] sm:$0xf]
    %v1512 = vld [vmem:[%s1452 + $0xec] sm:$0xf]
    %v1513 = vld [vmem:[%s1452 + $0xf0] sm:$0xf]
    %v1514 = vld [vmem:[%s1452 + $0xf4] sm:$0xf]
    %v1515 = vld [vmem:[%s1452 + $0xf8] sm:$0xf]
    %v1516 = vld [vmem:[%s1452 + $0xfc] sm:$0xf]
    %s1517 = scalar_lea.vmem %s4, 3
    %v1518 = vld [vmem:[%s1517] sm:$0x1]
    %v1520 = vlaneseq
    %v1521 = vshrl.u32 %v1520, 7
    %v1522 = vsub.s32 0, %v1521
    %v1523 = vrot.slane %v1518, %v1522
    %v1589 = vunpack.c.l.b16 %v1453
    %v1590 = vunpack.c.l.b16 %v1454
    %v1591 = vunpack.c.l.b16 %v1455
    %v1592 = vunpack.c.l.b16 %v1456
    %v1593 = vunpack.c.l.b16 %v1457
    %v1594 = vunpack.c.l.b16 %v1458
    %v1595 = vunpack.c.l.b16 %v1459
    %v1596 = vunpack.c.l.b16 %v1460
    %v1597 = vunpack.c.l.b16 %v1461
    %v1598 = vunpack.c.l.b16 %v1462
    %v1599 = vunpack.c.l.b16 %v1463
    %v1600 = vunpack.c.l.b16 %v1464
    %v1601 = vunpack.c.l.b16 %v1465
    %v1602 = vunpack.c.l.b16 %v1466
    %v1603 = vunpack.c.l.b16 %v1467
    %v1604 = vunpack.c.l.b16 %v1468
    %v1605 = vunpack.c.l.b16 %v1469
    %v1606 = vunpack.c.l.b16 %v1470
    %v1607 = vunpack.c.l.b16 %v1471
    %v1608 = vunpack.c.l.b16 %v1472
    %v1609 = vunpack.c.l.b16 %v1473
    %v1610 = vunpack.c.l.b16 %v1474
    %v1611 = vunpack.c.l.b16 %v1475
    %v1612 = vunpack.c.l.b16 %v1476
    %v1613 = vunpack.c.l.b16 %v1477
    %v1614 = vunpack.c.l.b16 %v1478
    %v1615 = vunpack.c.l.b16 %v1479
    %v1616 = vunpack.c.l.b16 %v1480
    %v1617 = vunpack.c.l.b16 %v1481
    %v1618 = vunpack.c.l.b16 %v1482
    %v1619 = vunpack.c.l.b16 %v1483
    %v1620 = vunpack.c.l.b16 %v1484
    %v1621 = vunpack.c.l.b16 %v1485
    %v1622 = vunpack.c.l.b16 %v1486
    %v1623 = vunpack.c.l.b16 %v1487
    %v1624 = vunpack.c.l.b16 %v1488
    %v1625 = vunpack.c.l.b16 %v1489
    %v1626 = vunpack.c.l.b16 %v1490
    %v1627 = vunpack.c.l.b16 %v1491
    %v1628 = vunpack.c.l.b16 %v1492
    %v1629 = vunpack.c.l.b16 %v1493
    %v1630 = vunpack.c.l.b16 %v1494
    %v1631 = vunpack.c.l.b16 %v1495
    %v1632 = vunpack.c.l.b16 %v1496
    %v1633 = vunpack.c.l.b16 %v1497
    %v1634 = vunpack.c.l.b16 %v1498
    %v1635 = vunpack.c.l.b16 %v1499
    %v1636 = vunpack.c.l.b16 %v1500
    %v1637 = vunpack.c.l.b16 %v1501
    %v1638 = vunpack.c.l.b16 %v1502
    %v1639 = vunpack.c.l.b16 %v1503
    %v1640 = vunpack.c.l.b16 %v1504
    %v1641 = vunpack.c.l.b16 %v1505
    %v1642 = vunpack.c.l.b16 %v1506
    %v1643 = vunpack.c.l.b16 %v1507
    %v1644 = vunpack.c.l.b16 %v1508
    %v1645 = vunpack.c.l.b16 %v1509
    %v1646 = vunpack.c.l.b16 %v1510
    %v1647 = vunpack.c.l.b16 %v1511
    %v1648 = vunpack.c.l.b16 %v1512
    %v1649 = vunpack.c.l.b16 %v1513
    %v1650 = vunpack.c.l.b16 %v1514
    %v1651 = vunpack.c.l.b16 %v1515
    %v1652 = vunpack.c.l.b16 %v1516
    %v1653 = vpack.c.b16 %v1590, %v1589
    %v1654 = vpack.c.b16 %v1592, %v1591
    %v1655 = vpack.c.b16 %v1594, %v1593
    %v1656 = vpack.c.b16 %v1596, %v1595
    %v1657 = vpack.c.b16 %v1598, %v1597
    %v1658 = vpack.c.b16 %v1600, %v1599
    %v1659 = vpack.c.b16 %v1602, %v1601
    %v1660 = vpack.c.b16 %v1604, %v1603
    %v1661 = vpack.c.b16 %v1606, %v1605
    %v1662 = vpack.c.b16 %v1608, %v1607
    %v1663 = vpack.c.b16 %v1610, %v1609
    %v1664 = vpack.c.b16 %v1612, %v1611
    %v1665 = vpack.c.b16 %v1614, %v1613
    %v1666 = vpack.c.b16 %v1616, %v1615
    %v1667 = vpack.c.b16 %v1618, %v1617
    %v1668 = vpack.c.b16 %v1620, %v1619
    %v1669 = vpack.c.b16 %v1622, %v1621
    %v1670 = vpack.c.b16 %v1624, %v1623
    %v1671 = vpack.c.b16 %v1626, %v1625
    %v1672 = vpack.c.b16 %v1628, %v1627
    %v1673 = vpack.c.b16 %v1630, %v1629
    %v1674 = vpack.c.b16 %v1632, %v1631
    %v1675 = vpack.c.b16 %v1634, %v1633
    %v1676 = vpack.c.b16 %v1636, %v1635
    %v1677 = vpack.c.b16 %v1638, %v1637
    %v1678 = vpack.c.b16 %v1640, %v1639
    %v1679 = vpack.c.b16 %v1642, %v1641
    %v1680 = vpack.c.b16 %v1644, %v1643
    %v1681 = vpack.c.b16 %v1646, %v1645
    %v1682 = vpack.c.b16 %v1648, %v1647
    %v1683 = vpack.c.b16 %v1650, %v1649
    %v1684 = vpack.c.b16 %v1652, %v1651
    %1717 = vmatprep.subr.bf16.mxu0 0
    %1718 = vmatpush1.bf16.msra.mxu0 %v1653
    %1719 = vmatprep.subr.bf16.mxu0 0
    %1720 = vmatpush1.bf16.msra.mxu0 %v1654
    %1721 = vmatprep.subr.bf16.mxu0 0
    %1722 = vmatpush1.bf16.msra.mxu0 %v1655
    %1723 = vmatprep.subr.bf16.mxu0 0
    %1724 = vmatpush1.bf16.msra.mxu0 %v1656
    %1725 = vmatprep.subr.bf16.mxu0 0
    %1726 = vmatpush1.bf16.msra.mxu0 %v1657
    %1727 = vmatprep.subr.bf16.mxu0 0
    %1728 = vmatpush1.bf16.msra.mxu0 %v1658
    %1729 = vmatprep.subr.bf16.mxu0 0
    %1730 = vmatpush1.bf16.msra.mxu0 %v1659
    %1731 = vmatprep.subr.bf16.mxu0 0
    %1732 = vmatpush1.bf16.msra.mxu0 %v1660
    %1733 = vmatprep.subr.bf16.mxu0 0
    %1734 = vmatpush1.bf16.msra.mxu0 %v1661
    %1735 = vmatprep.subr.bf16.mxu0 0
    %1736 = vmatpush1.bf16.msra.mxu0 %v1662
    %1737 = vmatprep.subr.bf16.mxu0 0
    %1738 = vmatpush1.bf16.msra.mxu0 %v1663
    %1739 = vmatprep.subr.bf16.mxu0 0
    %1740 = vmatpush1.bf16.msra.mxu0 %v1664
    %1741 = vmatprep.subr.bf16.mxu0 0
    %1742 = vmatpush1.bf16.msra.mxu0 %v1665
    %1743 = vmatprep.subr.bf16.mxu0 0
    %1744 = vmatpush1.bf16.msra.mxu0 %v1666
    %1745 = vmatprep.subr.bf16.mxu0 0
    %1746 = vmatpush1.bf16.msra.mxu0 %v1667
    %1747 = vmatprep.subr.bf16.mxu0 0
    %1748 = vmatpush1.bf16.msra.mxu0 %v1668
    %1749 = vmatprep.mubr.bf16.mxu0 %v73
    %1750 = vmatmul.mubr.bf16.gmra.mrb[0].mxu0 %v72
    %v1751 = vpop.f32.mrb[0].mxu0
    %v1752 = vadd.f32 %v1523, %v1751
    %v1753 = vpop.f32.mrb[0].mxu0
    %v1754 = vpop.f32.mrb[0].mxu0
    %v1755 = vpop.f32.mrb[0].mxu0
    %1756 = vdwg.mxu0
    %1757 = vmatprep.subr.bf16.mxu0 0
    %1758 = vmatpush1.bf16.msra.mxu0 %v1669
    %1759 = vmatprep.subr.bf16.mxu0 0
    %1760 = vmatpush1.bf16.msra.mxu0 %v1670
    %1761 = vmatprep.subr.bf16.mxu0 0
    %1762 = vmatpush1.bf16.msra.mxu0 %v1671
    %1763 = vmatprep.subr.bf16.mxu0 0
    %1764 = vmatpush1.bf16.msra.mxu0 %v1672
    %1765 = vmatprep.subr.bf16.mxu0 0
    %1766 = vmatpush1.bf16.msra.mxu0 %v1673
    %1767 = vmatprep.subr.bf16.mxu0 0
    %1768 = vmatpush1.bf16.msra.mxu0 %v1674
    %1769 = vmatprep.subr.bf16.mxu0 0
    %1770 = vmatpush1.bf16.msra.mxu0 %v1675
    %1771 = vmatprep.subr.bf16.mxu0 0
    %1772 = vmatpush1.bf16.msra.mxu0 %v1676
    %1773 = vmatprep.subr.bf16.mxu0 0
    %1774 = vmatpush1.bf16.msra.mxu0 %v1677
    %1775 = vmatprep.subr.bf16.mxu0 0
    %1776 = vmatpush1.bf16.msra.mxu0 %v1678
    %1777 = vmatprep.subr.bf16.mxu0 0
    %1778 = vmatpush1.bf16.msra.mxu0 %v1679
    %1779 = vmatprep.subr.bf16.mxu0 0
    %1780 = vmatpush1.bf16.msra.mxu0 %v1680
    %1781 = vmatprep.subr.bf16.mxu0 0
    %1782 = vmatpush1.bf16.msra.mxu0 %v1681
    %1783 = vmatprep.subr.bf16.mxu0 0
    %1784 = vmatpush1.bf16.msra.mxu0 %v1682
    %1785 = vmatprep.subr.bf16.mxu0 0
    %1786 = vmatpush1.bf16.msra.mxu0 %v1683
    %1787 = vmatprep.subr.bf16.mxu0 0
    %1788 = vmatpush1.bf16.msra.mxu0 %v1684
    %1789 = vmatprep.mubr.bf16.mxu0 %v75
    %1790 = vmatmul.mubr.bf16.gmra.mrb[0].mxu0 %v74
    %v1791 = vpop.f32.mrb[0].mxu0
    %v1792 = vadd.f32 %v1752, %v1791
    %v1793 = vpop.f32.mrb[0].mxu0
    %v1794 = vpop.f32.mrb[0].mxu0
    %v1795 = vpop.f32.mrb[0].mxu0
    %1796 = vdwg.mxu0
    %s1797 = scalar_lea.vmem %s3, 1024
    %v1798 = vld [vmem:[%s1797] sm:$0xf]
    %v1799 = vld [vmem:[%s1797 + $0x4] sm:$0xf]
    %v1800 = vld [vmem:[%s1797 + $0x8] sm:$0xf]
    %v1801 = vld [vmem:[%s1797 + $0xc] sm:$0xf]
    %v1802 = vld [vmem:[%s1797 + $0x10] sm:$0xf]
    %v1803 = vld [vmem:[%s1797 + $0x14] sm:$0xf]
    %v1804 = vld [vmem:[%s1797 + $0x18] sm:$0xf]
    %v1805 = vld [vmem:[%s1797 + $0x1c] sm:$0xf]
    %v1806 = vld [vmem:[%s1797 + $0x20] sm:$0xf]
    %v1807 = vld [vmem:[%s1797 + $0x24] sm:$0xf]
    %v1808 = vld [vmem:[%s1797 + $0x28] sm:$0xf]
    %v1809 = vld [vmem:[%s1797 + $0x2c] sm:$0xf]
    %v1810 = vld [vmem:[%s1797 + $0x30] sm:$0xf]
    %v1811 = vld [vmem:[%s1797 + $0x34] sm:$0xf]
    %v1812 = vld [vmem:[%s1797 + $0x38] sm:$0xf]
    %v1813 = vld [vmem:[%s1797 + $0x3c] sm:$0xf]
    %v1814 = vld [vmem:[%s1797 + $0x40] sm:$0xf]
    %v1815 = vld [vmem:[%s1797 + $0x44] sm:$0xf]
    %v1816 = vld [vmem:[%s1797 + $0x48] sm:$0xf]
    %v1817 = vld [vmem:[%s1797 + $0x4c] sm:$0xf]
    %v1818 = vld [vmem:[%s1797 + $0x50] sm:$0xf]
    %v1819 = vld [vmem:[%s1797 + $0x54] sm:$0xf]
    %v1820 = vld [vmem:[%s1797 + $0x58] sm:$0xf]
    %v1821 = vld [vmem:[%s1797 + $0x5c] sm:$0xf]
    %v1822 = vld [vmem:[%s1797 + $0x60] sm:$0xf]
    %v1823 = vld [vmem:[%s1797 + $0x64] sm:$0xf]
    %v1824 = vld [vmem:[%s1797 + $0x68] sm:$0xf]
    %v1825 = vld [vmem:[%s1797 + $0x6c] sm:$0xf]
    %v1826 = vld [vmem:[%s1797 + $0x70] sm:$0xf]
    %v1827 = vld [vmem:[%s1797 + $0x74] sm:$0xf]
    %v1828 = vld [vmem:[%s1797 + $0x78] sm:$0xf]
    %v1829 = vld [vmem:[%s1797 + $0x7c] sm:$0xf]
    %v1830 = vld [vmem:[%s1797 + $0x80] sm:$0xf]
    %v1831 = vld [vmem:[%s1797 + $0x84] sm:$0xf]
    %v1832 = vld [vmem:[%s1797 + $0x88] sm:$0xf]
    %v1833 = vld [vmem:[%s1797 + $0x8c] sm:$0xf]
    %v1834 = vld [vmem:[%s1797 + $0x90] sm:$0xf]
    %v1835 = vld [vmem:[%s1797 + $0x94] sm:$0xf]
    %v1836 = vld [vmem:[%s1797 + $0x98] sm:$0xf]
    %v1837 = vld [vmem:[%s1797 + $0x9c] sm:$0xf]
    %v1838 = vld [vmem:[%s1797 + $0xa0] sm:$0xf]
    %v1839 = vld [vmem:[%s1797 + $0xa4] sm:$0xf]
    %v1840 = vld [vmem:[%s1797 + $0xa8] sm:$0xf]
    %v1841 = vld [vmem:[%s1797 + $0xac] sm:$0xf]
    %v1842 = vld [vmem:[%s1797 + $0xb0] sm:$0xf]
    %v1843 = vld [vmem:[%s1797 + $0xb4] sm:$0xf]
    %v1844 = vld [vmem:[%s1797 + $0xb8] sm:$0xf]
    %v1845 = vld [vmem:[%s1797 + $0xbc] sm:$0xf]
    %v1846 = vld [vmem:[%s1797 + $0xc0] sm:$0xf]
    %v1847 = vld [vmem:[%s1797 + $0xc4] sm:$0xf]
    %v1848 = vld [vmem:[%s1797 + $0xc8] sm:$0xf]
    %v1849 = vld [vmem:[%s1797 + $0xcc] sm:$0xf]
    %v1850 = vld [vmem:[%s1797 + $0xd0] sm:$0xf]
    %v1851 = vld [vmem:[%s1797 + $0xd4] sm:$0xf]
    %v1852 = vld [vmem:[%s1797 + $0xd8] sm:$0xf]
    %v1853 = vld [vmem:[%s1797 + $0xdc] sm:$0xf]
    %v1854 = vld [vmem:[%s1797 + $0xe0] sm:$0xf]
    %v1855 = vld [vmem:[%s1797 + $0xe4] sm:$0xf]
    %v1856 = vld [vmem:[%s1797 + $0xe8] sm:$0xf]
    %v1857 = vld [vmem:[%s1797 + $0xec] sm:$0xf]
    %v1858 = vld [vmem:[%s1797 + $0xf0] sm:$0xf]
    %v1859 = vld [vmem:[%s1797 + $0xf4] sm:$0xf]
    %v1860 = vld [vmem:[%s1797 + $0xf8] sm:$0xf]
    %v1861 = vld [vmem:[%s1797 + $0xfc] sm:$0xf]
    %s1862 = scalar_lea.vmem %s4, 4
    %v1863 = vld [vmem:[%s1862] sm:$0x1]
    %v1865 = vlaneseq
    %v1866 = vshrl.u32 %v1865, 7
    %v1867 = vsub.s32 0, %v1866
    %v1868 = vrot.slane %v1863, %v1867
    %v1934 = vunpack.c.l.b16 %v1798
    %v1935 = vunpack.c.l.b16 %v1799
    %v1936 = vunpack.c.l.b16 %v1800
    %v1937 = vunpack.c.l.b16 %v1801
    %v1938 = vunpack.c.l.b16 %v1802
    %v1939 = vunpack.c.l.b16 %v1803
    %v1940 = vunpack.c.l.b16 %v1804
    %v1941 = vunpack.c.l.b16 %v1805
    %v1942 = vunpack.c.l.b16 %v1806
    %v1943 = vunpack.c.l.b16 %v1807
    %v1944 = vunpack.c.l.b16 %v1808
    %v1945 = vunpack.c.l.b16 %v1809
    %v1946 = vunpack.c.l.b16 %v1810
    %v1947 = vunpack.c.l.b16 %v1811
    %v1948 = vunpack.c.l.b16 %v1812
    %v1949 = vunpack.c.l.b16 %v1813
    %v1950 = vunpack.c.l.b16 %v1814
    %v1951 = vunpack.c.l.b16 %v1815
    %v1952 = vunpack.c.l.b16 %v1816
    %v1953 = vunpack.c.l.b16 %v1817
    %v1954 = vunpack.c.l.b16 %v1818
    %v1955 = vunpack.c.l.b16 %v1819
    %v1956 = vunpack.c.l.b16 %v1820
    %v1957 = vunpack.c.l.b16 %v1821
    %v1958 = vunpack.c.l.b16 %v1822
    %v1959 = vunpack.c.l.b16 %v1823
    %v1960 = vunpack.c.l.b16 %v1824
    %v1961 = vunpack.c.l.b16 %v1825
    %v1962 = vunpack.c.l.b16 %v1826
    %v1963 = vunpack.c.l.b16 %v1827
    %v1964 = vunpack.c.l.b16 %v1828
    %v1965 = vunpack.c.l.b16 %v1829
    %v1966 = vunpack.c.l.b16 %v1830
    %v1967 = vunpack.c.l.b16 %v1831
    %v1968 = vunpack.c.l.b16 %v1832
    %v1969 = vunpack.c.l.b16 %v1833
    %v1970 = vunpack.c.l.b16 %v1834
    %v1971 = vunpack.c.l.b16 %v1835
    %v1972 = vunpack.c.l.b16 %v1836
    %v1973 = vunpack.c.l.b16 %v1837
    %v1974 = vunpack.c.l.b16 %v1838
    %v1975 = vunpack.c.l.b16 %v1839
    %v1976 = vunpack.c.l.b16 %v1840
    %v1977 = vunpack.c.l.b16 %v1841
    %v1978 = vunpack.c.l.b16 %v1842
    %v1979 = vunpack.c.l.b16 %v1843
    %v1980 = vunpack.c.l.b16 %v1844
    %v1981 = vunpack.c.l.b16 %v1845
    %v1982 = vunpack.c.l.b16 %v1846
    %v1983 = vunpack.c.l.b16 %v1847
    %v1984 = vunpack.c.l.b16 %v1848
    %v1985 = vunpack.c.l.b16 %v1849
    %v1986 = vunpack.c.l.b16 %v1850
    %v1987 = vunpack.c.l.b16 %v1851
    %v1988 = vunpack.c.l.b16 %v1852
    %v1989 = vunpack.c.l.b16 %v1853
    %v1990 = vunpack.c.l.b16 %v1854
    %v1991 = vunpack.c.l.b16 %v1855
    %v1992 = vunpack.c.l.b16 %v1856
    %v1993 = vunpack.c.l.b16 %v1857
    %v1994 = vunpack.c.l.b16 %v1858
    %v1995 = vunpack.c.l.b16 %v1859
    %v1996 = vunpack.c.l.b16 %v1860
    %v1997 = vunpack.c.l.b16 %v1861
    %v1998 = vpack.c.b16 %v1935, %v1934
    %v1999 = vpack.c.b16 %v1937, %v1936
    %v2000 = vpack.c.b16 %v1939, %v1938
    %v2001 = vpack.c.b16 %v1941, %v1940
    %v2002 = vpack.c.b16 %v1943, %v1942
    %v2003 = vpack.c.b16 %v1945, %v1944
    %v2004 = vpack.c.b16 %v1947, %v1946
    %v2005 = vpack.c.b16 %v1949, %v1948
    %v2006 = vpack.c.b16 %v1951, %v1950
    %v2007 = vpack.c.b16 %v1953, %v1952
    %v2008 = vpack.c.b16 %v1955, %v1954
    %v2009 = vpack.c.b16 %v1957, %v1956
    %v2010 = vpack.c.b16 %v1959, %v1958
    %v2011 = vpack.c.b16 %v1961, %v1960
    %v2012 = vpack.c.b16 %v1963, %v1962
    %v2013 = vpack.c.b16 %v1965, %v1964
    %v2014 = vpack.c.b16 %v1967, %v1966
    %v2015 = vpack.c.b16 %v1969, %v1968
    %v2016 = vpack.c.b16 %v1971, %v1970
    %v2017 = vpack.c.b16 %v1973, %v1972
    %v2018 = vpack.c.b16 %v1975, %v1974
    %v2019 = vpack.c.b16 %v1977, %v1976
    %v2020 = vpack.c.b16 %v1979, %v1978
    %v2021 = vpack.c.b16 %v1981, %v1980
    %v2022 = vpack.c.b16 %v1983, %v1982
    %v2023 = vpack.c.b16 %v1985, %v1984
    %v2024 = vpack.c.b16 %v1987, %v1986
    %v2025 = vpack.c.b16 %v1989, %v1988
    %v2026 = vpack.c.b16 %v1991, %v1990
    %v2027 = vpack.c.b16 %v1993, %v1992
    %v2028 = vpack.c.b16 %v1995, %v1994
    %v2029 = vpack.c.b16 %v1997, %v1996
    %2062 = vmatprep.subr.bf16.mxu0 0
    %2063 = vmatpush1.bf16.msra.mxu0 %v1998
    %2064 = vmatprep.subr.bf16.mxu0 0
    %2065 = vmatpush1.bf16.msra.mxu0 %v1999
    %2066 = vmatprep.subr.bf16.mxu0 0
    %2067 = vmatpush1.bf16.msra.mxu0 %v2000
    %2068 = vmatprep.subr.bf16.mxu0 0
    %2069 = vmatpush1.bf16.msra.mxu0 %v2001
    %2070 = vmatprep.subr.bf16.mxu0 0
    %2071 = vmatpush1.bf16.msra.mxu0 %v2002
    %2072 = vmatprep.subr.bf16.mxu0 0
    %2073 = vmatpush1.bf16.msra.mxu0 %v2003
    %2074 = vmatprep.subr.bf16.mxu0 0
    %2075 = vmatpush1.bf16.msra.mxu0 %v2004
    %2076 = vmatprep.subr.bf16.mxu0 0
    %2077 = vmatpush1.bf16.msra.mxu0 %v2005
    %2078 = vmatprep.subr.bf16.mxu0 0
    %2079 = vmatpush1.bf16.msra.mxu0 %v2006
    %2080 = vmatprep.subr.bf16.mxu0 0
    %2081 = vmatpush1.bf16.msra.mxu0 %v2007
    %2082 = vmatprep.subr.bf16.mxu0 0
    %2083 = vmatpush1.bf16.msra.mxu0 %v2008
    %2084 = vmatprep.subr.bf16.mxu0 0
    %2085 = vmatpush1.bf16.msra.mxu0 %v2009
    %2086 = vmatprep.subr.bf16.mxu0 0
    %2087 = vmatpush1.bf16.msra.mxu0 %v2010
    %2088 = vmatprep.subr.bf16.mxu0 0
    %2089 = vmatpush1.bf16.msra.mxu0 %v2011
    %2090 = vmatprep.subr.bf16.mxu0 0
    %2091 = vmatpush1.bf16.msra.mxu0 %v2012
    %2092 = vmatprep.subr.bf16.mxu0 0
    %2093 = vmatpush1.bf16.msra.mxu0 %v2013
    %2094 = vmatprep.mubr.bf16.mxu0 %v73
    %2095 = vmatmul.mubr.bf16.gmra.mrb[0].mxu0 %v72
    %v2096 = vpop.f32.mrb[0].mxu0
    %v2097 = vadd.f32 %v1868, %v2096
    %v2098 = vpop.f32.mrb[0].mxu0
    %v2099 = vpop.f32.mrb[0].mxu0
    %v2100 = vpop.f32.mrb[0].mxu0
    %2101 = vdwg.mxu0
    %2102 = vmatprep.subr.bf16.mxu0 0
    %2103 = vmatpush1.bf16.msra.mxu0 %v2014
    %2104 = vmatprep.subr.bf16.mxu0 0
    %2105 = vmatpush1.bf16.msra.mxu0 %v2015
    %2106 = vmatprep.subr.bf16.mxu0 0
    %2107 = vmatpush1.bf16.msra.mxu0 %v2016
    %2108 = vmatprep.subr.bf16.mxu0 0
    %2109 = vmatpush1.bf16.msra.mxu0 %v2017
    %2110 = vmatprep.subr.bf16.mxu0 0
    %2111 = vmatpush1.bf16.msra.mxu0 %v2018
    %2112 = vmatprep.subr.bf16.mxu0 0
    %2113 = vmatpush1.bf16.msra.mxu0 %v2019
    %2114 = vmatprep.subr.bf16.mxu0 0
    %2115 = vmatpush1.bf16.msra.mxu0 %v2020
    %2116 = vmatprep.subr.bf16.mxu0 0
    %2117 = vmatpush1.bf16.msra.mxu0 %v2021
    %2118 = vmatprep.subr.bf16.mxu0 0
    %2119 = vmatpush1.bf16.msra.mxu0 %v2022
    %2120 = vmatprep.subr.bf16.mxu0 0
    %2121 = vmatpush1.bf16.msra.mxu0 %v2023
    %2122 = vmatprep.subr.bf16.mxu0 0
    %2123 = vmatpush1.bf16.msra.mxu0 %v2024
    %2124 = vmatprep.subr.bf16.mxu0 0
    %2125 = vmatpush1.bf16.msra.mxu0 %v2025
    %2126 = vmatprep.subr.bf16.mxu0 0
    %2127 = vmatpush1.bf16.msra.mxu0 %v2026
    %2128 = vmatprep.subr.bf16.mxu0 0
    %2129 = vmatpush1.bf16.msra.mxu0 %v2027
    %2130 = vmatprep.subr.bf16.mxu0 0
    %2131 = vmatpush1.bf16.msra.mxu0 %v2028
    %2132 = vmatprep.subr.bf16.mxu0 0
    %2133 = vmatpush1.bf16.msra.mxu0 %v2029
    %2134 = vmatprep.mubr.bf16.mxu0 %v75
    %2135 = vmatmul.mubr.bf16.gmra.mrb[0].mxu0 %v74
    %v2136 = vpop.f32.mrb[0].mxu0
    %v2137 = vadd.f32 %v2097, %v2136
    %v2138 = vpop.f32.mrb[0].mxu0
    %v2139 = vpop.f32.mrb[0].mxu0
    %v2140 = vpop.f32.mrb[0].mxu0
    %2141 = vdwg.mxu0
    %s2142 = scalar_lea.vmem %s3, 1280
    %v2143 = vld [vmem:[%s2142] sm:$0xf]
    %v2144 = vld [vmem:[%s2142 + $0x4] sm:$0xf]
    %v2145 = vld [vmem:[%s2142 + $0x8] sm:$0xf]
    %v2146 = vld [vmem:[%s2142 + $0xc] sm:$0xf]
    %v2147 = vld [vmem:[%s2142 + $0x10] sm:$0xf]
    %v2148 = vld [vmem:[%s2142 + $0x14] sm:$0xf]
    %v2149 = vld [vmem:[%s2142 + $0x18] sm:$0xf]
    %v2150 = vld [vmem:[%s2142 + $0x1c] sm:$0xf]
    %v2151 = vld [vmem:[%s2142 + $0x20] sm:$0xf]
    %v2152 = vld [vmem:[%s2142 + $0x24] sm:$0xf]
    %v2153 = vld [vmem:[%s2142 + $0x28] sm:$0xf]
    %v2154 = vld [vmem:[%s2142 + $0x2c] sm:$0xf]
    %v2155 = vld [vmem:[%s2142 + $0x30] sm:$0xf]
    %v2156 = vld [vmem:[%s2142 + $0x34] sm:$0xf]
    %v2157 = vld [vmem:[%s2142 + $0x38] sm:$0xf]
    %v2158 = vld [vmem:[%s2142 + $0x3c] sm:$0xf]
    %v2159 = vld [vmem:[%s2142 + $0x40] sm:$0xf]
    %v2160 = vld [vmem:[%s2142 + $0x44] sm:$0xf]
    %v2161 = vld [vmem:[%s2142 + $0x48] sm:$0xf]
    %v2162 = vld [vmem:[%s2142 + $0x4c] sm:$0xf]
    %v2163 = vld [vmem:[%s2142 + $0x50] sm:$0xf]
    %v2164 = vld [vmem:[%s2142 + $0x54] sm:$0xf]
    %v2165 = vld [vmem:[%s2142 + $0x58] sm:$0xf]
    %v2166 = vld [vmem:[%s2142 + $0x5c] sm:$0xf]
    %v2167 = vld [vmem:[%s2142 + $0x60] sm:$0xf]
    %v2168 = vld [vmem:[%s2142 + $0x64] sm:$0xf]
    %v2169 = vld [vmem:[%s2142 + $0x68] sm:$0xf]
    %v2170 = vld [vmem:[%s2142 + $0x6c] sm:$0xf]
    %v2171 = vld [vmem:[%s2142 + $0x70] sm:$0xf]
    %v2172 = vld [vmem:[%s2142 + $0x74] sm:$0xf]
    %v2173 = vld [vmem:[%s2142 + $0x78] sm:$0xf]
    %v2174 = vld [vmem:[%s2142 + $0x7c] sm:$0xf]
    %v2175 = vld [vmem:[%s2142 + $0x80] sm:$0xf]
    %v2176 = vld [vmem:[%s2142 + $0x84] sm:$0xf]
    %v2177 = vld [vmem:[%s2142 + $0x88] sm:$0xf]
    %v2178 = vld [vmem:[%s2142 + $0x8c] sm:$0xf]
    %v2179 = vld [vmem:[%s2142 + $0x90] sm:$0xf]
    %v2180 = vld [vmem:[%s2142 + $0x94] sm:$0xf]
    %v2181 = vld [vmem:[%s2142 + $0x98] sm:$0xf]
    %v2182 = vld [vmem:[%s2142 + $0x9c] sm:$0xf]
    %v2183 = vld [vmem:[%s2142 + $0xa0] sm:$0xf]
    %v2184 = vld [vmem:[%s2142 + $0xa4] sm:$0xf]
    %v2185 = vld [vmem:[%s2142 + $0xa8] sm:$0xf]
    %v2186 = vld [vmem:[%s2142 + $0xac] sm:$0xf]
    %v2187 = vld [vmem:[%s2142 + $0xb0] sm:$0xf]
    %v2188 = vld [vmem:[%s2142 + $0xb4] sm:$0xf]
    %v2189 = vld [vmem:[%s2142 + $0xb8] sm:$0xf]
    %v2190 = vld [vmem:[%s2142 + $0xbc] sm:$0xf]
    %v2191 = vld [vmem:[%s2142 + $0xc0] sm:$0xf]
    %v2192 = vld [vmem:[%s2142 + $0xc4] sm:$0xf]
    %v2193 = vld [vmem:[%s2142 + $0xc8] sm:$0xf]
    %v2194 = vld [vmem:[%s2142 + $0xcc] sm:$0xf]
    %v2195 = vld [vmem:[%s2142 + $0xd0] sm:$0xf]
    %v2196 = vld [vmem:[%s2142 + $0xd4] sm:$0xf]
    %v2197 = vld [vmem:[%s2142 + $0xd8] sm:$0xf]
    %v2198 = vld [vmem:[%s2142 + $0xdc] sm:$0xf]
    %v2199 = vld [vmem:[%s2142 + $0xe0] sm:$0xf]
    %v2200 = vld [vmem:[%s2142 + $0xe4] sm:$0xf]
    %v2201 = vld [vmem:[%s2142 + $0xe8] sm:$0xf]
    %v2202 = vld [vmem:[%s2142 + $0xec] sm:$0xf]
    %v2203 = vld [vmem:[%s2142 + $0xf0] sm:$0xf]
    %v2204 = vld [vmem:[%s2142 + $0xf4] sm:$0xf]
    %v2205 = vld [vmem:[%s2142 + $0xf8] sm:$0xf]
    %v2206 = vld [vmem:[%s2142 + $0xfc] sm:$0xf]
    %s2207 = scalar_lea.vmem %s4, 5
    %v2208 = vld [vmem:[%s2207] sm:$0x1]
    %v2210 = vlaneseq
    %v2211 = vshrl.u32 %v2210, 7
    %v2212 = vsub.s32 0, %v2211
    %v2213 = vrot.slane %v2208, %v2212
    %v2279 = vunpack.c.l.b16 %v2143
    %v2280 = vunpack.c.l.b16 %v2144
    %v2281 = vunpack.c.l.b16 %v2145
    %v2282 = vunpack.c.l.b16 %v2146
    %v2283 = vunpack.c.l.b16 %v2147
    %v2284 = vunpack.c.l.b16 %v2148
    %v2285 = vunpack.c.l.b16 %v2149
    %v2286 = vunpack.c.l.b16 %v2150
    %v2287 = vunpack.c.l.b16 %v2151
    %v2288 = vunpack.c.l.b16 %v2152
    %v2289 = vunpack.c.l.b16 %v2153
    %v2290 = vunpack.c.l.b16 %v2154
    %v2291 = vunpack.c.l.b16 %v2155
    %v2292 = vunpack.c.l.b16 %v2156
    %v2293 = vunpack.c.l.b16 %v2157
    %v2294 = vunpack.c.l.b16 %v2158
    %v2295 = vunpack.c.l.b16 %v2159
    %v2296 = vunpack.c.l.b16 %v2160
    %v2297 = vunpack.c.l.b16 %v2161
    %v2298 = vunpack.c.l.b16 %v2162
    %v2299 = vunpack.c.l.b16 %v2163
    %v2300 = vunpack.c.l.b16 %v2164
    %v2301 = vunpack.c.l.b16 %v2165
    %v2302 = vunpack.c.l.b16 %v2166
    %v2303 = vunpack.c.l.b16 %v2167
    %v2304 = vunpack.c.l.b16 %v2168
    %v2305 = vunpack.c.l.b16 %v2169
    %v2306 = vunpack.c.l.b16 %v2170
    %v2307 = vunpack.c.l.b16 %v2171
    %v2308 = vunpack.c.l.b16 %v2172
    %v2309 = vunpack.c.l.b16 %v2173
    %v2310 = vunpack.c.l.b16 %v2174
    %v2311 = vunpack.c.l.b16 %v2175
    %v2312 = vunpack.c.l.b16 %v2176
    %v2313 = vunpack.c.l.b16 %v2177
    %v2314 = vunpack.c.l.b16 %v2178
    %v2315 = vunpack.c.l.b16 %v2179
    %v2316 = vunpack.c.l.b16 %v2180
    %v2317 = vunpack.c.l.b16 %v2181
    %v2318 = vunpack.c.l.b16 %v2182
    %v2319 = vunpack.c.l.b16 %v2183
    %v2320 = vunpack.c.l.b16 %v2184
    %v2321 = vunpack.c.l.b16 %v2185
    %v2322 = vunpack.c.l.b16 %v2186
    %v2323 = vunpack.c.l.b16 %v2187
    %v2324 = vunpack.c.l.b16 %v2188
    %v2325 = vunpack.c.l.b16 %v2189
    %v2326 = vunpack.c.l.b16 %v2190
    %v2327 = vunpack.c.l.b16 %v2191
    %v2328 = vunpack.c.l.b16 %v2192
    %v2329 = vunpack.c.l.b16 %v2193
    %v2330 = vunpack.c.l.b16 %v2194
    %v2331 = vunpack.c.l.b16 %v2195
    %v2332 = vunpack.c.l.b16 %v2196
    %v2333 = vunpack.c.l.b16 %v2197
    %v2334 = vunpack.c.l.b16 %v2198
    %v2335 = vunpack.c.l.b16 %v2199
    %v2336 = vunpack.c.l.b16 %v2200
    %v2337 = vunpack.c.l.b16 %v2201
    %v2338 = vunpack.c.l.b16 %v2202
    %v2339 = vunpack.c.l.b16 %v2203
    %v2340 = vunpack.c.l.b16 %v2204
    %v2341 = vunpack.c.l.b16 %v2205
    %v2342 = vunpack.c.l.b16 %v2206
    %v2343 = vpack.c.b16 %v2280, %v2279
    %v2344 = vpack.c.b16 %v2282, %v2281
    %v2345 = vpack.c.b16 %v2284, %v2283
    %v2346 = vpack.c.b16 %v2286, %v2285
    %v2347 = vpack.c.b16 %v2288, %v2287
    %v2348 = vpack.c.b16 %v2290, %v2289
    %v2349 = vpack.c.b16 %v2292, %v2291
    %v2350 = vpack.c.b16 %v2294, %v2293
    %v2351 = vpack.c.b16 %v2296, %v2295
    %v2352 = vpack.c.b16 %v2298, %v2297
    %v2353 = vpack.c.b16 %v2300, %v2299
    %v2354 = vpack.c.b16 %v2302, %v2301
    %v2355 = vpack.c.b16 %v2304, %v2303
    %v2356 = vpack.c.b16 %v2306, %v2305
    %v2357 = vpack.c.b16 %v2308, %v2307
    %v2358 = vpack.c.b16 %v2310, %v2309
    %v2359 = vpack.c.b16 %v2312, %v2311
    %v2360 = vpack.c.b16 %v2314, %v2313
    %v2361 = vpack.c.b16 %v2316, %v2315
    %v2362 = vpack.c.b16 %v2318, %v2317
    %v2363 = vpack.c.b16 %v2320, %v2319
    %v2364 = vpack.c.b16 %v2322, %v2321
    %v2365 = vpack.c.b16 %v2324, %v2323
    %v2366 = vpack.c.b16 %v2326, %v2325
    %v2367 = vpack.c.b16 %v2328, %v2327
    %v2368 = vpack.c.b16 %v2330, %v2329
    %v2369 = vpack.c.b16 %v2332, %v2331
    %v2370 = vpack.c.b16 %v2334, %v2333
    %v2371 = vpack.c.b16 %v2336, %v2335
    %v2372 = vpack.c.b16 %v2338, %v2337
    %v2373 = vpack.c.b16 %v2340, %v2339
    %v2374 = vpack.c.b16 %v2342, %v2341
    %2407 = vmatprep.subr.bf16.mxu0 0
    %2408 = vmatpush1.bf16.msra.mxu0 %v2343
    %2409 = vmatprep.subr.bf16.mxu0 0
    %2410 = vmatpush1.bf16.msra.mxu0 %v2344
    %2411 = vmatprep.subr.bf16.mxu0 0
    %2412 = vmatpush1.bf16.msra.mxu0 %v2345
    %2413 = vmatprep.subr.bf16.mxu0 0
    %2414 = vmatpush1.bf16.msra.mxu0 %v2346
    %2415 = vmatprep.subr.bf16.mxu0 0
    %2416 = vmatpush1.bf16.msra.mxu0 %v2347
    %2417 = vmatprep.subr.bf16.mxu0 0
    %2418 = vmatpush1.bf16.msra.mxu0 %v2348
    %2419 = vmatprep.subr.bf16.mxu0 0
    %2420 = vmatpush1.bf16.msra.mxu0 %v2349
    %2421 = vmatprep.subr.bf16.mxu0 0
    %2422 = vmatpush1.bf16.msra.mxu0 %v2350
    %2423 = vmatprep.subr.bf16.mxu0 0
    %2424 = vmatpush1.bf16.msra.mxu0 %v2351
    %2425 = vmatprep.subr.bf16.mxu0 0
    %2426 = vmatpush1.bf16.msra.mxu0 %v2352
    %2427 = vmatprep.subr.bf16.mxu0 0
    %2428 = vmatpush1.bf16.msra.mxu0 %v2353
    %2429 = vmatprep.subr.bf16.mxu0 0
    %2430 = vmatpush1.bf16.msra.mxu0 %v2354
    %2431 = vmatprep.subr.bf16.mxu0 0
    %2432 = vmatpush1.bf16.msra.mxu0 %v2355
    %2433 = vmatprep.subr.bf16.mxu0 0
    %2434 = vmatpush1.bf16.msra.mxu0 %v2356
    %2435 = vmatprep.subr.bf16.mxu0 0
    %2436 = vmatpush1.bf16.msra.mxu0 %v2357
    %2437 = vmatprep.subr.bf16.mxu0 0
    %2438 = vmatpush1.bf16.msra.mxu0 %v2358
    %2439 = vmatprep.mubr.bf16.mxu0 %v73
    %2440 = vmatmul.mubr.bf16.gmra.mrb[0].mxu0 %v72
    %v2441 = vpop.f32.mrb[0].mxu0
    %v2442 = vadd.f32 %v2213, %v2441
    %v2443 = vpop.f32.mrb[0].mxu0
    %v2444 = vpop.f32.mrb[0].mxu0
    %v2445 = vpop.f32.mrb[0].mxu0
    %2446 = vdwg.mxu0
    %2447 = vmatprep.subr.bf16.mxu0 0
    %2448 = vmatpush1.bf16.msra.mxu0 %v2359
    %2449 = vmatprep.subr.bf16.mxu0 0
    %2450 = vmatpush1.bf16.msra.mxu0 %v2360
    %2451 = vmatprep.subr.bf16.mxu0 0
    %2452 = vmatpush1.bf16.msra.mxu0 %v2361
    %2453 = vmatprep.subr.bf16.mxu0 0
    %2454 = vmatpush1.bf16.msra.mxu0 %v2362
    %2455 = vmatprep.subr.bf16.mxu0 0
    %2456 = vmatpush1.bf16.msra.mxu0 %v2363
    %2457 = vmatprep.subr.bf16.mxu0 0
    %2458 = vmatpush1.bf16.msra.mxu0 %v2364
    %2459 = vmatprep.subr.bf16.mxu0 0
    %2460 = vmatpush1.bf16.msra.mxu0 %v2365
    %2461 = vmatprep.subr.bf16.mxu0 0
    %2462 = vmatpush1.bf16.msra.mxu0 %v2366
    %2463 = vmatprep.subr.bf16.mxu0 0
    %2464 = vmatpush1.bf16.msra.mxu0 %v2367
    %2465 = vmatprep.subr.bf16.mxu0 0
    %2466 = vmatpush1.bf16.msra.mxu0 %v2368
    %2467 = vmatprep.subr.bf16.mxu0 0
    %2468 = vmatpush1.bf16.msra.mxu0 %v2369
    %2469 = vmatprep.subr.bf16.mxu0 0
    %2470 = vmatpush1.bf16.msra.mxu0 %v2370
    %2471 = vmatprep.subr.bf16.mxu0 0
    %2472 = vmatpush1.bf16.msra.mxu0 %v2371
    %2473 = vmatprep.subr.bf16.mxu0 0
    %2474 = vmatpush1.bf16.msra.mxu0 %v2372
    %2475 = vmatprep.subr.bf16.mxu0 0
    %2476 = vmatpush1.bf16.msra.mxu0 %v2373
    %2477 = vmatprep.subr.bf16.mxu0 0
    %2478 = vmatpush1.bf16.msra.mxu0 %v2374
    %2479 = vmatprep.mubr.bf16.mxu0 %v75
    %2480 = vmatmul.mubr.bf16.gmra.mrb[0].mxu0 %v74
    %v2481 = vpop.f32.mrb[0].mxu0
    %v2482 = vadd.f32 %v2442, %v2481
    %v2483 = vpop.f32.mrb[0].mxu0
    %v2484 = vpop.f32.mrb[0].mxu0
    %v2485 = vpop.f32.mrb[0].mxu0
    %2486 = vdwg.mxu0
    %s2487 = scalar_lea.vmem %s3, 1536
    %v2488 = vld [vmem:[%s2487] sm:$0xf]
    %v2489 = vld [vmem:[%s2487 + $0x4] sm:$0xf]
    %v2490 = vld [vmem:[%s2487 + $0x8] sm:$0xf]
    %v2491 = vld [vmem:[%s2487 + $0xc] sm:$0xf]
    %v2492 = vld [vmem:[%s2487 + $0x10] sm:$0xf]
    %v2493 = vld [vmem:[%s2487 + $0x14] sm:$0xf]
    %v2494 = vld [vmem:[%s2487 + $0x18] sm:$0xf]
    %v2495 = vld [vmem:[%s2487 + $0x1c] sm:$0xf]
    %v2496 = vld [vmem:[%s2487 + $0x20] sm:$0xf]
    %v2497 = vld [vmem:[%s2487 + $0x24] sm:$0xf]
    %v2498 = vld [vmem:[%s2487 + $0x28] sm:$0xf]
    %v2499 = vld [vmem:[%s2487 + $0x2c] sm:$0xf]
    %v2500 = vld [vmem:[%s2487 + $0x30] sm:$0xf]
    %v2501 = vld [vmem:[%s2487 + $0x34] sm:$0xf]
    %v2502 = vld [vmem:[%s2487 + $0x38] sm:$0xf]
    %v2503 = vld [vmem:[%s2487 + $0x3c] sm:$0xf]
    %v2504 = vld [vmem:[%s2487 + $0x40] sm:$0xf]
    %v2505 = vld [vmem:[%s2487 + $0x44] sm:$0xf]
    %v2506 = vld [vmem:[%s2487 + $0x48] sm:$0xf]
    %v2507 = vld [vmem:[%s2487 + $0x4c] sm:$0xf]
    %v2508 = vld [vmem:[%s2487 + $0x50] sm:$0xf]
    %v2509 = vld [vmem:[%s2487 + $0x54] sm:$0xf]
    %v2510 = vld [vmem:[%s2487 + $0x58] sm:$0xf]
    %v2511 = vld [vmem:[%s2487 + $0x5c] sm:$0xf]
    %v2512 = vld [vmem:[%s2487 + $0x60] sm:$0xf]
    %v2513 = vld [vmem:[%s2487 + $0x64] sm:$0xf]
    %v2514 = vld [vmem:[%s2487 + $0x68] sm:$0xf]
    %v2515 = vld [vmem:[%s2487 + $0x6c] sm:$0xf]
    %v2516 = vld [vmem:[%s2487 + $0x70] sm:$0xf]
    %v2517 = vld [vmem:[%s2487 + $0x74] sm:$0xf]
    %v2518 = vld [vmem:[%s2487 + $0x78] sm:$0xf]
    %v2519 = vld [vmem:[%s2487 + $0x7c] sm:$0xf]
    %v2520 = vld [vmem:[%s2487 + $0x80] sm:$0xf]
    %v2521 = vld [vmem:[%s2487 + $0x84] sm:$0xf]
    %v2522 = vld [vmem:[%s2487 + $0x88] sm:$0xf]
    %v2523 = vld [vmem:[%s2487 + $0x8c] sm:$0xf]
    %v2524 = vld [vmem:[%s2487 + $0x90] sm:$0xf]
    %v2525 = vld [vmem:[%s2487 + $0x94] sm:$0xf]
    %v2526 = vld [vmem:[%s2487 + $0x98] sm:$0xf]
    %v2527 = vld [vmem:[%s2487 + $0x9c] sm:$0xf]
    %v2528 = vld [vmem:[%s2487 + $0xa0] sm:$0xf]
    %v2529 = vld [vmem:[%s2487 + $0xa4] sm:$0xf]
    %v2530 = vld [vmem:[%s2487 + $0xa8] sm:$0xf]
    %v2531 = vld [vmem:[%s2487 + $0xac] sm:$0xf]
    %v2532 = vld [vmem:[%s2487 + $0xb0] sm:$0xf]
    %v2533 = vld [vmem:[%s2487 + $0xb4] sm:$0xf]
    %v2534 = vld [vmem:[%s2487 + $0xb8] sm:$0xf]
    %v2535 = vld [vmem:[%s2487 + $0xbc] sm:$0xf]
    %v2536 = vld [vmem:[%s2487 + $0xc0] sm:$0xf]
    %v2537 = vld [vmem:[%s2487 + $0xc4] sm:$0xf]
    %v2538 = vld [vmem:[%s2487 + $0xc8] sm:$0xf]
    %v2539 = vld [vmem:[%s2487 + $0xcc] sm:$0xf]
    %v2540 = vld [vmem:[%s2487 + $0xd0] sm:$0xf]
    %v2541 = vld [vmem:[%s2487 + $0xd4] sm:$0xf]
    %v2542 = vld [vmem:[%s2487 + $0xd8] sm:$0xf]
    %v2543 = vld [vmem:[%s2487 + $0xdc] sm:$0xf]
    %v2544 = vld [vmem:[%s2487 + $0xe0] sm:$0xf]
    %v2545 = vld [vmem:[%s2487 + $0xe4] sm:$0xf]
    %v2546 = vld [vmem:[%s2487 + $0xe8] sm:$0xf]
    %v2547 = vld [vmem:[%s2487 + $0xec] sm:$0xf]
    %v2548 = vld [vmem:[%s2487 + $0xf0] sm:$0xf]
    %v2549 = vld [vmem:[%s2487 + $0xf4] sm:$0xf]
    %v2550 = vld [vmem:[%s2487 + $0xf8] sm:$0xf]
    %v2551 = vld [vmem:[%s2487 + $0xfc] sm:$0xf]
    %s2552 = scalar_lea.vmem %s4, 6
    %v2553 = vld [vmem:[%s2552] sm:$0x1]
    %v2555 = vlaneseq
    %v2556 = vshrl.u32 %v2555, 7
    %v2557 = vsub.s32 0, %v2556
    %v2558 = vrot.slane %v2553, %v2557
    %v2624 = vunpack.c.l.b16 %v2488
    %v2625 = vunpack.c.l.b16 %v2489
    %v2626 = vunpack.c.l.b16 %v2490
    %v2627 = vunpack.c.l.b16 %v2491
    %v2628 = vunpack.c.l.b16 %v2492
    %v2629 = vunpack.c.l.b16 %v2493
    %v2630 = vunpack.c.l.b16 %v2494
    %v2631 = vunpack.c.l.b16 %v2495
    %v2632 = vunpack.c.l.b16 %v2496
    %v2633 = vunpack.c.l.b16 %v2497
    %v2634 = vunpack.c.l.b16 %v2498
    %v2635 = vunpack.c.l.b16 %v2499
    %v2636 = vunpack.c.l.b16 %v2500
    %v2637 = vunpack.c.l.b16 %v2501
    %v2638 = vunpack.c.l.b16 %v2502
    %v2639 = vunpack.c.l.b16 %v2503
    %v2640 = vunpack.c.l.b16 %v2504
    %v2641 = vunpack.c.l.b16 %v2505
    %v2642 = vunpack.c.l.b16 %v2506
    %v2643 = vunpack.c.l.b16 %v2507
    %v2644 = vunpack.c.l.b16 %v2508
    %v2645 = vunpack.c.l.b16 %v2509
    %v2646 = vunpack.c.l.b16 %v2510
    %v2647 = vunpack.c.l.b16 %v2511
    %v2648 = vunpack.c.l.b16 %v2512
    %v2649 = vunpack.c.l.b16 %v2513
    %v2650 = vunpack.c.l.b16 %v2514
    %v2651 = vunpack.c.l.b16 %v2515
    %v2652 = vunpack.c.l.b16 %v2516
    %v2653 = vunpack.c.l.b16 %v2517
    %v2654 = vunpack.c.l.b16 %v2518
    %v2655 = vunpack.c.l.b16 %v2519
    %v2656 = vunpack.c.l.b16 %v2520
    %v2657 = vunpack.c.l.b16 %v2521
    %v2658 = vunpack.c.l.b16 %v2522
    %v2659 = vunpack.c.l.b16 %v2523
    %v2660 = vunpack.c.l.b16 %v2524
    %v2661 = vunpack.c.l.b16 %v2525
    %v2662 = vunpack.c.l.b16 %v2526
    %v2663 = vunpack.c.l.b16 %v2527
    %v2664 = vunpack.c.l.b16 %v2528
    %v2665 = vunpack.c.l.b16 %v2529
    %v2666 = vunpack.c.l.b16 %v2530
    %v2667 = vunpack.c.l.b16 %v2531
    %v2668 = vunpack.c.l.b16 %v2532
    %v2669 = vunpack.c.l.b16 %v2533
    %v2670 = vunpack.c.l.b16 %v2534
    %v2671 = vunpack.c.l.b16 %v2535
    %v2672 = vunpack.c.l.b16 %v2536
    %v2673 = vunpack.c.l.b16 %v2537
    %v2674 = vunpack.c.l.b16 %v2538
    %v2675 = vunpack.c.l.b16 %v2539
    %v2676 = vunpack.c.l.b16 %v2540
    %v2677 = vunpack.c.l.b16 %v2541
    %v2678 = vunpack.c.l.b16 %v2542
    %v2679 = vunpack.c.l.b16 %v2543
    %v2680 = vunpack.c.l.b16 %v2544
    %v2681 = vunpack.c.l.b16 %v2545
    %v2682 = vunpack.c.l.b16 %v2546
    %v2683 = vunpack.c.l.b16 %v2547
    %v2684 = vunpack.c.l.b16 %v2548
    %v2685 = vunpack.c.l.b16 %v2549
    %v2686 = vunpack.c.l.b16 %v2550
    %v2687 = vunpack.c.l.b16 %v2551
    %v2688 = vpack.c.b16 %v2625, %v2624
    %v2689 = vpack.c.b16 %v2627, %v2626
    %v2690 = vpack.c.b16 %v2629, %v2628
    %v2691 = vpack.c.b16 %v2631, %v2630
    %v2692 = vpack.c.b16 %v2633, %v2632
    %v2693 = vpack.c.b16 %v2635, %v2634
    %v2694 = vpack.c.b16 %v2637, %v2636
    %v2695 = vpack.c.b16 %v2639, %v2638
    %v2696 = vpack.c.b16 %v2641, %v2640
    %v2697 = vpack.c.b16 %v2643, %v2642
    %v2698 = vpack.c.b16 %v2645, %v2644
    %v2699 = vpack.c.b16 %v2647, %v2646
    %v2700 = vpack.c.b16 %v2649, %v2648
    %v2701 = vpack.c.b16 %v2651, %v2650
    %v2702 = vpack.c.b16 %v2653, %v2652
    %v2703 = vpack.c.b16 %v2655, %v2654
    %v2704 = vpack.c.b16 %v2657, %v2656
    %v2705 = vpack.c.b16 %v2659, %v2658
    %v2706 = vpack.c.b16 %v2661, %v2660
    %v2707 = vpack.c.b16 %v2663, %v2662
    %v2708 = vpack.c.b16 %v2665, %v2664
    %v2709 = vpack.c.b16 %v2667, %v2666
    %v2710 = vpack.c.b16 %v2669, %v2668
    %v2711 = vpack.c.b16 %v2671, %v2670
    %v2712 = vpack.c.b16 %v2673, %v2672
    %v2713 = vpack.c.b16 %v2675, %v2674
    %v2714 = vpack.c.b16 %v2677, %v2676
    %v2715 = vpack.c.b16 %v2679, %v2678
    %v2716 = vpack.c.b16 %v2681, %v2680
    %v2717 = vpack.c.b16 %v2683, %v2682
    %v2718 = vpack.c.b16 %v2685, %v2684
    %v2719 = vpack.c.b16 %v2687, %v2686
    %2752 = vmatprep.subr.bf16.mxu0 0
    %2753 = vmatpush1.bf16.msra.mxu0 %v2688
    %2754 = vmatprep.subr.bf16.mxu0 0
    %2755 = vmatpush1.bf16.msra.mxu0 %v2689
    %2756 = vmatprep.subr.bf16.mxu0 0
    %2757 = vmatpush1.bf16.msra.mxu0 %v2690
    %2758 = vmatprep.subr.bf16.mxu0 0
    %2759 = vmatpush1.bf16.msra.mxu0 %v2691
    %2760 = vmatprep.subr.bf16.mxu0 0
    %2761 = vmatpush1.bf16.msra.mxu0 %v2692
    %2762 = vmatprep.subr.bf16.mxu0 0
    %2763 = vmatpush1.bf16.msra.mxu0 %v2693
    %2764 = vmatprep.subr.bf16.mxu0 0
    %2765 = vmatpush1.bf16.msra.mxu0 %v2694
    %2766 = vmatprep.subr.bf16.mxu0 0
    %2767 = vmatpush1.bf16.msra.mxu0 %v2695
    %2768 = vmatprep.subr.bf16.mxu0 0
    %2769 = vmatpush1.bf16.msra.mxu0 %v2696
    %2770 = vmatprep.subr.bf16.mxu0 0
    %2771 = vmatpush1.bf16.msra.mxu0 %v2697
    %2772 = vmatprep.subr.bf16.mxu0 0
    %2773 = vmatpush1.bf16.msra.mxu0 %v2698
    %2774 = vmatprep.subr.bf16.mxu0 0
    %2775 = vmatpush1.bf16.msra.mxu0 %v2699
    %2776 = vmatprep.subr.bf16.mxu0 0
    %2777 = vmatpush1.bf16.msra.mxu0 %v2700
    %2778 = vmatprep.subr.bf16.mxu0 0
    %2779 = vmatpush1.bf16.msra.mxu0 %v2701
    %2780 = vmatprep.subr.bf16.mxu0 0
    %2781 = vmatpush1.bf16.msra.mxu0 %v2702
    %2782 = vmatprep.subr.bf16.mxu0 0
    %2783 = vmatpush1.bf16.msra.mxu0 %v2703
    %2784 = vmatprep.mubr.bf16.mxu0 %v73
    %2785 = vmatmul.mubr.bf16.gmra.mrb[0].mxu0 %v72
    %v2786 = vpop.f32.mrb[0].mxu0
    %v2787 = vadd.f32 %v2558, %v2786
    %v2788 = vpop.f32.mrb[0].mxu0
    %v2789 = vpop.f32.mrb[0].mxu0
    %v2790 = vpop.f32.mrb[0].mxu0
    %2791 = vdwg.mxu0
    %2792 = vmatprep.subr.bf16.mxu0 0
    %2793 = vmatpush1.bf16.msra.mxu0 %v2704
    %2794 = vmatprep.subr.bf16.mxu0 0
    %2795 = vmatpush1.bf16.msra.mxu0 %v2705
    %2796 = vmatprep.subr.bf16.mxu0 0
    %2797 = vmatpush1.bf16.msra.mxu0 %v2706
    %2798 = vmatprep.subr.bf16.mxu0 0
    %2799 = vmatpush1.bf16.msra.mxu0 %v2707
    %2800 = vmatprep.subr.bf16.mxu0 0
    %2801 = vmatpush1.bf16.msra.mxu0 %v2708
    %2802 = vmatprep.subr.bf16.mxu0 0
    %2803 = vmatpush1.bf16.msra.mxu0 %v2709
    %2804 = vmatprep.subr.bf16.mxu0 0
    %2805 = vmatpush1.bf16.msra.mxu0 %v2710
    %2806 = vmatprep.subr.bf16.mxu0 0
    %2807 = vmatpush1.bf16.msra.mxu0 %v2711
    %2808 = vmatprep.subr.bf16.mxu0 0
    %2809 = vmatpush1.bf16.msra.mxu0 %v2712
    %2810 = vmatprep.subr.bf16.mxu0 0
    %2811 = vmatpush1.bf16.msra.mxu0 %v2713
    %2812 = vmatprep.subr.bf16.mxu0 0
    %2813 = vmatpush1.bf16.msra.mxu0 %v2714
    %2814 = vmatprep.subr.bf16.mxu0 0
    %2815 = vmatpush1.bf16.msra.mxu0 %v2715
    %2816 = vmatprep.subr.bf16.mxu0 0
    %2817 = vmatpush1.bf16.msra.mxu0 %v2716
    %2818 = vmatprep.subr.bf16.mxu0 0
    %2819 = vmatpush1.bf16.msra.mxu0 %v2717
    %2820 = vmatprep.subr.bf16.mxu0 0
    %2821 = vmatpush1.bf16.msra.mxu0 %v2718
    %2822 = vmatprep.subr.bf16.mxu0 0
    %2823 = vmatpush1.bf16.msra.mxu0 %v2719
    %2824 = vmatprep.mubr.bf16.mxu0 %v75
    %2825 = vmatmul.mubr.bf16.gmra.mrb[0].mxu0 %v74
    %v2826 = vpop.f32.mrb[0].mxu0
    %v2827 = vadd.f32 %v2787, %v2826
    %v2828 = vpop.f32.mrb[0].mxu0
    %v2829 = vpop.f32.mrb[0].mxu0
    %v2830 = vpop.f32.mrb[0].mxu0
    %2831 = vdwg.mxu0
    %s2832 = scalar_lea.vmem %s3, 1792
    %v2833 = vld [vmem:[%s2832] sm:$0xf]
    %v2834 = vld [vmem:[%s2832 + $0x4] sm:$0xf]
    %v2835 = vld [vmem:[%s2832 + $0x8] sm:$0xf]
    %v2836 = vld [vmem:[%s2832 + $0xc] sm:$0xf]
    %v2837 = vld [vmem:[%s2832 + $0x10] sm:$0xf]
    %v2838 = vld [vmem:[%s2832 + $0x14] sm:$0xf]
    %v2839 = vld [vmem:[%s2832 + $0x18] sm:$0xf]
    %v2840 = vld [vmem:[%s2832 + $0x1c] sm:$0xf]
    %v2841 = vld [vmem:[%s2832 + $0x20] sm:$0xf]
    %v2842 = vld [vmem:[%s2832 + $0x24] sm:$0xf]
    %v2843 = vld [vmem:[%s2832 + $0x28] sm:$0xf]
    %v2844 = vld [vmem:[%s2832 + $0x2c] sm:$0xf]
    %v2845 = vld [vmem:[%s2832 + $0x30] sm:$0xf]
    %v2846 = vld [vmem:[%s2832 + $0x34] sm:$0xf]
    %v2847 = vld [vmem:[%s2832 + $0x38] sm:$0xf]
    %v2848 = vld [vmem:[%s2832 + $0x3c] sm:$0xf]
    %v2849 = vld [vmem:[%s2832 + $0x40] sm:$0xf]
    %v2850 = vld [vmem:[%s2832 + $0x44] sm:$0xf]
    %v2851 = vld [vmem:[%s2832 + $0x48] sm:$0xf]
    %v2852 = vld [vmem:[%s2832 + $0x4c] sm:$0xf]
    %v2853 = vld [vmem:[%s2832 + $0x50] sm:$0xf]
    %v2854 = vld [vmem:[%s2832 + $0x54] sm:$0xf]
    %v2855 = vld [vmem:[%s2832 + $0x58] sm:$0xf]
    %v2856 = vld [vmem:[%s2832 + $0x5c] sm:$0xf]
    %v2857 = vld [vmem:[%s2832 + $0x60] sm:$0xf]
    %v2858 = vld [vmem:[%s2832 + $0x64] sm:$0xf]
    %v2859 = vld [vmem:[%s2832 + $0x68] sm:$0xf]
    %v2860 = vld [vmem:[%s2832 + $0x6c] sm:$0xf]
    %v2861 = vld [vmem:[%s2832 + $0x70] sm:$0xf]
    %v2862 = vld [vmem:[%s2832 + $0x74] sm:$0xf]
    %v2863 = vld [vmem:[%s2832 + $0x78] sm:$0xf]
    %v2864 = vld [vmem:[%s2832 + $0x7c] sm:$0xf]
    %v2865 = vld [vmem:[%s2832 + $0x80] sm:$0xf]
    %v2866 = vld [vmem:[%s2832 + $0x84] sm:$0xf]
    %v2867 = vld [vmem:[%s2832 + $0x88] sm:$0xf]
    %v2868 = vld [vmem:[%s2832 + $0x8c] sm:$0xf]
    %v2869 = vld [vmem:[%s2832 + $0x90] sm:$0xf]
    %v2870 = vld [vmem:[%s2832 + $0x94] sm:$0xf]
    %v2871 = vld [vmem:[%s2832 + $0x98] sm:$0xf]
    %v2872 = vld [vmem:[%s2832 + $0x9c] sm:$0xf]
    %v2873 = vld [vmem:[%s2832 + $0xa0] sm:$0xf]
    %v2874 = vld [vmem:[%s2832 + $0xa4] sm:$0xf]
    %v2875 = vld [vmem:[%s2832 + $0xa8] sm:$0xf]
    %v2876 = vld [vmem:[%s2832 + $0xac] sm:$0xf]
    %v2877 = vld [vmem:[%s2832 + $0xb0] sm:$0xf]
    %v2878 = vld [vmem:[%s2832 + $0xb4] sm:$0xf]
    %v2879 = vld [vmem:[%s2832 + $0xb8] sm:$0xf]
    %v2880 = vld [vmem:[%s2832 + $0xbc] sm:$0xf]
    %v2881 = vld [vmem:[%s2832 + $0xc0] sm:$0xf]
    %v2882 = vld [vmem:[%s2832 + $0xc4] sm:$0xf]
    %v2883 = vld [vmem:[%s2832 + $0xc8] sm:$0xf]
    %v2884 = vld [vmem:[%s2832 + $0xcc] sm:$0xf]
    %v2885 = vld [vmem:[%s2832 + $0xd0] sm:$0xf]
    %v2886 = vld [vmem:[%s2832 + $0xd4] sm:$0xf]
    %v2887 = vld [vmem:[%s2832 + $0xd8] sm:$0xf]
    %v2888 = vld [vmem:[%s2832 + $0xdc] sm:$0xf]
    %v2889 = vld [vmem:[%s2832 + $0xe0] sm:$0xf]
    %v2890 = vld [vmem:[%s2832 + $0xe4] sm:$0xf]
    %v2891 = vld [vmem:[%s2832 + $0xe8] sm:$0xf]
    %v2892 = vld [vmem:[%s2832 + $0xec] sm:$0xf]
    %v2893 = vld [vmem:[%s2832 + $0xf0] sm:$0xf]
    %v2894 = vld [vmem:[%s2832 + $0xf4] sm:$0xf]
    %v2895 = vld [vmem:[%s2832 + $0xf8] sm:$0xf]
    %v2896 = vld [vmem:[%s2832 + $0xfc] sm:$0xf]
    %s2897 = scalar_lea.vmem %s4, 7
    %v2898 = vld [vmem:[%s2897] sm:$0x1]
    %v2900 = vlaneseq
    %v2901 = vshrl.u32 %v2900, 7
    %v2902 = vsub.s32 0, %v2901
    %v2903 = vrot.slane %v2898, %v2902
    %v2969 = vunpack.c.l.b16 %v2833
    %v2970 = vunpack.c.l.b16 %v2834
    %v2971 = vunpack.c.l.b16 %v2835
    %v2972 = vunpack.c.l.b16 %v2836
    %v2973 = vunpack.c.l.b16 %v2837
    %v2974 = vunpack.c.l.b16 %v2838
    %v2975 = vunpack.c.l.b16 %v2839
    %v2976 = vunpack.c.l.b16 %v2840
    %v2977 = vunpack.c.l.b16 %v2841
    %v2978 = vunpack.c.l.b16 %v2842
    %v2979 = vunpack.c.l.b16 %v2843
    %v2980 = vunpack.c.l.b16 %v2844
    %v2981 = vunpack.c.l.b16 %v2845
    %v2982 = vunpack.c.l.b16 %v2846
    %v2983 = vunpack.c.l.b16 %v2847
    %v2984 = vunpack.c.l.b16 %v2848
    %v2985 = vunpack.c.l.b16 %v2849
    %v2986 = vunpack.c.l.b16 %v2850
    %v2987 = vunpack.c.l.b16 %v2851
    %v2988 = vunpack.c.l.b16 %v2852
    %v2989 = vunpack.c.l.b16 %v2853
    %v2990 = vunpack.c.l.b16 %v2854
    %v2991 = vunpack.c.l.b16 %v2855
    %v2992 = vunpack.c.l.b16 %v2856
    %v2993 = vunpack.c.l.b16 %v2857
    %v2994 = vunpack.c.l.b16 %v2858
    %v2995 = vunpack.c.l.b16 %v2859
    %v2996 = vunpack.c.l.b16 %v2860
    %v2997 = vunpack.c.l.b16 %v2861
    %v2998 = vunpack.c.l.b16 %v2862
    %v2999 = vunpack.c.l.b16 %v2863
    %v3000 = vunpack.c.l.b16 %v2864
    %v3001 = vunpack.c.l.b16 %v2865
    %v3002 = vunpack.c.l.b16 %v2866
    %v3003 = vunpack.c.l.b16 %v2867
    %v3004 = vunpack.c.l.b16 %v2868
    %v3005 = vunpack.c.l.b16 %v2869
    %v3006 = vunpack.c.l.b16 %v2870
    %v3007 = vunpack.c.l.b16 %v2871
    %v3008 = vunpack.c.l.b16 %v2872
    %v3009 = vunpack.c.l.b16 %v2873
    %v3010 = vunpack.c.l.b16 %v2874
    %v3011 = vunpack.c.l.b16 %v2875
    %v3012 = vunpack.c.l.b16 %v2876
    %v3013 = vunpack.c.l.b16 %v2877
    %v3014 = vunpack.c.l.b16 %v2878
    %v3015 = vunpack.c.l.b16 %v2879
    %v3016 = vunpack.c.l.b16 %v2880
    %v3017 = vunpack.c.l.b16 %v2881
    %v3018 = vunpack.c.l.b16 %v2882
    %v3019 = vunpack.c.l.b16 %v2883
    %v3020 = vunpack.c.l.b16 %v2884
    %v3021 = vunpack.c.l.b16 %v2885
    %v3022 = vunpack.c.l.b16 %v2886
    %v3023 = vunpack.c.l.b16 %v2887
    %v3024 = vunpack.c.l.b16 %v2888
    %v3025 = vunpack.c.l.b16 %v2889
    %v3026 = vunpack.c.l.b16 %v2890
    %v3027 = vunpack.c.l.b16 %v2891
    %v3028 = vunpack.c.l.b16 %v2892
    %v3029 = vunpack.c.l.b16 %v2893
    %v3030 = vunpack.c.l.b16 %v2894
    %v3031 = vunpack.c.l.b16 %v2895
    %v3032 = vunpack.c.l.b16 %v2896
    %v3033 = vpack.c.b16 %v2970, %v2969
    %v3034 = vpack.c.b16 %v2972, %v2971
    %v3035 = vpack.c.b16 %v2974, %v2973
    %v3036 = vpack.c.b16 %v2976, %v2975
    %v3037 = vpack.c.b16 %v2978, %v2977
    %v3038 = vpack.c.b16 %v2980, %v2979
    %v3039 = vpack.c.b16 %v2982, %v2981
    %v3040 = vpack.c.b16 %v2984, %v2983
    %v3041 = vpack.c.b16 %v2986, %v2985
    %v3042 = vpack.c.b16 %v2988, %v2987
    %v3043 = vpack.c.b16 %v2990, %v2989
    %v3044 = vpack.c.b16 %v2992, %v2991
    %v3045 = vpack.c.b16 %v2994, %v2993
    %v3046 = vpack.c.b16 %v2996, %v2995
    %v3047 = vpack.c.b16 %v2998, %v2997
    %v3048 = vpack.c.b16 %v3000, %v2999
    %v3049 = vpack.c.b16 %v3002, %v3001
    %v3050 = vpack.c.b16 %v3004, %v3003
    %v3051 = vpack.c.b16 %v3006, %v3005
    %v3052 = vpack.c.b16 %v3008, %v3007
    %v3053 = vpack.c.b16 %v3010, %v3009
    %v3054 = vpack.c.b16 %v3012, %v3011
    %v3055 = vpack.c.b16 %v3014, %v3013
    %v3056 = vpack.c.b16 %v3016, %v3015
    %v3057 = vpack.c.b16 %v3018, %v3017
    %v3058 = vpack.c.b16 %v3020, %v3019
    %v3059 = vpack.c.b16 %v3022, %v3021
    %v3060 = vpack.c.b16 %v3024, %v3023
    %v3061 = vpack.c.b16 %v3026, %v3025
    %v3062 = vpack.c.b16 %v3028, %v3027
    %v3063 = vpack.c.b16 %v3030, %v3029
    %v3064 = vpack.c.b16 %v3032, %v3031
    %3097 = vmatprep.subr.bf16.mxu0 0
    %3098 = vmatpush1.bf16.msra.mxu0 %v3033
    %3099 = vmatprep.subr.bf16.mxu0 0
    %3100 = vmatpush1.bf16.msra.mxu0 %v3034
    %3101 = vmatprep.subr.bf16.mxu0 0
    %3102 = vmatpush1.bf16.msra.mxu0 %v3035
    %3103 = vmatprep.subr.bf16.mxu0 0
    %3104 = vmatpush1.bf16.msra.mxu0 %v3036
    %3105 = vmatprep.subr.bf16.mxu0 0
    %3106 = vmatpush1.bf16.msra.mxu0 %v3037
    %3107 = vmatprep.subr.bf16.mxu0 0
    %3108 = vmatpush1.bf16.msra.mxu0 %v3038
    %3109 = vmatprep.subr.bf16.mxu0 0
    %3110 = vmatpush1.bf16.msra.mxu0 %v3039
    %3111 = vmatprep.subr.bf16.mxu0 0
    %3112 = vmatpush1.bf16.msra.mxu0 %v3040
    %3113 = vmatprep.subr.bf16.mxu0 0
    %3114 = vmatpush1.bf16.msra.mxu0 %v3041
    %3115 = vmatprep.subr.bf16.mxu0 0
    %3116 = vmatpush1.bf16.msra.mxu0 %v3042
    %3117 = vmatprep.subr.bf16.mxu0 0
    %3118 = vmatpush1.bf16.msra.mxu0 %v3043
    %3119 = vmatprep.subr.bf16.mxu0 0
    %3120 = vmatpush1.bf16.msra.mxu0 %v3044
    %3121 = vmatprep.subr.bf16.mxu0 0
    %3122 = vmatpush1.bf16.msra.mxu0 %v3045
    %3123 = vmatprep.subr.bf16.mxu0 0
    %3124 = vmatpush1.bf16.msra.mxu0 %v3046
    %3125 = vmatprep.subr.bf16.mxu0 0
    %3126 = vmatpush1.bf16.msra.mxu0 %v3047
    %3127 = vmatprep.subr.bf16.mxu0 0
    %3128 = vmatpush1.bf16.msra.mxu0 %v3048
    %3129 = vmatprep.mubr.bf16.mxu0 %v73
    %3130 = vmatmul.mubr.bf16.gmra.mrb[0].mxu0 %v72
    %v3131 = vpop.f32.mrb[0].mxu0
    %v3132 = vadd.f32 %v2903, %v3131
    %v3133 = vpop.f32.mrb[0].mxu0
    %v3134 = vpop.f32.mrb[0].mxu0
    %v3135 = vpop.f32.mrb[0].mxu0
    %3136 = vdwg.mxu0
    %3137 = vmatprep.subr.bf16.mxu0 0
    %3138 = vmatpush1.bf16.msra.mxu0 %v3049
    %3139 = vmatprep.subr.bf16.mxu0 0
    %3140 = vmatpush1.bf16.msra.mxu0 %v3050
    %3141 = vmatprep.subr.bf16.mxu0 0
    %3142 = vmatpush1.bf16.msra.mxu0 %v3051
    %3143 = vmatprep.subr.bf16.mxu0 0
    %3144 = vmatpush1.bf16.msra.mxu0 %v3052
    %3145 = vmatprep.subr.bf16.mxu0 0
    %3146 = vmatpush1.bf16.msra.mxu0 %v3053
    %3147 = vmatprep.subr.bf16.mxu0 0
    %3148 = vmatpush1.bf16.msra.mxu0 %v3054
    %3149 = vmatprep.subr.bf16.mxu0 0
    %3150 = vmatpush1.bf16.msra.mxu0 %v3055
    %3151 = vmatprep.subr.bf16.mxu0 0
    %3152 = vmatpush1.bf16.msra.mxu0 %v3056
    %3153 = vmatprep.subr.bf16.mxu0 0
    %3154 = vmatpush1.bf16.msra.mxu0 %v3057
    %3155 = vmatprep.subr.bf16.mxu0 0
    %3156 = vmatpush1.bf16.msra.mxu0 %v3058
    %3157 = vmatprep.subr.bf16.mxu0 0
    %3158 = vmatpush1.bf16.msra.mxu0 %v3059
    %3159 = vmatprep.subr.bf16.mxu0 0
    %3160 = vmatpush1.bf16.msra.mxu0 %v3060
    %3161 = vmatprep.subr.bf16.mxu0 0
    %3162 = vmatpush1.bf16.msra.mxu0 %v3061
    %3163 = vmatprep.subr.bf16.mxu0 0
    %3164 = vmatpush1.bf16.msra.mxu0 %v3062
    %3165 = vmatprep.subr.bf16.mxu0 0
    %3166 = vmatpush1.bf16.msra.mxu0 %v3063
    %3167 = vmatprep.subr.bf16.mxu0 0
    %3168 = vmatpush1.bf16.msra.mxu0 %v3064
    %3169 = vmatprep.mubr.bf16.mxu0 %v75
    %3170 = vmatmul.mubr.bf16.gmra.mrb[0].mxu0 %v74
    %v3171 = vpop.f32.mrb[0].mxu0
    %v3172 = vadd.f32 %v3132, %v3171
    %v3173 = vpop.f32.mrb[0].mxu0
    %v3174 = vpop.f32.mrb[0].mxu0
    %v3175 = vpop.f32.mrb[0].mxu0
    %3176 = vdwg.mxu0
    %s3177 = scalar_lea.vmem %s3, 2048
    %v3178 = vld [vmem:[%s3177] sm:$0xf]
    %v3179 = vld [vmem:[%s3177 + $0x4] sm:$0xf]
    %v3180 = vld [vmem:[%s3177 + $0x8] sm:$0xf]
    %v3181 = vld [vmem:[%s3177 + $0xc] sm:$0xf]
    %v3182 = vld [vmem:[%s3177 + $0x10] sm:$0xf]
    %v3183 = vld [vmem:[%s3177 + $0x14] sm:$0xf]
    %v3184 = vld [vmem:[%s3177 + $0x18] sm:$0xf]
    %v3185 = vld [vmem:[%s3177 + $0x1c] sm:$0xf]
    %v3186 = vld [vmem:[%s3177 + $0x20] sm:$0xf]
    %v3187 = vld [vmem:[%s3177 + $0x24] sm:$0xf]
    %v3188 = vld [vmem:[%s3177 + $0x28] sm:$0xf]
    %v3189 = vld [vmem:[%s3177 + $0x2c] sm:$0xf]
    %v3190 = vld [vmem:[%s3177 + $0x30] sm:$0xf]
    %v3191 = vld [vmem:[%s3177 + $0x34] sm:$0xf]
    %v3192 = vld [vmem:[%s3177 + $0x38] sm:$0xf]
    %v3193 = vld [vmem:[%s3177 + $0x3c] sm:$0xf]
    %v3194 = vld [vmem:[%s3177 + $0x40] sm:$0xf]
    %v3195 = vld [vmem:[%s3177 + $0x44] sm:$0xf]
    %v3196 = vld [vmem:[%s3177 + $0x48] sm:$0xf]
    %v3197 = vld [vmem:[%s3177 + $0x4c] sm:$0xf]
    %v3198 = vld [vmem:[%s3177 + $0x50] sm:$0xf]
    %v3199 = vld [vmem:[%s3177 + $0x54] sm:$0xf]
    %v3200 = vld [vmem:[%s3177 + $0x58] sm:$0xf]
    %v3201 = vld [vmem:[%s3177 + $0x5c] sm:$0xf]
    %v3202 = vld [vmem:[%s3177 + $0x60] sm:$0xf]
    %v3203 = vld [vmem:[%s3177 + $0x64] sm:$0xf]
    %v3204 = vld [vmem:[%s3177 + $0x68] sm:$0xf]
    %v3205 = vld [vmem:[%s3177 + $0x6c] sm:$0xf]
    %v3206 = vld [vmem:[%s3177 + $0x70] sm:$0xf]
    %v3207 = vld [vmem:[%s3177 + $0x74] sm:$0xf]
    %v3208 = vld [vmem:[%s3177 + $0x78] sm:$0xf]
    %v3209 = vld [vmem:[%s3177 + $0x7c] sm:$0xf]
    %v3210 = vld [vmem:[%s3177 + $0x80] sm:$0xf]
    %v3211 = vld [vmem:[%s3177 + $0x84] sm:$0xf]
    %v3212 = vld [vmem:[%s3177 + $0x88] sm:$0xf]
    %v3213 = vld [vmem:[%s3177 + $0x8c] sm:$0xf]
    %v3214 = vld [vmem:[%s3177 + $0x90] sm:$0xf]
    %v3215 = vld [vmem:[%s3177 + $0x94] sm:$0xf]
    %v3216 = vld [vmem:[%s3177 + $0x98] sm:$0xf]
    %v3217 = vld [vmem:[%s3177 + $0x9c] sm:$0xf]
    %v3218 = vld [vmem:[%s3177 + $0xa0] sm:$0xf]
    %v3219 = vld [vmem:[%s3177 + $0xa4] sm:$0xf]
    %v3220 = vld [vmem:[%s3177 + $0xa8] sm:$0xf]
    %v3221 = vld [vmem:[%s3177 + $0xac] sm:$0xf]
    %v3222 = vld [vmem:[%s3177 + $0xb0] sm:$0xf]
    %v3223 = vld [vmem:[%s3177 + $0xb4] sm:$0xf]
    %v3224 = vld [vmem:[%s3177 + $0xb8] sm:$0xf]
    %v3225 = vld [vmem:[%s3177 + $0xbc] sm:$0xf]
    %v3226 = vld [vmem:[%s3177 + $0xc0] sm:$0xf]
    %v3227 = vld [vmem:[%s3177 + $0xc4] sm:$0xf]
    %v3228 = vld [vmem:[%s3177 + $0xc8] sm:$0xf]
    %v3229 = vld [vmem:[%s3177 + $0xcc] sm:$0xf]
    %v3230 = vld [vmem:[%s3177 + $0xd0] sm:$0xf]
    %v3231 = vld [vmem:[%s3177 + $0xd4] sm:$0xf]
    %v3232 = vld [vmem:[%s3177 + $0xd8] sm:$0xf]
    %v3233 = vld [vmem:[%s3177 + $0xdc] sm:$0xf]
    %v3234 = vld [vmem:[%s3177 + $0xe0] sm:$0xf]
    %v3235 = vld [vmem:[%s3177 + $0xe4] sm:$0xf]
    %v3236 = vld [vmem:[%s3177 + $0xe8] sm:$0xf]
    %v3237 = vld [vmem:[%s3177 + $0xec] sm:$0xf]
    %v3238 = vld [vmem:[%s3177 + $0xf0] sm:$0xf]
    %v3239 = vld [vmem:[%s3177 + $0xf4] sm:$0xf]
    %v3240 = vld [vmem:[%s3177 + $0xf8] sm:$0xf]
    %v3241 = vld [vmem:[%s3177 + $0xfc] sm:$0xf]
    %s3242 = scalar_lea.vmem %s4, 8
    %v3243 = vld [vmem:[%s3242] sm:$0x1]
    %v3245 = vlaneseq
    %v3246 = vshrl.u32 %v3245, 7
    %v3247 = vsub.s32 0, %v3246
    %v3248 = vrot.slane %v3243, %v3247
    %v3314 = vunpack.c.l.b16 %v3178
    %v3315 = vunpack.c.l.b16 %v3179
    %v3316 = vunpack.c.l.b16 %v3180
    %v3317 = vunpack.c.l.b16 %v3181
    %v3318 = vunpack.c.l.b16 %v3182
    %v3319 = vunpack.c.l.b16 %v3183
    %v3320 = vunpack.c.l.b16 %v3184
    %v3321 = vunpack.c.l.b16 %v3185
    %v3322 = vunpack.c.l.b16 %v3186
    %v3323 = vunpack.c.l.b16 %v3187
    %v3324 = vunpack.c.l.b16 %v3188
    %v3325 = vunpack.c.l.b16 %v3189
    %v3326 = vunpack.c.l.b16 %v3190
    %v3327 = vunpack.c.l.b16 %v3191
    %v3328 = vunpack.c.l.b16 %v3192
    %v3329 = vunpack.c.l.b16 %v3193
    %v3330 = vunpack.c.l.b16 %v3194
    %v3331 = vunpack.c.l.b16 %v3195
    %v3332 = vunpack.c.l.b16 %v3196
    %v3333 = vunpack.c.l.b16 %v3197
    %v3334 = vunpack.c.l.b16 %v3198
    %v3335 = vunpack.c.l.b16 %v3199
    %v3336 = vunpack.c.l.b16 %v3200
    %v3337 = vunpack.c.l.b16 %v3201
    %v3338 = vunpack.c.l.b16 %v3202
    %v3339 = vunpack.c.l.b16 %v3203
    %v3340 = vunpack.c.l.b16 %v3204
    %v3341 = vunpack.c.l.b16 %v3205
    %v3342 = vunpack.c.l.b16 %v3206
    %v3343 = vunpack.c.l.b16 %v3207
    %v3344 = vunpack.c.l.b16 %v3208
    %v3345 = vunpack.c.l.b16 %v3209
    %v3346 = vunpack.c.l.b16 %v3210
    %v3347 = vunpack.c.l.b16 %v3211
    %v3348 = vunpack.c.l.b16 %v3212
    %v3349 = vunpack.c.l.b16 %v3213
    %v3350 = vunpack.c.l.b16 %v3214
    %v3351 = vunpack.c.l.b16 %v3215
    %v3352 = vunpack.c.l.b16 %v3216
    %v3353 = vunpack.c.l.b16 %v3217
    %v3354 = vunpack.c.l.b16 %v3218
    %v3355 = vunpack.c.l.b16 %v3219
    %v3356 = vunpack.c.l.b16 %v3220
    %v3357 = vunpack.c.l.b16 %v3221
    %v3358 = vunpack.c.l.b16 %v3222
    %v3359 = vunpack.c.l.b16 %v3223
    %v3360 = vunpack.c.l.b16 %v3224
    %v3361 = vunpack.c.l.b16 %v3225
    %v3362 = vunpack.c.l.b16 %v3226
    %v3363 = vunpack.c.l.b16 %v3227
    %v3364 = vunpack.c.l.b16 %v3228
    %v3365 = vunpack.c.l.b16 %v3229
    %v3366 = vunpack.c.l.b16 %v3230
    %v3367 = vunpack.c.l.b16 %v3231
    %v3368 = vunpack.c.l.b16 %v3232
    %v3369 = vunpack.c.l.b16 %v3233
    %v3370 = vunpack.c.l.b16 %v3234
    %v3371 = vunpack.c.l.b16 %v3235
    %v3372 = vunpack.c.l.b16 %v3236
    %v3373 = vunpack.c.l.b16 %v3237
    %v3374 = vunpack.c.l.b16 %v3238
    %v3375 = vunpack.c.l.b16 %v3239
    %v3376 = vunpack.c.l.b16 %v3240
    %v3377 = vunpack.c.l.b16 %v3241
    %v3378 = vpack.c.b16 %v3315, %v3314
    %v3379 = vpack.c.b16 %v3317, %v3316
    %v3380 = vpack.c.b16 %v3319, %v3318
    %v3381 = vpack.c.b16 %v3321, %v3320
    %v3382 = vpack.c.b16 %v3323, %v3322
    %v3383 = vpack.c.b16 %v3325, %v3324
    %v3384 = vpack.c.b16 %v3327, %v3326
    %v3385 = vpack.c.b16 %v3329, %v3328
    %v3386 = vpack.c.b16 %v3331, %v3330
    %v3387 = vpack.c.b16 %v3333, %v3332
    %v3388 = vpack.c.b16 %v3335, %v3334
    %v3389 = vpack.c.b16 %v3337, %v3336
    %v3390 = vpack.c.b16 %v3339, %v3338
    %v3391 = vpack.c.b16 %v3341, %v3340
    %v3392 = vpack.c.b16 %v3343, %v3342
    %v3393 = vpack.c.b16 %v3345, %v3344
    %v3394 = vpack.c.b16 %v3347, %v3346
    %v3395 = vpack.c.b16 %v3349, %v3348
    %v3396 = vpack.c.b16 %v3351, %v3350
    %v3397 = vpack.c.b16 %v3353, %v3352
    %v3398 = vpack.c.b16 %v3355, %v3354
    %v3399 = vpack.c.b16 %v3357, %v3356
    %v3400 = vpack.c.b16 %v3359, %v3358
    %v3401 = vpack.c.b16 %v3361, %v3360
    %v3402 = vpack.c.b16 %v3363, %v3362
    %v3403 = vpack.c.b16 %v3365, %v3364
    %v3404 = vpack.c.b16 %v3367, %v3366
    %v3405 = vpack.c.b16 %v3369, %v3368
    %v3406 = vpack.c.b16 %v3371, %v3370
    %v3407 = vpack.c.b16 %v3373, %v3372
    %v3408 = vpack.c.b16 %v3375, %v3374
    %v3409 = vpack.c.b16 %v3377, %v3376
    %3442 = vmatprep.subr.bf16.mxu0 0
    %3443 = vmatpush1.bf16.msra.mxu0 %v3378
    %3444 = vmatprep.subr.bf16.mxu0 0
    %3445 = vmatpush1.bf16.msra.mxu0 %v3379
    %3446 = vmatprep.subr.bf16.mxu0 0
    %3447 = vmatpush1.bf16.msra.mxu0 %v3380
    %3448 = vmatprep.subr.bf16.mxu0 0
    %3449 = vmatpush1.bf16.msra.mxu0 %v3381
    %3450 = vmatprep.subr.bf16.mxu0 0
    %3451 = vmatpush1.bf16.msra.mxu0 %v3382
    %3452 = vmatprep.subr.bf16.mxu0 0
    %3453 = vmatpush1.bf16.msra.mxu0 %v3383
    %3454 = vmatprep.subr.bf16.mxu0 0
    %3455 = vmatpush1.bf16.msra.mxu0 %v3384
    %3456 = vmatprep.subr.bf16.mxu0 0
    %3457 = vmatpush1.bf16.msra.mxu0 %v3385
    %3458 = vmatprep.subr.bf16.mxu0 0
    %3459 = vmatpush1.bf16.msra.mxu0 %v3386
    %3460 = vmatprep.subr.bf16.mxu0 0
    %3461 = vmatpush1.bf16.msra.mxu0 %v3387
    %3462 = vmatprep.subr.bf16.mxu0 0
    %3463 = vmatpush1.bf16.msra.mxu0 %v3388
    %3464 = vmatprep.subr.bf16.mxu0 0
    %3465 = vmatpush1.bf16.msra.mxu0 %v3389
    %3466 = vmatprep.subr.bf16.mxu0 0
    %3467 = vmatpush1.bf16.msra.mxu0 %v3390
    %3468 = vmatprep.subr.bf16.mxu0 0
    %3469 = vmatpush1.bf16.msra.mxu0 %v3391
    %3470 = vmatprep.subr.bf16.mxu0 0
    %3471 = vmatpush1.bf16.msra.mxu0 %v3392
    %3472 = vmatprep.subr.bf16.mxu0 0
    %3473 = vmatpush1.bf16.msra.mxu0 %v3393
    %3474 = vmatprep.mubr.bf16.mxu0 %v73
    %3475 = vmatmul.mubr.bf16.gmra.mrb[0].mxu0 %v72
    %v3476 = vpop.f32.mrb[0].mxu0
    %v3477 = vadd.f32 %v3248, %v3476
    %v3478 = vpop.f32.mrb[0].mxu0
    %v3479 = vpop.f32.mrb[0].mxu0
    %v3480 = vpop.f32.mrb[0].mxu0
    %3481 = vdwg.mxu0
    %3482 = vmatprep.subr.bf16.mxu0 0
    %3483 = vmatpush1.bf16.msra.mxu0 %v3394
    %3484 = vmatprep.subr.bf16.mxu0 0
    %3485 = vmatpush1.bf16.msra.mxu0 %v3395
    %3486 = vmatprep.subr.bf16.mxu0 0
    %3487 = vmatpush1.bf16.msra.mxu0 %v3396
    %3488 = vmatprep.subr.bf16.mxu0 0
    %3489 = vmatpush1.bf16.msra.mxu0 %v3397
    %3490 = vmatprep.subr.bf16.mxu0 0
    %3491 = vmatpush1.bf16.msra.mxu0 %v3398
    %3492 = vmatprep.subr.bf16.mxu0 0
    %3493 = vmatpush1.bf16.msra.mxu0 %v3399
    %3494 = vmatprep.subr.bf16.mxu0 0
    %3495 = vmatpush1.bf16.msra.mxu0 %v3400
    %3496 = vmatprep.subr.bf16.mxu0 0
    %3497 = vmatpush1.bf16.msra.mxu0 %v3401
    %3498 = vmatprep.subr.bf16.mxu0 0
    %3499 = vmatpush1.bf16.msra.mxu0 %v3402
    %3500 = vmatprep.subr.bf16.mxu0 0
    %3501 = vmatpush1.bf16.msra.mxu0 %v3403
    %3502 = vmatprep.subr.bf16.mxu0 0
    %3503 = vmatpush1.bf16.msra.mxu0 %v3404
    %3504 = vmatprep.subr.bf16.mxu0 0
    %3505 = vmatpush1.bf16.msra.mxu0 %v3405
    %3506 = vmatprep.subr.bf16.mxu0 0
    %3507 = vmatpush1.bf16.msra.mxu0 %v3406
    %3508 = vmatprep.subr.bf16.mxu0 0
    %3509 = vmatpush1.bf16.msra.mxu0 %v3407
    %3510 = vmatprep.subr.bf16.mxu0 0
    %3511 = vmatpush1.bf16.msra.mxu0 %v3408
    %3512 = vmatprep.subr.bf16.mxu0 0
    %3513 = vmatpush1.bf16.msra.mxu0 %v3409
    %3514 = vmatprep.mubr.bf16.mxu0 %v75
    %3515 = vmatmul.mubr.bf16.gmra.mrb[0].mxu0 %v74
    %v3516 = vpop.f32.mrb[0].mxu0
    %v3517 = vadd.f32 %v3477, %v3516
    %v3518 = vpop.f32.mrb[0].mxu0
    %v3519 = vpop.f32.mrb[0].mxu0
    %v3520 = vpop.f32.mrb[0].mxu0
    %3521 = vdwg.mxu0
    %s3522 = scalar_lea.vmem %s3, 2304
    %v3523 = vld [vmem:[%s3522] sm:$0xf]
    %v3524 = vld [vmem:[%s3522 + $0x4] sm:$0xf]
    %v3525 = vld [vmem:[%s3522 + $0x8] sm:$0xf]
    %v3526 = vld [vmem:[%s3522 + $0xc] sm:$0xf]
    %v3527 = vld [vmem:[%s3522 + $0x10] sm:$0xf]
    %v3528 = vld [vmem:[%s3522 + $0x14] sm:$0xf]
    %v3529 = vld [vmem:[%s3522 + $0x18] sm:$0xf]
    %v3530 = vld [vmem:[%s3522 + $0x1c] sm:$0xf]
    %v3531 = vld [vmem:[%s3522 + $0x20] sm:$0xf]
    %v3532 = vld [vmem:[%s3522 + $0x24] sm:$0xf]
    %v3533 = vld [vmem:[%s3522 + $0x28] sm:$0xf]
    %v3534 = vld [vmem:[%s3522 + $0x2c] sm:$0xf]
    %v3535 = vld [vmem:[%s3522 + $0x30] sm:$0xf]
    %v3536 = vld [vmem:[%s3522 + $0x34] sm:$0xf]
    %v3537 = vld [vmem:[%s3522 + $0x38] sm:$0xf]
    %v3538 = vld [vmem:[%s3522 + $0x3c] sm:$0xf]
    %v3539 = vld [vmem:[%s3522 + $0x40] sm:$0xf]
    %v3540 = vld [vmem:[%s3522 + $0x44] sm:$0xf]
    %v3541 = vld [vmem:[%s3522 + $0x48] sm:$0xf]
    %v3542 = vld [vmem:[%s3522 + $0x4c] sm:$0xf]
    %v3543 = vld [vmem:[%s3522 + $0x50] sm:$0xf]
    %v3544 = vld [vmem:[%s3522 + $0x54] sm:$0xf]
    %v3545 = vld [vmem:[%s3522 + $0x58] sm:$0xf]
    %v3546 = vld [vmem:[%s3522 + $0x5c] sm:$0xf]
    %v3547 = vld [vmem:[%s3522 + $0x60] sm:$0xf]
    %v3548 = vld [vmem:[%s3522 + $0x64] sm:$0xf]
    %v3549 = vld [vmem:[%s3522 + $0x68] sm:$0xf]
    %v3550 = vld [vmem:[%s3522 + $0x6c] sm:$0xf]
    %v3551 = vld [vmem:[%s3522 + $0x70] sm:$0xf]
    %v3552 = vld [vmem:[%s3522 + $0x74] sm:$0xf]
    %v3553 = vld [vmem:[%s3522 + $0x78] sm:$0xf]
    %v3554 = vld [vmem:[%s3522 + $0x7c] sm:$0xf]
    %v3555 = vld [vmem:[%s3522 + $0x80] sm:$0xf]
    %v3556 = vld [vmem:[%s3522 + $0x84] sm:$0xf]
    %v3557 = vld [vmem:[%s3522 + $0x88] sm:$0xf]
    %v3558 = vld [vmem:[%s3522 + $0x8c] sm:$0xf]
    %v3559 = vld [vmem:[%s3522 + $0x90] sm:$0xf]
    %v3560 = vld [vmem:[%s3522 + $0x94] sm:$0xf]
    %v3561 = vld [vmem:[%s3522 + $0x98] sm:$0xf]
    %v3562 = vld [vmem:[%s3522 + $0x9c] sm:$0xf]
    %v3563 = vld [vmem:[%s3522 + $0xa0] sm:$0xf]
    %v3564 = vld [vmem:[%s3522 + $0xa4] sm:$0xf]
    %v3565 = vld [vmem:[%s3522 + $0xa8] sm:$0xf]
    %v3566 = vld [vmem:[%s3522 + $0xac] sm:$0xf]
    %v3567 = vld [vmem:[%s3522 + $0xb0] sm:$0xf]
    %v3568 = vld [vmem:[%s3522 + $0xb4] sm:$0xf]
    %v3569 = vld [vmem:[%s3522 + $0xb8] sm:$0xf]
    %v3570 = vld [vmem:[%s3522 + $0xbc] sm:$0xf]
    %v3571 = vld [vmem:[%s3522 + $0xc0] sm:$0xf]
    %v3572 = vld [vmem:[%s3522 + $0xc4] sm:$0xf]
    %v3573 = vld [vmem:[%s3522 + $0xc8] sm:$0xf]
    %v3574 = vld [vmem:[%s3522 + $0xcc] sm:$0xf]
    %v3575 = vld [vmem:[%s3522 + $0xd0] sm:$0xf]
    %v3576 = vld [vmem:[%s3522 + $0xd4] sm:$0xf]
    %v3577 = vld [vmem:[%s3522 + $0xd8] sm:$0xf]
    %v3578 = vld [vmem:[%s3522 + $0xdc] sm:$0xf]
    %v3579 = vld [vmem:[%s3522 + $0xe0] sm:$0xf]
    %v3580 = vld [vmem:[%s3522 + $0xe4] sm:$0xf]
    %v3581 = vld [vmem:[%s3522 + $0xe8] sm:$0xf]
    %v3582 = vld [vmem:[%s3522 + $0xec] sm:$0xf]
    %v3583 = vld [vmem:[%s3522 + $0xf0] sm:$0xf]
    %v3584 = vld [vmem:[%s3522 + $0xf4] sm:$0xf]
    %v3585 = vld [vmem:[%s3522 + $0xf8] sm:$0xf]
    %v3586 = vld [vmem:[%s3522 + $0xfc] sm:$0xf]
    %s3587 = scalar_lea.vmem %s4, 9
    %v3588 = vld [vmem:[%s3587] sm:$0x1]
    %v3590 = vlaneseq
    %v3591 = vshrl.u32 %v3590, 7
    %v3592 = vsub.s32 0, %v3591
    %v3593 = vrot.slane %v3588, %v3592
    %v3659 = vunpack.c.l.b16 %v3523
    %v3660 = vunpack.c.l.b16 %v3524
    %v3661 = vunpack.c.l.b16 %v3525
    %v3662 = vunpack.c.l.b16 %v3526
    %v3663 = vunpack.c.l.b16 %v3527
    %v3664 = vunpack.c.l.b16 %v3528
    %v3665 = vunpack.c.l.b16 %v3529
    %v3666 = vunpack.c.l.b16 %v3530
    %v3667 = vunpack.c.l.b16 %v3531
    %v3668 = vunpack.c.l.b16 %v3532
    %v3669 = vunpack.c.l.b16 %v3533
    %v3670 = vunpack.c.l.b16 %v3534
    %v3671 = vunpack.c.l.b16 %v3535
    %v3672 = vunpack.c.l.b16 %v3536
    %v3673 = vunpack.c.l.b16 %v3537
    %v3674 = vunpack.c.l.b16 %v3538
    %v3675 = vunpack.c.l.b16 %v3539
    %v3676 = vunpack.c.l.b16 %v3540
    %v3677 = vunpack.c.l.b16 %v3541
    %v3678 = vunpack.c.l.b16 %v3542
    %v3679 = vunpack.c.l.b16 %v3543
    %v3680 = vunpack.c.l.b16 %v3544
    %v3681 = vunpack.c.l.b16 %v3545
    %v3682 = vunpack.c.l.b16 %v3546
    %v3683 = vunpack.c.l.b16 %v3547
    %v3684 = vunpack.c.l.b16 %v3548
    %v3685 = vunpack.c.l.b16 %v3549
    %v3686 = vunpack.c.l.b16 %v3550
    %v3687 = vunpack.c.l.b16 %v3551
    %v3688 = vunpack.c.l.b16 %v3552
    %v3689 = vunpack.c.l.b16 %v3553
    %v3690 = vunpack.c.l.b16 %v3554
    %v3691 = vunpack.c.l.b16 %v3555
    %v3692 = vunpack.c.l.b16 %v3556
    %v3693 = vunpack.c.l.b16 %v3557
    %v3694 = vunpack.c.l.b16 %v3558
    %v3695 = vunpack.c.l.b16 %v3559
    %v3696 = vunpack.c.l.b16 %v3560
    %v3697 = vunpack.c.l.b16 %v3561
    %v3698 = vunpack.c.l.b16 %v3562
    %v3699 = vunpack.c.l.b16 %v3563
    %v3700 = vunpack.c.l.b16 %v3564
    %v3701 = vunpack.c.l.b16 %v3565
    %v3702 = vunpack.c.l.b16 %v3566
    %v3703 = vunpack.c.l.b16 %v3567
    %v3704 = vunpack.c.l.b16 %v3568
    %v3705 = vunpack.c.l.b16 %v3569
    %v3706 = vunpack.c.l.b16 %v3570
    %v3707 = vunpack.c.l.b16 %v3571
    %v3708 = vunpack.c.l.b16 %v3572
    %v3709 = vunpack.c.l.b16 %v3573
    %v3710 = vunpack.c.l.b16 %v3574
    %v3711 = vunpack.c.l.b16 %v3575
    %v3712 = vunpack.c.l.b16 %v3576
    %v3713 = vunpack.c.l.b16 %v3577
    %v3714 = vunpack.c.l.b16 %v3578
    %v3715 = vunpack.c.l.b16 %v3579
    %v3716 = vunpack.c.l.b16 %v3580
    %v3717 = vunpack.c.l.b16 %v3581
    %v3718 = vunpack.c.l.b16 %v3582
    %v3719 = vunpack.c.l.b16 %v3583
    %v3720 = vunpack.c.l.b16 %v3584
    %v3721 = vunpack.c.l.b16 %v3585
    %v3722 = vunpack.c.l.b16 %v3586
    %v3723 = vpack.c.b16 %v3660, %v3659
    %v3724 = vpack.c.b16 %v3662, %v3661
    %v3725 = vpack.c.b16 %v3664, %v3663
    %v3726 = vpack.c.b16 %v3666, %v3665
    %v3727 = vpack.c.b16 %v3668, %v3667
    %v3728 = vpack.c.b16 %v3670, %v3669
    %v3729 = vpack.c.b16 %v3672, %v3671
    %v3730 = vpack.c.b16 %v3674, %v3673
    %v3731 = vpack.c.b16 %v3676, %v3675
    %v3732 = vpack.c.b16 %v3678, %v3677
    %v3733 = vpack.c.b16 %v3680, %v3679
    %v3734 = vpack.c.b16 %v3682, %v3681
    %v3735 = vpack.c.b16 %v3684, %v3683
    %v3736 = vpack.c.b16 %v3686, %v3685
    %v3737 = vpack.c.b16 %v3688, %v3687
    %v3738 = vpack.c.b16 %v3690, %v3689
    %v3739 = vpack.c.b16 %v3692, %v3691
    %v3740 = vpack.c.b16 %v3694, %v3693
    %v3741 = vpack.c.b16 %v3696, %v3695
    %v3742 = vpack.c.b16 %v3698, %v3697
    %v3743 = vpack.c.b16 %v3700, %v3699
    %v3744 = vpack.c.b16 %v3702, %v3701
    %v3745 = vpack.c.b16 %v3704, %v3703
    %v3746 = vpack.c.b16 %v3706, %v3705
    %v3747 = vpack.c.b16 %v3708, %v3707
    %v3748 = vpack.c.b16 %v3710, %v3709
    %v3749 = vpack.c.b16 %v3712, %v3711
    %v3750 = vpack.c.b16 %v3714, %v3713
    %v3751 = vpack.c.b16 %v3716, %v3715
    %v3752 = vpack.c.b16 %v3718, %v3717
    %v3753 = vpack.c.b16 %v3720, %v3719
    %v3754 = vpack.c.b16 %v3722, %v3721
    %3787 = vmatprep.subr.bf16.mxu0 0
    %3788 = vmatpush1.bf16.msra.mxu0 %v3723
    %3789 = vmatprep.subr.bf16.mxu0 0
    %3790 = vmatpush1.bf16.msra.mxu0 %v3724
    %3791 = vmatprep.subr.bf16.mxu0 0
    %3792 = vmatpush1.bf16.msra.mxu0 %v3725
    %3793 = vmatprep.subr.bf16.mxu0 0
    %3794 = vmatpush1.bf16.msra.mxu0 %v3726
    %3795 = vmatprep.subr.bf16.mxu0 0
    %3796 = vmatpush1.bf16.msra.mxu0 %v3727
    %3797 = vmatprep.subr.bf16.mxu0 0
    %3798 = vmatpush1.bf16.msra.mxu0 %v3728
    %3799 = vmatprep.subr.bf16.mxu0 0
    %3800 = vmatpush1.bf16.msra.mxu0 %v3729
    %3801 = vmatprep.subr.bf16.mxu0 0
    %3802 = vmatpush1.bf16.msra.mxu0 %v3730
    %3803 = vmatprep.subr.bf16.mxu0 0
    %3804 = vmatpush1.bf16.msra.mxu0 %v3731
    %3805 = vmatprep.subr.bf16.mxu0 0
    %3806 = vmatpush1.bf16.msra.mxu0 %v3732
    %3807 = vmatprep.subr.bf16.mxu0 0
    %3808 = vmatpush1.bf16.msra.mxu0 %v3733
    %3809 = vmatprep.subr.bf16.mxu0 0
    %3810 = vmatpush1.bf16.msra.mxu0 %v3734
    %3811 = vmatprep.subr.bf16.mxu0 0
    %3812 = vmatpush1.bf16.msra.mxu0 %v3735
    %3813 = vmatprep.subr.bf16.mxu0 0
    %3814 = vmatpush1.bf16.msra.mxu0 %v3736
    %3815 = vmatprep.subr.bf16.mxu0 0
    %3816 = vmatpush1.bf16.msra.mxu0 %v3737
    %3817 = vmatprep.subr.bf16.mxu0 0
    %3818 = vmatpush1.bf16.msra.mxu0 %v3738
    %3819 = vmatprep.mubr.bf16.mxu0 %v73
    %3820 = vmatmul.mubr.bf16.gmra.mrb[0].mxu0 %v72
    %v3821 = vpop.f32.mrb[0].mxu0
    %v3822 = vadd.f32 %v3593, %v3821
    %v3823 = vpop.f32.mrb[0].mxu0
    %v3824 = vpop.f32.mrb[0].mxu0
    %v3825 = vpop.f32.mrb[0].mxu0
    %3826 = vdwg.mxu0
    %3827 = vmatprep.subr.bf16.mxu0 0
    %3828 = vmatpush1.bf16.msra.mxu0 %v3739
    %3829 = vmatprep.subr.bf16.mxu0 0
    %3830 = vmatpush1.bf16.msra.mxu0 %v3740
    %3831 = vmatprep.subr.bf16.mxu0 0
    %3832 = vmatpush1.bf16.msra.mxu0 %v3741
    %3833 = vmatprep.subr.bf16.mxu0 0
    %3834 = vmatpush1.bf16.msra.mxu0 %v3742
    %3835 = vmatprep.subr.bf16.mxu0 0
    %3836 = vmatpush1.bf16.msra.mxu0 %v3743
    %3837 = vmatprep.subr.bf16.mxu0 0
    %3838 = vmatpush1.bf16.msra.mxu0 %v3744
    %3839 = vmatprep.subr.bf16.mxu0 0
    %3840 = vmatpush1.bf16.msra.mxu0 %v3745
    %3841 = vmatprep.subr.bf16.mxu0 0
    %3842 = vmatpush1.bf16.msra.mxu0 %v3746
    %3843 = vmatprep.subr.bf16.mxu0 0
    %3844 = vmatpush1.bf16.msra.mxu0 %v3747
    %3845 = vmatprep.subr.bf16.mxu0 0
    %3846 = vmatpush1.bf16.msra.mxu0 %v3748
    %3847 = vmatprep.subr.bf16.mxu0 0
    %3848 = vmatpush1.bf16.msra.mxu0 %v3749
    %3849 = vmatprep.subr.bf16.mxu0 0
    %3850 = vmatpush1.bf16.msra.mxu0 %v3750
    %3851 = vmatprep.subr.bf16.mxu0 0
    %3852 = vmatpush1.bf16.msra.mxu0 %v3751
    %3853 = vmatprep.subr.bf16.mxu0 0
    %3854 = vmatpush1.bf16.msra.mxu0 %v3752
    %3855 = vmatprep.subr.bf16.mxu0 0
    %3856 = vmatpush1.bf16.msra.mxu0 %v3753
    %3857 = vmatprep.subr.bf16.mxu0 0
    %3858 = vmatpush1.bf16.msra.mxu0 %v3754
    %3859 = vmatprep.mubr.bf16.mxu0 %v75
    %3860 = vmatmul.mubr.bf16.gmra.mrb[0].mxu0 %v74
    %v3861 = vpop.f32.mrb[0].mxu0
    %v3862 = vadd.f32 %v3822, %v3861
    %v3863 = vpop.f32.mrb[0].mxu0
    %v3864 = vpop.f32.mrb[0].mxu0
    %v3865 = vpop.f32.mrb[0].mxu0
    %3866 = vdwg.mxu0
    %s3867 = scalar_lea.vmem %s3, 2560
    %v3868 = vld [vmem:[%s3867] sm:$0xf]
    %v3869 = vld [vmem:[%s3867 + $0x4] sm:$0xf]
    %v3870 = vld [vmem:[%s3867 + $0x8] sm:$0xf]
    %v3871 = vld [vmem:[%s3867 + $0xc] sm:$0xf]
    %v3872 = vld [vmem:[%s3867 + $0x10] sm:$0xf]
    %v3873 = vld [vmem:[%s3867 + $0x14] sm:$0xf]
    %v3874 = vld [vmem:[%s3867 + $0x18] sm:$0xf]
    %v3875 = vld [vmem:[%s3867 + $0x1c] sm:$0xf]
    %v3876 = vld [vmem:[%s3867 + $0x20] sm:$0xf]
    %v3877 = vld [vmem:[%s3867 + $0x24] sm:$0xf]
    %v3878 = vld [vmem:[%s3867 + $0x28] sm:$0xf]
    %v3879 = vld [vmem:[%s3867 + $0x2c] sm:$0xf]
    %v3880 = vld [vmem:[%s3867 + $0x30] sm:$0xf]
    %v3881 = vld [vmem:[%s3867 + $0x34] sm:$0xf]
    %v3882 = vld [vmem:[%s3867 + $0x38] sm:$0xf]
    %v3883 = vld [vmem:[%s3867 + $0x3c] sm:$0xf]
    %v3884 = vld [vmem:[%s3867 + $0x40] sm:$0xf]
    %v3885 = vld [vmem:[%s3867 + $0x44] sm:$0xf]
    %v3886 = vld [vmem:[%s3867 + $0x48] sm:$0xf]
    %v3887 = vld [vmem:[%s3867 + $0x4c] sm:$0xf]
    %v3888 = vld [vmem:[%s3867 + $0x50] sm:$0xf]
    %v3889 = vld [vmem:[%s3867 + $0x54] sm:$0xf]
    %v3890 = vld [vmem:[%s3867 + $0x58] sm:$0xf]
    %v3891 = vld [vmem:[%s3867 + $0x5c] sm:$0xf]
    %v3892 = vld [vmem:[%s3867 + $0x60] sm:$0xf]
    %v3893 = vld [vmem:[%s3867 + $0x64] sm:$0xf]
    %v3894 = vld [vmem:[%s3867 + $0x68] sm:$0xf]
    %v3895 = vld [vmem:[%s3867 + $0x6c] sm:$0xf]
    %v3896 = vld [vmem:[%s3867 + $0x70] sm:$0xf]
    %v3897 = vld [vmem:[%s3867 + $0x74] sm:$0xf]
    %v3898 = vld [vmem:[%s3867 + $0x78] sm:$0xf]
    %v3899 = vld [vmem:[%s3867 + $0x7c] sm:$0xf]
    %v3900 = vld [vmem:[%s3867 + $0x80] sm:$0xf]
    %v3901 = vld [vmem:[%s3867 + $0x84] sm:$0xf]
    %v3902 = vld [vmem:[%s3867 + $0x88] sm:$0xf]
    %v3903 = vld [vmem:[%s3867 + $0x8c] sm:$0xf]
    %v3904 = vld [vmem:[%s3867 + $0x90] sm:$0xf]
    %v3905 = vld [vmem:[%s3867 + $0x94] sm:$0xf]
    %v3906 = vld [vmem:[%s3867 + $0x98] sm:$0xf]
    %v3907 = vld [vmem:[%s3867 + $0x9c] sm:$0xf]
    %v3908 = vld [vmem:[%s3867 + $0xa0] sm:$0xf]
    %v3909 = vld [vmem:[%s3867 + $0xa4] sm:$0xf]
    %v3910 = vld [vmem:[%s3867 + $0xa8] sm:$0xf]
    %v3911 = vld [vmem:[%s3867 + $0xac] sm:$0xf]
    %v3912 = vld [vmem:[%s3867 + $0xb0] sm:$0xf]
    %v3913 = vld [vmem:[%s3867 + $0xb4] sm:$0xf]
    %v3914 = vld [vmem:[%s3867 + $0xb8] sm:$0xf]
    %v3915 = vld [vmem:[%s3867 + $0xbc] sm:$0xf]
    %v3916 = vld [vmem:[%s3867 + $0xc0] sm:$0xf]
    %v3917 = vld [vmem:[%s3867 + $0xc4] sm:$0xf]
    %v3918 = vld [vmem:[%s3867 + $0xc8] sm:$0xf]
    %v3919 = vld [vmem:[%s3867 + $0xcc] sm:$0xf]
    %v3920 = vld [vmem:[%s3867 + $0xd0] sm:$0xf]
    %v3921 = vld [vmem:[%s3867 + $0xd4] sm:$0xf]
    %v3922 = vld [vmem:[%s3867 + $0xd8] sm:$0xf]
    %v3923 = vld [vmem:[%s3867 + $0xdc] sm:$0xf]
    %v3924 = vld [vmem:[%s3867 + $0xe0] sm:$0xf]
    %v3925 = vld [vmem:[%s3867 + $0xe4] sm:$0xf]
    %v3926 = vld [vmem:[%s3867 + $0xe8] sm:$0xf]
    %v3927 = vld [vmem:[%s3867 + $0xec] sm:$0xf]
    %v3928 = vld [vmem:[%s3867 + $0xf0] sm:$0xf]
    %v3929 = vld [vmem:[%s3867 + $0xf4] sm:$0xf]
    %v3930 = vld [vmem:[%s3867 + $0xf8] sm:$0xf]
    %v3931 = vld [vmem:[%s3867 + $0xfc] sm:$0xf]
    %s3932 = scalar_lea.vmem %s4, 10
    %v3933 = vld [vmem:[%s3932] sm:$0x1]
    %v3935 = vlaneseq
    %v3936 = vshrl.u32 %v3935, 7
    %v3937 = vsub.s32 0, %v3936
    %v3938 = vrot.slane %v3933, %v3937
    %v4004 = vunpack.c.l.b16 %v3868
    %v4005 = vunpack.c.l.b16 %v3869
    %v4006 = vunpack.c.l.b16 %v3870
    %v4007 = vunpack.c.l.b16 %v3871
    %v4008 = vunpack.c.l.b16 %v3872
    %v4009 = vunpack.c.l.b16 %v3873
    %v4010 = vunpack.c.l.b16 %v3874
    %v4011 = vunpack.c.l.b16 %v3875
    %v4012 = vunpack.c.l.b16 %v3876
    %v4013 = vunpack.c.l.b16 %v3877
    %v4014 = vunpack.c.l.b16 %v3878
    %v4015 = vunpack.c.l.b16 %v3879
    %v4016 = vunpack.c.l.b16 %v3880
    %v4017 = vunpack.c.l.b16 %v3881
    %v4018 = vunpack.c.l.b16 %v3882
    %v4019 = vunpack.c.l.b16 %v3883
    %v4020 = vunpack.c.l.b16 %v3884
    %v4021 = vunpack.c.l.b16 %v3885
    %v4022 = vunpack.c.l.b16 %v3886
    %v4023 = vunpack.c.l.b16 %v3887
    %v4024 = vunpack.c.l.b16 %v3888
    %v4025 = vunpack.c.l.b16 %v3889
    %v4026 = vunpack.c.l.b16 %v3890
    %v4027 = vunpack.c.l.b16 %v3891
    %v4028 = vunpack.c.l.b16 %v3892
    %v4029 = vunpack.c.l.b16 %v3893
    %v4030 = vunpack.c.l.b16 %v3894
    %v4031 = vunpack.c.l.b16 %v3895
    %v4032 = vunpack.c.l.b16 %v3896
    %v4033 = vunpack.c.l.b16 %v3897
    %v4034 = vunpack.c.l.b16 %v3898
    %v4035 = vunpack.c.l.b16 %v3899
    %v4036 = vunpack.c.l.b16 %v3900
    %v4037 = vunpack.c.l.b16 %v3901
    %v4038 = vunpack.c.l.b16 %v3902
    %v4039 = vunpack.c.l.b16 %v3903
    %v4040 = vunpack.c.l.b16 %v3904
    %v4041 = vunpack.c.l.b16 %v3905
    %v4042 = vunpack.c.l.b16 %v3906
    %v4043 = vunpack.c.l.b16 %v3907
    %v4044 = vunpack.c.l.b16 %v3908
    %v4045 = vunpack.c.l.b16 %v3909
    %v4046 = vunpack.c.l.b16 %v3910
    %v4047 = vunpack.c.l.b16 %v3911
    %v4048 = vunpack.c.l.b16 %v3912
    %v4049 = vunpack.c.l.b16 %v3913
    %v4050 = vunpack.c.l.b16 %v3914
    %v4051 = vunpack.c.l.b16 %v3915
    %v4052 = vunpack.c.l.b16 %v3916
    %v4053 = vunpack.c.l.b16 %v3917
    %v4054 = vunpack.c.l.b16 %v3918
    %v4055 = vunpack.c.l.b16 %v3919
    %v4056 = vunpack.c.l.b16 %v3920
    %v4057 = vunpack.c.l.b16 %v3921
    %v4058 = vunpack.c.l.b16 %v3922
    %v4059 = vunpack.c.l.b16 %v3923
    %v4060 = vunpack.c.l.b16 %v3924
    %v4061 = vunpack.c.l.b16 %v3925
    %v4062 = vunpack.c.l.b16 %v3926
    %v4063 = vunpack.c.l.b16 %v3927
    %v4064 = vunpack.c.l.b16 %v3928
    %v4065 = vunpack.c.l.b16 %v3929
    %v4066 = vunpack.c.l.b16 %v3930
    %v4067 = vunpack.c.l.b16 %v3931
    %v4068 = vpack.c.b16 %v4005, %v4004
    %v4069 = vpack.c.b16 %v4007, %v4006
    %v4070 = vpack.c.b16 %v4009, %v4008
    %v4071 = vpack.c.b16 %v4011, %v4010
    %v4072 = vpack.c.b16 %v4013, %v4012
    %v4073 = vpack.c.b16 %v4015, %v4014
    %v4074 = vpack.c.b16 %v4017, %v4016
    %v4075 = vpack.c.b16 %v4019, %v4018
    %v4076 = vpack.c.b16 %v4021, %v4020
    %v4077 = vpack.c.b16 %v4023, %v4022
    %v4078 = vpack.c.b16 %v4025, %v4024
    %v4079 = vpack.c.b16 %v4027, %v4026
    %v4080 = vpack.c.b16 %v4029, %v4028
    %v4081 = vpack.c.b16 %v4031, %v4030
    %v4082 = vpack.c.b16 %v4033, %v4032
    %v4083 = vpack.c.b16 %v4035, %v4034
    %v4084 = vpack.c.b16 %v4037, %v4036
    %v4085 = vpack.c.b16 %v4039, %v4038
    %v4086 = vpack.c.b16 %v4041, %v4040
    %v4087 = vpack.c.b16 %v4043, %v4042
    %v4088 = vpack.c.b16 %v4045, %v4044
    %v4089 = vpack.c.b16 %v4047, %v4046
    %v4090 = vpack.c.b16 %v4049, %v4048
    %v4091 = vpack.c.b16 %v4051, %v4050
    %v4092 = vpack.c.b16 %v4053, %v4052
    %v4093 = vpack.c.b16 %v4055, %v4054
    %v4094 = vpack.c.b16 %v4057, %v4056
    %v4095 = vpack.c.b16 %v4059, %v4058
    %v4096 = vpack.c.b16 %v4061, %v4060
    %v4097 = vpack.c.b16 %v4063, %v4062
    %v4098 = vpack.c.b16 %v4065, %v4064
    %v4099 = vpack.c.b16 %v4067, %v4066
    %4132 = vmatprep.subr.bf16.mxu0 0
    %4133 = vmatpush1.bf16.msra.mxu0 %v4068
    %4134 = vmatprep.subr.bf16.mxu0 0
    %4135 = vmatpush1.bf16.msra.mxu0 %v4069
    %4136 = vmatprep.subr.bf16.mxu0 0
    %4137 = vmatpush1.bf16.msra.mxu0 %v4070
    %4138 = vmatprep.subr.bf16.mxu0 0
    %4139 = vmatpush1.bf16.msra.mxu0 %v4071
    %4140 = vmatprep.subr.bf16.mxu0 0
    %4141 = vmatpush1.bf16.msra.mxu0 %v4072
    %4142 = vmatprep.subr.bf16.mxu0 0
    %4143 = vmatpush1.bf16.msra.mxu0 %v4073
    %4144 = vmatprep.subr.bf16.mxu0 0
    %4145 = vmatpush1.bf16.msra.mxu0 %v4074
    %4146 = vmatprep.subr.bf16.mxu0 0
    %4147 = vmatpush1.bf16.msra.mxu0 %v4075
    %4148 = vmatprep.subr.bf16.mxu0 0
    %4149 = vmatpush1.bf16.msra.mxu0 %v4076
    %4150 = vmatprep.subr.bf16.mxu0 0
    %4151 = vmatpush1.bf16.msra.mxu0 %v4077
    %4152 = vmatprep.subr.bf16.mxu0 0
    %4153 = vmatpush1.bf16.msra.mxu0 %v4078
    %4154 = vmatprep.subr.bf16.mxu0 0
    %4155 = vmatpush1.bf16.msra.mxu0 %v4079
    %4156 = vmatprep.subr.bf16.mxu0 0
    %4157 = vmatpush1.bf16.msra.mxu0 %v4080
    %4158 = vmatprep.subr.bf16.mxu0 0
    %4159 = vmatpush1.bf16.msra.mxu0 %v4081
    %4160 = vmatprep.subr.bf16.mxu0 0
    %4161 = vmatpush1.bf16.msra.mxu0 %v4082
    %4162 = vmatprep.subr.bf16.mxu0 0
    %4163 = vmatpush1.bf16.msra.mxu0 %v4083
    %4164 = vmatprep.mubr.bf16.mxu0 %v73
    %4165 = vmatmul.mubr.bf16.gmra.mrb[0].mxu0 %v72
    %v4166 = vpop.f32.mrb[0].mxu0
    %v4167 = vadd.f32 %v3938, %v4166
    %v4168 = vpop.f32.mrb[0].mxu0
    %v4169 = vpop.f32.mrb[0].mxu0
    %v4170 = vpop.f32.mrb[0].mxu0
    %4171 = vdwg.mxu0
    %4172 = vmatprep.subr.bf16.mxu0 0
    %4173 = vmatpush1.bf16.msra.mxu0 %v4084
    %4174 = vmatprep.subr.bf16.mxu0 0
    %4175 = vmatpush1.bf16.msra.mxu0 %v4085
    %4176 = vmatprep.subr.bf16.mxu0 0
    %4177 = vmatpush1.bf16.msra.mxu0 %v4086
    %4178 = vmatprep.subr.bf16.mxu0 0
    %4179 = vmatpush1.bf16.msra.mxu0 %v4087
    %4180 = vmatprep.subr.bf16.mxu0 0
    %4181 = vmatpush1.bf16.msra.mxu0 %v4088
    %4182 = vmatprep.subr.bf16.mxu0 0
    %4183 = vmatpush1.bf16.msra.mxu0 %v4089
    %4184 = vmatprep.subr.bf16.mxu0 0
    %4185 = vmatpush1.bf16.msra.mxu0 %v4090
    %4186 = vmatprep.subr.bf16.mxu0 0
    %4187 = vmatpush1.bf16.msra.mxu0 %v4091
    %4188 = vmatprep.subr.bf16.mxu0 0
    %4189 = vmatpush1.bf16.msra.mxu0 %v4092
    %4190 = vmatprep.subr.bf16.mxu0 0
    %4191 = vmatpush1.bf16.msra.mxu0 %v4093
    %4192 = vmatprep.subr.bf16.mxu0 0
    %4193 = vmatpush1.bf16.msra.mxu0 %v4094
    %4194 = vmatprep.subr.bf16.mxu0 0
    %4195 = vmatpush1.bf16.msra.mxu0 %v4095
    %4196 = vmatprep.subr.bf16.mxu0 0
    %4197 = vmatpush1.bf16.msra.mxu0 %v4096
    %4198 = vmatprep.subr.bf16.mxu0 0
    %4199 = vmatpush1.bf16.msra.mxu0 %v4097
    %4200 = vmatprep.subr.bf16.mxu0 0
    %4201 = vmatpush1.bf16.msra.mxu0 %v4098
    %4202 = vmatprep.subr.bf16.mxu0 0
    %4203 = vmatpush1.bf16.msra.mxu0 %v4099
    %4204 = vmatprep.mubr.bf16.mxu0 %v75
    %4205 = vmatmul.mubr.bf16.gmra.mrb[0].mxu0 %v74
    %v4206 = vpop.f32.mrb[0].mxu0
    %v4207 = vadd.f32 %v4167, %v4206
    %v4208 = vpop.f32.mrb[0].mxu0
    %v4209 = vpop.f32.mrb[0].mxu0
    %v4210 = vpop.f32.mrb[0].mxu0
    %4211 = vdwg.mxu0
    %s4212 = scalar_lea.vmem %s3, 2816
    %v4213 = vld [vmem:[%s4212] sm:$0xf]
    %v4214 = vld [vmem:[%s4212 + $0x4] sm:$0xf]
    %v4215 = vld [vmem:[%s4212 + $0x8] sm:$0xf]
    %v4216 = vld [vmem:[%s4212 + $0xc] sm:$0xf]
    %v4217 = vld [vmem:[%s4212 + $0x10] sm:$0xf]
    %v4218 = vld [vmem:[%s4212 + $0x14] sm:$0xf]
    %v4219 = vld [vmem:[%s4212 + $0x18] sm:$0xf]
    %v4220 = vld [vmem:[%s4212 + $0x1c] sm:$0xf]
    %v4221 = vld [vmem:[%s4212 + $0x20] sm:$0xf]
    %v4222 = vld [vmem:[%s4212 + $0x24] sm:$0xf]
    %v4223 = vld [vmem:[%s4212 + $0x28] sm:$0xf]
    %v4224 = vld [vmem:[%s4212 + $0x2c] sm:$0xf]
    %v4225 = vld [vmem:[%s4212 + $0x30] sm:$0xf]
    %v4226 = vld [vmem:[%s4212 + $0x34] sm:$0xf]
    %v4227 = vld [vmem:[%s4212 + $0x38] sm:$0xf]
    %v4228 = vld [vmem:[%s4212 + $0x3c] sm:$0xf]
    %v4229 = vld [vmem:[%s4212 + $0x40] sm:$0xf]
    %v4230 = vld [vmem:[%s4212 + $0x44] sm:$0xf]
    %v4231 = vld [vmem:[%s4212 + $0x48] sm:$0xf]
    %v4232 = vld [vmem:[%s4212 + $0x4c] sm:$0xf]
    %v4233 = vld [vmem:[%s4212 + $0x50] sm:$0xf]
    %v4234 = vld [vmem:[%s4212 + $0x54] sm:$0xf]
    %v4235 = vld [vmem:[%s4212 + $0x58] sm:$0xf]
    %v4236 = vld [vmem:[%s4212 + $0x5c] sm:$0xf]
    %v4237 = vld [vmem:[%s4212 + $0x60] sm:$0xf]
    %v4238 = vld [vmem:[%s4212 + $0x64] sm:$0xf]
    %v4239 = vld [vmem:[%s4212 + $0x68] sm:$0xf]
    %v4240 = vld [vmem:[%s4212 + $0x6c] sm:$0xf]
    %v4241 = vld [vmem:[%s4212 + $0x70] sm:$0xf]
    %v4242 = vld [vmem:[%s4212 + $0x74] sm:$0xf]
    %v4243 = vld [vmem:[%s4212 + $0x78] sm:$0xf]
    %v4244 = vld [vmem:[%s4212 + $0x7c] sm:$0xf]
    %v4245 = vld [vmem:[%s4212 + $0x80] sm:$0xf]
    %v4246 = vld [vmem:[%s4212 + $0x84] sm:$0xf]
    %v4247 = vld [vmem:[%s4212 + $0x88] sm:$0xf]
    %v4248 = vld [vmem:[%s4212 + $0x8c] sm:$0xf]
    %v4249 = vld [vmem:[%s4212 + $0x90] sm:$0xf]
    %v4250 = vld [vmem:[%s4212 + $0x94] sm:$0xf]
    %v4251 = vld [vmem:[%s4212 + $0x98] sm:$0xf]
    %v4252 = vld [vmem:[%s4212 + $0x9c] sm:$0xf]
    %v4253 = vld [vmem:[%s4212 + $0xa0] sm:$0xf]
    %v4254 = vld [vmem:[%s4212 + $0xa4] sm:$0xf]
    %v4255 = vld [vmem:[%s4212 + $0xa8] sm:$0xf]
    %v4256 = vld [vmem:[%s4212 + $0xac] sm:$0xf]
    %v4257 = vld [vmem:[%s4212 + $0xb0] sm:$0xf]
    %v4258 = vld [vmem:[%s4212 + $0xb4] sm:$0xf]
    %v4259 = vld [vmem:[%s4212 + $0xb8] sm:$0xf]
    %v4260 = vld [vmem:[%s4212 + $0xbc] sm:$0xf]
    %v4261 = vld [vmem:[%s4212 + $0xc0] sm:$0xf]
    %v4262 = vld [vmem:[%s4212 + $0xc4] sm:$0xf]
    %v4263 = vld [vmem:[%s4212 + $0xc8] sm:$0xf]
    %v4264 = vld [vmem:[%s4212 + $0xcc] sm:$0xf]
    %v4265 = vld [vmem:[%s4212 + $0xd0] sm:$0xf]
    %v4266 = vld [vmem:[%s4212 + $0xd4] sm:$0xf]
    %v4267 = vld [vmem:[%s4212 + $0xd8] sm:$0xf]
    %v4268 = vld [vmem:[%s4212 + $0xdc] sm:$0xf]
    %v4269 = vld [vmem:[%s4212 + $0xe0] sm:$0xf]
    %v4270 = vld [vmem:[%s4212 + $0xe4] sm:$0xf]
    %v4271 = vld [vmem:[%s4212 + $0xe8] sm:$0xf]
    %v4272 = vld [vmem:[%s4212 + $0xec] sm:$0xf]
    %v4273 = vld [vmem:[%s4212 + $0xf0] sm:$0xf]
    %v4274 = vld [vmem:[%s4212 + $0xf4] sm:$0xf]
    %v4275 = vld [vmem:[%s4212 + $0xf8] sm:$0xf]
    %v4276 = vld [vmem:[%s4212 + $0xfc] sm:$0xf]
    %s4277 = scalar_lea.vmem %s4, 11
    %v4278 = vld [vmem:[%s4277] sm:$0x1]
    %v4280 = vlaneseq
    %v4281 = vshrl.u32 %v4280, 7
    %v4282 = vsub.s32 0, %v4281
    %v4283 = vrot.slane %v4278, %v4282
    %v4349 = vunpack.c.l.b16 %v4213
    %v4350 = vunpack.c.l.b16 %v4214
    %v4351 = vunpack.c.l.b16 %v4215
    %v4352 = vunpack.c.l.b16 %v4216
    %v4353 = vunpack.c.l.b16 %v4217
    %v4354 = vunpack.c.l.b16 %v4218
    %v4355 = vunpack.c.l.b16 %v4219
    %v4356 = vunpack.c.l.b16 %v4220
    %v4357 = vunpack.c.l.b16 %v4221
    %v4358 = vunpack.c.l.b16 %v4222
    %v4359 = vunpack.c.l.b16 %v4223
    %v4360 = vunpack.c.l.b16 %v4224
    %v4361 = vunpack.c.l.b16 %v4225
    %v4362 = vunpack.c.l.b16 %v4226
    %v4363 = vunpack.c.l.b16 %v4227
    %v4364 = vunpack.c.l.b16 %v4228
    %v4365 = vunpack.c.l.b16 %v4229
    %v4366 = vunpack.c.l.b16 %v4230
    %v4367 = vunpack.c.l.b16 %v4231
    %v4368 = vunpack.c.l.b16 %v4232
    %v4369 = vunpack.c.l.b16 %v4233
    %v4370 = vunpack.c.l.b16 %v4234
    %v4371 = vunpack.c.l.b16 %v4235
    %v4372 = vunpack.c.l.b16 %v4236
    %v4373 = vunpack.c.l.b16 %v4237
    %v4374 = vunpack.c.l.b16 %v4238
    %v4375 = vunpack.c.l.b16 %v4239
    %v4376 = vunpack.c.l.b16 %v4240
    %v4377 = vunpack.c.l.b16 %v4241
    %v4378 = vunpack.c.l.b16 %v4242
    %v4379 = vunpack.c.l.b16 %v4243
    %v4380 = vunpack.c.l.b16 %v4244
    %v4381 = vunpack.c.l.b16 %v4245
    %v4382 = vunpack.c.l.b16 %v4246
    %v4383 = vunpack.c.l.b16 %v4247
    %v4384 = vunpack.c.l.b16 %v4248
    %v4385 = vunpack.c.l.b16 %v4249
    %v4386 = vunpack.c.l.b16 %v4250
    %v4387 = vunpack.c.l.b16 %v4251
    %v4388 = vunpack.c.l.b16 %v4252
    %v4389 = vunpack.c.l.b16 %v4253
    %v4390 = vunpack.c.l.b16 %v4254
    %v4391 = vunpack.c.l.b16 %v4255
    %v4392 = vunpack.c.l.b16 %v4256
    %v4393 = vunpack.c.l.b16 %v4257
    %v4394 = vunpack.c.l.b16 %v4258
    %v4395 = vunpack.c.l.b16 %v4259
    %v4396 = vunpack.c.l.b16 %v4260
    %v4397 = vunpack.c.l.b16 %v4261
    %v4398 = vunpack.c.l.b16 %v4262
    %v4399 = vunpack.c.l.b16 %v4263
    %v4400 = vunpack.c.l.b16 %v4264
    %v4401 = vunpack.c.l.b16 %v4265
    %v4402 = vunpack.c.l.b16 %v4266
    %v4403 = vunpack.c.l.b16 %v4267
    %v4404 = vunpack.c.l.b16 %v4268
    %v4405 = vunpack.c.l.b16 %v4269
    %v4406 = vunpack.c.l.b16 %v4270
    %v4407 = vunpack.c.l.b16 %v4271
    %v4408 = vunpack.c.l.b16 %v4272
    %v4409 = vunpack.c.l.b16 %v4273
    %v4410 = vunpack.c.l.b16 %v4274
    %v4411 = vunpack.c.l.b16 %v4275
    %v4412 = vunpack.c.l.b16 %v4276
    %v4413 = vpack.c.b16 %v4350, %v4349
    %v4414 = vpack.c.b16 %v4352, %v4351
    %v4415 = vpack.c.b16 %v4354, %v4353
    %v4416 = vpack.c.b16 %v4356, %v4355
    %v4417 = vpack.c.b16 %v4358, %v4357
    %v4418 = vpack.c.b16 %v4360, %v4359
    %v4419 = vpack.c.b16 %v4362, %v4361
    %v4420 = vpack.c.b16 %v4364, %v4363
    %v4421 = vpack.c.b16 %v4366, %v4365
    %v4422 = vpack.c.b16 %v4368, %v4367
    %v4423 = vpack.c.b16 %v4370, %v4369
    %v4424 = vpack.c.b16 %v4372, %v4371
    %v4425 = vpack.c.b16 %v4374, %v4373
    %v4426 = vpack.c.b16 %v4376, %v4375
    %v4427 = vpack.c.b16 %v4378, %v4377
    %v4428 = vpack.c.b16 %v4380, %v4379
    %v4429 = vpack.c.b16 %v4382, %v4381
    %v4430 = vpack.c.b16 %v4384, %v4383
    %v4431 = vpack.c.b16 %v4386, %v4385
    %v4432 = vpack.c.b16 %v4388, %v4387
    %v4433 = vpack.c.b16 %v4390, %v4389
    %v4434 = vpack.c.b16 %v4392, %v4391
    %v4435 = vpack.c.b16 %v4394, %v4393
    %v4436 = vpack.c.b16 %v4396, %v4395
    %v4437 = vpack.c.b16 %v4398, %v4397
    %v4438 = vpack.c.b16 %v4400, %v4399
    %v4439 = vpack.c.b16 %v4402, %v4401
    %v4440 = vpack.c.b16 %v4404, %v4403
    %v4441 = vpack.c.b16 %v4406, %v4405
    %v4442 = vpack.c.b16 %v4408, %v4407
    %v4443 = vpack.c.b16 %v4410, %v4409
    %v4444 = vpack.c.b16 %v4412, %v4411
    %4477 = vmatprep.subr.bf16.mxu0 0
    %4478 = vmatpush1.bf16.msra.mxu0 %v4413
    %4479 = vmatprep.subr.bf16.mxu0 0
    %4480 = vmatpush1.bf16.msra.mxu0 %v4414
    %4481 = vmatprep.subr.bf16.mxu0 0
    %4482 = vmatpush1.bf16.msra.mxu0 %v4415
    %4483 = vmatprep.subr.bf16.mxu0 0
    %4484 = vmatpush1.bf16.msra.mxu0 %v4416
    %4485 = vmatprep.subr.bf16.mxu0 0
    %4486 = vmatpush1.bf16.msra.mxu0 %v4417
    %4487 = vmatprep.subr.bf16.mxu0 0
    %4488 = vmatpush1.bf16.msra.mxu0 %v4418
    %4489 = vmatprep.subr.bf16.mxu0 0
    %4490 = vmatpush1.bf16.msra.mxu0 %v4419
    %4491 = vmatprep.subr.bf16.mxu0 0
    %4492 = vmatpush1.bf16.msra.mxu0 %v4420
    %4493 = vmatprep.subr.bf16.mxu0 0
    %4494 = vmatpush1.bf16.msra.mxu0 %v4421
    %4495 = vmatprep.subr.bf16.mxu0 0
    %4496 = vmatpush1.bf16.msra.mxu0 %v4422
    %4497 = vmatprep.subr.bf16.mxu0 0
    %4498 = vmatpush1.bf16.msra.mxu0 %v4423
    %4499 = vmatprep.subr.bf16.mxu0 0
    %4500 = vmatpush1.bf16.msra.mxu0 %v4424
    %4501 = vmatprep.subr.bf16.mxu0 0
    %4502 = vmatpush1.bf16.msra.mxu0 %v4425
    %4503 = vmatprep.subr.bf16.mxu0 0
    %4504 = vmatpush1.bf16.msra.mxu0 %v4426
    %4505 = vmatprep.subr.bf16.mxu0 0
    %4506 = vmatpush1.bf16.msra.mxu0 %v4427
    %4507 = vmatprep.subr.bf16.mxu0 0
    %4508 = vmatpush1.bf16.msra.mxu0 %v4428
    %4509 = vmatprep.mubr.bf16.mxu0 %v73
    %4510 = vmatmul.mubr.bf16.gmra.mrb[0].mxu0 %v72
    %v4511 = vpop.f32.mrb[0].mxu0
    %v4512 = vadd.f32 %v4283, %v4511
    %v4513 = vpop.f32.mrb[0].mxu0
    %v4514 = vpop.f32.mrb[0].mxu0
    %v4515 = vpop.f32.mrb[0].mxu0
    %4516 = vdwg.mxu0
    %4517 = vmatprep.subr.bf16.mxu0 0
    %4518 = vmatpush1.bf16.msra.mxu0 %v4429
    %4519 = vmatprep.subr.bf16.mxu0 0
    %4520 = vmatpush1.bf16.msra.mxu0 %v4430
    %4521 = vmatprep.subr.bf16.mxu0 0
    %4522 = vmatpush1.bf16.msra.mxu0 %v4431
    %4523 = vmatprep.subr.bf16.mxu0 0
    %4524 = vmatpush1.bf16.msra.mxu0 %v4432
    %4525 = vmatprep.subr.bf16.mxu0 0
    %4526 = vmatpush1.bf16.msra.mxu0 %v4433
    %4527 = vmatprep.subr.bf16.mxu0 0
    %4528 = vmatpush1.bf16.msra.mxu0 %v4434
    %4529 = vmatprep.subr.bf16.mxu0 0
    %4530 = vmatpush1.bf16.msra.mxu0 %v4435
    %4531 = vmatprep.subr.bf16.mxu0 0
    %4532 = vmatpush1.bf16.msra.mxu0 %v4436
    %4533 = vmatprep.subr.bf16.mxu0 0
    %4534 = vmatpush1.bf16.msra.mxu0 %v4437
    %4535 = vmatprep.subr.bf16.mxu0 0
    %4536 = vmatpush1.bf16.msra.mxu0 %v4438
    %4537 = vmatprep.subr.bf16.mxu0 0
    %4538 = vmatpush1.bf16.msra.mxu0 %v4439
    %4539 = vmatprep.subr.bf16.mxu0 0
    %4540 = vmatpush1.bf16.msra.mxu0 %v4440
    %4541 = vmatprep.subr.bf16.mxu0 0
    %4542 = vmatpush1.bf16.msra.mxu0 %v4441
    %4543 = vmatprep.subr.bf16.mxu0 0
    %4544 = vmatpush1.bf16.msra.mxu0 %v4442
    %4545 = vmatprep.subr.bf16.mxu0 0
    %4546 = vmatpush1.bf16.msra.mxu0 %v4443
    %4547 = vmatprep.subr.bf16.mxu0 0
    %4548 = vmatpush1.bf16.msra.mxu0 %v4444
    %4549 = vmatprep.mubr.bf16.mxu0 %v75
    %4550 = vmatmul.mubr.bf16.gmra.mrb[0].mxu0 %v74
    %v4551 = vpop.f32.mrb[0].mxu0
    %v4552 = vadd.f32 %v4512, %v4551
    %v4553 = vpop.f32.mrb[0].mxu0
    %v4554 = vpop.f32.mrb[0].mxu0
    %v4555 = vpop.f32.mrb[0].mxu0
    %4556 = vdwg.mxu0
    %v4557 = vadd.f32 %v757, %v1102
    %v4558 = vadd.f32 %v4557, %v1447
    %v4559 = vadd.f32 %v4558, %v1792
    %v4560 = vadd.f32 %v4559, %v2137
    %v4561 = vadd.f32 %v4560, %v2482
    %v4562 = vadd.f32 %v4561, %v2827
    %v4563 = vadd.f32 %v4562, %v3172
    %v4564 = vadd.f32 %v4563, %v3517
    %v4565 = vadd.f32 %v4564, %v3862
    %v4566 = vadd.f32 %v4565, %v4207
    %v4567 = vadd.f32 %v4566, %v4552
    %v4568 = vmul.f32 %v4567, 0.083333336
    %v4569 = vsub.f32 %v414, %v4568
    %v4570 = vadd.f32 %v4569, %v757
    %vm4571 = vcmask 410624
    %v4572 = vsel %vm4571, %v4570, -inf
    %4573 = vmax.xlane.f32.xlu0 %v4572
    %v4574 = vpop.xlane.xlu0 %4573
    %v4575 = vsub.f32 %v4570, %v4574
    %v4576 = vmul.f32 %v4575, 1.442695
    %v4577 = vpow.pop %v4576
    %v4578 = vsel %vm4571, %v4577, 0.0
    %4579 = vadd.xlane.f32.xlu0 %v4578
    %v4580 = vpop.xlane.xlu0 %4579
    %v4581 = vrcp.pop %v4580
    %v4582 = vmul.f32 %v4577, %v4581
    %4583 = vst.msk [vmem:[#allocation2] sm:$0x3] %vm4571, %v4582
    %v4584 = vadd.f32 %v4569, %v1102
    %v4585 = vsel %vm4571, %v4584, -inf
    %4586 = vmax.xlane.f32.xlu0 %v4585
    %v4587 = vpop.xlane.xlu0 %4586
    %v4588 = vsub.f32 %v4584, %v4587
    %v4589 = vmul.f32 %v4588, 1.442695
    %v4590 = vpow.pop %v4589
    %v4591 = vsel %vm4571, %v4590, 0.0
    %4592 = vadd.xlane.f32.xlu0 %v4591
    %v4593 = vpop.xlane.xlu0 %4592
    %v4594 = vrcp.pop %v4593
    %v4595 = vmul.f32 %v4590, %v4594
    %s4596 = scalar_lea.vmem [#allocation2], 2
    %4597 = vst.msk [vmem:[%s4596] sm:$0x3] %vm4571, %v4595
    %v4598 = vadd.f32 %v4569, %v1447
    %v4599 = vsel %vm4571, %v4598, -inf
    %4600 = vmax.xlane.f32.xlu0 %v4599
    %v4601 = vpop.xlane.xlu0 %4600
    %v4602 = vsub.f32 %v4598, %v4601
    %v4603 = vmul.f32 %v4602, 1.442695
    %v4604 = vpow.pop %v4603
    %v4605 = vsel %vm4571, %v4604, 0.0
    %4606 = vadd.xlane.f32.xlu0 %v4605
    %v4607 = vpop.xlane.xlu0 %4606
    %v4608 = vrcp.pop %v4607
    %v4609 = vmul.f32 %v4604, %v4608
    %s4610 = scalar_lea.vmem [#allocation2], 4
    %4611 = vst.msk [vmem:[%s4610] sm:$0x3] %vm4571, %v4609
    %v4612 = vadd.f32 %v4569, %v1792
    %v4613 = vsel %vm4571, %v4612, -inf
    %4614 = vmax.xlane.f32.xlu0 %v4613
    %v4615 = vpop.xlane.xlu0 %4614
    %v4616 = vsub.f32 %v4612, %v4615
    %v4617 = vmul.f32 %v4616, 1.442695
    %v4618 = vpow.pop %v4617
    %v4619 = vsel %vm4571, %v4618, 0.0
    %4620 = vadd.xlane.f32.xlu0 %v4619
    %v4621 = vpop.xlane.xlu0 %4620
    %v4622 = vrcp.pop %v4621
    %v4623 = vmul.f32 %v4618, %v4622
    %s4624 = scalar_lea.vmem [#allocation2], 6
    %4625 = vst.msk [vmem:[%s4624] sm:$0x3] %vm4571, %v4623
    %v4626 = vadd.f32 %v4569, %v2137
    %v4627 = vsel %vm4571, %v4626, -inf
    %4628 = vmax.xlane.f32.xlu0 %v4627
    %v4629 = vpop.xlane.xlu0 %4628
    %v4630 = vsub.f32 %v4626, %v4629
    %v4631 = vmul.f32 %v4630, 1.442695
    %v4632 = vpow.pop %v4631
    %v4633 = vsel %vm4571, %v4632, 0.0
    %4634 = vadd.xlane.f32.xlu0 %v4633
    %v4635 = vpop.xlane.xlu0 %4634
    %v4636 = vrcp.pop %v4635
    %v4637 = vmul.f32 %v4632, %v4636
    %s4638 = scalar_lea.vmem [#allocation2], 8
    %4639 = vst.msk [vmem:[%s4638] sm:$0x3] %vm4571, %v4637
    %v4640 = vadd.f32 %v4569, %v2482
    %v4641 = vsel %vm4571, %v4640, -inf
    %4642 = vmax.xlane.f32.xlu0 %v4641
    %v4643 = vpop.xlane.xlu0 %4642
    %v4644 = vsub.f32 %v4640, %v4643
    %v4645 = vmul.f32 %v4644, 1.442695
    %v4646 = vpow.pop %v4645
    %v4647 = vsel %vm4571, %v4646, 0.0
    %4648 = vadd.xlane.f32.xlu0 %v4647
    %v4649 = vpop.xlane.xlu0 %4648
    %v4650 = vrcp.pop %v4649
    %v4651 = vmul.f32 %v4646, %v4650
    %s4652 = scalar_lea.vmem [#allocation2], 10
    %4653 = vst.msk [vmem:[%s4652] sm:$0x3] %vm4571, %v4651
    %v4654 = vadd.f32 %v4569, %v2827
    %v4655 = vsel %vm4571, %v4654, -inf
    %4656 = vmax.xlane.f32.xlu0 %v4655
    %v4657 = vpop.xlane.xlu0 %4656
    %v4658 = vsub.f32 %v4654, %v4657
    %v4659 = vmul.f32 %v4658, 1.442695
    %v4660 = vpow.pop %v4659
    %v4661 = vsel %vm4571, %v4660, 0.0
    %4662 = vadd.xlane.f32.xlu0 %v4661
    %v4663 = vpop.xlane.xlu0 %4662
    %v4664 = vrcp.pop %v4663
    %v4665 = vmul.f32 %v4660, %v4664
    %s4666 = scalar_lea.vmem [#allocation2], 12
    %4667 = vst.msk [vmem:[%s4666] sm:$0x3] %vm4571, %v4665
    %v4668 = vadd.f32 %v4569, %v3172
    %v4669 = vsel %vm4571, %v4668, -inf
    %4670 = vmax.xlane.f32.xlu0 %v4669
    %v4671 = vpop.xlane.xlu0 %4670
    %v4672 = vsub.f32 %v4668, %v4671
    %v4673 = vmul.f32 %v4672, 1.442695
    %v4674 = vpow.pop %v4673
    %v4675 = vsel %vm4571, %v4674, 0.0
    %4676 = vadd.xlane.f32.xlu0 %v4675
    %v4677 = vpop.xlane.xlu0 %4676
    %v4678 = vrcp.pop %v4677
    %v4679 = vmul.f32 %v4674, %v4678
    %s4680 = scalar_lea.vmem [#allocation2], 14
    %4681 = vst.msk [vmem:[%s4680] sm:$0x3] %vm4571, %v4679
    %v4682 = vadd.f32 %v4569, %v3517
    %v4683 = vsel %vm4571, %v4682, -inf
    %4684 = vmax.xlane.f32.xlu0 %v4683
    %v4685 = vpop.xlane.xlu0 %4684
    %v4686 = vsub.f32 %v4682, %v4685
    %v4687 = vmul.f32 %v4686, 1.442695
    %v4688 = vpow.pop %v4687
    %v4689 = vsel %vm4571, %v4688, 0.0
    %4690 = vadd.xlane.f32.xlu0 %v4689
    %v4691 = vpop.xlane.xlu0 %4690
    %v4692 = vrcp.pop %v4691
    %v4693 = vmul.f32 %v4688, %v4692
    %s4694 = scalar_lea.vmem [#allocation2], 16
    %4695 = vst.msk [vmem:[%s4694] sm:$0x3] %vm4571, %v4693
    %v4696 = vadd.f32 %v4569, %v3862
    %v4697 = vsel %vm4571, %v4696, -inf
    %4698 = vmax.xlane.f32.xlu0 %v4697
    %v4699 = vpop.xlane.xlu0 %4698
    %v4700 = vsub.f32 %v4696, %v4699
    %v4701 = vmul.f32 %v4700, 1.442695
    %v4702 = vpow.pop %v4701
    %v4703 = vsel %vm4571, %v4702, 0.0
    %4704 = vadd.xlane.f32.xlu0 %v4703
    %v4705 = vpop.xlane.xlu0 %4704
    %v4706 = vrcp.pop %v4705
    %v4707 = vmul.f32 %v4702, %v4706
    %s4708 = scalar_lea.vmem [#allocation2], 18
    %4709 = vst.msk [vmem:[%s4708] sm:$0x3] %vm4571, %v4707
    %v4710 = vadd.f32 %v4569, %v4207
    %v4711 = vsel %vm4571, %v4710, -inf
    %4712 = vmax.xlane.f32.xlu0 %v4711
    %v4713 = vpop.xlane.xlu0 %4712
    %v4714 = vsub.f32 %v4710, %v4713
    %v4715 = vmul.f32 %v4714, 1.442695
    %v4716 = vpow.pop %v4715
    %v4717 = vsel %vm4571, %v4716, 0.0
    %4718 = vadd.xlane.f32.xlu0 %v4717
    %v4719 = vpop.xlane.xlu0 %4718
    %v4720 = vrcp.pop %v4719
    %v4721 = vmul.f32 %v4716, %v4720
    %s4722 = scalar_lea.vmem [#allocation2], 20
    %4723 = vst.msk [vmem:[%s4722] sm:$0x3] %vm4571, %v4721
    %v4724 = vadd.f32 %v4569, %v4552
    %v4725 = vsel %vm4571, %v4724, -inf
    %4726 = vmax.xlane.f32.xlu0 %v4725
    %v4727 = vpop.xlane.xlu0 %4726
    %v4728 = vsub.f32 %v4724, %v4727
    %v4729 = vmul.f32 %v4728, 1.442695
    %v4730 = vpow.pop %v4729
    %v4731 = vsel %vm4571, %v4730, 0.0
    %4732 = vadd.xlane.f32.xlu0 %v4731
    %v4733 = vpop.xlane.xlu0 %4732
    %v4734 = vrcp.pop %v4733
    %v4735 = vmul.f32 %v4730, %v4734
    %s4736 = scalar_lea.vmem [#allocation2], 22
    %4737 = vst.msk [vmem:[%s4736] sm:$0x3] %vm4571, %v4735
    // Predicated region
    $region22: #{forward.9} parent=1 // pred_check
      _
    $region23: #{forward.9} parent=1 // pred_check_branch
      %4739 = sbr.rel (0) target = $region25
    $region24: #{forward.9} parent=1 // pred_region
      %s4741 = ssub.s32 384, 384
      %4742 = vsyncadd [#allocation3], %s4741
      %s4743 = sshll.u32 [#allocation2], 4
      %s4744 = int_to_ptr.vmem [resolvable:$true] %s4743
      %4749 = dma.vmem_to_hbm [thread:$0]  %s4744, 384, %s5, [#allocation3], 32, 32, 2
    $region25: #{forward.9} parent=1 // pred_fallthru
      _
    // Predicated region
    $region26: #{forward.9} parent=1 // pred_check
      _
    $region27: #{forward.9} parent=1 // pred_check_branch
      %4751 = sbr.rel (0) target = $region29
    $region28: #{forward.9} parent=1 // pred_region
      %4752 = dma.done [#allocation3], 384
    $region29: #{forward.9} parent=1 // pred_fallthru
      _
    %4753 = vsyncpa [#allocation3], 1

</llo_original>
